<compile_context>
chip_gen: v7x
topology: tpu7x:2x2x1
jax: 0.10.0
libtpu: 0.0.40
codegen_flags: <defaults>
</compile_context>

<pallas_src>
import numpy as np
import jax
import jax.numpy as jnp
from jax import lax
from jax.experimental import pallas as pl
from jax.experimental.pallas import tpu as pltpu

CHANNEL_SEQ = (np.array([1, 2, 3, 4, 5, 6, 7, 8, 9, 10, 11, 12, 14, 15, 13, 17,
                         18, 21, 23, 24, 27, 29, 30, 33, 35, 36, 39, 16, 20, 19,
                         22, 26, 25, 28, 32, 31, 34, 38, 37, 40]) - 1)

HID = 64  # LSTM hidden size (fixed by the module)


def _r8(n):
  return ((n + 7) // 8) * 8


def _elu(z):
  # ELU(alpha=1); the min() keeps the discarded where() branch from overflowing.
  return jnp.where(z > 0, z, jnp.exp(jnp.minimum(z, 0.0)) - 1.0)


def _sigmoid(z):
  return 1.0 / (1.0 + jnp.exp(-z))


# ---------------------------------------------------------------------------
# Fused kernel: CNN (block1+block2) + bi-LSTM + classifier, one invocation.
# ---------------------------------------------------------------------------
def make_fused_kernel(B, H2, W3, W4, n_class):
  W3P, W4P = _r8(W3), _r8(W4)       # 40, 24
  T = H2 * W4                       # 54
  TP = _r8(T)                       # 56
  CB = H2 * HID                     # 192 (band-stacked channel width)
  GW = 2 * HID                      # 128 (padded per-gate width)

  def kernel(x_ref, w1t_ref, b1_ref, w2t_ref, b2_ref, s3_ref, w3_ref, b3_ref,
             s4_ref, w4_ref, b4_ref, wih_ref, whf_ref, whr_ref, bf_ref, br_ref,
             wc_ref, mask_ref, rmat_ref, g_ref, bc_ref, o_ref):
    # ------------------ CNN feature extractor (time-major) ------------------
    # B is tiny (2); a static Python loop keeps the LLO scheduler's view flat.
    feats = []
    for b in range(B):
      xt = x_ref[b].T                                                # [S, C]
      a1 = _elu(jnp.dot(xt, w1t_ref[...],
                        preferred_element_type=jnp.float32) + b1_ref[...])   # [S, 288]
      a2 = _elu(jnp.dot(a1, w2t_ref[...],
                        preferred_element_type=jnp.float32) + b2_ref[...])   # [S, 192]

      # conv3: one merged tap-selection dot, then 8 accumulating weight dots
      # (block-diagonal over the 3 bands; sublane-aligned row slices).
      q3 = jnp.dot(s3_ref[...], a2, preferred_element_type=jnp.float32)      # [320, 192]
      acc3 = jnp.zeros((W3P, CB), jnp.float32)
      for k in range(8):
        acc3 = acc3 + jnp.dot(q3[W3P * k:W3P * (k + 1), :],
                              w3_ref[CB * k:CB * (k + 1), :],
                              preferred_element_type=jnp.float32)
      a3 = _elu(acc3 + b3_ref[...])                                  # [40, 192]

      # conv4: same pattern with 4 taps.
      q4 = jnp.dot(s4_ref[...], a3, preferred_element_type=jnp.float32)      # [96, 192]
      acc4 = jnp.zeros((W4P, CB), jnp.float32)
      for k in range(4):
        acc4 = acc4 + jnp.dot(q4[W4P * k:W4P * (k + 1), :],
                              w4_ref[CB * k:CB * (k + 1), :],
                              preferred_element_type=jnp.float32)
      a4 = _elu(acc4 + b4_ref[...])                                  # [24, 192]

      # feature.reshape(B,64,-1).permute(0,2,1): row t = 18*h + w4, col = chan.
      pieces = [a4[:W4, HID * h:HID * (h + 1)] for h in range(H2)]   # H2 x [18, 64]
      if TP > T:
        pieces.append(jnp.zeros((TP - T, HID), jnp.float32))
      feats.append(jnp.concatenate(pieces, axis=0))                  # [56, 64]

    feat_all = jnp.concatenate(feats, axis=0)                        # [B*56, 64]

    # ------------------ bi-LSTM over the batch axis ------------------
    # Input projection hoisted out of the recurrence (both directions, all B).
    xw_all = jnp.dot(feat_all, wih_ref[...],
                     preferred_element_type=jnp.float32)             # [B*56, 1024]

    def run_dir(whhT, bias, col0, reverse):
      h = jnp.zeros((TP, GW), jnp.float32)
      c = jnp.zeros((TP, GW), jnp.float32)
      hs = [None] * B
      order = range(B - 1, -1, -1) if reverse else range(B)
      for s in order:
        pre = (xw_all[TP * s:TP * (s + 1), col0:col0 + 4 * GW]
               + jnp.dot(h, whhT, preferred_element_type=jnp.float32) + bias)
        i = _sigmoid(pre[:, 0 * GW:1 * GW])
        f = _sigmoid(pre[:, 1 * GW:2 * GW])
        g = jnp.tanh(pre[:, 2 * GW:3 * GW])
        o = _sigmoid(pre[:, 3 * GW:4 * GW])
        c = f * c + i * g
        h = o * jnp.tanh(c)
        hs[s] = h
      return hs

    hf = run_dir(whf_ref[...], bf_ref[...], 0, False)
    hb = run_dir(whr_ref[...], br_ref[...], 4 * GW, True)

    # ------------------ classifier (Flatten + Linear, folded) ------------------
    hcat = jnp.concatenate(
        [jnp.concatenate([hf[s], hb[s]], axis=1) for s in range(B)], axis=0)  # [B*56, 256]
    p = jnp.dot(hcat, wc_ref[...], preferred_element_type=jnp.float32)
    p = p * mask_ref[...]                                            # [B*56, T*n]
    s_all = jnp.dot(rmat_ref[...], p, preferred_element_type=jnp.float32)     # [B, T*n]
    o_ref[...] = (jnp.dot(s_all, g_ref[...],
                          preferred_element_type=jnp.float32) + bc_ref[...])

  return kernel


# ---------------------------------------------------------------------------
# Wrapper: offline weight folding (numpy) + one pallas_call.
# ---------------------------------------------------------------------------
def cnn_nlstm_forward(x, params, n_class):
  B, C, S = x.shape
  H1 = (C - 8) // 4 + 1          # 9
  H2 = (H1 - 4) // 2 + 1         # 3
  W3 = (S - 8) // 4 + 1          # 38
  W4 = (W3 - 4) // 2 + 1         # 18
  T = H2 * W4                    # 54
  W3P, W4P, TP = _r8(W3), _r8(W4), _r8(T)
  CB = H2 * HID                  # 192
  GW = 2 * HID                   # 128

  # ---- conv1 (channel conv), folded + channel permutation, time-major ----
  w1 = np.asarray(params["w1"], np.float32).reshape(32, 8)
  w1t = np.zeros((C, H1 * 32), np.float32)
  for h in range(H1):
    for k in range(8):
      w1t[CHANNEL_SEQ[4 * h + k], 32 * h:32 * h + 32] += w1[:, k]
  b1r = np.tile(np.asarray(params["b1"], np.float32), H1).reshape(1, H1 * 32)

  # ---- conv2 (channel conv), folded, time-major ----
  w2 = np.asarray(params["w2"], np.float32)[:, :, :, 0]              # [64,32,4]
  w2t = np.zeros((H1 * 32, CB), np.float32)
  for h in range(H2):
    for k in range(4):
      r = 32 * (2 * h + k)
      w2t[r:r + 32, 64 * h:64 * h + 64] = w2[:, :, k].T
  b2r = np.tile(np.asarray(params["b2"], np.float32), H2).reshape(1, CB)

  # ---- conv3 (time conv, stride 4): merged tap selection + blockdiag weights ----
  s3l = np.zeros((8 * W3P, S), np.float32)
  for k in range(8):
    for w in range(W3):
      s3l[W3P * k + w, 4 * w + k] = 1.0
  w3 = np.asarray(params["w3"], np.float32)[:, :, 0, :]              # [64,64,8]
  w3blk = np.zeros((8 * CB, CB), np.float32)
  for k in range(8):
    wk = w3[:, :, k].T                                               # [ci, co]
    for h in range(H2):
      w3blk[CB * k + 64 * h:CB * k + 64 * h + 64, 64 * h:64 * h + 64] = wk
  b3r = np.tile(np.asarray(params["b3"], np.float32), H2).reshape(1, CB)

  # ---- conv4 (time conv, stride 2): merged tap selection + blockdiag weights ----
  s4l = np.zeros((4 * W4P, W3P), np.float32)
  for k in range(4):
    for w in range(W4):
      s4l[W4P * k + w, 2 * w + k] = 1.0
  w4 = np.asarray(params["w4"], np.float32)[:, :, 0, :]              # [64,64,4]
  w4blk = np.zeros((4 * CB, CB), np.float32)
  for k in range(4):
    wk = w4[:, :, k].T
    for h in range(H2):
      w4blk[CB * k + 64 * h:CB * k + 64 * h + 64, 64 * h:64 * h + 64] = wk
  b4r = np.tile(np.asarray(params["b4"], np.float32), H2).reshape(1, CB)

  # ---- LSTM weights, gate-padded layout (each gate occupies 128 lanes) ----
  def pad_ih(w_ih):                           # [256,64] -> [64,512]
    out = np.zeros((HID, 4 * GW), np.float32)
    for g in range(4):
      out[:, GW * g:GW * g + HID] = np.asarray(w_ih, np.float32)[64 * g:64 * g + 64, :].T
    return out

  def pad_hh(w_hh):                           # [256,64] -> [128,512] (rows 64: zero)
    out = np.zeros((GW, 4 * GW), np.float32)
    for g in range(4):
      out[:HID, GW * g:GW * g + HID] = np.asarray(w_hh, np.float32)[64 * g:64 * g + 64, :].T
    return out

  def pad_bias(b_ih, b_hh):                   # -> [1,512]
    out = np.zeros((1, 4 * GW), np.float32)
    s = np.asarray(b_ih, np.float32) + np.asarray(b_hh, np.float32)
    for g in range(4):
      out[0, GW * g:GW * g + HID] = s[64 * g:64 * g + 64]
    return out

  wih_big = np.concatenate([pad_ih(params["w_ih_f"]), pad_ih(params["w_ih_r"])],
                           axis=1)                                   # [64, 1024]
  whh_f_p = pad_hh(params["w_hh_f"])
  whh_r_p = pad_hh(params["w_hh_r"])
  bias_f_p = pad_bias(params["b_ih_f"], params["b_hh_f"])
  bias_r_p = pad_bias(params["b_ih_r"], params["b_hh_r"])

  # ---- classifier (Flatten + Linear), folded ----
  wc3 = np.asarray(params["wc"], np.float32).reshape(n_class, T, 2 * HID)
  wcf = np.transpose(wc3[:, :, :HID], (2, 1, 0)).reshape(HID, T * n_class)
  wcb = np.transpose(wc3[:, :, HID:], (2, 1, 0)).reshape(HID, T * n_class)
  wcstack = np.zeros((2 * GW, T * n_class), np.float32)
  wcstack[0:HID, :] = wcf                      # fwd hidden (padded cols 64:128 zero)
  wcstack[GW:GW + HID, :] = wcb                # bwd hidden
  mask = np.zeros((TP, T * n_class), np.float32)
  mask[:T, :] = np.repeat(np.eye(T, dtype=np.float32), n_class, axis=1)
  mask_tiled = np.tile(mask, (B, 1))                                 # [B*56, T*n]
  rmat = np.zeros((B, B * TP), np.float32)
  for b in range(B):
    rmat[b, TP * b:TP * (b + 1)] = 1.0
  gmat = np.tile(np.eye(n_class, dtype=np.float32), (T, 1))          # [T*n, n]
  bcr = np.asarray(params["bc"], np.float32).reshape(1, n_class)

  # ---- single fused pallas_call ----
  args = (x, w1t, b1r, w2t, b2r, s3l, w3blk, b3r, s4l, w4blk, b4r,
          wih_big, whh_f_p, whh_r_p, bias_f_p, bias_r_p,
          wcstack, mask_tiled, rmat, gmat, bcr)

  def full_spec(shape):
    return pl.BlockSpec(tuple(shape), lambda i, _n=len(shape): (0,) * _n)

  logits = pl.pallas_call(
      make_fused_kernel(B, H2, W3, W4, n_class),
      out_shape=jax.ShapeDtypeStruct((B, n_class), jnp.float32),
      grid_spec=pltpu.PrefetchScalarGridSpec(
          num_scalar_prefetch=0,
          grid=(1,),
          in_specs=[full_spec(np.shape(a)) for a in args],
          out_specs=full_spec((B, n_class)),
      ),
      compiler_params=pltpu.CompilerParams(dimension_semantics=("arbitrary",)),
  )(*args)
  return logits


# ---------------------------------------------------------------------------
# Deterministic synthetic parameters (PyTorch-default-like uniform bounds).
# ---------------------------------------------------------------------------
def init_params(key, n_class, channels, samples):
  H1 = (channels - 8) // 4 + 1
  H2 = (H1 - 4) // 2 + 1
  W3 = (samples - 8) // 4 + 1
  W4 = (W3 - 4) // 2 + 1
  T = H2 * W4
  ks = jax.random.split(key, 18)

  def u(k, shape, fan_in):
    b = 1.0 / np.sqrt(fan_in)
    return jax.random.uniform(k, shape, jnp.float32, -b, b)

  return dict(
      w1=u(ks[0], (32, 1, 8, 1), 8),        b1=u(ks[1], (32,), 8),
      w2=u(ks[2], (64, 32, 4, 1), 128),     b2=u(ks[3], (64,), 128),
      w3=u(ks[4], (64, 64, 1, 8), 512),     b3=u(ks[5], (64,), 512),
      w4=u(ks[6], (64, 64, 1, 4), 256),     b4=u(ks[7], (64,), 256),
      w_ih_f=u(ks[8], (4 * HID, HID), HID), w_hh_f=u(ks[9], (4 * HID, HID), HID),
      b_ih_f=u(ks[10], (4 * HID,), HID),    b_hh_f=u(ks[11], (4 * HID,), HID),
      w_ih_r=u(ks[12], (4 * HID, HID), HID), w_hh_r=u(ks[13], (4 * HID, HID), HID),
      b_ih_r=u(ks[14], (4 * HID,), HID),    b_hh_r=u(ks[15], (4 * HID,), HID),
      wc=u(ks[16], (n_class, 2 * HID * T), 2 * HID * T),
      bc=u(ks[17], (n_class,), 2 * HID * T),
  )


# ---------------------------------------------------------------------------
# Pure-JAX reference reproducing the PyTorch module (f32, HIGHEST precision).
# ---------------------------------------------------------------------------
def reference_forward(x, params):
  prec = lax.Precision.HIGHEST
  B, C, S = x.shape
  xp = x[:, jnp.asarray(CHANNEL_SEQ), :][:, None, :, :]              # [B,1,C,S]

  def conv(a, w, b, stride):
    z = lax.conv_general_dilated(a, w, stride, "VALID",
                                 dimension_numbers=("NCHW", "OIHW", "NCHW"),
                                 precision=prec)
    return _elu(z + b.reshape(1, -1, 1, 1))

  a = conv(xp, params["w1"], params["b1"], (4, 1))
  a = conv(a, params["w2"], params["b2"], (2, 1))
  a = conv(a, params["w3"], params["b3"], (1, 4))
  a = conv(a, params["w4"], params["b4"], (1, 2))
  feat = a.reshape(B, 64, -1).transpose(0, 2, 1)                     # [B, T, 64]
  T = feat.shape[1]

  def run_dir(wih, whh, bih, bhh, reverse):
    h = jnp.zeros((T, HID), jnp.float32)
    c = jnp.zeros((T, HID), jnp.float32)
    outs = [None] * B
    order = range(B - 1, -1, -1) if reverse else range(B)
    for s in order:
      pre = (jnp.dot(feat[s], wih.T, precision=prec)
             + jnp.dot(h, whh.T, precision=prec) + bih + bhh)
      i = _sigmoid(pre[:, 0 * HID:1 * HID])
      f = _sigmoid(pre[:, 1 * HID:2 * HID])
      g = jnp.tanh(pre[:, 2 * HID:3 * HID])
      o = _sigmoid(pre[:, 3 * HID:4 * HID])
      c = f * c + i * g
      h = o * jnp.tanh(c)
      outs[s] = h
    return jnp.stack(outs, 0)                                        # [B, T, 64]

  hf = run_dir(params["w_ih_f"], params["w_hh_f"],
               params["b_ih_f"], params["b_hh_f"], False)
  hb = run_dir(params["w_ih_r"], params["w_hh_r"],
               params["b_ih_r"], params["b_hh_r"], True)
  out = jnp.concatenate([hf, hb], axis=-1)                           # [B, T, 128]
  flat = out.reshape(B, -1)
  return jnp.dot(flat, params["wc"].T, precision=prec) + params["bc"]


if __name__ == "__main__":
  # Shapes are pinned by the module: channel_seq => 40 input channels, and
  # Linear(128*54, n_class) => samples = 156 (block2 yields 3*18 = 54 steps).
  B, C, S, n_class = 2, 40, 156, 4
  key = jax.random.PRNGKey(0)
  kx, kp = jax.random.split(key)
  x = jax.random.normal(kx, (B, C, S), jnp.float32)
  params = init_params(kp, n_class, C, S)

  out = jax.block_until_ready(cnn_nlstm_forward(x, params, n_class))
  ref = jax.block_until_ready(reference_forward(x, params))

  # Kernel matmuls run at default (single-pass bf16-input) MXU precision,
  # the reference at f32 HIGHEST; differences are well inside 2e-2 at B=2.
  np.testing.assert_allclose(np.asarray(out), np.asarray(ref), rtol=2e-2, atol=2e-2)
  print("KERNEL_OK")
</pallas_src>

<mosaic_0001>
module attributes {stable_mosaic.version = 11 : i64} {
  func.func @kernel(%arg0: i32, %arg1: memref<2x40x156xf32, #tpu.memory_space<vmem>>, %arg2: memref<40x288xf32, #tpu.memory_space<vmem>>, %arg3: memref<1x288xf32, #tpu.memory_space<vmem>>, %arg4: memref<288x192xf32, #tpu.memory_space<vmem>>, %arg5: memref<1x192xf32, #tpu.memory_space<vmem>>, %arg6: memref<320x156xf32, #tpu.memory_space<vmem>>, %arg7: memref<1536x192xf32, #tpu.memory_space<vmem>>, %arg8: memref<1x192xf32, #tpu.memory_space<vmem>>, %arg9: memref<96x40xf32, #tpu.memory_space<vmem>>, %arg10: memref<768x192xf32, #tpu.memory_space<vmem>>, %arg11: memref<1x192xf32, #tpu.memory_space<vmem>>, %arg12: memref<64x1024xf32, #tpu.memory_space<vmem>>, %arg13: memref<128x512xf32, #tpu.memory_space<vmem>>, %arg14: memref<128x512xf32, #tpu.memory_space<vmem>>, %arg15: memref<1x512xf32, #tpu.memory_space<vmem>>, %arg16: memref<1x512xf32, #tpu.memory_space<vmem>>, %arg17: memref<256x216xf32, #tpu.memory_space<vmem>>, %arg18: memref<112x216xf32, #tpu.memory_space<vmem>>, %arg19: memref<2x112xf32, #tpu.memory_space<vmem>>, %arg20: memref<216x4xf32, #tpu.memory_space<vmem>>, %arg21: memref<1x4xf32, #tpu.memory_space<vmem>>, %arg22: memref<2x4xf32, #tpu.memory_space<vmem>>) attributes {dimension_semantics = [#tpu.dimension_semantics<arbitrary>], iteration_bounds = array<i64: 1>, scalar_prefetch = 0 : i64, scratch_operands = 0 : i64, tpu.core_type = #tpu.core_type<tc>, window_params = [{pipeline_mode = #tpu.pipeline_mode<synchronous>, transform_indices = @transform_0, window_bounds = array<i64: 2, 40, 156>}, {pipeline_mode = #tpu.pipeline_mode<synchronous>, transform_indices = @transform_1, window_bounds = array<i64: 40, 288>}, {pipeline_mode = #tpu.pipeline_mode<synchronous>, transform_indices = @transform_2, window_bounds = array<i64: 1, 288>}, {pipeline_mode = #tpu.pipeline_mode<synchronous>, transform_indices = @transform_3, window_bounds = array<i64: 288, 192>}, {pipeline_mode = #tpu.pipeline_mode<synchronous>, transform_indices = @transform_4, window_bounds = array<i64: 1, 192>}, {pipeline_mode = #tpu.pipeline_mode<synchronous>, transform_indices = @transform_5, window_bounds = array<i64: 320, 156>}, {pipeline_mode = #tpu.pipeline_mode<synchronous>, transform_indices = @transform_6, window_bounds = array<i64: 1536, 192>}, {pipeline_mode = #tpu.pipeline_mode<synchronous>, transform_indices = @transform_7, window_bounds = array<i64: 1, 192>}, {pipeline_mode = #tpu.pipeline_mode<synchronous>, transform_indices = @transform_8, window_bounds = array<i64: 96, 40>}, {pipeline_mode = #tpu.pipeline_mode<synchronous>, transform_indices = @transform_9, window_bounds = array<i64: 768, 192>}, {pipeline_mode = #tpu.pipeline_mode<synchronous>, transform_indices = @transform_10, window_bounds = array<i64: 1, 192>}, {pipeline_mode = #tpu.pipeline_mode<synchronous>, transform_indices = @transform_11, window_bounds = array<i64: 64, 1024>}, {pipeline_mode = #tpu.pipeline_mode<synchronous>, transform_indices = @transform_12, window_bounds = array<i64: 128, 512>}, {pipeline_mode = #tpu.pipeline_mode<synchronous>, transform_indices = @transform_13, window_bounds = array<i64: 128, 512>}, {pipeline_mode = #tpu.pipeline_mode<synchronous>, transform_indices = @transform_14, window_bounds = array<i64: 1, 512>}, {pipeline_mode = #tpu.pipeline_mode<synchronous>, transform_indices = @transform_15, window_bounds = array<i64: 1, 512>}, {pipeline_mode = #tpu.pipeline_mode<synchronous>, transform_indices = @transform_16, window_bounds = array<i64: 256, 216>}, {pipeline_mode = #tpu.pipeline_mode<synchronous>, transform_indices = @transform_17, window_bounds = array<i64: 112, 216>}, {pipeline_mode = #tpu.pipeline_mode<synchronous>, transform_indices = @transform_18, window_bounds = array<i64: 2, 112>}, {pipeline_mode = #tpu.pipeline_mode<synchronous>, transform_indices = @transform_19, window_bounds = array<i64: 216, 4>}, {pipeline_mode = #tpu.pipeline_mode<synchronous>, transform_indices = @transform_20, window_bounds = array<i64: 1, 4>}, {pipeline_mode = #tpu.pipeline_mode<synchronous>, transform_indices = @transform_21, window_bounds = array<i64: 2, 4>}]} {
    %c0 = arith.constant 0 : index
    %c0_0 = arith.constant 0 : index
    %c0_1 = arith.constant 0 : index
    %0 = vector.load %arg1[%c0, %c0_0, %c0_1] : memref<2x40x156xf32, #tpu.memory_space<vmem>>, vector<1x40x156xf32>
    %1 = vector.shape_cast %0 : vector<1x40x156xf32> to vector<40x156xf32>
    %2 = tpu.transpose %1, [1, 0] : vector<40x156xf32> -> vector<156x40xf32>
    %c0_2 = arith.constant 0 : index
    %c0_3 = arith.constant 0 : index
    %3 = vector.load %arg2[%c0_2, %c0_3] : memref<40x288xf32, #tpu.memory_space<vmem>>, vector<40x288xf32>
    %cst = arith.constant dense<0.000000e+00> : vector<156x288xf32>
    %4 = tpu.matmul %2, %3, %cst {dimension_numbers = #tpu.dot_dimension_numbers<[1], [0], [0], [1], [0, 0, 1, 1], [], []>} : vector<156x40xf32>, vector<40x288xf32>, vector<156x288xf32> -> vector<156x288xf32>
    %c0_4 = arith.constant 0 : index
    %c0_5 = arith.constant 0 : index
    %5 = vector.load %arg3[%c0_4, %c0_5] : memref<1x288xf32, #tpu.memory_space<vmem>>, vector<1x288xf32>
    %6 = vector.broadcast %5 : vector<1x288xf32> to vector<156x288xf32>
    %7 = arith.addf %4, %6 : vector<156x288xf32>
    %cst_6 = arith.constant 0.000000e+00 : f32
    %8 = vector.broadcast %cst_6 : f32 to vector<156x288xf32>
    %9 = arith.cmpf ogt, %7, %8 : vector<156x288xf32>
    %cst_7 = arith.constant 0.000000e+00 : f32
    %10 = vector.broadcast %cst_7 : f32 to vector<156x288xf32>
    %11 = arith.minimumf %7, %10 : vector<156x288xf32>
    %12 = math.exp %11 : vector<156x288xf32>
    %cst_8 = arith.constant 1.000000e+00 : f32
    %13 = vector.broadcast %cst_8 : f32 to vector<156x288xf32>
    %14 = arith.subf %12, %13 : vector<156x288xf32>
    %15 = arith.select %9, %7, %14 : vector<156x288xi1>, vector<156x288xf32>
    %c0_9 = arith.constant 0 : index
    %c0_10 = arith.constant 0 : index
    %16 = vector.load %arg4[%c0_9, %c0_10] : memref<288x192xf32, #tpu.memory_space<vmem>>, vector<288x192xf32>
    %cst_11 = arith.constant dense<0.000000e+00> : vector<156x192xf32>
    %17 = tpu.matmul %15, %16, %cst_11 {dimension_numbers = #tpu.dot_dimension_numbers<[1], [0], [0], [1], [0, 0, 1, 1], [], []>} : vector<156x288xf32>, vector<288x192xf32>, vector<156x192xf32> -> vector<156x192xf32>
    %c0_12 = arith.constant 0 : index
    %c0_13 = arith.constant 0 : index
    %18 = vector.load %arg5[%c0_12, %c0_13] : memref<1x192xf32, #tpu.memory_space<vmem>>, vector<1x192xf32>
    %19 = vector.broadcast %18 : vector<1x192xf32> to vector<156x192xf32>
    %20 = arith.addf %17, %19 : vector<156x192xf32>
    %cst_14 = arith.constant 0.000000e+00 : f32
    %21 = vector.broadcast %cst_14 : f32 to vector<156x192xf32>
    %22 = arith.cmpf ogt, %20, %21 : vector<156x192xf32>
    %cst_15 = arith.constant 0.000000e+00 : f32
    %23 = vector.broadcast %cst_15 : f32 to vector<156x192xf32>
    %24 = arith.minimumf %20, %23 : vector<156x192xf32>
    %25 = math.exp %24 : vector<156x192xf32>
    %cst_16 = arith.constant 1.000000e+00 : f32
    %26 = vector.broadcast %cst_16 : f32 to vector<156x192xf32>
    %27 = arith.subf %25, %26 : vector<156x192xf32>
    %28 = arith.select %22, %20, %27 : vector<156x192xi1>, vector<156x192xf32>
    %c0_17 = arith.constant 0 : index
    %c0_18 = arith.constant 0 : index
    %29 = vector.load %arg6[%c0_17, %c0_18] : memref<320x156xf32, #tpu.memory_space<vmem>>, vector<320x156xf32>
    %cst_19 = arith.constant dense<0.000000e+00> : vector<320x192xf32>
    %30 = tpu.matmul %29, %28, %cst_19 {dimension_numbers = #tpu.dot_dimension_numbers<[1], [0], [0], [1], [0, 0, 1, 1], [], []>} : vector<320x156xf32>, vector<156x192xf32>, vector<320x192xf32> -> vector<320x192xf32>
    %cst_20 = arith.constant 0.000000e+00 : f32
    %31 = vector.broadcast %cst_20 : f32 to vector<40x192xf32>
    %32 = vector.extract_strided_slice %30 {offsets = [0, 0], sizes = [40, 192], strides = [1, 1]} : vector<320x192xf32> to vector<40x192xf32>
    %c0_21 = arith.constant 0 : index
    %c0_22 = arith.constant 0 : index
    %33 = vector.load %arg7[%c0_21, %c0_22] : memref<1536x192xf32, #tpu.memory_space<vmem>>, vector<192x192xf32>
    %cst_23 = arith.constant dense<0.000000e+00> : vector<40x192xf32>
    %34 = tpu.matmul %32, %33, %cst_23 {dimension_numbers = #tpu.dot_dimension_numbers<[1], [0], [0], [1], [0, 0, 1, 1], [], []>} : vector<40x192xf32>, vector<192x192xf32>, vector<40x192xf32> -> vector<40x192xf32>
    %35 = arith.addf %31, %34 : vector<40x192xf32>
    %36 = vector.extract_strided_slice %30 {offsets = [40, 0], sizes = [40, 192], strides = [1, 1]} : vector<320x192xf32> to vector<40x192xf32>
    %c192 = arith.constant 192 : index
    %c0_24 = arith.constant 0 : index
    %37 = vector.load %arg7[%c192, %c0_24] : memref<1536x192xf32, #tpu.memory_space<vmem>>, vector<192x192xf32>
    %cst_25 = arith.constant dense<0.000000e+00> : vector<40x192xf32>
    %38 = tpu.matmul %36, %37, %cst_25 {dimension_numbers = #tpu.dot_dimension_numbers<[1], [0], [0], [1], [0, 0, 1, 1], [], []>} : vector<40x192xf32>, vector<192x192xf32>, vector<40x192xf32> -> vector<40x192xf32>
    %39 = arith.addf %35, %38 : vector<40x192xf32>
    %40 = vector.extract_strided_slice %30 {offsets = [80, 0], sizes = [40, 192], strides = [1, 1]} : vector<320x192xf32> to vector<40x192xf32>
    %c384 = arith.constant 384 : index
    %c0_26 = arith.constant 0 : index
    %41 = vector.load %arg7[%c384, %c0_26] : memref<1536x192xf32, #tpu.memory_space<vmem>>, vector<192x192xf32>
    %cst_27 = arith.constant dense<0.000000e+00> : vector<40x192xf32>
    %42 = tpu.matmul %40, %41, %cst_27 {dimension_numbers = #tpu.dot_dimension_numbers<[1], [0], [0], [1], [0, 0, 1, 1], [], []>} : vector<40x192xf32>, vector<192x192xf32>, vector<40x192xf32> -> vector<40x192xf32>
    %43 = arith.addf %39, %42 : vector<40x192xf32>
    %44 = vector.extract_strided_slice %30 {offsets = [120, 0], sizes = [40, 192], strides = [1, 1]} : vector<320x192xf32> to vector<40x192xf32>
    %c576 = arith.constant 576 : index
    %c0_28 = arith.constant 0 : index
    %45 = vector.load %arg7[%c576, %c0_28] : memref<1536x192xf32, #tpu.memory_space<vmem>>, vector<192x192xf32>
    %cst_29 = arith.constant dense<0.000000e+00> : vector<40x192xf32>
    %46 = tpu.matmul %44, %45, %cst_29 {dimension_numbers = #tpu.dot_dimension_numbers<[1], [0], [0], [1], [0, 0, 1, 1], [], []>} : vector<40x192xf32>, vector<192x192xf32>, vector<40x192xf32> -> vector<40x192xf32>
    %47 = arith.addf %43, %46 : vector<40x192xf32>
    %48 = vector.extract_strided_slice %30 {offsets = [160, 0], sizes = [40, 192], strides = [1, 1]} : vector<320x192xf32> to vector<40x192xf32>
    %c768 = arith.constant 768 : index
    %c0_30 = arith.constant 0 : index
    %49 = vector.load %arg7[%c768, %c0_30] : memref<1536x192xf32, #tpu.memory_space<vmem>>, vector<192x192xf32>
    %cst_31 = arith.constant dense<0.000000e+00> : vector<40x192xf32>
    %50 = tpu.matmul %48, %49, %cst_31 {dimension_numbers = #tpu.dot_dimension_numbers<[1], [0], [0], [1], [0, 0, 1, 1], [], []>} : vector<40x192xf32>, vector<192x192xf32>, vector<40x192xf32> -> vector<40x192xf32>
    %51 = arith.addf %47, %50 : vector<40x192xf32>
    %52 = vector.extract_strided_slice %30 {offsets = [200, 0], sizes = [40, 192], strides = [1, 1]} : vector<320x192xf32> to vector<40x192xf32>
    %c960 = arith.constant 960 : index
    %c0_32 = arith.constant 0 : index
    %53 = vector.load %arg7[%c960, %c0_32] : memref<1536x192xf32, #tpu.memory_space<vmem>>, vector<192x192xf32>
    %cst_33 = arith.constant dense<0.000000e+00> : vector<40x192xf32>
    %54 = tpu.matmul %52, %53, %cst_33 {dimension_numbers = #tpu.dot_dimension_numbers<[1], [0], [0], [1], [0, 0, 1, 1], [], []>} : vector<40x192xf32>, vector<192x192xf32>, vector<40x192xf32> -> vector<40x192xf32>
    %55 = arith.addf %51, %54 : vector<40x192xf32>
    %56 = vector.extract_strided_slice %30 {offsets = [240, 0], sizes = [40, 192], strides = [1, 1]} : vector<320x192xf32> to vector<40x192xf32>
    %c1152 = arith.constant 1152 : index
    %c0_34 = arith.constant 0 : index
    %57 = vector.load %arg7[%c1152, %c0_34] : memref<1536x192xf32, #tpu.memory_space<vmem>>, vector<192x192xf32>
    %cst_35 = arith.constant dense<0.000000e+00> : vector<40x192xf32>
    %58 = tpu.matmul %56, %57, %cst_35 {dimension_numbers = #tpu.dot_dimension_numbers<[1], [0], [0], [1], [0, 0, 1, 1], [], []>} : vector<40x192xf32>, vector<192x192xf32>, vector<40x192xf32> -> vector<40x192xf32>
    %59 = arith.addf %55, %58 : vector<40x192xf32>
    %60 = vector.extract_strided_slice %30 {offsets = [280, 0], sizes = [40, 192], strides = [1, 1]} : vector<320x192xf32> to vector<40x192xf32>
    %c1344 = arith.constant 1344 : index
    %c0_36 = arith.constant 0 : index
    %61 = vector.load %arg7[%c1344, %c0_36] : memref<1536x192xf32, #tpu.memory_space<vmem>>, vector<192x192xf32>
    %cst_37 = arith.constant dense<0.000000e+00> : vector<40x192xf32>
    %62 = tpu.matmul %60, %61, %cst_37 {dimension_numbers = #tpu.dot_dimension_numbers<[1], [0], [0], [1], [0, 0, 1, 1], [], []>} : vector<40x192xf32>, vector<192x192xf32>, vector<40x192xf32> -> vector<40x192xf32>
    %63 = arith.addf %59, %62 : vector<40x192xf32>
    %c0_38 = arith.constant 0 : index
    %c0_39 = arith.constant 0 : index
    %64 = vector.load %arg8[%c0_38, %c0_39] : memref<1x192xf32, #tpu.memory_space<vmem>>, vector<1x192xf32>
    %65 = vector.broadcast %64 : vector<1x192xf32> to vector<40x192xf32>
    %66 = arith.addf %63, %65 : vector<40x192xf32>
    %cst_40 = arith.constant 0.000000e+00 : f32
    %67 = vector.broadcast %cst_40 : f32 to vector<40x192xf32>
    %68 = arith.cmpf ogt, %66, %67 : vector<40x192xf32>
    %cst_41 = arith.constant 0.000000e+00 : f32
    %69 = vector.broadcast %cst_41 : f32 to vector<40x192xf32>
    %70 = arith.minimumf %66, %69 : vector<40x192xf32>
    %71 = math.exp %70 : vector<40x192xf32>
    %cst_42 = arith.constant 1.000000e+00 : f32
    %72 = vector.broadcast %cst_42 : f32 to vector<40x192xf32>
    %73 = arith.subf %71, %72 : vector<40x192xf32>
    %74 = arith.select %68, %66, %73 : vector<40x192xi1>, vector<40x192xf32>
    %c0_43 = arith.constant 0 : index
    %c0_44 = arith.constant 0 : index
    %75 = vector.load %arg9[%c0_43, %c0_44] : memref<96x40xf32, #tpu.memory_space<vmem>>, vector<96x40xf32>
    %cst_45 = arith.constant dense<0.000000e+00> : vector<96x192xf32>
    %76 = tpu.matmul %75, %74, %cst_45 {dimension_numbers = #tpu.dot_dimension_numbers<[1], [0], [0], [1], [0, 0, 1, 1], [], []>} : vector<96x40xf32>, vector<40x192xf32>, vector<96x192xf32> -> vector<96x192xf32>
    %cst_46 = arith.constant 0.000000e+00 : f32
    %77 = vector.broadcast %cst_46 : f32 to vector<24x192xf32>
    %78 = vector.extract_strided_slice %76 {offsets = [0, 0], sizes = [24, 192], strides = [1, 1]} : vector<96x192xf32> to vector<24x192xf32>
    %c0_47 = arith.constant 0 : index
    %c0_48 = arith.constant 0 : index
    %79 = vector.load %arg10[%c0_47, %c0_48] : memref<768x192xf32, #tpu.memory_space<vmem>>, vector<192x192xf32>
    %cst_49 = arith.constant dense<0.000000e+00> : vector<24x192xf32>
    %80 = tpu.matmul %78, %79, %cst_49 {dimension_numbers = #tpu.dot_dimension_numbers<[1], [0], [0], [1], [0, 0, 1, 1], [], []>} : vector<24x192xf32>, vector<192x192xf32>, vector<24x192xf32> -> vector<24x192xf32>
    %81 = arith.addf %77, %80 : vector<24x192xf32>
    %82 = vector.extract_strided_slice %76 {offsets = [24, 0], sizes = [24, 192], strides = [1, 1]} : vector<96x192xf32> to vector<24x192xf32>
    %c192_50 = arith.constant 192 : index
    %c0_51 = arith.constant 0 : index
    %83 = vector.load %arg10[%c192_50, %c0_51] : memref<768x192xf32, #tpu.memory_space<vmem>>, vector<192x192xf32>
    %cst_52 = arith.constant dense<0.000000e+00> : vector<24x192xf32>
    %84 = tpu.matmul %82, %83, %cst_52 {dimension_numbers = #tpu.dot_dimension_numbers<[1], [0], [0], [1], [0, 0, 1, 1], [], []>} : vector<24x192xf32>, vector<192x192xf32>, vector<24x192xf32> -> vector<24x192xf32>
    %85 = arith.addf %81, %84 : vector<24x192xf32>
    %86 = vector.extract_strided_slice %76 {offsets = [48, 0], sizes = [24, 192], strides = [1, 1]} : vector<96x192xf32> to vector<24x192xf32>
    %c384_53 = arith.constant 384 : index
    %c0_54 = arith.constant 0 : index
    %87 = vector.load %arg10[%c384_53, %c0_54] : memref<768x192xf32, #tpu.memory_space<vmem>>, vector<192x192xf32>
    %cst_55 = arith.constant dense<0.000000e+00> : vector<24x192xf32>
    %88 = tpu.matmul %86, %87, %cst_55 {dimension_numbers = #tpu.dot_dimension_numbers<[1], [0], [0], [1], [0, 0, 1, 1], [], []>} : vector<24x192xf32>, vector<192x192xf32>, vector<24x192xf32> -> vector<24x192xf32>
    %89 = arith.addf %85, %88 : vector<24x192xf32>
    %90 = vector.extract_strided_slice %76 {offsets = [72, 0], sizes = [24, 192], strides = [1, 1]} : vector<96x192xf32> to vector<24x192xf32>
    %c576_56 = arith.constant 576 : index
    %c0_57 = arith.constant 0 : index
    %91 = vector.load %arg10[%c576_56, %c0_57] : memref<768x192xf32, #tpu.memory_space<vmem>>, vector<192x192xf32>
    %cst_58 = arith.constant dense<0.000000e+00> : vector<24x192xf32>
    %92 = tpu.matmul %90, %91, %cst_58 {dimension_numbers = #tpu.dot_dimension_numbers<[1], [0], [0], [1], [0, 0, 1, 1], [], []>} : vector<24x192xf32>, vector<192x192xf32>, vector<24x192xf32> -> vector<24x192xf32>
    %93 = arith.addf %89, %92 : vector<24x192xf32>
    %c0_59 = arith.constant 0 : index
    %c0_60 = arith.constant 0 : index
    %94 = vector.load %arg11[%c0_59, %c0_60] : memref<1x192xf32, #tpu.memory_space<vmem>>, vector<1x192xf32>
    %95 = vector.broadcast %94 : vector<1x192xf32> to vector<24x192xf32>
    %96 = arith.addf %93, %95 : vector<24x192xf32>
    %cst_61 = arith.constant 0.000000e+00 : f32
    %97 = vector.broadcast %cst_61 : f32 to vector<24x192xf32>
    %98 = arith.cmpf ogt, %96, %97 : vector<24x192xf32>
    %cst_62 = arith.constant 0.000000e+00 : f32
    %99 = vector.broadcast %cst_62 : f32 to vector<24x192xf32>
    %100 = arith.minimumf %96, %99 : vector<24x192xf32>
    %101 = math.exp %100 : vector<24x192xf32>
    %cst_63 = arith.constant 1.000000e+00 : f32
    %102 = vector.broadcast %cst_63 : f32 to vector<24x192xf32>
    %103 = arith.subf %101, %102 : vector<24x192xf32>
    %104 = arith.select %98, %96, %103 : vector<24x192xi1>, vector<24x192xf32>
    %105 = vector.extract_strided_slice %104 {offsets = [0, 0], sizes = [18, 64], strides = [1, 1]} : vector<24x192xf32> to vector<18x64xf32>
    %106 = vector.extract_strided_slice %104 {offsets = [0, 64], sizes = [18, 64], strides = [1, 1]} : vector<24x192xf32> to vector<18x64xf32>
    %107 = vector.extract_strided_slice %104 {offsets = [0, 128], sizes = [18, 64], strides = [1, 1]} : vector<24x192xf32> to vector<18x64xf32>
    %cst_64 = arith.constant 0.000000e+00 : f32
    %108 = vector.broadcast %cst_64 : f32 to vector<2x64xf32>
    %109 = tpu.concatenate %105, %106, %107, %108 in 0 : vector<18x64xf32>, vector<18x64xf32>, vector<18x64xf32>, vector<2x64xf32> -> vector<56x64xf32>
    %c1 = arith.constant 1 : index
    %c0_65 = arith.constant 0 : index
    %c0_66 = arith.constant 0 : index
    %110 = vector.load %arg1[%c1, %c0_65, %c0_66] : memref<2x40x156xf32, #tpu.memory_space<vmem>>, vector<1x40x156xf32>
    %111 = vector.shape_cast %110 : vector<1x40x156xf32> to vector<40x156xf32>
    %112 = tpu.transpose %111, [1, 0] : vector<40x156xf32> -> vector<156x40xf32>
    %c0_67 = arith.constant 0 : index
    %c0_68 = arith.constant 0 : index
    %113 = vector.load %arg2[%c0_67, %c0_68] : memref<40x288xf32, #tpu.memory_space<vmem>>, vector<40x288xf32>
    %cst_69 = arith.constant dense<0.000000e+00> : vector<156x288xf32>
    %114 = tpu.matmul %112, %113, %cst_69 {dimension_numbers = #tpu.dot_dimension_numbers<[1], [0], [0], [1], [0, 0, 1, 1], [], []>} : vector<156x40xf32>, vector<40x288xf32>, vector<156x288xf32> -> vector<156x288xf32>
    %c0_70 = arith.constant 0 : index
    %c0_71 = arith.constant 0 : index
    %115 = vector.load %arg3[%c0_70, %c0_71] : memref<1x288xf32, #tpu.memory_space<vmem>>, vector<1x288xf32>
    %116 = vector.broadcast %115 : vector<1x288xf32> to vector<156x288xf32>
    %117 = arith.addf %114, %116 : vector<156x288xf32>
    %cst_72 = arith.constant 0.000000e+00 : f32
    %118 = vector.broadcast %cst_72 : f32 to vector<156x288xf32>
    %119 = arith.cmpf ogt, %117, %118 : vector<156x288xf32>
    %cst_73 = arith.constant 0.000000e+00 : f32
    %120 = vector.broadcast %cst_73 : f32 to vector<156x288xf32>
    %121 = arith.minimumf %117, %120 : vector<156x288xf32>
    %122 = math.exp %121 : vector<156x288xf32>
    %cst_74 = arith.constant 1.000000e+00 : f32
    %123 = vector.broadcast %cst_74 : f32 to vector<156x288xf32>
    %124 = arith.subf %122, %123 : vector<156x288xf32>
    %125 = arith.select %119, %117, %124 : vector<156x288xi1>, vector<156x288xf32>
    %c0_75 = arith.constant 0 : index
    %c0_76 = arith.constant 0 : index
    %126 = vector.load %arg4[%c0_75, %c0_76] : memref<288x192xf32, #tpu.memory_space<vmem>>, vector<288x192xf32>
    %cst_77 = arith.constant dense<0.000000e+00> : vector<156x192xf32>
    %127 = tpu.matmul %125, %126, %cst_77 {dimension_numbers = #tpu.dot_dimension_numbers<[1], [0], [0], [1], [0, 0, 1, 1], [], []>} : vector<156x288xf32>, vector<288x192xf32>, vector<156x192xf32> -> vector<156x192xf32>
    %c0_78 = arith.constant 0 : index
    %c0_79 = arith.constant 0 : index
    %128 = vector.load %arg5[%c0_78, %c0_79] : memref<1x192xf32, #tpu.memory_space<vmem>>, vector<1x192xf32>
    %129 = vector.broadcast %128 : vector<1x192xf32> to vector<156x192xf32>
    %130 = arith.addf %127, %129 : vector<156x192xf32>
    %cst_80 = arith.constant 0.000000e+00 : f32
    %131 = vector.broadcast %cst_80 : f32 to vector<156x192xf32>
    %132 = arith.cmpf ogt, %130, %131 : vector<156x192xf32>
    %cst_81 = arith.constant 0.000000e+00 : f32
    %133 = vector.broadcast %cst_81 : f32 to vector<156x192xf32>
    %134 = arith.minimumf %130, %133 : vector<156x192xf32>
    %135 = math.exp %134 : vector<156x192xf32>
    %cst_82 = arith.constant 1.000000e+00 : f32
    %136 = vector.broadcast %cst_82 : f32 to vector<156x192xf32>
    %137 = arith.subf %135, %136 : vector<156x192xf32>
    %138 = arith.select %132, %130, %137 : vector<156x192xi1>, vector<156x192xf32>
    %c0_83 = arith.constant 0 : index
    %c0_84 = arith.constant 0 : index
    %139 = vector.load %arg6[%c0_83, %c0_84] : memref<320x156xf32, #tpu.memory_space<vmem>>, vector<320x156xf32>
    %cst_85 = arith.constant dense<0.000000e+00> : vector<320x192xf32>
    %140 = tpu.matmul %139, %138, %cst_85 {dimension_numbers = #tpu.dot_dimension_numbers<[1], [0], [0], [1], [0, 0, 1, 1], [], []>} : vector<320x156xf32>, vector<156x192xf32>, vector<320x192xf32> -> vector<320x192xf32>
    %cst_86 = arith.constant 0.000000e+00 : f32
    %141 = vector.broadcast %cst_86 : f32 to vector<40x192xf32>
    %142 = vector.extract_strided_slice %140 {offsets = [0, 0], sizes = [40, 192], strides = [1, 1]} : vector<320x192xf32> to vector<40x192xf32>
    %c0_87 = arith.constant 0 : index
    %c0_88 = arith.constant 0 : index
    %143 = vector.load %arg7[%c0_87, %c0_88] : memref<1536x192xf32, #tpu.memory_space<vmem>>, vector<192x192xf32>
    %cst_89 = arith.constant dense<0.000000e+00> : vector<40x192xf32>
    %144 = tpu.matmul %142, %143, %cst_89 {dimension_numbers = #tpu.dot_dimension_numbers<[1], [0], [0], [1], [0, 0, 1, 1], [], []>} : vector<40x192xf32>, vector<192x192xf32>, vector<40x192xf32> -> vector<40x192xf32>
    %145 = arith.addf %141, %144 : vector<40x192xf32>
    %146 = vector.extract_strided_slice %140 {offsets = [40, 0], sizes = [40, 192], strides = [1, 1]} : vector<320x192xf32> to vector<40x192xf32>
    %c192_90 = arith.constant 192 : index
    %c0_91 = arith.constant 0 : index
    %147 = vector.load %arg7[%c192_90, %c0_91] : memref<1536x192xf32, #tpu.memory_space<vmem>>, vector<192x192xf32>
    %cst_92 = arith.constant dense<0.000000e+00> : vector<40x192xf32>
    %148 = tpu.matmul %146, %147, %cst_92 {dimension_numbers = #tpu.dot_dimension_numbers<[1], [0], [0], [1], [0, 0, 1, 1], [], []>} : vector<40x192xf32>, vector<192x192xf32>, vector<40x192xf32> -> vector<40x192xf32>
    %149 = arith.addf %145, %148 : vector<40x192xf32>
    %150 = vector.extract_strided_slice %140 {offsets = [80, 0], sizes = [40, 192], strides = [1, 1]} : vector<320x192xf32> to vector<40x192xf32>
    %c384_93 = arith.constant 384 : index
    %c0_94 = arith.constant 0 : index
    %151 = vector.load %arg7[%c384_93, %c0_94] : memref<1536x192xf32, #tpu.memory_space<vmem>>, vector<192x192xf32>
    %cst_95 = arith.constant dense<0.000000e+00> : vector<40x192xf32>
    %152 = tpu.matmul %150, %151, %cst_95 {dimension_numbers = #tpu.dot_dimension_numbers<[1], [0], [0], [1], [0, 0, 1, 1], [], []>} : vector<40x192xf32>, vector<192x192xf32>, vector<40x192xf32> -> vector<40x192xf32>
    %153 = arith.addf %149, %152 : vector<40x192xf32>
    %154 = vector.extract_strided_slice %140 {offsets = [120, 0], sizes = [40, 192], strides = [1, 1]} : vector<320x192xf32> to vector<40x192xf32>
    %c576_96 = arith.constant 576 : index
    %c0_97 = arith.constant 0 : index
    %155 = vector.load %arg7[%c576_96, %c0_97] : memref<1536x192xf32, #tpu.memory_space<vmem>>, vector<192x192xf32>
    %cst_98 = arith.constant dense<0.000000e+00> : vector<40x192xf32>
    %156 = tpu.matmul %154, %155, %cst_98 {dimension_numbers = #tpu.dot_dimension_numbers<[1], [0], [0], [1], [0, 0, 1, 1], [], []>} : vector<40x192xf32>, vector<192x192xf32>, vector<40x192xf32> -> vector<40x192xf32>
    %157 = arith.addf %153, %156 : vector<40x192xf32>
    %158 = vector.extract_strided_slice %140 {offsets = [160, 0], sizes = [40, 192], strides = [1, 1]} : vector<320x192xf32> to vector<40x192xf32>
    %c768_99 = arith.constant 768 : index
    %c0_100 = arith.constant 0 : index
    %159 = vector.load %arg7[%c768_99, %c0_100] : memref<1536x192xf32, #tpu.memory_space<vmem>>, vector<192x192xf32>
    %cst_101 = arith.constant dense<0.000000e+00> : vector<40x192xf32>
    %160 = tpu.matmul %158, %159, %cst_101 {dimension_numbers = #tpu.dot_dimension_numbers<[1], [0], [0], [1], [0, 0, 1, 1], [], []>} : vector<40x192xf32>, vector<192x192xf32>, vector<40x192xf32> -> vector<40x192xf32>
    %161 = arith.addf %157, %160 : vector<40x192xf32>
    %162 = vector.extract_strided_slice %140 {offsets = [200, 0], sizes = [40, 192], strides = [1, 1]} : vector<320x192xf32> to vector<40x192xf32>
    %c960_102 = arith.constant 960 : index
    %c0_103 = arith.constant 0 : index
    %163 = vector.load %arg7[%c960_102, %c0_103] : memref<1536x192xf32, #tpu.memory_space<vmem>>, vector<192x192xf32>
    %cst_104 = arith.constant dense<0.000000e+00> : vector<40x192xf32>
    %164 = tpu.matmul %162, %163, %cst_104 {dimension_numbers = #tpu.dot_dimension_numbers<[1], [0], [0], [1], [0, 0, 1, 1], [], []>} : vector<40x192xf32>, vector<192x192xf32>, vector<40x192xf32> -> vector<40x192xf32>
    %165 = arith.addf %161, %164 : vector<40x192xf32>
    %166 = vector.extract_strided_slice %140 {offsets = [240, 0], sizes = [40, 192], strides = [1, 1]} : vector<320x192xf32> to vector<40x192xf32>
    %c1152_105 = arith.constant 1152 : index
    %c0_106 = arith.constant 0 : index
    %167 = vector.load %arg7[%c1152_105, %c0_106] : memref<1536x192xf32, #tpu.memory_space<vmem>>, vector<192x192xf32>
    %cst_107 = arith.constant dense<0.000000e+00> : vector<40x192xf32>
    %168 = tpu.matmul %166, %167, %cst_107 {dimension_numbers = #tpu.dot_dimension_numbers<[1], [0], [0], [1], [0, 0, 1, 1], [], []>} : vector<40x192xf32>, vector<192x192xf32>, vector<40x192xf32> -> vector<40x192xf32>
    %169 = arith.addf %165, %168 : vector<40x192xf32>
    %170 = vector.extract_strided_slice %140 {offsets = [280, 0], sizes = [40, 192], strides = [1, 1]} : vector<320x192xf32> to vector<40x192xf32>
    %c1344_108 = arith.constant 1344 : index
    %c0_109 = arith.constant 0 : index
    %171 = vector.load %arg7[%c1344_108, %c0_109] : memref<1536x192xf32, #tpu.memory_space<vmem>>, vector<192x192xf32>
    %cst_110 = arith.constant dense<0.000000e+00> : vector<40x192xf32>
    %172 = tpu.matmul %170, %171, %cst_110 {dimension_numbers = #tpu.dot_dimension_numbers<[1], [0], [0], [1], [0, 0, 1, 1], [], []>} : vector<40x192xf32>, vector<192x192xf32>, vector<40x192xf32> -> vector<40x192xf32>
    %173 = arith.addf %169, %172 : vector<40x192xf32>
    %c0_111 = arith.constant 0 : index
    %c0_112 = arith.constant 0 : index
    %174 = vector.load %arg8[%c0_111, %c0_112] : memref<1x192xf32, #tpu.memory_space<vmem>>, vector<1x192xf32>
    %175 = vector.broadcast %174 : vector<1x192xf32> to vector<40x192xf32>
    %176 = arith.addf %173, %175 : vector<40x192xf32>
    %cst_113 = arith.constant 0.000000e+00 : f32
    %177 = vector.broadcast %cst_113 : f32 to vector<40x192xf32>
    %178 = arith.cmpf ogt, %176, %177 : vector<40x192xf32>
    %cst_114 = arith.constant 0.000000e+00 : f32
    %179 = vector.broadcast %cst_114 : f32 to vector<40x192xf32>
    %180 = arith.minimumf %176, %179 : vector<40x192xf32>
    %181 = math.exp %180 : vector<40x192xf32>
    %cst_115 = arith.constant 1.000000e+00 : f32
    %182 = vector.broadcast %cst_115 : f32 to vector<40x192xf32>
    %183 = arith.subf %181, %182 : vector<40x192xf32>
    %184 = arith.select %178, %176, %183 : vector<40x192xi1>, vector<40x192xf32>
    %c0_116 = arith.constant 0 : index
    %c0_117 = arith.constant 0 : index
    %185 = vector.load %arg9[%c0_116, %c0_117] : memref<96x40xf32, #tpu.memory_space<vmem>>, vector<96x40xf32>
    %cst_118 = arith.constant dense<0.000000e+00> : vector<96x192xf32>
    %186 = tpu.matmul %185, %184, %cst_118 {dimension_numbers = #tpu.dot_dimension_numbers<[1], [0], [0], [1], [0, 0, 1, 1], [], []>} : vector<96x40xf32>, vector<40x192xf32>, vector<96x192xf32> -> vector<96x192xf32>
    %cst_119 = arith.constant 0.000000e+00 : f32
    %187 = vector.broadcast %cst_119 : f32 to vector<24x192xf32>
    %188 = vector.extract_strided_slice %186 {offsets = [0, 0], sizes = [24, 192], strides = [1, 1]} : vector<96x192xf32> to vector<24x192xf32>
    %c0_120 = arith.constant 0 : index
    %c0_121 = arith.constant 0 : index
    %189 = vector.load %arg10[%c0_120, %c0_121] : memref<768x192xf32, #tpu.memory_space<vmem>>, vector<192x192xf32>
    %cst_122 = arith.constant dense<0.000000e+00> : vector<24x192xf32>
    %190 = tpu.matmul %188, %189, %cst_122 {dimension_numbers = #tpu.dot_dimension_numbers<[1], [0], [0], [1], [0, 0, 1, 1], [], []>} : vector<24x192xf32>, vector<192x192xf32>, vector<24x192xf32> -> vector<24x192xf32>
    %191 = arith.addf %187, %190 : vector<24x192xf32>
    %192 = vector.extract_strided_slice %186 {offsets = [24, 0], sizes = [24, 192], strides = [1, 1]} : vector<96x192xf32> to vector<24x192xf32>
    %c192_123 = arith.constant 192 : index
    %c0_124 = arith.constant 0 : index
    %193 = vector.load %arg10[%c192_123, %c0_124] : memref<768x192xf32, #tpu.memory_space<vmem>>, vector<192x192xf32>
    %cst_125 = arith.constant dense<0.000000e+00> : vector<24x192xf32>
    %194 = tpu.matmul %192, %193, %cst_125 {dimension_numbers = #tpu.dot_dimension_numbers<[1], [0], [0], [1], [0, 0, 1, 1], [], []>} : vector<24x192xf32>, vector<192x192xf32>, vector<24x192xf32> -> vector<24x192xf32>
    %195 = arith.addf %191, %194 : vector<24x192xf32>
    %196 = vector.extract_strided_slice %186 {offsets = [48, 0], sizes = [24, 192], strides = [1, 1]} : vector<96x192xf32> to vector<24x192xf32>
    %c384_126 = arith.constant 384 : index
    %c0_127 = arith.constant 0 : index
    %197 = vector.load %arg10[%c384_126, %c0_127] : memref<768x192xf32, #tpu.memory_space<vmem>>, vector<192x192xf32>
    %cst_128 = arith.constant dense<0.000000e+00> : vector<24x192xf32>
    %198 = tpu.matmul %196, %197, %cst_128 {dimension_numbers = #tpu.dot_dimension_numbers<[1], [0], [0], [1], [0, 0, 1, 1], [], []>} : vector<24x192xf32>, vector<192x192xf32>, vector<24x192xf32> -> vector<24x192xf32>
    %199 = arith.addf %195, %198 : vector<24x192xf32>
    %200 = vector.extract_strided_slice %186 {offsets = [72, 0], sizes = [24, 192], strides = [1, 1]} : vector<96x192xf32> to vector<24x192xf32>
    %c576_129 = arith.constant 576 : index
    %c0_130 = arith.constant 0 : index
    %201 = vector.load %arg10[%c576_129, %c0_130] : memref<768x192xf32, #tpu.memory_space<vmem>>, vector<192x192xf32>
    %cst_131 = arith.constant dense<0.000000e+00> : vector<24x192xf32>
    %202 = tpu.matmul %200, %201, %cst_131 {dimension_numbers = #tpu.dot_dimension_numbers<[1], [0], [0], [1], [0, 0, 1, 1], [], []>} : vector<24x192xf32>, vector<192x192xf32>, vector<24x192xf32> -> vector<24x192xf32>
    %203 = arith.addf %199, %202 : vector<24x192xf32>
    %c0_132 = arith.constant 0 : index
    %c0_133 = arith.constant 0 : index
    %204 = vector.load %arg11[%c0_132, %c0_133] : memref<1x192xf32, #tpu.memory_space<vmem>>, vector<1x192xf32>
    %205 = vector.broadcast %204 : vector<1x192xf32> to vector<24x192xf32>
    %206 = arith.addf %203, %205 : vector<24x192xf32>
    %cst_134 = arith.constant 0.000000e+00 : f32
    %207 = vector.broadcast %cst_134 : f32 to vector<24x192xf32>
    %208 = arith.cmpf ogt, %206, %207 : vector<24x192xf32>
    %cst_135 = arith.constant 0.000000e+00 : f32
    %209 = vector.broadcast %cst_135 : f32 to vector<24x192xf32>
    %210 = arith.minimumf %206, %209 : vector<24x192xf32>
    %211 = math.exp %210 : vector<24x192xf32>
    %cst_136 = arith.constant 1.000000e+00 : f32
    %212 = vector.broadcast %cst_136 : f32 to vector<24x192xf32>
    %213 = arith.subf %211, %212 : vector<24x192xf32>
    %214 = arith.select %208, %206, %213 : vector<24x192xi1>, vector<24x192xf32>
    %215 = vector.extract_strided_slice %214 {offsets = [0, 0], sizes = [18, 64], strides = [1, 1]} : vector<24x192xf32> to vector<18x64xf32>
    %216 = vector.extract_strided_slice %214 {offsets = [0, 64], sizes = [18, 64], strides = [1, 1]} : vector<24x192xf32> to vector<18x64xf32>
    %217 = vector.extract_strided_slice %214 {offsets = [0, 128], sizes = [18, 64], strides = [1, 1]} : vector<24x192xf32> to vector<18x64xf32>
    %cst_137 = arith.constant 0.000000e+00 : f32
    %218 = vector.broadcast %cst_137 : f32 to vector<2x64xf32>
    %219 = tpu.concatenate %215, %216, %217, %218 in 0 : vector<18x64xf32>, vector<18x64xf32>, vector<18x64xf32>, vector<2x64xf32> -> vector<56x64xf32>
    %220 = tpu.concatenate %109, %219 in 0 : vector<56x64xf32>, vector<56x64xf32> -> vector<112x64xf32>
    %c0_138 = arith.constant 0 : index
    %c0_139 = arith.constant 0 : index
    %221 = vector.load %arg12[%c0_138, %c0_139] : memref<64x1024xf32, #tpu.memory_space<vmem>>, vector<64x1024xf32>
    %cst_140 = arith.constant dense<0.000000e+00> : vector<112x1024xf32>
    %222 = tpu.matmul %220, %221, %cst_140 {dimension_numbers = #tpu.dot_dimension_numbers<[1], [0], [0], [1], [0, 0, 1, 1], [], []>} : vector<112x64xf32>, vector<64x1024xf32>, vector<112x1024xf32> -> vector<112x1024xf32>
    %c0_141 = arith.constant 0 : index
    %c0_142 = arith.constant 0 : index
    %223 = vector.load %arg13[%c0_141, %c0_142] : memref<128x512xf32, #tpu.memory_space<vmem>>, vector<128x512xf32>
    %c0_143 = arith.constant 0 : index
    %c0_144 = arith.constant 0 : index
    %224 = vector.load %arg15[%c0_143, %c0_144] : memref<1x512xf32, #tpu.memory_space<vmem>>, vector<1x512xf32>
    %cst_145 = arith.constant 0.000000e+00 : f32
    %225 = vector.broadcast %cst_145 : f32 to vector<56x128xf32>
    %cst_146 = arith.constant 0.000000e+00 : f32
    %226 = vector.broadcast %cst_146 : f32 to vector<56x128xf32>
    %227 = vector.extract_strided_slice %222 {offsets = [0, 0], sizes = [56, 512], strides = [1, 1]} : vector<112x1024xf32> to vector<56x512xf32>
    %cst_147 = arith.constant dense<0.000000e+00> : vector<56x512xf32>
    %228 = tpu.matmul %225, %223, %cst_147 {dimension_numbers = #tpu.dot_dimension_numbers<[1], [0], [0], [1], [0, 0, 1, 1], [], []>} : vector<56x128xf32>, vector<128x512xf32>, vector<56x512xf32> -> vector<56x512xf32>
    %229 = arith.addf %227, %228 : vector<56x512xf32>
    %230 = vector.broadcast %224 : vector<1x512xf32> to vector<56x512xf32>
    %231 = arith.addf %229, %230 : vector<56x512xf32>
    %232 = vector.extract_strided_slice %231 {offsets = [0, 0], sizes = [56, 128], strides = [1, 1]} : vector<56x512xf32> to vector<56x128xf32>
    %cst_148 = arith.constant 0.000000e+00 : f32
    %233 = vector.broadcast %cst_148 : f32 to vector<56x128xf32>
    %234 = arith.subf %233, %232 : vector<56x128xf32>
    %235 = math.exp %234 : vector<56x128xf32>
    %cst_149 = arith.constant 1.000000e+00 : f32
    %236 = vector.broadcast %cst_149 : f32 to vector<56x128xf32>
    %237 = arith.addf %236, %235 : vector<56x128xf32>
    %cst_150 = arith.constant 1.000000e+00 : f32
    %238 = vector.broadcast %cst_150 : f32 to vector<56x128xf32>
    %239 = arith.divf %238, %237 : vector<56x128xf32>
    %240 = vector.extract_strided_slice %231 {offsets = [0, 128], sizes = [56, 128], strides = [1, 1]} : vector<56x512xf32> to vector<56x128xf32>
    %cst_151 = arith.constant 0.000000e+00 : f32
    %241 = vector.broadcast %cst_151 : f32 to vector<56x128xf32>
    %242 = arith.subf %241, %240 : vector<56x128xf32>
    %243 = math.exp %242 : vector<56x128xf32>
    %cst_152 = arith.constant 1.000000e+00 : f32
    %244 = vector.broadcast %cst_152 : f32 to vector<56x128xf32>
    %245 = arith.addf %244, %243 : vector<56x128xf32>
    %cst_153 = arith.constant 1.000000e+00 : f32
    %246 = vector.broadcast %cst_153 : f32 to vector<56x128xf32>
    %247 = arith.divf %246, %245 : vector<56x128xf32>
    %248 = vector.extract_strided_slice %231 {offsets = [0, 256], sizes = [56, 128], strides = [1, 1]} : vector<56x512xf32> to vector<56x128xf32>
    %249 = math.tanh %248 : vector<56x128xf32>
    %250 = vector.extract_strided_slice %231 {offsets = [0, 384], sizes = [56, 128], strides = [1, 1]} : vector<56x512xf32> to vector<56x128xf32>
    %cst_154 = arith.constant 0.000000e+00 : f32
    %251 = vector.broadcast %cst_154 : f32 to vector<56x128xf32>
    %252 = arith.subf %251, %250 : vector<56x128xf32>
    %253 = math.exp %252 : vector<56x128xf32>
    %cst_155 = arith.constant 1.000000e+00 : f32
    %254 = vector.broadcast %cst_155 : f32 to vector<56x128xf32>
    %255 = arith.addf %254, %253 : vector<56x128xf32>
    %cst_156 = arith.constant 1.000000e+00 : f32
    %256 = vector.broadcast %cst_156 : f32 to vector<56x128xf32>
    %257 = arith.divf %256, %255 : vector<56x128xf32>
    %258 = arith.mulf %247, %226 : vector<56x128xf32>
    %259 = arith.mulf %239, %249 : vector<56x128xf32>
    %260 = arith.addf %258, %259 : vector<56x128xf32>
    %261 = math.tanh %260 : vector<56x128xf32>
    %262 = arith.mulf %257, %261 : vector<56x128xf32>
    %263 = vector.extract_strided_slice %222 {offsets = [56, 0], sizes = [56, 512], strides = [1, 1]} : vector<112x1024xf32> to vector<56x512xf32>
    %cst_157 = arith.constant dense<0.000000e+00> : vector<56x512xf32>
    %264 = tpu.matmul %262, %223, %cst_157 {dimension_numbers = #tpu.dot_dimension_numbers<[1], [0], [0], [1], [0, 0, 1, 1], [], []>} : vector<56x128xf32>, vector<128x512xf32>, vector<56x512xf32> -> vector<56x512xf32>
    %265 = arith.addf %263, %264 : vector<56x512xf32>
    %266 = vector.broadcast %224 : vector<1x512xf32> to vector<56x512xf32>
    %267 = arith.addf %265, %266 : vector<56x512xf32>
    %268 = vector.extract_strided_slice %267 {offsets = [0, 0], sizes = [56, 128], strides = [1, 1]} : vector<56x512xf32> to vector<56x128xf32>
    %cst_158 = arith.constant 0.000000e+00 : f32
    %269 = vector.broadcast %cst_158 : f32 to vector<56x128xf32>
    %270 = arith.subf %269, %268 : vector<56x128xf32>
    %271 = math.exp %270 : vector<56x128xf32>
    %cst_159 = arith.constant 1.000000e+00 : f32
    %272 = vector.broadcast %cst_159 : f32 to vector<56x128xf32>
    %273 = arith.addf %272, %271 : vector<56x128xf32>
    %cst_160 = arith.constant 1.000000e+00 : f32
    %274 = vector.broadcast %cst_160 : f32 to vector<56x128xf32>
    %275 = arith.divf %274, %273 : vector<56x128xf32>
    %276 = vector.extract_strided_slice %267 {offsets = [0, 128], sizes = [56, 128], strides = [1, 1]} : vector<56x512xf32> to vector<56x128xf32>
    %cst_161 = arith.constant 0.000000e+00 : f32
    %277 = vector.broadcast %cst_161 : f32 to vector<56x128xf32>
    %278 = arith.subf %277, %276 : vector<56x128xf32>
    %279 = math.exp %278 : vector<56x128xf32>
    %cst_162 = arith.constant 1.000000e+00 : f32
    %280 = vector.broadcast %cst_162 : f32 to vector<56x128xf32>
    %281 = arith.addf %280, %279 : vector<56x128xf32>
    %cst_163 = arith.constant 1.000000e+00 : f32
    %282 = vector.broadcast %cst_163 : f32 to vector<56x128xf32>
    %283 = arith.divf %282, %281 : vector<56x128xf32>
    %284 = vector.extract_strided_slice %267 {offsets = [0, 256], sizes = [56, 128], strides = [1, 1]} : vector<56x512xf32> to vector<56x128xf32>
    %285 = math.tanh %284 : vector<56x128xf32>
    %286 = vector.extract_strided_slice %267 {offsets = [0, 384], sizes = [56, 128], strides = [1, 1]} : vector<56x512xf32> to vector<56x128xf32>
    %cst_164 = arith.constant 0.000000e+00 : f32
    %287 = vector.broadcast %cst_164 : f32 to vector<56x128xf32>
    %288 = arith.subf %287, %286 : vector<56x128xf32>
    %289 = math.exp %288 : vector<56x128xf32>
    %cst_165 = arith.constant 1.000000e+00 : f32
    %290 = vector.broadcast %cst_165 : f32 to vector<56x128xf32>
    %291 = arith.addf %290, %289 : vector<56x128xf32>
    %cst_166 = arith.constant 1.000000e+00 : f32
    %292 = vector.broadcast %cst_166 : f32 to vector<56x128xf32>
    %293 = arith.divf %292, %291 : vector<56x128xf32>
    %294 = arith.mulf %283, %260 : vector<56x128xf32>
    %295 = arith.mulf %275, %285 : vector<56x128xf32>
    %296 = arith.addf %294, %295 : vector<56x128xf32>
    %297 = math.tanh %296 : vector<56x128xf32>
    %298 = arith.mulf %293, %297 : vector<56x128xf32>
    %c0_167 = arith.constant 0 : index
    %c0_168 = arith.constant 0 : index
    %299 = vector.load %arg14[%c0_167, %c0_168] : memref<128x512xf32, #tpu.memory_space<vmem>>, vector<128x512xf32>
    %c0_169 = arith.constant 0 : index
    %c0_170 = arith.constant 0 : index
    %300 = vector.load %arg16[%c0_169, %c0_170] : memref<1x512xf32, #tpu.memory_space<vmem>>, vector<1x512xf32>
    %cst_171 = arith.constant 0.000000e+00 : f32
    %301 = vector.broadcast %cst_171 : f32 to vector<56x128xf32>
    %cst_172 = arith.constant 0.000000e+00 : f32
    %302 = vector.broadcast %cst_172 : f32 to vector<56x128xf32>
    %303 = vector.extract_strided_slice %222 {offsets = [56, 512], sizes = [56, 512], strides = [1, 1]} : vector<112x1024xf32> to vector<56x512xf32>
    %cst_173 = arith.constant dense<0.000000e+00> : vector<56x512xf32>
    %304 = tpu.matmul %301, %299, %cst_173 {dimension_numbers = #tpu.dot_dimension_numbers<[1], [0], [0], [1], [0, 0, 1, 1], [], []>} : vector<56x128xf32>, vector<128x512xf32>, vector<56x512xf32> -> vector<56x512xf32>
    %305 = arith.addf %303, %304 : vector<56x512xf32>
    %306 = vector.broadcast %300 : vector<1x512xf32> to vector<56x512xf32>
    %307 = arith.addf %305, %306 : vector<56x512xf32>
    %308 = vector.extract_strided_slice %307 {offsets = [0, 0], sizes = [56, 128], strides = [1, 1]} : vector<56x512xf32> to vector<56x128xf32>
    %cst_174 = arith.constant 0.000000e+00 : f32
    %309 = vector.broadcast %cst_174 : f32 to vector<56x128xf32>
    %310 = arith.subf %309, %308 : vector<56x128xf32>
    %311 = math.exp %310 : vector<56x128xf32>
    %cst_175 = arith.constant 1.000000e+00 : f32
    %312 = vector.broadcast %cst_175 : f32 to vector<56x128xf32>
    %313 = arith.addf %312, %311 : vector<56x128xf32>
    %cst_176 = arith.constant 1.000000e+00 : f32
    %314 = vector.broadcast %cst_176 : f32 to vector<56x128xf32>
    %315 = arith.divf %314, %313 : vector<56x128xf32>
    %316 = vector.extract_strided_slice %307 {offsets = [0, 128], sizes = [56, 128], strides = [1, 1]} : vector<56x512xf32> to vector<56x128xf32>
    %cst_177 = arith.constant 0.000000e+00 : f32
    %317 = vector.broadcast %cst_177 : f32 to vector<56x128xf32>
    %318 = arith.subf %317, %316 : vector<56x128xf32>
    %319 = math.exp %318 : vector<56x128xf32>
    %cst_178 = arith.constant 1.000000e+00 : f32
    %320 = vector.broadcast %cst_178 : f32 to vector<56x128xf32>
    %321 = arith.addf %320, %319 : vector<56x128xf32>
    %cst_179 = arith.constant 1.000000e+00 : f32
    %322 = vector.broadcast %cst_179 : f32 to vector<56x128xf32>
    %323 = arith.divf %322, %321 : vector<56x128xf32>
    %324 = vector.extract_strided_slice %307 {offsets = [0, 256], sizes = [56, 128], strides = [1, 1]} : vector<56x512xf32> to vector<56x128xf32>
    %325 = math.tanh %324 : vector<56x128xf32>
    %326 = vector.extract_strided_slice %307 {offsets = [0, 384], sizes = [56, 128], strides = [1, 1]} : vector<56x512xf32> to vector<56x128xf32>
    %cst_180 = arith.constant 0.000000e+00 : f32
    %327 = vector.broadcast %cst_180 : f32 to vector<56x128xf32>
    %328 = arith.subf %327, %326 : vector<56x128xf32>
    %329 = math.exp %328 : vector<56x128xf32>
    %cst_181 = arith.constant 1.000000e+00 : f32
    %330 = vector.broadcast %cst_181 : f32 to vector<56x128xf32>
    %331 = arith.addf %330, %329 : vector<56x128xf32>
    %cst_182 = arith.constant 1.000000e+00 : f32
    %332 = vector.broadcast %cst_182 : f32 to vector<56x128xf32>
    %333 = arith.divf %332, %331 : vector<56x128xf32>
    %334 = arith.mulf %323, %302 : vector<56x128xf32>
    %335 = arith.mulf %315, %325 : vector<56x128xf32>
    %336 = arith.addf %334, %335 : vector<56x128xf32>
    %337 = math.tanh %336 : vector<56x128xf32>
    %338 = arith.mulf %333, %337 : vector<56x128xf32>
    %339 = vector.extract_strided_slice %222 {offsets = [0, 512], sizes = [56, 512], strides = [1, 1]} : vector<112x1024xf32> to vector<56x512xf32>
    %cst_183 = arith.constant dense<0.000000e+00> : vector<56x512xf32>
    %340 = tpu.matmul %338, %299, %cst_183 {dimension_numbers = #tpu.dot_dimension_numbers<[1], [0], [0], [1], [0, 0, 1, 1], [], []>} : vector<56x128xf32>, vector<128x512xf32>, vector<56x512xf32> -> vector<56x512xf32>
    %341 = arith.addf %339, %340 : vector<56x512xf32>
    %342 = vector.broadcast %300 : vector<1x512xf32> to vector<56x512xf32>
    %343 = arith.addf %341, %342 : vector<56x512xf32>
    %344 = vector.extract_strided_slice %343 {offsets = [0, 0], sizes = [56, 128], strides = [1, 1]} : vector<56x512xf32> to vector<56x128xf32>
    %cst_184 = arith.constant 0.000000e+00 : f32
    %345 = vector.broadcast %cst_184 : f32 to vector<56x128xf32>
    %346 = arith.subf %345, %344 : vector<56x128xf32>
    %347 = math.exp %346 : vector<56x128xf32>
    %cst_185 = arith.constant 1.000000e+00 : f32
    %348 = vector.broadcast %cst_185 : f32 to vector<56x128xf32>
    %349 = arith.addf %348, %347 : vector<56x128xf32>
    %cst_186 = arith.constant 1.000000e+00 : f32
    %350 = vector.broadcast %cst_186 : f32 to vector<56x128xf32>
    %351 = arith.divf %350, %349 : vector<56x128xf32>
    %352 = vector.extract_strided_slice %343 {offsets = [0, 128], sizes = [56, 128], strides = [1, 1]} : vector<56x512xf32> to vector<56x128xf32>
    %cst_187 = arith.constant 0.000000e+00 : f32
    %353 = vector.broadcast %cst_187 : f32 to vector<56x128xf32>
    %354 = arith.subf %353, %352 : vector<56x128xf32>
    %355 = math.exp %354 : vector<56x128xf32>
    %cst_188 = arith.constant 1.000000e+00 : f32
    %356 = vector.broadcast %cst_188 : f32 to vector<56x128xf32>
    %357 = arith.addf %356, %355 : vector<56x128xf32>
    %cst_189 = arith.constant 1.000000e+00 : f32
    %358 = vector.broadcast %cst_189 : f32 to vector<56x128xf32>
    %359 = arith.divf %358, %357 : vector<56x128xf32>
    %360 = vector.extract_strided_slice %343 {offsets = [0, 256], sizes = [56, 128], strides = [1, 1]} : vector<56x512xf32> to vector<56x128xf32>
    %361 = math.tanh %360 : vector<56x128xf32>
    %362 = vector.extract_strided_slice %343 {offsets = [0, 384], sizes = [56, 128], strides = [1, 1]} : vector<56x512xf32> to vector<56x128xf32>
    %cst_190 = arith.constant 0.000000e+00 : f32
    %363 = vector.broadcast %cst_190 : f32 to vector<56x128xf32>
    %364 = arith.subf %363, %362 : vector<56x128xf32>
    %365 = math.exp %364 : vector<56x128xf32>
    %cst_191 = arith.constant 1.000000e+00 : f32
    %366 = vector.broadcast %cst_191 : f32 to vector<56x128xf32>
    %367 = arith.addf %366, %365 : vector<56x128xf32>
    %cst_192 = arith.constant 1.000000e+00 : f32
    %368 = vector.broadcast %cst_192 : f32 to vector<56x128xf32>
    %369 = arith.divf %368, %367 : vector<56x128xf32>
    %370 = arith.mulf %359, %336 : vector<56x128xf32>
    %371 = arith.mulf %351, %361 : vector<56x128xf32>
    %372 = arith.addf %370, %371 : vector<56x128xf32>
    %373 = math.tanh %372 : vector<56x128xf32>
    %374 = arith.mulf %369, %373 : vector<56x128xf32>
    %375 = tpu.concatenate %262, %374 in 1 : vector<56x128xf32>, vector<56x128xf32> -> vector<56x256xf32>
    %376 = tpu.concatenate %298, %338 in 1 : vector<56x128xf32>, vector<56x128xf32> -> vector<56x256xf32>
    %377 = tpu.concatenate %375, %376 in 0 : vector<56x256xf32>, vector<56x256xf32> -> vector<112x256xf32>
    %c0_193 = arith.constant 0 : index
    %c0_194 = arith.constant 0 : index
    %378 = vector.load %arg17[%c0_193, %c0_194] : memref<256x216xf32, #tpu.memory_space<vmem>>, vector<256x216xf32>
    %cst_195 = arith.constant dense<0.000000e+00> : vector<112x216xf32>
    %379 = tpu.matmul %377, %378, %cst_195 {dimension_numbers = #tpu.dot_dimension_numbers<[1], [0], [0], [1], [0, 0, 1, 1], [], []>} : vector<112x256xf32>, vector<256x216xf32>, vector<112x216xf32> -> vector<112x216xf32>
    %c0_196 = arith.constant 0 : index
    %c0_197 = arith.constant 0 : index
    %380 = vector.load %arg18[%c0_196, %c0_197] : memref<112x216xf32, #tpu.memory_space<vmem>>, vector<112x216xf32>
    %381 = arith.mulf %379, %380 : vector<112x216xf32>
    %c0_198 = arith.constant 0 : index
    %c0_199 = arith.constant 0 : index
    %382 = vector.load %arg19[%c0_198, %c0_199] : memref<2x112xf32, #tpu.memory_space<vmem>>, vector<2x112xf32>
    %cst_200 = arith.constant dense<0.000000e+00> : vector<2x216xf32>
    %383 = tpu.matmul %382, %381, %cst_200 {dimension_numbers = #tpu.dot_dimension_numbers<[1], [0], [0], [1], [0, 0, 1, 1], [], []>} : vector<2x112xf32>, vector<112x216xf32>, vector<2x216xf32> -> vector<2x216xf32>
    %c0_201 = arith.constant 0 : index
    %c0_202 = arith.constant 0 : index
    %384 = vector.load %arg20[%c0_201, %c0_202] : memref<216x4xf32, #tpu.memory_space<vmem>>, vector<216x4xf32>
    %cst_203 = arith.constant dense<0.000000e+00> : vector<2x4xf32>
    %385 = tpu.matmul %383, %384, %cst_203 {dimension_numbers = #tpu.dot_dimension_numbers<[1], [0], [0], [1], [0, 0, 1, 1], [], []>} : vector<2x216xf32>, vector<216x4xf32>, vector<2x4xf32> -> vector<2x4xf32>
    %c0_204 = arith.constant 0 : index
    %c0_205 = arith.constant 0 : index
    %386 = vector.load %arg21[%c0_204, %c0_205] : memref<1x4xf32, #tpu.memory_space<vmem>>, vector<1x4xf32>
    %387 = vector.broadcast %386 : vector<1x4xf32> to vector<2x4xf32>
    %388 = arith.addf %385, %387 : vector<2x4xf32>
    %c0_206 = arith.constant 0 : index
    %c0_207 = arith.constant 0 : index
    %389 = vector.load %arg22[%c0_206, %c0_207] : memref<2x4xf32, #tpu.memory_space<vmem>>, vector<2x4xf32>
    tpu.vector_store %arg22[%c0_206, %c0_207], %388 {strides = array<i32>} : memref<2x4xf32, #tpu.memory_space<vmem>>, vector<2x4xf32>,
    return
  }
  func.func @transform_0(%arg0: i32) -> (i32, i32, i32) {
    %c0_i32 = arith.constant 0 : i32
    %c0_i32_0 = arith.constant 0 : i32
    %c0_i32_1 = arith.constant 0 : i32
    %c0_i32_2 = arith.constant 0 : i32
    return %c0_i32, %c0_i32_0, %c0_i32_1 : i32, i32, i32
  }
  func.func @transform_1(%arg0: i32) -> (i32, i32) {
    %c0_i32 = arith.constant 0 : i32
    %c0_i32_0 = arith.constant 0 : i32
    %c0_i32_1 = arith.constant 0 : i32
    return %c0_i32, %c0_i32_0 : i32, i32
  }
  func.func @transform_2(%arg0: i32) -> (i32, i32) {
    %c0_i32 = arith.constant 0 : i32
    %c0_i32_0 = arith.constant 0 : i32
    %c0_i32_1 = arith.constant 0 : i32
    return %c0_i32, %c0_i32_0 : i32, i32
  }
  func.func @transform_3(%arg0: i32) -> (i32, i32) {
    %c0_i32 = arith.constant 0 : i32
    %c0_i32_0 = arith.constant 0 : i32
    %c0_i32_1 = arith.constant 0 : i32
    return %c0_i32, %c0_i32_0 : i32, i32
  }
  func.func @transform_4(%arg0: i32) -> (i32, i32) {
    %c0_i32 = arith.constant 0 : i32
    %c0_i32_0 = arith.constant 0 : i32
    %c0_i32_1 = arith.constant 0 : i32
    return %c0_i32, %c0_i32_0 : i32, i32
  }
  func.func @transform_5(%arg0: i32) -> (i32, i32) {
    %c0_i32 = arith.constant 0 : i32
    %c0_i32_0 = arith.constant 0 : i32
    %c0_i32_1 = arith.constant 0 : i32
    return %c0_i32, %c0_i32_0 : i32, i32
  }
  func.func @transform_6(%arg0: i32) -> (i32, i32) {
    %c0_i32 = arith.constant 0 : i32
    %c0_i32_0 = arith.constant 0 : i32
    %c0_i32_1 = arith.constant 0 : i32
    return %c0_i32, %c0_i32_0 : i32, i32
  }
  func.func @transform_7(%arg0: i32) -> (i32, i32) {
    %c0_i32 = arith.constant 0 : i32
    %c0_i32_0 = arith.constant 0 : i32
    %c0_i32_1 = arith.constant 0 : i32
    return %c0_i32, %c0_i32_0 : i32, i32
  }
  func.func @transform_8(%arg0: i32) -> (i32, i32) {
    %c0_i32 = arith.constant 0 : i32
    %c0_i32_0 = arith.constant 0 : i32
    %c0_i32_1 = arith.constant 0 : i32
    return %c0_i32, %c0_i32_0 : i32, i32
  }
  func.func @transform_9(%arg0: i32) -> (i32, i32) {
    %c0_i32 = arith.constant 0 : i32
    %c0_i32_0 = arith.constant 0 : i32
    %c0_i32_1 = arith.constant 0 : i32
    return %c0_i32, %c0_i32_0 : i32, i32
  }
  func.func @transform_10(%arg0: i32) -> (i32, i32) {
    %c0_i32 = arith.constant 0 : i32
    %c0_i32_0 = arith.constant 0 : i32
    %c0_i32_1 = arith.constant 0 : i32
    return %c0_i32, %c0_i32_0 : i32, i32
  }
  func.func @transform_11(%arg0: i32) -> (i32, i32) {
    %c0_i32 = arith.constant 0 : i32
    %c0_i32_0 = arith.constant 0 : i32
    %c0_i32_1 = arith.constant 0 : i32
    return %c0_i32, %c0_i32_0 : i32, i32
  }
  func.func @transform_12(%arg0: i32) -> (i32, i32) {
    %c0_i32 = arith.constant 0 : i32
    %c0_i32_0 = arith.constant 0 : i32
    %c0_i32_1 = arith.constant 0 : i32
    return %c0_i32, %c0_i32_0 : i32, i32
  }
  func.func @transform_13(%arg0: i32) -> (i32, i32) {
    %c0_i32 = arith.constant 0 : i32
    %c0_i32_0 = arith.constant 0 : i32
    %c0_i32_1 = arith.constant 0 : i32
    return %c0_i32, %c0_i32_0 : i32, i32
  }
  func.func @transform_14(%arg0: i32) -> (i32, i32) {
    %c0_i32 = arith.constant 0 : i32
    %c0_i32_0 = arith.constant 0 : i32
    %c0_i32_1 = arith.constant 0 : i32
    return %c0_i32, %c0_i32_0 : i32, i32
  }
  func.func @transform_15(%arg0: i32) -> (i32, i32) {
    %c0_i32 = arith.constant 0 : i32
    %c0_i32_0 = arith.constant 0 : i32
    %c0_i32_1 = arith.constant 0 : i32
    return %c0_i32, %c0_i32_0 : i32, i32
  }
  func.func @transform_16(%arg0: i32) -> (i32, i32) {
    %c0_i32 = arith.constant 0 : i32
    %c0_i32_0 = arith.constant 0 : i32
    %c0_i32_1 = arith.constant 0 : i32
    return %c0_i32, %c0_i32_0 : i32, i32
  }
  func.func @transform_17(%arg0: i32) -> (i32, i32) {
    %c0_i32 = arith.constant 0 : i32
    %c0_i32_0 = arith.constant 0 : i32
    %c0_i32_1 = arith.constant 0 : i32
    return %c0_i32, %c0_i32_0 : i32, i32
  }
  func.func @transform_18(%arg0: i32) -> (i32, i32) {
    %c0_i32 = arith.constant 0 : i32
    %c0_i32_0 = arith.constant 0 : i32
    %c0_i32_1 = arith.constant 0 : i32
    return %c0_i32, %c0_i32_0 : i32, i32
  }
  func.func @transform_19(%arg0: i32) -> (i32, i32) {
    %c0_i32 = arith.constant 0 : i32
    %c0_i32_0 = arith.constant 0 : i32
    %c0_i32_1 = arith.constant 0 : i32
    return %c0_i32, %c0_i32_0 : i32, i32
  }
  func.func @transform_20(%arg0: i32) -> (i32, i32) {
    %c0_i32 = arith.constant 0 : i32
    %c0_i32_0 = arith.constant 0 : i32
    %c0_i32_1 = arith.constant 0 : i32
    return %c0_i32, %c0_i32_0 : i32, i32
  }
  func.func @transform_21(%arg0: i32) -> (i32, i32) {
    %c0_i32 = arith.constant 0 : i32
    %c0_i32_0 = arith.constant 0 : i32
    %c0_i32_1 = arith.constant 0 : i32
    return %c0_i32, %c0_i32_0 : i32, i32
  }
}

</mosaic_0001>

<llo_original>
// kernel: tpu_custom_call.1
$region0: #{tpu_custom_call.1}
  #allocation0 [shape = 'u32[]', space=smem, size = 0x4, offset = 0x4, fixed_abs, tag = 'smem constant byte address 0x4 - core index']
  #allocation1 [shape = 'u32[144,128]{1,0:T(1,128)}', space=vmem, size = 0x12000, scoped, tag = 'internal scratch']
  %s0 = inlined_call_operand.vmem [shape: f32[2,40,156], index: 0, kind: input, shape index: {}]
  %s1 = inlined_call_operand.vmem [shape: f32[40,288], index: 1, kind: input, shape index: {}]
  %s2 = inlined_call_operand.vmem [shape: f32[1,288], index: 2, kind: input, shape index: {}]
  %s3 = inlined_call_operand.vmem [shape: f32[288,192], index: 3, kind: input, shape index: {}]
  %s4 = inlined_call_operand.vmem [shape: f32[1,192], index: 4, kind: input, shape index: {}]
  %s5 = inlined_call_operand.vmem [shape: f32[320,156], index: 5, kind: input, shape index: {}]
  %s6 = inlined_call_operand.vmem [shape: f32[1536,192], index: 6, kind: input, shape index: {}]
  %s7 = inlined_call_operand.vmem [shape: f32[1,192], index: 7, kind: input, shape index: {}]
  %s8 = inlined_call_operand.vmem [shape: f32[96,40], index: 8, kind: input, shape index: {}]
  %s9 = inlined_call_operand.vmem [shape: f32[768,192], index: 9, kind: input, shape index: {}]
  %s10 = inlined_call_operand.vmem [shape: f32[1,192], index: 10, kind: input, shape index: {}]
  %s11 = inlined_call_operand.vmem [shape: f32[64,1024], index: 11, kind: input, shape index: {}]
  %s12 = inlined_call_operand.vmem [shape: f32[128,512], index: 12, kind: input, shape index: {}]
  %s13 = inlined_call_operand.vmem [shape: f32[128,512], index: 13, kind: input, shape index: {}]
  %s14 = inlined_call_operand.vmem [shape: f32[1,512], index: 14, kind: input, shape index: {}]
  %s15 = inlined_call_operand.vmem [shape: f32[1,512], index: 15, kind: input, shape index: {}]
  %s16 = inlined_call_operand.vmem [shape: f32[256,216], index: 16, kind: input, shape index: {}]
  %s17 = inlined_call_operand.vmem [shape: f32[112,216], index: 17, kind: input, shape index: {}]
  %s18 = inlined_call_operand.vmem [shape: f32[2,112], index: 18, kind: input, shape index: {}]
  %s19 = inlined_call_operand.vmem [shape: f32[216,4], index: 19, kind: input, shape index: {}]
  %s20 = inlined_call_operand.vmem [shape: f32[1,4], index: 20, kind: input, shape index: {}]
  %s21 = inlined_call_operand.hbm [shape: f32[2,4], index: 21, kind: output, shape index: {}]
  %s22 = sld [smem:[#allocation0]]
  $region94: #{tpu_custom_call.1} parent=0
    _
  %s24 = ssub.s32 1, %s22
  %s25 = scalar_select 0, %s24, %s22
  $region1: #{tpu_custom_call.1} parent=0
    #allocation2 [shape = 'u8[1024]{0}', space=vmem, size = 0x400, scoped, tag = 'output window, operand 0, single buffered']
    #allocation3 [shape = 's32[1]{0}', space=sflag, size = 0x4, scoped, tag = 'scoped memory for tpu_custom_call.1']
    %26 = vsyncpa [#allocation3], 0
    // Predicated region
    $region2: #{tpu_custom_call.1} parent=1 // pred_check
      _
    $region3: #{tpu_custom_call.1} parent=1 // pred_check_branch
      %28 = sbr.rel (0) target = $region5
    $region4: #{tpu_custom_call.1} parent=1 // pred_region
      _
    $region5: #{tpu_custom_call.1} parent=1 // pred_fallthru
      _
    // Predicated region
    $region6: #{tpu_custom_call.1} parent=1 // pred_check
      _
    $region7: #{tpu_custom_call.1} parent=1 // pred_check_branch
      %30 = sbr.rel (0) target = $region9
    $region8: #{tpu_custom_call.1} parent=1 // pred_region
      _
    $region9: #{tpu_custom_call.1} parent=1 // pred_fallthru
      _
    // Predicated region
    $region10: #{tpu_custom_call.1} parent=1 // pred_check
      _
    $region11: #{tpu_custom_call.1} parent=1 // pred_check_branch
      %32 = sbr.rel (0) target = $region13
    $region12: #{tpu_custom_call.1} parent=1 // pred_region
      _
    $region13: #{tpu_custom_call.1} parent=1 // pred_fallthru
      _
    // Predicated region
    $region14: #{tpu_custom_call.1} parent=1 // pred_check
      _
    $region15: #{tpu_custom_call.1} parent=1 // pred_check_branch
      %34 = sbr.rel (0) target = $region17
    $region16: #{tpu_custom_call.1} parent=1 // pred_region
      _
    $region17: #{tpu_custom_call.1} parent=1 // pred_fallthru
      _
    // Predicated region
    $region18: #{tpu_custom_call.1} parent=1 // pred_check
      _
    $region19: #{tpu_custom_call.1} parent=1 // pred_check_branch
      %36 = sbr.rel (0) target = $region21
    $region20: #{tpu_custom_call.1} parent=1 // pred_region
      _
    $region21: #{tpu_custom_call.1} parent=1 // pred_fallthru
      _
    // Predicated region
    $region22: #{tpu_custom_call.1} parent=1 // pred_check
      _
    $region23: #{tpu_custom_call.1} parent=1 // pred_check_branch
      %38 = sbr.rel (0) target = $region25
    $region24: #{tpu_custom_call.1} parent=1 // pred_region
      _
    $region25: #{tpu_custom_call.1} parent=1 // pred_fallthru
      _
    // Predicated region
    $region26: #{tpu_custom_call.1} parent=1 // pred_check
      _
    $region27: #{tpu_custom_call.1} parent=1 // pred_check_branch
      %40 = sbr.rel (0) target = $region29
    $region28: #{tpu_custom_call.1} parent=1 // pred_region
      _
    $region29: #{tpu_custom_call.1} parent=1 // pred_fallthru
      _
    // Predicated region
    $region30: #{tpu_custom_call.1} parent=1 // pred_check
      _
    $region31: #{tpu_custom_call.1} parent=1 // pred_check_branch
      %42 = sbr.rel (0) target = $region33
    $region32: #{tpu_custom_call.1} parent=1 // pred_region
      _
    $region33: #{tpu_custom_call.1} parent=1 // pred_fallthru
      _
    // Predicated region
    $region34: #{tpu_custom_call.1} parent=1 // pred_check
      _
    $region35: #{tpu_custom_call.1} parent=1 // pred_check_branch
      %44 = sbr.rel (0) target = $region37
    $region36: #{tpu_custom_call.1} parent=1 // pred_region
      _
    $region37: #{tpu_custom_call.1} parent=1 // pred_fallthru
      _
    // Predicated region
    $region38: #{tpu_custom_call.1} parent=1 // pred_check
      _
    $region39: #{tpu_custom_call.1} parent=1 // pred_check_branch
      %46 = sbr.rel (0) target = $region41
    $region40: #{tpu_custom_call.1} parent=1 // pred_region
      _
    $region41: #{tpu_custom_call.1} parent=1 // pred_fallthru
      _
    // Predicated region
    $region42: #{tpu_custom_call.1} parent=1 // pred_check
      _
    $region43: #{tpu_custom_call.1} parent=1 // pred_check_branch
      %48 = sbr.rel (0) target = $region45
    $region44: #{tpu_custom_call.1} parent=1 // pred_region
      _
    $region45: #{tpu_custom_call.1} parent=1 // pred_fallthru
      _
    // Predicated region
    $region46: #{tpu_custom_call.1} parent=1 // pred_check
      _
    $region47: #{tpu_custom_call.1} parent=1 // pred_check_branch
      %50 = sbr.rel (0) target = $region49
    $region48: #{tpu_custom_call.1} parent=1 // pred_region
      _
    $region49: #{tpu_custom_call.1} parent=1 // pred_fallthru
      _
    // Predicated region
    $region50: #{tpu_custom_call.1} parent=1 // pred_check
      _
    $region51: #{tpu_custom_call.1} parent=1 // pred_check_branch
      %52 = sbr.rel (0) target = $region53
    $region52: #{tpu_custom_call.1} parent=1 // pred_region
      _
    $region53: #{tpu_custom_call.1} parent=1 // pred_fallthru
      _
    // Predicated region
    $region54: #{tpu_custom_call.1} parent=1 // pred_check
      _
    $region55: #{tpu_custom_call.1} parent=1 // pred_check_branch
      %54 = sbr.rel (0) target = $region57
    $region56: #{tpu_custom_call.1} parent=1 // pred_region
      _
    $region57: #{tpu_custom_call.1} parent=1 // pred_fallthru
      _
    // Predicated region
    $region58: #{tpu_custom_call.1} parent=1 // pred_check
      _
    $region59: #{tpu_custom_call.1} parent=1 // pred_check_branch
      %56 = sbr.rel (0) target = $region61
    $region60: #{tpu_custom_call.1} parent=1 // pred_region
      _
    $region61: #{tpu_custom_call.1} parent=1 // pred_fallthru
      _
    // Predicated region
    $region62: #{tpu_custom_call.1} parent=1 // pred_check
      _
    $region63: #{tpu_custom_call.1} parent=1 // pred_check_branch
      %58 = sbr.rel (0) target = $region65
    $region64: #{tpu_custom_call.1} parent=1 // pred_region
      _
    $region65: #{tpu_custom_call.1} parent=1 // pred_fallthru
      _
    // Predicated region
    $region66: #{tpu_custom_call.1} parent=1 // pred_check
      _
    $region67: #{tpu_custom_call.1} parent=1 // pred_check_branch
      %60 = sbr.rel (0) target = $region69
    $region68: #{tpu_custom_call.1} parent=1 // pred_region
      _
    $region69: #{tpu_custom_call.1} parent=1 // pred_fallthru
      _
    // Predicated region
    $region70: #{tpu_custom_call.1} parent=1 // pred_check
      _
    $region71: #{tpu_custom_call.1} parent=1 // pred_check_branch
      %62 = sbr.rel (0) target = $region73
    $region72: #{tpu_custom_call.1} parent=1 // pred_region
      _
    $region73: #{tpu_custom_call.1} parent=1 // pred_fallthru
      _
    // Predicated region
    $region74: #{tpu_custom_call.1} parent=1 // pred_check
      _
    $region75: #{tpu_custom_call.1} parent=1 // pred_check_branch
      %64 = sbr.rel (0) target = $region77
    $region76: #{tpu_custom_call.1} parent=1 // pred_region
      _
    $region77: #{tpu_custom_call.1} parent=1 // pred_fallthru
      _
    // Predicated region
    $region78: #{tpu_custom_call.1} parent=1 // pred_check
      _
    $region79: #{tpu_custom_call.1} parent=1 // pred_check_branch
      %66 = sbr.rel (0) target = $region81
    $region80: #{tpu_custom_call.1} parent=1 // pred_region
      _
    $region81: #{tpu_custom_call.1} parent=1 // pred_fallthru
      _
    // Predicated region
    $region82: #{tpu_custom_call.1} parent=1 // pred_check
      _
    $region83: #{tpu_custom_call.1} parent=1 // pred_check_branch
      %68 = sbr.rel (0) target = $region85
    $region84: #{tpu_custom_call.1} parent=1 // pred_region
      _
    $region85: #{tpu_custom_call.1} parent=1 // pred_fallthru
      _
    %v69 = vld [vmem:[%s0] sm:$0xff]
    %v70 = vld [vmem:[%s0 + $0x8] sm:$0xff]
    %v71 = vld [vmem:[%s0 + $0x10] sm:$0xff]
    %v72 = vld [vmem:[%s0 + $0x18] sm:$0xff]
    %v73 = vld [vmem:[%s0 + $0x20] sm:$0xff]
    %v74 = vld [vmem:[%s0 + $0x28] sm:$0xff]
    %v75 = vld [vmem:[%s0 + $0x30] sm:$0xff]
    %v76 = vld [vmem:[%s0 + $0x38] sm:$0xff]
    %v77 = vld [vmem:[%s0 + $0x40] sm:$0xff]
    %v78 = vld [vmem:[%s0 + $0x48] sm:$0xff]
    %79 = vxpose.xlu0.b32.start [1/16] %v69, 128
    %80 = vxpose.xlu0.b32.cont [2/16] %v71, 128
    %81 = vxpose.xlu0.b32.cont [3/16] %v73, 128
    %82 = vxpose.xlu0.b32.cont [4/16] %v75, 128
    %83 = vxpose.xlu0.b32.cont [5/16] %v77, 128
    %84 = vxpose.xlu0.b32.cont [6/16] 0.0, 128
    %85 = vxpose.xlu0.b32.cont [7/16] 0.0, 128
    %86 = vxpose.xlu0.b32.cont [8/16] 0.0, 128
    %87 = vxpose.xlu0.b32.cont [9/16] 0.0, 128
    %88 = vxpose.xlu0.b32.cont [10/16] 0.0, 128
    %89 = vxpose.xlu0.b32.cont [11/16] 0.0, 128
    %90 = vxpose.xlu0.b32.cont [12/16] 0.0, 128
    %91 = vxpose.xlu0.b32.cont [13/16] 0.0, 128
    %92 = vxpose.xlu0.b32.cont [14/16] 0.0, 128
    %93 = vxpose.xlu0.b32.cont [15/16] 0.0, 128
    %94 = vxpose.xlu0.b32.end [16/16] 0.0, 128
    %v95 = vpop.trf.xlu0
    %v96 = vpop.trf.xlu0
    %v97 = vpop.trf.xlu0
    %v98 = vpop.trf.xlu0
    %v99 = vpop.trf.xlu0
    %v100 = vpop.trf.xlu0
    %v101 = vpop.trf.xlu0
    %v102 = vpop.trf.xlu0
    %v103 = vpop.trf.xlu0
    %v104 = vpop.trf.xlu0
    %v105 = vpop.trf.xlu0
    %v106 = vpop.trf.xlu0
    %v107 = vpop.trf.xlu0
    %v108 = vpop.trf.xlu0
    %v109 = vpop.trf.xlu0
    %v110 = vpop.trf.xlu0
    %111 = vxpose.xlu0.b32.start [1/16] %v70, 128
    %112 = vxpose.xlu0.b32.cont [2/16] %v72, 128
    %113 = vxpose.xlu0.b32.cont [3/16] %v74, 128
    %114 = vxpose.xlu0.b32.cont [4/16] %v76, 128
    %115 = vxpose.xlu0.b32.cont [5/16] %v78, 128
    %116 = vxpose.xlu0.b32.cont [6/16] 0.0, 128
    %117 = vxpose.xlu0.b32.cont [7/16] 0.0, 128
    %118 = vxpose.xlu0.b32.cont [8/16] 0.0, 128
    %119 = vxpose.xlu0.b32.cont [9/16] 0.0, 128
    %120 = vxpose.xlu0.b32.cont [10/16] 0.0, 128
    %121 = vxpose.xlu0.b32.cont [11/16] 0.0, 128
    %122 = vxpose.xlu0.b32.cont [12/16] 0.0, 128
    %123 = vxpose.xlu0.b32.cont [13/16] 0.0, 128
    %124 = vxpose.xlu0.b32.cont [14/16] 0.0, 128
    %125 = vxpose.xlu0.b32.cont [15/16] 0.0, 128
    %126 = vxpose.xlu0.b32.end [16/16] 0.0, 128
    %v127 = vpop.trf.xlu0
    %v128 = vpop.trf.xlu0
    %v129 = vpop.trf.xlu0
    %v130 = vpop.trf.xlu0
    %v131 = vpop.trf.xlu0
    %v132 = vpop.trf.xlu0
    %v133 = vpop.trf.xlu0
    %v134 = vpop.trf.xlu0
    %v135 = vpop.trf.xlu0
    %v136 = vpop.trf.xlu0
    %v137 = vpop.trf.xlu0
    %v138 = vpop.trf.xlu0
    %v139 = vpop.trf.xlu0
    %v140 = vpop.trf.xlu0
    %v141 = vpop.trf.xlu0
    %v142 = vpop.trf.xlu0
    %v143 = vld [vmem:[%s1] sm:$0xff]
    %v144 = vld [vmem:[%s1 + $0x8] sm:$0xff]
    %v145 = vld [vmem:[%s1 + $0x10] sm:$0xff]
    %v146 = vld [vmem:[%s1 + $0x18] sm:$0xff]
    %v147 = vld [vmem:[%s1 + $0x20] sm:$0xff]
    %v148 = vld [vmem:[%s1 + $0x28] sm:$0xff]
    %v149 = vld [vmem:[%s1 + $0x30] sm:$0xff]
    %v150 = vld [vmem:[%s1 + $0x38] sm:$0xff]
    %v151 = vld [vmem:[%s1 + $0x40] sm:$0xff]
    %v152 = vld [vmem:[%s1 + $0x48] sm:$0xff]
    %v153 = vld [vmem:[%s1 + $0x50] sm:$0xff]
    %v154 = vld [vmem:[%s1 + $0x58] sm:$0xff]
    %v155 = vld [vmem:[%s1 + $0x60] sm:$0xff]
    %v156 = vld [vmem:[%s1 + $0x68] sm:$0xff]
    %v157 = vld [vmem:[%s1 + $0x70] sm:$0xff]
    %v158 = vld [vmem:[%s2] sm:$0x7]
    %v160 = vlaneseq
    %v161 = vshrl.u32 %v160, 7
    %v162 = vsub.s32 0, %v161
    %v163 = vrot.slane %v158, %v162
    %v164 = vlaneseq
    %v165 = vshrl.u32 %v164, 7
    %v166 = vsub.s32 1, %v165
    %v167 = vrot.slane %v158, %v166
    %v168 = vlaneseq
    %v169 = vshrl.u32 %v168, 7
    %v170 = vsub.s32 2, %v169
    %v171 = vrot.slane %v158, %v170
    %vm175 = vcmask 326656
    %v177 = vsel %vm175, %v95, 0
    %v180 = vsel %vm175, %v96, 0
    %v183 = vsel %vm175, %v97, 0
    %v186 = vsel %vm175, %v98, 0
    %v189 = vsel %vm175, %v99, 0
    %v192 = vsel %vm175, %v100, 0
    %v195 = vsel %vm175, %v101, 0
    %v198 = vsel %vm175, %v102, 0
    %v201 = vsel %vm175, %v103, 0
    %v204 = vsel %vm175, %v104, 0
    %v207 = vsel %vm175, %v105, 0
    %v210 = vsel %vm175, %v106, 0
    %v213 = vsel %vm175, %v107, 0
    %v216 = vsel %vm175, %v108, 0
    %v219 = vsel %vm175, %v109, 0
    %v222 = vsel %vm175, %v110, 0
    %v225 = vsel %vm175, %v127, 0
    %v228 = vsel %vm175, %v128, 0
    %v231 = vsel %vm175, %v129, 0
    %v234 = vsel %vm175, %v130, 0
    %236 = vmatprep.subr.mxu0 %v144
    %237 = vmatpush1.msra.mxu0 %v143
    %238 = vmatprep.subr.mxu0 %v147
    %239 = vmatpush1.msra.mxu0 %v146
    %240 = vmatprep.subr.mxu0 %v150
    %241 = vmatpush1.msra.mxu0 %v149
    %242 = vmatprep.subr.mxu0 %v153
    %243 = vmatpush1.msra.mxu0 %v152
    %244 = vmatprep.subr.mxu0 %v156
    %245 = vmatpush1.msra.mxu0 %v155
    %246 = vmatprep.subr.mxu0 0.0
    %247 = vmatpush1.msra.mxu0 0.0
    %248 = vmatprep.subr.mxu0 0.0
    %249 = vmatpush1.msra.mxu0 0.0
    %250 = vmatprep.subr.mxu0 0.0
    %251 = vmatpush1.msra.mxu0 0.0
    %252 = vmatprep.subr.mxu0 0.0
    %253 = vmatpush1.msra.mxu0 0.0
    %254 = vmatprep.subr.mxu0 0.0
    %255 = vmatpush1.msra.mxu0 0.0
    %256 = vmatprep.subr.mxu0 0.0
    %257 = vmatpush1.msra.mxu0 0.0
    %258 = vmatprep.subr.mxu0 0.0
    %259 = vmatpush1.msra.mxu0 0.0
    %260 = vmatprep.subr.mxu0 0.0
    %261 = vmatpush1.msra.mxu0 0.0
    %262 = vmatprep.subr.mxu0 0.0
    %263 = vmatpush1.msra.mxu0 0.0
    %264 = vmatprep.subr.mxu0 0.0
    %265 = vmatpush1.msra.mxu0 0.0
    %266 = vmatprep.subr.mxu0 0.0
    %267 = vmatpush1.msra.mxu0 0.0
    %268 = vmatprep.subr.mxu0 0.0
    %269 = vmatpush1.msra.mxu0 0.0
    %270 = vmatprep.subr.mxu0 0.0
    %271 = vmatpush1.msra.mxu0 0.0
    %272 = vmatprep.subr.mxu0 0.0
    %273 = vmatpush1.msra.mxu0 0.0
    %274 = vmatprep.subr.mxu0 0.0
    %275 = vmatpush1.msra.mxu0 0.0
    %276 = vmatprep.subr.mxu0 0.0
    %277 = vmatpush1.msra.mxu0 0.0
    %278 = vmatprep.subr.mxu0 0.0
    %279 = vmatpush1.msra.mxu0 0.0
    %280 = vmatprep.subr.mxu0 0.0
    %281 = vmatpush1.msra.mxu0 0.0
    %282 = vmatprep.subr.mxu0 0.0
    %283 = vmatpush1.msra.mxu0 0.0
    %284 = vmatprep.subr.mxu0 0.0
    %285 = vmatpush1.msra.mxu0 0.0
    %286 = vmatprep.subr.mxu0 0.0
    %287 = vmatpush1.msra.mxu0 0.0
    %288 = vmatprep.subr.mxu0 0.0
    %289 = vmatpush1.msra.mxu0 0.0
    %290 = vmatprep.subr.mxu0 0.0
    %291 = vmatpush1.msra.mxu0 0.0
    %292 = vmatprep.subr.mxu0 0.0
    %293 = vmatpush1.msra.mxu0 0.0
    %294 = vmatprep.subr.mxu0 0.0
    %295 = vmatpush1.msra.mxu0 0.0
    %296 = vmatprep.subr.mxu0 0.0
    %297 = vmatpush1.msra.mxu0 0.0
    %298 = vmatprep.subr.mxu0 0.0
    %299 = vmatpush1.msra.mxu0 0.0
    %300 = vmatprep.mubr.f32.mxu0 0.0
    %301 = vmatmul.mubr.f32.gmra.mrb[0].mxu0 %v177
    %v302 = vpop.f32.mrb[0].mxu0
    %v303 = vadd.f32 %v163, %v302
    %v304 = vpop.f32.mrb[0].mxu0
    %v305 = vadd.f32 %v167, %v304
    %306 = vmatprep.mubr.f32.mxu0 0.0
    %307 = vmatmul.mubr.f32.gmra.mrb[0].mxu0 %v180
    %v308 = vpop.f32.mrb[0].mxu0
    %v309 = vadd.f32 %v163, %v308
    %v310 = vpop.f32.mrb[0].mxu0
    %v311 = vadd.f32 %v167, %v310
    %312 = vmatprep.mubr.f32.mxu0 0.0
    %313 = vmatmul.mubr.f32.gmra.mrb[0].mxu0 %v183
    %v314 = vpop.f32.mrb[0].mxu0
    %v315 = vadd.f32 %v163, %v314
    %v316 = vpop.f32.mrb[0].mxu0
    %v317 = vadd.f32 %v167, %v316
    %318 = vmatprep.mubr.f32.mxu0 0.0
    %319 = vmatmul.mubr.f32.gmra.mrb[0].mxu0 %v186
    %v320 = vpop.f32.mrb[0].mxu0
    %v321 = vadd.f32 %v163, %v320
    %v322 = vpop.f32.mrb[0].mxu0
    %v323 = vadd.f32 %v167, %v322
    %324 = vmatprep.mubr.f32.mxu0 0.0
    %325 = vmatmul.mubr.f32.gmra.mrb[0].mxu0 %v189
    %v326 = vpop.f32.mrb[0].mxu0
    %v327 = vadd.f32 %v163, %v326
    %v328 = vpop.f32.mrb[0].mxu0
    %v329 = vadd.f32 %v167, %v328
    %330 = vmatprep.mubr.f32.mxu0 0.0
    %331 = vmatmul.mubr.f32.gmra.mrb[0].mxu0 %v192
    %v332 = vpop.f32.mrb[0].mxu0
    %v333 = vadd.f32 %v163, %v332
    %v334 = vpop.f32.mrb[0].mxu0
    %v335 = vadd.f32 %v167, %v334
    %336 = vmatprep.mubr.f32.mxu0 0.0
    %337 = vmatmul.mubr.f32.gmra.mrb[0].mxu0 %v195
    %v338 = vpop.f32.mrb[0].mxu0
    %v339 = vadd.f32 %v163, %v338
    %v340 = vpop.f32.mrb[0].mxu0
    %v341 = vadd.f32 %v167, %v340
    %342 = vmatprep.mubr.f32.mxu0 0.0
    %343 = vmatmul.mubr.f32.gmra.mrb[0].mxu0 %v198
    %v344 = vpop.f32.mrb[0].mxu0
    %v345 = vadd.f32 %v163, %v344
    %v346 = vpop.f32.mrb[0].mxu0
    %v347 = vadd.f32 %v167, %v346
    %348 = vmatprep.mubr.f32.mxu0 0.0
    %349 = vmatmul.mubr.f32.gmra.mrb[0].mxu0 %v201
    %v350 = vpop.f32.mrb[0].mxu0
    %v351 = vadd.f32 %v163, %v350
    %v352 = vpop.f32.mrb[0].mxu0
    %v353 = vadd.f32 %v167, %v352
    %354 = vmatprep.mubr.f32.mxu0 0.0
    %355 = vmatmul.mubr.f32.gmra.mrb[0].mxu0 %v204
    %v356 = vpop.f32.mrb[0].mxu0
    %v357 = vadd.f32 %v163, %v356
    %v358 = vpop.f32.mrb[0].mxu0
    %v359 = vadd.f32 %v167, %v358
    %360 = vmatprep.mubr.f32.mxu0 0.0
    %361 = vmatmul.mubr.f32.gmra.mrb[0].mxu0 %v207
    %v362 = vpop.f32.mrb[0].mxu0
    %v363 = vadd.f32 %v163, %v362
    %v364 = vpop.f32.mrb[0].mxu0
    %v365 = vadd.f32 %v167, %v364
    %366 = vmatprep.mubr.f32.mxu0 0.0
    %367 = vmatmul.mubr.f32.gmra.mrb[0].mxu0 %v210
    %v368 = vpop.f32.mrb[0].mxu0
    %v369 = vadd.f32 %v163, %v368
    %v370 = vpop.f32.mrb[0].mxu0
    %v371 = vadd.f32 %v167, %v370
    %372 = vmatprep.mubr.f32.mxu0 0.0
    %373 = vmatmul.mubr.f32.gmra.mrb[0].mxu0 %v213
    %v374 = vpop.f32.mrb[0].mxu0
    %v375 = vadd.f32 %v163, %v374
    %v376 = vpop.f32.mrb[0].mxu0
    %v377 = vadd.f32 %v167, %v376
    %378 = vmatprep.mubr.f32.mxu0 0.0
    %379 = vmatmul.mubr.f32.gmra.mrb[0].mxu0 %v216
    %v380 = vpop.f32.mrb[0].mxu0
    %v381 = vadd.f32 %v163, %v380
    %v382 = vpop.f32.mrb[0].mxu0
    %v383 = vadd.f32 %v167, %v382
    %384 = vmatprep.mubr.f32.mxu0 0.0
    %385 = vmatmul.mubr.f32.gmra.mrb[0].mxu0 %v219
    %v386 = vpop.f32.mrb[0].mxu0
    %v387 = vadd.f32 %v163, %v386
    %v388 = vpop.f32.mrb[0].mxu0
    %v389 = vadd.f32 %v167, %v388
    %390 = vmatprep.mubr.f32.mxu0 0.0
    %391 = vmatmul.mubr.f32.gmra.mrb[0].mxu0 %v222
    %v392 = vpop.f32.mrb[0].mxu0
    %v393 = vadd.f32 %v163, %v392
    %v394 = vpop.f32.mrb[0].mxu0
    %v395 = vadd.f32 %v167, %v394
    %396 = vmatprep.mubr.f32.mxu0 0.0
    %397 = vmatmul.mubr.f32.gmra.mrb[0].mxu0 %v225
    %v398 = vpop.f32.mrb[0].mxu0
    %v399 = vadd.f32 %v163, %v398
    %v400 = vpop.f32.mrb[0].mxu0
    %v401 = vadd.f32 %v167, %v400
    %402 = vmatprep.mubr.f32.mxu0 0.0
    %403 = vmatmul.mubr.f32.gmra.mrb[0].mxu0 %v228
    %v404 = vpop.f32.mrb[0].mxu0
    %v405 = vadd.f32 %v163, %v404
    %v406 = vpop.f32.mrb[0].mxu0
    %v407 = vadd.f32 %v167, %v406
    %408 = vmatprep.mubr.f32.mxu0 0.0
    %409 = vmatmul.mubr.f32.gmra.mrb[0].mxu0 %v231
    %v410 = vpop.f32.mrb[0].mxu0
    %v411 = vadd.f32 %v163, %v410
    %v412 = vpop.f32.mrb[0].mxu0
    %v413 = vadd.f32 %v167, %v412
    %414 = vmatprep.mubr.f32.mxu0 0.0
    %415 = vmatmul.mubr.f32.gmra.mrb[0].mxu0 %v234
    %v416 = vpop.f32.mrb[0].mxu0
    %v417 = vadd.f32 %v163, %v416
    %v418 = vpop.f32.mrb[0].mxu0
    %v419 = vadd.f32 %v167, %v418
    %420 = vdwg.mxu0
    %421 = vmatprep.subr.mxu0 0.0
    %422 = vmatpush1.msra.mxu0 %v145
    %423 = vmatprep.subr.mxu0 0.0
    %424 = vmatpush1.msra.mxu0 %v148
    %425 = vmatprep.subr.mxu0 0.0
    %426 = vmatpush1.msra.mxu0 %v151
    %427 = vmatprep.subr.mxu0 0.0
    %428 = vmatpush1.msra.mxu0 %v154
    %429 = vmatprep.subr.mxu0 0.0
    %430 = vmatpush1.msra.mxu0 %v157
    %431 = vmatprep.subr.mxu0 0.0
    %432 = vmatpush1.msra.mxu0 0.0
    %433 = vmatprep.subr.mxu0 0.0
    %434 = vmatpush1.msra.mxu0 0.0
    %435 = vmatprep.subr.mxu0 0.0
    %436 = vmatpush1.msra.mxu0 0.0
    %437 = vmatprep.subr.mxu0 0.0
    %438 = vmatpush1.msra.mxu0 0.0
    %439 = vmatprep.subr.mxu0 0.0
    %440 = vmatpush1.msra.mxu0 0.0
    %441 = vmatprep.subr.mxu0 0.0
    %442 = vmatpush1.msra.mxu0 0.0
    %443 = vmatprep.subr.mxu0 0.0
    %444 = vmatpush1.msra.mxu0 0.0
    %445 = vmatprep.subr.mxu0 0.0
    %446 = vmatpush1.msra.mxu0 0.0
    %447 = vmatprep.subr.mxu0 0.0
    %448 = vmatpush1.msra.mxu0 0.0
    %449 = vmatprep.subr.mxu0 0.0
    %450 = vmatpush1.msra.mxu0 0.0
    %451 = vmatprep.subr.mxu0 0.0
    %452 = vmatpush1.msra.mxu0 0.0
    %453 = vmatprep.subr.mxu0 0.0
    %454 = vmatpush1.msra.mxu0 0.0
    %455 = vmatprep.subr.mxu0 0.0
    %456 = vmatpush1.msra.mxu0 0.0
    %457 = vmatprep.subr.mxu0 0.0
    %458 = vmatpush1.msra.mxu0 0.0
    %459 = vmatprep.subr.mxu0 0.0
    %460 = vmatpush1.msra.mxu0 0.0
    %461 = vmatprep.subr.mxu0 0.0
    %462 = vmatpush1.msra.mxu0 0.0
    %463 = vmatprep.subr.mxu0 0.0
    %464 = vmatpush1.msra.mxu0 0.0
    %465 = vmatprep.subr.mxu0 0.0
    %466 = vmatpush1.msra.mxu0 0.0
    %467 = vmatprep.subr.mxu0 0.0
    %468 = vmatpush1.msra.mxu0 0.0
    %469 = vmatprep.subr.mxu0 0.0
    %470 = vmatpush1.msra.mxu0 0.0
    %471 = vmatprep.subr.mxu0 0.0
    %472 = vmatpush1.msra.mxu0 0.0
    %473 = vmatprep.subr.mxu0 0.0
    %474 = vmatpush1.msra.mxu0 0.0
    %475 = vmatprep.subr.mxu0 0.0
    %476 = vmatpush1.msra.mxu0 0.0
    %477 = vmatprep.subr.mxu0 0.0
    %478 = vmatpush1.msra.mxu0 0.0
    %479 = vmatprep.subr.mxu0 0.0
    %480 = vmatpush1.msra.mxu0 0.0
    %481 = vmatprep.subr.mxu0 0.0
    %482 = vmatpush1.msra.mxu0 0.0
    %483 = vmatprep.subr.mxu0 0.0
    %484 = vmatpush1.msra.mxu0 0.0
    %485 = vmatprep.mubr.f32.mxu0 0.0
    %486 = vmatmul.mubr.f32.gmra.mrb[0].mxu0 %v177
    %v487 = vpop.f32.mrb[0].mxu0
    %v488 = vadd.f32 %v171, %v487
    %v489 = vpop.f32.mrb[0].mxu0
    %490 = vmatprep.mubr.f32.mxu0 0.0
    %491 = vmatmul.mubr.f32.gmra.mrb[0].mxu0 %v180
    %v492 = vpop.f32.mrb[0].mxu0
    %v493 = vadd.f32 %v171, %v492
    %v494 = vpop.f32.mrb[0].mxu0
    %495 = vmatprep.mubr.f32.mxu0 0.0
    %496 = vmatmul.mubr.f32.gmra.mrb[0].mxu0 %v183
    %v497 = vpop.f32.mrb[0].mxu0
    %v498 = vadd.f32 %v171, %v497
    %v499 = vpop.f32.mrb[0].mxu0
    %500 = vmatprep.mubr.f32.mxu0 0.0
    %501 = vmatmul.mubr.f32.gmra.mrb[0].mxu0 %v186
    %v502 = vpop.f32.mrb[0].mxu0
    %v503 = vadd.f32 %v171, %v502
    %v504 = vpop.f32.mrb[0].mxu0
    %505 = vmatprep.mubr.f32.mxu0 0.0
    %506 = vmatmul.mubr.f32.gmra.mrb[0].mxu0 %v189
    %v507 = vpop.f32.mrb[0].mxu0
    %v508 = vadd.f32 %v171, %v507
    %v509 = vpop.f32.mrb[0].mxu0
    %510 = vmatprep.mubr.f32.mxu0 0.0
    %511 = vmatmul.mubr.f32.gmra.mrb[0].mxu0 %v192
    %v512 = vpop.f32.mrb[0].mxu0
    %v513 = vadd.f32 %v171, %v512
    %v514 = vpop.f32.mrb[0].mxu0
    %515 = vmatprep.mubr.f32.mxu0 0.0
    %516 = vmatmul.mubr.f32.gmra.mrb[0].mxu0 %v195
    %v517 = vpop.f32.mrb[0].mxu0
    %v518 = vadd.f32 %v171, %v517
    %v519 = vpop.f32.mrb[0].mxu0
    %520 = vmatprep.mubr.f32.mxu0 0.0
    %521 = vmatmul.mubr.f32.gmra.mrb[0].mxu0 %v198
    %v522 = vpop.f32.mrb[0].mxu0
    %v523 = vadd.f32 %v171, %v522
    %v524 = vpop.f32.mrb[0].mxu0
    %525 = vmatprep.mubr.f32.mxu0 0.0
    %526 = vmatmul.mubr.f32.gmra.mrb[0].mxu0 %v201
    %v527 = vpop.f32.mrb[0].mxu0
    %v528 = vadd.f32 %v171, %v527
    %v529 = vpop.f32.mrb[0].mxu0
    %530 = vmatprep.mubr.f32.mxu0 0.0
    %531 = vmatmul.mubr.f32.gmra.mrb[0].mxu0 %v204
    %v532 = vpop.f32.mrb[0].mxu0
    %v533 = vadd.f32 %v171, %v532
    %v534 = vpop.f32.mrb[0].mxu0
    %535 = vmatprep.mubr.f32.mxu0 0.0
    %536 = vmatmul.mubr.f32.gmra.mrb[0].mxu0 %v207
    %v537 = vpop.f32.mrb[0].mxu0
    %v538 = vadd.f32 %v171, %v537
    %v539 = vpop.f32.mrb[0].mxu0
    %540 = vmatprep.mubr.f32.mxu0 0.0
    %541 = vmatmul.mubr.f32.gmra.mrb[0].mxu0 %v210
    %v542 = vpop.f32.mrb[0].mxu0
    %v543 = vadd.f32 %v171, %v542
    %v544 = vpop.f32.mrb[0].mxu0
    %545 = vmatprep.mubr.f32.mxu0 0.0
    %546 = vmatmul.mubr.f32.gmra.mrb[0].mxu0 %v213
    %v547 = vpop.f32.mrb[0].mxu0
    %v548 = vadd.f32 %v171, %v547
    %v549 = vpop.f32.mrb[0].mxu0
    %550 = vmatprep.mubr.f32.mxu0 0.0
    %551 = vmatmul.mubr.f32.gmra.mrb[0].mxu0 %v216
    %v552 = vpop.f32.mrb[0].mxu0
    %v553 = vadd.f32 %v171, %v552
    %v554 = vpop.f32.mrb[0].mxu0
    %555 = vmatprep.mubr.f32.mxu0 0.0
    %556 = vmatmul.mubr.f32.gmra.mrb[0].mxu0 %v219
    %v557 = vpop.f32.mrb[0].mxu0
    %v558 = vadd.f32 %v171, %v557
    %v559 = vpop.f32.mrb[0].mxu0
    %560 = vmatprep.mubr.f32.mxu0 0.0
    %561 = vmatmul.mubr.f32.gmra.mrb[0].mxu0 %v222
    %v562 = vpop.f32.mrb[0].mxu0
    %v563 = vadd.f32 %v171, %v562
    %v564 = vpop.f32.mrb[0].mxu0
    %565 = vmatprep.mubr.f32.mxu0 0.0
    %566 = vmatmul.mubr.f32.gmra.mrb[0].mxu0 %v225
    %v567 = vpop.f32.mrb[0].mxu0
    %v568 = vadd.f32 %v171, %v567
    %v569 = vpop.f32.mrb[0].mxu0
    %570 = vmatprep.mubr.f32.mxu0 0.0
    %571 = vmatmul.mubr.f32.gmra.mrb[0].mxu0 %v228
    %v572 = vpop.f32.mrb[0].mxu0
    %v573 = vadd.f32 %v171, %v572
    %v574 = vpop.f32.mrb[0].mxu0
    %575 = vmatprep.mubr.f32.mxu0 0.0
    %576 = vmatmul.mubr.f32.gmra.mrb[0].mxu0 %v231
    %v577 = vpop.f32.mrb[0].mxu0
    %v578 = vadd.f32 %v171, %v577
    %v579 = vpop.f32.mrb[0].mxu0
    %580 = vmatprep.mubr.f32.mxu0 0.0
    %581 = vmatmul.mubr.f32.gmra.mrb[0].mxu0 %v234
    %v582 = vpop.f32.mrb[0].mxu0
    %v583 = vadd.f32 %v171, %v582
    %v584 = vpop.f32.mrb[0].mxu0
    %585 = vdwg.mxu0
    %vm586 = vcmp.gt.f32.partialorder %v303, 0.0
    %vm587 = vcmp.gt.f32.partialorder %v305, 0.0
    %vm588 = vcmp.gt.f32.partialorder %v488, 0.0
    %vm589 = vcmp.gt.f32.partialorder %v309, 0.0
    %vm590 = vcmp.gt.f32.partialorder %v311, 0.0
    %vm591 = vcmp.gt.f32.partialorder %v493, 0.0
    %vm592 = vcmp.gt.f32.partialorder %v315, 0.0
    %vm593 = vcmp.gt.f32.partialorder %v317, 0.0
    %vm594 = vcmp.gt.f32.partialorder %v498, 0.0
    %vm595 = vcmp.gt.f32.partialorder %v321, 0.0
    %vm596 = vcmp.gt.f32.partialorder %v323, 0.0
    %vm597 = vcmp.gt.f32.partialorder %v503, 0.0
    %vm598 = vcmp.gt.f32.partialorder %v327, 0.0
    %vm599 = vcmp.gt.f32.partialorder %v329, 0.0
    %vm600 = vcmp.gt.f32.partialorder %v508, 0.0
    %vm601 = vcmp.gt.f32.partialorder %v333, 0.0
    %vm602 = vcmp.gt.f32.partialorder %v335, 0.0
    %vm603 = vcmp.gt.f32.partialorder %v513, 0.0
    %vm604 = vcmp.gt.f32.partialorder %v339, 0.0
    %vm605 = vcmp.gt.f32.partialorder %v341, 0.0
    %vm606 = vcmp.gt.f32.partialorder %v518, 0.0
    %vm607 = vcmp.gt.f32.partialorder %v345, 0.0
    %vm608 = vcmp.gt.f32.partialorder %v347, 0.0
    %vm609 = vcmp.gt.f32.partialorder %v523, 0.0
    %vm610 = vcmp.gt.f32.partialorder %v351, 0.0
    %vm611 = vcmp.gt.f32.partialorder %v353, 0.0
    %vm612 = vcmp.gt.f32.partialorder %v528, 0.0
    %vm613 = vcmp.gt.f32.partialorder %v357, 0.0
    %vm614 = vcmp.gt.f32.partialorder %v359, 0.0
    %vm615 = vcmp.gt.f32.partialorder %v533, 0.0
    %vm616 = vcmp.gt.f32.partialorder %v363, 0.0
    %vm617 = vcmp.gt.f32.partialorder %v365, 0.0
    %vm618 = vcmp.gt.f32.partialorder %v538, 0.0
    %vm619 = vcmp.gt.f32.partialorder %v369, 0.0
    %vm620 = vcmp.gt.f32.partialorder %v371, 0.0
    %vm621 = vcmp.gt.f32.partialorder %v543, 0.0
    %vm622 = vcmp.gt.f32.partialorder %v375, 0.0
    %vm623 = vcmp.gt.f32.partialorder %v377, 0.0
    %vm624 = vcmp.gt.f32.partialorder %v548, 0.0
    %vm625 = vcmp.gt.f32.partialorder %v381, 0.0
    %vm626 = vcmp.gt.f32.partialorder %v383, 0.0
    %vm627 = vcmp.gt.f32.partialorder %v553, 0.0
    %vm628 = vcmp.gt.f32.partialorder %v387, 0.0
    %vm629 = vcmp.gt.f32.partialorder %v389, 0.0
    %vm630 = vcmp.gt.f32.partialorder %v558, 0.0
    %vm631 = vcmp.gt.f32.partialorder %v393, 0.0
    %vm632 = vcmp.gt.f32.partialorder %v395, 0.0
    %vm633 = vcmp.gt.f32.partialorder %v563, 0.0
    %vm634 = vcmp.gt.f32.partialorder %v399, 0.0
    %vm635 = vcmp.gt.f32.partialorder %v401, 0.0
    %vm636 = vcmp.gt.f32.partialorder %v568, 0.0
    %vm637 = vcmp.gt.f32.partialorder %v405, 0.0
    %vm638 = vcmp.gt.f32.partialorder %v407, 0.0
    %vm639 = vcmp.gt.f32.partialorder %v573, 0.0
    %vm640 = vcmp.gt.f32.partialorder %v411, 0.0
    %vm641 = vcmp.gt.f32.partialorder %v413, 0.0
    %vm642 = vcmp.gt.f32.partialorder %v578, 0.0
    %vm643 = vcmp.gt.f32.partialorder %v417, 0.0
    %vm644 = vcmp.gt.f32.partialorder %v419, 0.0
    %vm645 = vcmp.gt.f32.partialorder %v583, 0.0
    %v646 = vmin.f32 %v303, 0.0
    %v647 = vmin.f32 %v305, 0.0
    %v648 = vmin.f32 %v488, 0.0
    %v649 = vmin.f32 %v309, 0.0
    %v650 = vmin.f32 %v311, 0.0
    %v651 = vmin.f32 %v493, 0.0
    %v652 = vmin.f32 %v315, 0.0
    %v653 = vmin.f32 %v317, 0.0
    %v654 = vmin.f32 %v498, 0.0
    %v655 = vmin.f32 %v321, 0.0
    %v656 = vmin.f32 %v323, 0.0
    %v657 = vmin.f32 %v503, 0.0
    %v658 = vmin.f32 %v327, 0.0
    %v659 = vmin.f32 %v329, 0.0
    %v660 = vmin.f32 %v508, 0.0
    %v661 = vmin.f32 %v333, 0.0
    %v662 = vmin.f32 %v335, 0.0
    %v663 = vmin.f32 %v513, 0.0
    %v664 = vmin.f32 %v339, 0.0
    %v665 = vmin.f32 %v341, 0.0
    %v666 = vmin.f32 %v518, 0.0
    %v667 = vmin.f32 %v345, 0.0
    %v668 = vmin.f32 %v347, 0.0
    %v669 = vmin.f32 %v523, 0.0
    %v670 = vmin.f32 %v351, 0.0
    %v671 = vmin.f32 %v353, 0.0
    %v672 = vmin.f32 %v528, 0.0
    %v673 = vmin.f32 %v357, 0.0
    %v674 = vmin.f32 %v359, 0.0
    %v675 = vmin.f32 %v533, 0.0
    %v676 = vmin.f32 %v363, 0.0
    %v677 = vmin.f32 %v365, 0.0
    %v678 = vmin.f32 %v538, 0.0
    %v679 = vmin.f32 %v369, 0.0
    %v680 = vmin.f32 %v371, 0.0
    %v681 = vmin.f32 %v543, 0.0
    %v682 = vmin.f32 %v375, 0.0
    %v683 = vmin.f32 %v377, 0.0
    %v684 = vmin.f32 %v548, 0.0
    %v685 = vmin.f32 %v381, 0.0
    %v686 = vmin.f32 %v383, 0.0
    %v687 = vmin.f32 %v553, 0.0
    %v688 = vmin.f32 %v387, 0.0
    %v689 = vmin.f32 %v389, 0.0
    %v690 = vmin.f32 %v558, 0.0
    %v691 = vmin.f32 %v393, 0.0
    %v692 = vmin.f32 %v395, 0.0
    %v693 = vmin.f32 %v563, 0.0
    %v694 = vmin.f32 %v399, 0.0
    %v695 = vmin.f32 %v401, 0.0
    %v696 = vmin.f32 %v568, 0.0
    %v697 = vmin.f32 %v405, 0.0
    %v698 = vmin.f32 %v407, 0.0
    %v699 = vmin.f32 %v573, 0.0
    %v700 = vmin.f32 %v411, 0.0
    %v701 = vmin.f32 %v413, 0.0
    %v702 = vmin.f32 %v578, 0.0
    %v703 = vmin.f32 %v417, 0.0
    %v704 = vmin.f32 %v419, 0.0
    %v705 = vmin.f32 %v583, 0.0
    %v706 = vmul.f32 %v646, 1.442695
    %v707 = vpow.pop %v706
    %v708 = vmul.f32 %v647, 1.442695
    %v709 = vpow.pop %v708
    %v710 = vmul.f32 %v648, 1.442695
    %v711 = vpow.pop %v710
    %v712 = vmul.f32 %v649, 1.442695
    %v713 = vpow.pop %v712
    %v714 = vmul.f32 %v650, 1.442695
    %v715 = vpow.pop %v714
    %v716 = vmul.f32 %v651, 1.442695
    %v717 = vpow.pop %v716
    %v718 = vmul.f32 %v652, 1.442695
    %v719 = vpow.pop %v718
    %v720 = vmul.f32 %v653, 1.442695
    %v721 = vpow.pop %v720
    %v722 = vmul.f32 %v654, 1.442695
    %v723 = vpow.pop %v722
    %v724 = vmul.f32 %v655, 1.442695
    %v725 = vpow.pop %v724
    %v726 = vmul.f32 %v656, 1.442695
    %v727 = vpow.pop %v726
    %v728 = vmul.f32 %v657, 1.442695
    %v729 = vpow.pop %v728
    %v730 = vmul.f32 %v658, 1.442695
    %v731 = vpow.pop %v730
    %v732 = vmul.f32 %v659, 1.442695
    %v733 = vpow.pop %v732
    %v734 = vmul.f32 %v660, 1.442695
    %v735 = vpow.pop %v734
    %v736 = vmul.f32 %v661, 1.442695
    %v737 = vpow.pop %v736
    %v738 = vmul.f32 %v662, 1.442695
    %v739 = vpow.pop %v738
    %v740 = vmul.f32 %v663, 1.442695
    %v741 = vpow.pop %v740
    %v742 = vmul.f32 %v664, 1.442695
    %v743 = vpow.pop %v742
    %v744 = vmul.f32 %v665, 1.442695
    %v745 = vpow.pop %v744
    %v746 = vmul.f32 %v666, 1.442695
    %v747 = vpow.pop %v746
    %v748 = vmul.f32 %v667, 1.442695
    %v749 = vpow.pop %v748
    %v750 = vmul.f32 %v668, 1.442695
    %v751 = vpow.pop %v750
    %v752 = vmul.f32 %v669, 1.442695
    %v753 = vpow.pop %v752
    %v754 = vmul.f32 %v670, 1.442695
    %v755 = vpow.pop %v754
    %v756 = vmul.f32 %v671, 1.442695
    %v757 = vpow.pop %v756
    %v758 = vmul.f32 %v672, 1.442695
    %v759 = vpow.pop %v758
    %v760 = vmul.f32 %v673, 1.442695
    %v761 = vpow.pop %v760
    %v762 = vmul.f32 %v674, 1.442695
    %v763 = vpow.pop %v762
    %v764 = vmul.f32 %v675, 1.442695
    %v765 = vpow.pop %v764
    %v766 = vmul.f32 %v676, 1.442695
    %v767 = vpow.pop %v766
    %v768 = vmul.f32 %v677, 1.442695
    %v769 = vpow.pop %v768
    %v770 = vmul.f32 %v678, 1.442695
    %v771 = vpow.pop %v770
    %v772 = vmul.f32 %v679, 1.442695
    %v773 = vpow.pop %v772
    %v774 = vmul.f32 %v680, 1.442695
    %v775 = vpow.pop %v774
    %v776 = vmul.f32 %v681, 1.442695
    %v777 = vpow.pop %v776
    %v778 = vmul.f32 %v682, 1.442695
    %v779 = vpow.pop %v778
    %v780 = vmul.f32 %v683, 1.442695
    %v781 = vpow.pop %v780
    %v782 = vmul.f32 %v684, 1.442695
    %v783 = vpow.pop %v782
    %v784 = vmul.f32 %v685, 1.442695
    %v785 = vpow.pop %v784
    %v786 = vmul.f32 %v686, 1.442695
    %v787 = vpow.pop %v786
    %v788 = vmul.f32 %v687, 1.442695
    %v789 = vpow.pop %v788
    %v790 = vmul.f32 %v688, 1.442695
    %v791 = vpow.pop %v790
    %v792 = vmul.f32 %v689, 1.442695
    %v793 = vpow.pop %v792
    %v794 = vmul.f32 %v690, 1.442695
    %v795 = vpow.pop %v794
    %v796 = vmul.f32 %v691, 1.442695
    %v797 = vpow.pop %v796
    %v798 = vmul.f32 %v692, 1.442695
    %v799 = vpow.pop %v798
    %v800 = vmul.f32 %v693, 1.442695
    %v801 = vpow.pop %v800
    %v802 = vmul.f32 %v694, 1.442695
    %v803 = vpow.pop %v802
    %v804 = vmul.f32 %v695, 1.442695
    %v805 = vpow.pop %v804
    %v806 = vmul.f32 %v696, 1.442695
    %v807 = vpow.pop %v806
    %v808 = vmul.f32 %v697, 1.442695
    %v809 = vpow.pop %v808
    %v810 = vmul.f32 %v698, 1.442695
    %v811 = vpow.pop %v810
    %v812 = vmul.f32 %v699, 1.442695
    %v813 = vpow.pop %v812
    %v814 = vmul.f32 %v700, 1.442695
    %v815 = vpow.pop %v814
    %v816 = vmul.f32 %v701, 1.442695
    %v817 = vpow.pop %v816
    %v818 = vmul.f32 %v702, 1.442695
    %v819 = vpow.pop %v818
    %v820 = vmul.f32 %v703, 1.442695
    %v821 = vpow.pop %v820
    %v822 = vmul.f32 %v704, 1.442695
    %v823 = vpow.pop %v822
    %v824 = vmul.f32 %v705, 1.442695
    %v825 = vpow.pop %v824
    %v826 = vsub.f32 %v707, 1.0
    %v827 = vsub.f32 %v709, 1.0
    %v828 = vsub.f32 %v711, 1.0
    %v829 = vsub.f32 %v713, 1.0
    %v830 = vsub.f32 %v715, 1.0
    %v831 = vsub.f32 %v717, 1.0
    %v832 = vsub.f32 %v719, 1.0
    %v833 = vsub.f32 %v721, 1.0
    %v834 = vsub.f32 %v723, 1.0
    %v835 = vsub.f32 %v725, 1.0
    %v836 = vsub.f32 %v727, 1.0
    %v837 = vsub.f32 %v729, 1.0
    %v838 = vsub.f32 %v731, 1.0
    %v839 = vsub.f32 %v733, 1.0
    %v840 = vsub.f32 %v735, 1.0
    %v841 = vsub.f32 %v737, 1.0
    %v842 = vsub.f32 %v739, 1.0
    %v843 = vsub.f32 %v741, 1.0
    %v844 = vsub.f32 %v743, 1.0
    %v845 = vsub.f32 %v745, 1.0
    %v846 = vsub.f32 %v747, 1.0
    %v847 = vsub.f32 %v749, 1.0
    %v848 = vsub.f32 %v751, 1.0
    %v849 = vsub.f32 %v753, 1.0
    %v850 = vsub.f32 %v755, 1.0
    %v851 = vsub.f32 %v757, 1.0
    %v852 = vsub.f32 %v759, 1.0
    %v853 = vsub.f32 %v761, 1.0
    %v854 = vsub.f32 %v763, 1.0
    %v855 = vsub.f32 %v765, 1.0
    %v856 = vsub.f32 %v767, 1.0
    %v857 = vsub.f32 %v769, 1.0
    %v858 = vsub.f32 %v771, 1.0
    %v859 = vsub.f32 %v773, 1.0
    %v860 = vsub.f32 %v775, 1.0
    %v861 = vsub.f32 %v777, 1.0
    %v862 = vsub.f32 %v779, 1.0
    %v863 = vsub.f32 %v781, 1.0
    %v864 = vsub.f32 %v783, 1.0
    %v865 = vsub.f32 %v785, 1.0
    %v866 = vsub.f32 %v787, 1.0
    %v867 = vsub.f32 %v789, 1.0
    %v868 = vsub.f32 %v791, 1.0
    %v869 = vsub.f32 %v793, 1.0
    %v870 = vsub.f32 %v795, 1.0
    %v871 = vsub.f32 %v797, 1.0
    %v872 = vsub.f32 %v799, 1.0
    %v873 = vsub.f32 %v801, 1.0
    %v874 = vsub.f32 %v803, 1.0
    %v875 = vsub.f32 %v805, 1.0
    %v876 = vsub.f32 %v807, 1.0
    %v877 = vsub.f32 %v809, 1.0
    %v878 = vsub.f32 %v811, 1.0
    %v879 = vsub.f32 %v813, 1.0
    %v880 = vsub.f32 %v815, 1.0
    %v881 = vsub.f32 %v817, 1.0
    %v882 = vsub.f32 %v819, 1.0
    %v883 = vsub.f32 %v821, 1.0
    %v884 = vsub.f32 %v823, 1.0
    %v885 = vsub.f32 %v825, 1.0
    %v886 = vsel %vm586, %v303, %v826
    %v887 = vsel %vm587, %v305, %v827
    %v888 = vsel %vm588, %v488, %v828
    %v889 = vsel %vm589, %v309, %v829
    %v890 = vsel %vm590, %v311, %v830
    %v891 = vsel %vm591, %v493, %v831
    %v892 = vsel %vm592, %v315, %v832
    %v893 = vsel %vm593, %v317, %v833
    %v894 = vsel %vm594, %v498, %v834
    %v895 = vsel %vm595, %v321, %v835
    %v896 = vsel %vm596, %v323, %v836
    %v897 = vsel %vm597, %v503, %v837
    %v898 = vsel %vm598, %v327, %v838
    %v899 = vsel %vm599, %v329, %v839
    %v900 = vsel %vm600, %v508, %v840
    %v901 = vsel %vm601, %v333, %v841
    %v902 = vsel %vm602, %v335, %v842
    %v903 = vsel %vm603, %v513, %v843
    %v904 = vsel %vm604, %v339, %v844
    %v905 = vsel %vm605, %v341, %v845
    %v906 = vsel %vm606, %v518, %v846
    %v907 = vsel %vm607, %v345, %v847
    %v908 = vsel %vm608, %v347, %v848
    %v909 = vsel %vm609, %v523, %v849
    %v910 = vsel %vm610, %v351, %v850
    %v911 = vsel %vm611, %v353, %v851
    %v912 = vsel %vm612, %v528, %v852
    %v913 = vsel %vm613, %v357, %v853
    %v914 = vsel %vm614, %v359, %v854
    %v915 = vsel %vm615, %v533, %v855
    %v916 = vsel %vm616, %v363, %v856
    %v917 = vsel %vm617, %v365, %v857
    %v918 = vsel %vm618, %v538, %v858
    %v919 = vsel %vm619, %v369, %v859
    %v920 = vsel %vm620, %v371, %v860
    %v921 = vsel %vm621, %v543, %v861
    %v922 = vsel %vm622, %v375, %v862
    %v923 = vsel %vm623, %v377, %v863
    %v924 = vsel %vm624, %v548, %v864
    %v925 = vsel %vm625, %v381, %v865
    %v926 = vsel %vm626, %v383, %v866
    %v927 = vsel %vm627, %v553, %v867
    %v928 = vsel %vm628, %v387, %v868
    %v929 = vsel %vm629, %v389, %v869
    %v930 = vsel %vm630, %v558, %v870
    %v931 = vsel %vm631, %v393, %v871
    %v932 = vsel %vm632, %v395, %v872
    %v933 = vsel %vm633, %v563, %v873
    %v934 = vsel %vm634, %v399, %v874
    %v935 = vsel %vm635, %v401, %v875
    %v936 = vsel %vm636, %v568, %v876
    %v937 = vsel %vm637, %v405, %v877
    %v938 = vsel %vm638, %v407, %v878
    %v939 = vsel %vm639, %v573, %v879
    %v940 = vsel %vm640, %v411, %v880
    %v941 = vsel %vm641, %v413, %v881
    %v942 = vsel %vm642, %v578, %v882
    %v943 = vsel %vm643, %v417, %v883
    %v944 = vsel %vm644, %v419, %v884
    %v945 = vsel %vm645, %v583, %v885
    %v946 = vld [vmem:[%s3] sm:$0xff]
    %v947 = vld [vmem:[%s3 + $0x8] sm:$0xff]
    %v948 = vld [vmem:[%s3 + $0x10] sm:$0xff]
    %v949 = vld [vmem:[%s3 + $0x18] sm:$0xff]
    %v950 = vld [vmem:[%s3 + $0x20] sm:$0xff]
    %v951 = vld [vmem:[%s3 + $0x28] sm:$0xff]
    %v952 = vld [vmem:[%s3 + $0x30] sm:$0xff]
    %v953 = vld [vmem:[%s3 + $0x38] sm:$0xff]
    %v954 = vld [vmem:[%s3 + $0x40] sm:$0xff]
    %v955 = vld [vmem:[%s3 + $0x48] sm:$0xff]
    %v956 = vld [vmem:[%s3 + $0x50] sm:$0xff]
    %v957 = vld [vmem:[%s3 + $0x58] sm:$0xff]
    %v958 = vld [vmem:[%s3 + $0x60] sm:$0xff]
    %v959 = vld [vmem:[%s3 + $0x68] sm:$0xff]
    %v960 = vld [vmem:[%s3 + $0x70] sm:$0xff]
    %v961 = vld [vmem:[%s3 + $0x78] sm:$0xff]
    %v962 = vld [vmem:[%s3 + $0x80] sm:$0xff]
    %v963 = vld [vmem:[%s3 + $0x88] sm:$0xff]
    %v964 = vld [vmem:[%s3 + $0x90] sm:$0xff]
    %v965 = vld [vmem:[%s3 + $0x98] sm:$0xff]
    %v966 = vld [vmem:[%s3 + $0xa0] sm:$0xff]
    %v967 = vld [vmem:[%s3 + $0xa8] sm:$0xff]
    %v968 = vld [vmem:[%s3 + $0xb0] sm:$0xff]
    %v969 = vld [vmem:[%s3 + $0xb8] sm:$0xff]
    %v970 = vld [vmem:[%s3 + $0xc0] sm:$0xff]
    %v971 = vld [vmem:[%s3 + $0xc8] sm:$0xff]
    %v972 = vld [vmem:[%s3 + $0xd0] sm:$0xff]
    %v973 = vld [vmem:[%s3 + $0xd8] sm:$0xff]
    %v974 = vld [vmem:[%s3 + $0xe0] sm:$0xff]
    %v975 = vld [vmem:[%s3 + $0xe8] sm:$0xff]
    %v976 = vld [vmem:[%s3 + $0xf0] sm:$0xff]
    %v977 = vld [vmem:[%s3 + $0xf8] sm:$0xff]
    %v978 = vld [vmem:[%s3 + $0x100] sm:$0xff]
    %v979 = vld [vmem:[%s3 + $0x108] sm:$0xff]
    %v980 = vld [vmem:[%s3 + $0x110] sm:$0xff]
    %v981 = vld [vmem:[%s3 + $0x118] sm:$0xff]
    %v982 = vld [vmem:[%s3 + $0x120] sm:$0xff]
    %v983 = vld [vmem:[%s3 + $0x128] sm:$0xff]
    %v984 = vld [vmem:[%s3 + $0x130] sm:$0xff]
    %v985 = vld [vmem:[%s3 + $0x138] sm:$0xff]
    %v986 = vld [vmem:[%s3 + $0x140] sm:$0xff]
    %v987 = vld [vmem:[%s3 + $0x148] sm:$0xff]
    %v988 = vld [vmem:[%s3 + $0x150] sm:$0xff]
    %v989 = vld [vmem:[%s3 + $0x158] sm:$0xff]
    %v990 = vld [vmem:[%s3 + $0x160] sm:$0xff]
    %v991 = vld [vmem:[%s3 + $0x168] sm:$0xff]
    %v992 = vld [vmem:[%s3 + $0x170] sm:$0xff]
    %v993 = vld [vmem:[%s3 + $0x178] sm:$0xff]
    %v994 = vld [vmem:[%s3 + $0x180] sm:$0xff]
    %v995 = vld [vmem:[%s3 + $0x188] sm:$0xff]
    %v996 = vld [vmem:[%s3 + $0x190] sm:$0xff]
    %v997 = vld [vmem:[%s3 + $0x198] sm:$0xff]
    %v998 = vld [vmem:[%s3 + $0x1a0] sm:$0xff]
    %v999 = vld [vmem:[%s3 + $0x1a8] sm:$0xff]
    %v1000 = vld [vmem:[%s3 + $0x1b0] sm:$0xff]
    %v1001 = vld [vmem:[%s3 + $0x1b8] sm:$0xff]
    %v1002 = vld [vmem:[%s3 + $0x1c0] sm:$0xff]
    %v1003 = vld [vmem:[%s3 + $0x1c8] sm:$0xff]
    %v1004 = vld [vmem:[%s3 + $0x1d0] sm:$0xff]
    %v1005 = vld [vmem:[%s3 + $0x1d8] sm:$0xff]
    %v1006 = vld [vmem:[%s3 + $0x1e0] sm:$0xff]
    %v1007 = vld [vmem:[%s3 + $0x1e8] sm:$0xff]
    %v1008 = vld [vmem:[%s3 + $0x1f0] sm:$0xff]
    %v1009 = vld [vmem:[%s3 + $0x1f8] sm:$0xff]
    %v1010 = vld [vmem:[%s3 + $0x200] sm:$0xff]
    %v1011 = vld [vmem:[%s3 + $0x208] sm:$0xff]
    %v1012 = vld [vmem:[%s3 + $0x210] sm:$0xff]
    %v1013 = vld [vmem:[%s3 + $0x218] sm:$0xff]
    %v1014 = vld [vmem:[%s3 + $0x220] sm:$0xff]
    %v1015 = vld [vmem:[%s3 + $0x228] sm:$0xff]
    %v1016 = vld [vmem:[%s3 + $0x230] sm:$0xff]
    %v1017 = vld [vmem:[%s3 + $0x238] sm:$0xff]
    %v1018 = vld [vmem:[%s4] sm:$0x3]
    %v1020 = vlaneseq
    %v1021 = vshrl.u32 %v1020, 7
    %v1022 = vsub.s32 0, %v1021
    %v1023 = vrot.slane %v1018, %v1022
    %v1024 = vlaneseq
    %v1025 = vshrl.u32 %v1024, 7
    %v1026 = vsub.s32 1, %v1025
    %v1027 = vrot.slane %v1018, %v1026
    %vm1030 = vcmask 261120
    %v1032 = vsel %vm1030, %v888, 0
    %v1035 = vsel %vm1030, %v891, 0
    %v1038 = vsel %vm1030, %v894, 0
    %v1041 = vsel %vm1030, %v897, 0
    %v1044 = vsel %vm1030, %v900, 0
    %v1047 = vsel %vm1030, %v903, 0
    %v1050 = vsel %vm1030, %v906, 0
    %v1053 = vsel %vm1030, %v909, 0
    %v1056 = vsel %vm1030, %v912, 0
    %v1059 = vsel %vm1030, %v915, 0
    %v1062 = vsel %vm1030, %v918, 0
    %v1065 = vsel %vm1030, %v921, 0
    %v1068 = vsel %vm1030, %v924, 0
    %v1071 = vsel %vm1030, %v927, 0
    %v1074 = vsel %vm1030, %v930, 0
    %v1077 = vsel %vm1030, %v933, 0
    %v1080 = vsel %vm1030, %v936, 0
    %v1083 = vsel %vm1030, %v939, 0
    %v1086 = vsel %vm1030, %v942, 0
    %v1089 = vsel %vm1030, %v945, 0
    %1091 = vmatprep.subr.mxu0 %v947
    %1092 = vmatpush1.msra.mxu0 %v946
    %1093 = vmatprep.subr.mxu0 %v949
    %1094 = vmatpush1.msra.mxu0 %v948
    %1095 = vmatprep.subr.mxu0 %v951
    %1096 = vmatpush1.msra.mxu0 %v950
    %1097 = vmatprep.subr.mxu0 %v953
    %1098 = vmatpush1.msra.mxu0 %v952
    %1099 = vmatprep.subr.mxu0 %v955
    %1100 = vmatpush1.msra.mxu0 %v954
    %1101 = vmatprep.subr.mxu0 %v957
    %1102 = vmatpush1.msra.mxu0 %v956
    %1103 = vmatprep.subr.mxu0 %v959
    %1104 = vmatpush1.msra.mxu0 %v958
    %1105 = vmatprep.subr.mxu0 %v961
    %1106 = vmatpush1.msra.mxu0 %v960
    %1107 = vmatprep.subr.mxu0 %v963
    %1108 = vmatpush1.msra.mxu0 %v962
    %1109 = vmatprep.subr.mxu0 %v965
    %1110 = vmatpush1.msra.mxu0 %v964
    %1111 = vmatprep.subr.mxu0 %v967
    %1112 = vmatpush1.msra.mxu0 %v966
    %1113 = vmatprep.subr.mxu0 %v969
    %1114 = vmatpush1.msra.mxu0 %v968
    %1115 = vmatprep.subr.mxu0 %v971
    %1116 = vmatpush1.msra.mxu0 %v970
    %1117 = vmatprep.subr.mxu0 %v973
    %1118 = vmatpush1.msra.mxu0 %v972
    %1119 = vmatprep.subr.mxu0 %v975
    %1120 = vmatpush1.msra.mxu0 %v974
    %1121 = vmatprep.subr.mxu0 %v977
    %1122 = vmatpush1.msra.mxu0 %v976
    %1123 = vmatprep.subr.mxu0 %v979
    %1124 = vmatpush1.msra.mxu0 %v978
    %1125 = vmatprep.subr.mxu0 %v981
    %1126 = vmatpush1.msra.mxu0 %v980
    %1127 = vmatprep.subr.mxu0 %v983
    %1128 = vmatpush1.msra.mxu0 %v982
    %1129 = vmatprep.subr.mxu0 %v985
    %1130 = vmatpush1.msra.mxu0 %v984
    %1131 = vmatprep.subr.mxu0 %v987
    %1132 = vmatpush1.msra.mxu0 %v986
    %1133 = vmatprep.subr.mxu0 %v989
    %1134 = vmatpush1.msra.mxu0 %v988
    %1135 = vmatprep.subr.mxu0 %v991
    %1136 = vmatpush1.msra.mxu0 %v990
    %1137 = vmatprep.subr.mxu0 %v993
    %1138 = vmatpush1.msra.mxu0 %v992
    %1139 = vmatprep.subr.mxu0 %v995
    %1140 = vmatpush1.msra.mxu0 %v994
    %1141 = vmatprep.subr.mxu0 %v997
    %1142 = vmatpush1.msra.mxu0 %v996
    %1143 = vmatprep.subr.mxu0 %v999
    %1144 = vmatpush1.msra.mxu0 %v998
    %1145 = vmatprep.subr.mxu0 %v1001
    %1146 = vmatpush1.msra.mxu0 %v1000
    %1147 = vmatprep.subr.mxu0 %v1003
    %1148 = vmatpush1.msra.mxu0 %v1002
    %1149 = vmatprep.subr.mxu0 %v1005
    %1150 = vmatpush1.msra.mxu0 %v1004
    %1151 = vmatprep.subr.mxu0 %v1007
    %1152 = vmatpush1.msra.mxu0 %v1006
    %1153 = vmatprep.subr.mxu0 %v1009
    %1154 = vmatpush1.msra.mxu0 %v1008
    %1155 = vmatprep.mubr.f32.mxu0 %v887
    %1156 = vmatmul.mubr.f32.gmra.mrb[0].mxu0 %v886
    %v1157 = vpop.f32.mrb[0].mxu0
    %v1158 = vadd.f32 %v1023, %v1157
    %v1159 = vpop.f32.mrb[0].mxu0
    %v1160 = vadd.f32 %v1027, %v1159
    %1161 = vmatprep.mubr.f32.mxu0 %v890
    %1162 = vmatmul.mubr.f32.gmra.mrb[0].mxu0 %v889
    %v1163 = vpop.f32.mrb[0].mxu0
    %v1164 = vadd.f32 %v1023, %v1163
    %v1165 = vpop.f32.mrb[0].mxu0
    %v1166 = vadd.f32 %v1027, %v1165
    %1167 = vmatprep.mubr.f32.mxu0 %v893
    %1168 = vmatmul.mubr.f32.gmra.mrb[0].mxu0 %v892
    %v1169 = vpop.f32.mrb[0].mxu0
    %v1170 = vadd.f32 %v1023, %v1169
    %v1171 = vpop.f32.mrb[0].mxu0
    %v1172 = vadd.f32 %v1027, %v1171
    %1173 = vmatprep.mubr.f32.mxu0 %v896
    %1174 = vmatmul.mubr.f32.gmra.mrb[0].mxu0 %v895
    %v1175 = vpop.f32.mrb[0].mxu0
    %v1176 = vadd.f32 %v1023, %v1175
    %v1177 = vpop.f32.mrb[0].mxu0
    %v1178 = vadd.f32 %v1027, %v1177
    %1179 = vmatprep.mubr.f32.mxu0 %v899
    %1180 = vmatmul.mubr.f32.gmra.mrb[0].mxu0 %v898
    %v1181 = vpop.f32.mrb[0].mxu0
    %v1182 = vadd.f32 %v1023, %v1181
    %v1183 = vpop.f32.mrb[0].mxu0
    %v1184 = vadd.f32 %v1027, %v1183
    %1185 = vmatprep.mubr.f32.mxu0 %v902
    %1186 = vmatmul.mubr.f32.gmra.mrb[0].mxu0 %v901
    %v1187 = vpop.f32.mrb[0].mxu0
    %v1188 = vadd.f32 %v1023, %v1187
    %v1189 = vpop.f32.mrb[0].mxu0
    %v1190 = vadd.f32 %v1027, %v1189
    %1191 = vmatprep.mubr.f32.mxu0 %v905
    %1192 = vmatmul.mubr.f32.gmra.mrb[0].mxu0 %v904
    %v1193 = vpop.f32.mrb[0].mxu0
    %v1194 = vadd.f32 %v1023, %v1193
    %v1195 = vpop.f32.mrb[0].mxu0
    %v1196 = vadd.f32 %v1027, %v1195
    %1197 = vmatprep.mubr.f32.mxu0 %v908
    %1198 = vmatmul.mubr.f32.gmra.mrb[0].mxu0 %v907
    %v1199 = vpop.f32.mrb[0].mxu0
    %v1200 = vadd.f32 %v1023, %v1199
    %v1201 = vpop.f32.mrb[0].mxu0
    %v1202 = vadd.f32 %v1027, %v1201
    %1203 = vmatprep.mubr.f32.mxu0 %v911
    %1204 = vmatmul.mubr.f32.gmra.mrb[0].mxu0 %v910
    %v1205 = vpop.f32.mrb[0].mxu0
    %v1206 = vadd.f32 %v1023, %v1205
    %v1207 = vpop.f32.mrb[0].mxu0
    %v1208 = vadd.f32 %v1027, %v1207
    %1209 = vmatprep.mubr.f32.mxu0 %v914
    %1210 = vmatmul.mubr.f32.gmra.mrb[0].mxu0 %v913
    %v1211 = vpop.f32.mrb[0].mxu0
    %v1212 = vadd.f32 %v1023, %v1211
    %v1213 = vpop.f32.mrb[0].mxu0
    %v1214 = vadd.f32 %v1027, %v1213
    %1215 = vmatprep.mubr.f32.mxu0 %v917
    %1216 = vmatmul.mubr.f32.gmra.mrb[0].mxu0 %v916
    %v1217 = vpop.f32.mrb[0].mxu0
    %v1218 = vadd.f32 %v1023, %v1217
    %v1219 = vpop.f32.mrb[0].mxu0
    %v1220 = vadd.f32 %v1027, %v1219
    %1221 = vmatprep.mubr.f32.mxu0 %v920
    %1222 = vmatmul.mubr.f32.gmra.mrb[0].mxu0 %v919
    %v1223 = vpop.f32.mrb[0].mxu0
    %v1224 = vadd.f32 %v1023, %v1223
    %v1225 = vpop.f32.mrb[0].mxu0
    %v1226 = vadd.f32 %v1027, %v1225
    %1227 = vmatprep.mubr.f32.mxu0 %v923
    %1228 = vmatmul.mubr.f32.gmra.mrb[0].mxu0 %v922
    %v1229 = vpop.f32.mrb[0].mxu0
    %v1230 = vadd.f32 %v1023, %v1229
    %v1231 = vpop.f32.mrb[0].mxu0
    %v1232 = vadd.f32 %v1027, %v1231
    %1233 = vmatprep.mubr.f32.mxu0 %v926
    %1234 = vmatmul.mubr.f32.gmra.mrb[0].mxu0 %v925
    %v1235 = vpop.f32.mrb[0].mxu0
    %v1236 = vadd.f32 %v1023, %v1235
    %v1237 = vpop.f32.mrb[0].mxu0
    %v1238 = vadd.f32 %v1027, %v1237
    %1239 = vmatprep.mubr.f32.mxu0 %v929
    %1240 = vmatmul.mubr.f32.gmra.mrb[0].mxu0 %v928
    %v1241 = vpop.f32.mrb[0].mxu0
    %v1242 = vadd.f32 %v1023, %v1241
    %v1243 = vpop.f32.mrb[0].mxu0
    %v1244 = vadd.f32 %v1027, %v1243
    %1245 = vmatprep.mubr.f32.mxu0 %v932
    %1246 = vmatmul.mubr.f32.gmra.mrb[0].mxu0 %v931
    %v1247 = vpop.f32.mrb[0].mxu0
    %v1248 = vadd.f32 %v1023, %v1247
    %v1249 = vpop.f32.mrb[0].mxu0
    %v1250 = vadd.f32 %v1027, %v1249
    %1251 = vmatprep.mubr.f32.mxu0 %v935
    %1252 = vmatmul.mubr.f32.gmra.mrb[0].mxu0 %v934
    %v1253 = vpop.f32.mrb[0].mxu0
    %v1254 = vadd.f32 %v1023, %v1253
    %v1255 = vpop.f32.mrb[0].mxu0
    %v1256 = vadd.f32 %v1027, %v1255
    %1257 = vmatprep.mubr.f32.mxu0 %v938
    %1258 = vmatmul.mubr.f32.gmra.mrb[0].mxu0 %v937
    %v1259 = vpop.f32.mrb[0].mxu0
    %v1260 = vadd.f32 %v1023, %v1259
    %v1261 = vpop.f32.mrb[0].mxu0
    %v1262 = vadd.f32 %v1027, %v1261
    %1263 = vmatprep.mubr.f32.mxu0 %v941
    %1264 = vmatmul.mubr.f32.gmra.mrb[0].mxu0 %v940
    %v1265 = vpop.f32.mrb[0].mxu0
    %v1266 = vadd.f32 %v1023, %v1265
    %v1267 = vpop.f32.mrb[0].mxu0
    %v1268 = vadd.f32 %v1027, %v1267
    %1269 = vmatprep.mubr.f32.mxu0 %v944
    %1270 = vmatmul.mubr.f32.gmra.mrb[0].mxu0 %v943
    %v1271 = vpop.f32.mrb[0].mxu0
    %v1272 = vadd.f32 %v1023, %v1271
    %v1273 = vpop.f32.mrb[0].mxu0
    %v1274 = vadd.f32 %v1027, %v1273
    %1275 = vdwg.mxu0
    %1276 = vmatprep.subr.mxu0 %v1011
    %1277 = vmatpush1.msra.mxu0 %v1010
    %1278 = vmatprep.subr.mxu0 %v1013
    %1279 = vmatpush1.msra.mxu0 %v1012
    %1280 = vmatprep.subr.mxu0 %v1015
    %1281 = vmatpush1.msra.mxu0 %v1014
    %1282 = vmatprep.subr.mxu0 %v1017
    %1283 = vmatpush1.msra.mxu0 %v1016
    %1284 = vmatprep.subr.mxu0 0.0
    %1285 = vmatpush1.msra.mxu0 0.0
    %1286 = vmatprep.subr.mxu0 0.0
    %1287 = vmatpush1.msra.mxu0 0.0
    %1288 = vmatprep.subr.mxu0 0.0
    %1289 = vmatpush1.msra.mxu0 0.0
    %1290 = vmatprep.subr.mxu0 0.0
    %1291 = vmatpush1.msra.mxu0 0.0
    %1292 = vmatprep.subr.mxu0 0.0
    %1293 = vmatpush1.msra.mxu0 0.0
    %1294 = vmatprep.subr.mxu0 0.0
    %1295 = vmatpush1.msra.mxu0 0.0
    %1296 = vmatprep.subr.mxu0 0.0
    %1297 = vmatpush1.msra.mxu0 0.0
    %1298 = vmatprep.subr.mxu0 0.0
    %1299 = vmatpush1.msra.mxu0 0.0
    %1300 = vmatprep.subr.mxu0 0.0
    %1301 = vmatpush1.msra.mxu0 0.0
    %1302 = vmatprep.subr.mxu0 0.0
    %1303 = vmatpush1.msra.mxu0 0.0
    %1304 = vmatprep.subr.mxu0 0.0
    %1305 = vmatpush1.msra.mxu0 0.0
    %1306 = vmatprep.subr.mxu0 0.0
    %1307 = vmatpush1.msra.mxu0 0.0
    %1308 = vmatprep.subr.mxu0 0.0
    %1309 = vmatpush1.msra.mxu0 0.0
    %1310 = vmatprep.subr.mxu0 0.0
    %1311 = vmatpush1.msra.mxu0 0.0
    %1312 = vmatprep.subr.mxu0 0.0
    %1313 = vmatpush1.msra.mxu0 0.0
    %1314 = vmatprep.subr.mxu0 0.0
    %1315 = vmatpush1.msra.mxu0 0.0
    %1316 = vmatprep.subr.mxu0 0.0
    %1317 = vmatpush1.msra.mxu0 0.0
    %1318 = vmatprep.subr.mxu0 0.0
    %1319 = vmatpush1.msra.mxu0 0.0
    %1320 = vmatprep.subr.mxu0 0.0
    %1321 = vmatpush1.msra.mxu0 0.0
    %1322 = vmatprep.subr.mxu0 0.0
    %1323 = vmatpush1.msra.mxu0 0.0
    %1324 = vmatprep.subr.mxu0 0.0
    %1325 = vmatpush1.msra.mxu0 0.0
    %1326 = vmatprep.subr.mxu0 0.0
    %1327 = vmatpush1.msra.mxu0 0.0
    %1328 = vmatprep.subr.mxu0 0.0
    %1329 = vmatpush1.msra.mxu0 0.0
    %1330 = vmatprep.subr.mxu0 0.0
    %1331 = vmatpush1.msra.mxu0 0.0
    %1332 = vmatprep.subr.mxu0 0.0
    %1333 = vmatpush1.msra.mxu0 0.0
    %1334 = vmatprep.subr.mxu0 0.0
    %1335 = vmatpush1.msra.mxu0 0.0
    %1336 = vmatprep.subr.mxu0 0.0
    %1337 = vmatpush1.msra.mxu0 0.0
    %1338 = vmatprep.subr.mxu0 0.0
    %1339 = vmatpush1.msra.mxu0 0.0
    %1340 = vmatprep.mubr.f32.mxu0 0.0
    %1341 = vmatmul.mubr.f32.gmra.mrb[0].mxu0 %v1032
    %v1342 = vpop.f32.mrb[0].mxu0
    %v1343 = vadd.f32 %v1158, %v1342
    %v1344 = vpop.f32.mrb[0].mxu0
    %v1345 = vadd.f32 %v1160, %v1344
    %1346 = vmatprep.mubr.f32.mxu0 0.0
    %1347 = vmatmul.mubr.f32.gmra.mrb[0].mxu0 %v1035
    %v1348 = vpop.f32.mrb[0].mxu0
    %v1349 = vadd.f32 %v1164, %v1348
    %v1350 = vpop.f32.mrb[0].mxu0
    %v1351 = vadd.f32 %v1166, %v1350
    %1352 = vmatprep.mubr.f32.mxu0 0.0
    %1353 = vmatmul.mubr.f32.gmra.mrb[0].mxu0 %v1038
    %v1354 = vpop.f32.mrb[0].mxu0
    %v1355 = vadd.f32 %v1170, %v1354
    %v1356 = vpop.f32.mrb[0].mxu0
    %v1357 = vadd.f32 %v1172, %v1356
    %1358 = vmatprep.mubr.f32.mxu0 0.0
    %1359 = vmatmul.mubr.f32.gmra.mrb[0].mxu0 %v1041
    %v1360 = vpop.f32.mrb[0].mxu0
    %v1361 = vadd.f32 %v1176, %v1360
    %v1362 = vpop.f32.mrb[0].mxu0
    %v1363 = vadd.f32 %v1178, %v1362
    %1364 = vmatprep.mubr.f32.mxu0 0.0
    %1365 = vmatmul.mubr.f32.gmra.mrb[0].mxu0 %v1044
    %v1366 = vpop.f32.mrb[0].mxu0
    %v1367 = vadd.f32 %v1182, %v1366
    %v1368 = vpop.f32.mrb[0].mxu0
    %v1369 = vadd.f32 %v1184, %v1368
    %1370 = vmatprep.mubr.f32.mxu0 0.0
    %1371 = vmatmul.mubr.f32.gmra.mrb[0].mxu0 %v1047
    %v1372 = vpop.f32.mrb[0].mxu0
    %v1373 = vadd.f32 %v1188, %v1372
    %v1374 = vpop.f32.mrb[0].mxu0
    %v1375 = vadd.f32 %v1190, %v1374
    %1376 = vmatprep.mubr.f32.mxu0 0.0
    %1377 = vmatmul.mubr.f32.gmra.mrb[0].mxu0 %v1050
    %v1378 = vpop.f32.mrb[0].mxu0
    %v1379 = vadd.f32 %v1194, %v1378
    %v1380 = vpop.f32.mrb[0].mxu0
    %v1381 = vadd.f32 %v1196, %v1380
    %1382 = vmatprep.mubr.f32.mxu0 0.0
    %1383 = vmatmul.mubr.f32.gmra.mrb[0].mxu0 %v1053
    %v1384 = vpop.f32.mrb[0].mxu0
    %v1385 = vadd.f32 %v1200, %v1384
    %v1386 = vpop.f32.mrb[0].mxu0
    %v1387 = vadd.f32 %v1202, %v1386
    %1388 = vmatprep.mubr.f32.mxu0 0.0
    %1389 = vmatmul.mubr.f32.gmra.mrb[0].mxu0 %v1056
    %v1390 = vpop.f32.mrb[0].mxu0
    %v1391 = vadd.f32 %v1206, %v1390
    %v1392 = vpop.f32.mrb[0].mxu0
    %v1393 = vadd.f32 %v1208, %v1392
    %1394 = vmatprep.mubr.f32.mxu0 0.0
    %1395 = vmatmul.mubr.f32.gmra.mrb[0].mxu0 %v1059
    %v1396 = vpop.f32.mrb[0].mxu0
    %v1397 = vadd.f32 %v1212, %v1396
    %v1398 = vpop.f32.mrb[0].mxu0
    %v1399 = vadd.f32 %v1214, %v1398
    %1400 = vmatprep.mubr.f32.mxu0 0.0
    %1401 = vmatmul.mubr.f32.gmra.mrb[0].mxu0 %v1062
    %v1402 = vpop.f32.mrb[0].mxu0
    %v1403 = vadd.f32 %v1218, %v1402
    %v1404 = vpop.f32.mrb[0].mxu0
    %v1405 = vadd.f32 %v1220, %v1404
    %1406 = vmatprep.mubr.f32.mxu0 0.0
    %1407 = vmatmul.mubr.f32.gmra.mrb[0].mxu0 %v1065
    %v1408 = vpop.f32.mrb[0].mxu0
    %v1409 = vadd.f32 %v1224, %v1408
    %v1410 = vpop.f32.mrb[0].mxu0
    %v1411 = vadd.f32 %v1226, %v1410
    %1412 = vmatprep.mubr.f32.mxu0 0.0
    %1413 = vmatmul.mubr.f32.gmra.mrb[0].mxu0 %v1068
    %v1414 = vpop.f32.mrb[0].mxu0
    %v1415 = vadd.f32 %v1230, %v1414
    %v1416 = vpop.f32.mrb[0].mxu0
    %v1417 = vadd.f32 %v1232, %v1416
    %1418 = vmatprep.mubr.f32.mxu0 0.0
    %1419 = vmatmul.mubr.f32.gmra.mrb[0].mxu0 %v1071
    %v1420 = vpop.f32.mrb[0].mxu0
    %v1421 = vadd.f32 %v1236, %v1420
    %v1422 = vpop.f32.mrb[0].mxu0
    %v1423 = vadd.f32 %v1238, %v1422
    %1424 = vmatprep.mubr.f32.mxu0 0.0
    %1425 = vmatmul.mubr.f32.gmra.mrb[0].mxu0 %v1074
    %v1426 = vpop.f32.mrb[0].mxu0
    %v1427 = vadd.f32 %v1242, %v1426
    %v1428 = vpop.f32.mrb[0].mxu0
    %v1429 = vadd.f32 %v1244, %v1428
    %1430 = vmatprep.mubr.f32.mxu0 0.0
    %1431 = vmatmul.mubr.f32.gmra.mrb[0].mxu0 %v1077
    %v1432 = vpop.f32.mrb[0].mxu0
    %v1433 = vadd.f32 %v1248, %v1432
    %v1434 = vpop.f32.mrb[0].mxu0
    %v1435 = vadd.f32 %v1250, %v1434
    %1436 = vmatprep.mubr.f32.mxu0 0.0
    %1437 = vmatmul.mubr.f32.gmra.mrb[0].mxu0 %v1080
    %v1438 = vpop.f32.mrb[0].mxu0
    %v1439 = vadd.f32 %v1254, %v1438
    %v1440 = vpop.f32.mrb[0].mxu0
    %v1441 = vadd.f32 %v1256, %v1440
    %1442 = vmatprep.mubr.f32.mxu0 0.0
    %1443 = vmatmul.mubr.f32.gmra.mrb[0].mxu0 %v1083
    %v1444 = vpop.f32.mrb[0].mxu0
    %v1445 = vadd.f32 %v1260, %v1444
    %v1446 = vpop.f32.mrb[0].mxu0
    %v1447 = vadd.f32 %v1262, %v1446
    %1448 = vmatprep.mubr.f32.mxu0 0.0
    %1449 = vmatmul.mubr.f32.gmra.mrb[0].mxu0 %v1086
    %v1450 = vpop.f32.mrb[0].mxu0
    %v1451 = vadd.f32 %v1266, %v1450
    %v1452 = vpop.f32.mrb[0].mxu0
    %v1453 = vadd.f32 %v1268, %v1452
    %1454 = vmatprep.mubr.f32.mxu0 0.0
    %1455 = vmatmul.mubr.f32.gmra.mrb[0].mxu0 %v1089
    %v1456 = vpop.f32.mrb[0].mxu0
    %v1457 = vadd.f32 %v1272, %v1456
    %v1458 = vpop.f32.mrb[0].mxu0
    %v1459 = vadd.f32 %v1274, %v1458
    %1460 = vdwg.mxu0
    %vm1461 = vcmp.gt.f32.partialorder %v1343, 0.0
    %vm1462 = vcmp.gt.f32.partialorder %v1345, 0.0
    %vm1463 = vcmp.gt.f32.partialorder %v1349, 0.0
    %vm1464 = vcmp.gt.f32.partialorder %v1351, 0.0
    %vm1465 = vcmp.gt.f32.partialorder %v1355, 0.0
    %vm1466 = vcmp.gt.f32.partialorder %v1357, 0.0
    %vm1467 = vcmp.gt.f32.partialorder %v1361, 0.0
    %vm1468 = vcmp.gt.f32.partialorder %v1363, 0.0
    %vm1469 = vcmp.gt.f32.partialorder %v1367, 0.0
    %vm1470 = vcmp.gt.f32.partialorder %v1369, 0.0
    %vm1471 = vcmp.gt.f32.partialorder %v1373, 0.0
    %vm1472 = vcmp.gt.f32.partialorder %v1375, 0.0
    %vm1473 = vcmp.gt.f32.partialorder %v1379, 0.0
    %vm1474 = vcmp.gt.f32.partialorder %v1381, 0.0
    %vm1475 = vcmp.gt.f32.partialorder %v1385, 0.0
    %vm1476 = vcmp.gt.f32.partialorder %v1387, 0.0
    %vm1477 = vcmp.gt.f32.partialorder %v1391, 0.0
    %vm1478 = vcmp.gt.f32.partialorder %v1393, 0.0
    %vm1479 = vcmp.gt.f32.partialorder %v1397, 0.0
    %vm1480 = vcmp.gt.f32.partialorder %v1399, 0.0
    %vm1481 = vcmp.gt.f32.partialorder %v1403, 0.0
    %vm1482 = vcmp.gt.f32.partialorder %v1405, 0.0
    %vm1483 = vcmp.gt.f32.partialorder %v1409, 0.0
    %vm1484 = vcmp.gt.f32.partialorder %v1411, 0.0
    %vm1485 = vcmp.gt.f32.partialorder %v1415, 0.0
    %vm1486 = vcmp.gt.f32.partialorder %v1417, 0.0
    %vm1487 = vcmp.gt.f32.partialorder %v1421, 0.0
    %vm1488 = vcmp.gt.f32.partialorder %v1423, 0.0
    %vm1489 = vcmp.gt.f32.partialorder %v1427, 0.0
    %vm1490 = vcmp.gt.f32.partialorder %v1429, 0.0
    %vm1491 = vcmp.gt.f32.partialorder %v1433, 0.0
    %vm1492 = vcmp.gt.f32.partialorder %v1435, 0.0
    %vm1493 = vcmp.gt.f32.partialorder %v1439, 0.0
    %vm1494 = vcmp.gt.f32.partialorder %v1441, 0.0
    %vm1495 = vcmp.gt.f32.partialorder %v1445, 0.0
    %vm1496 = vcmp.gt.f32.partialorder %v1447, 0.0
    %vm1497 = vcmp.gt.f32.partialorder %v1451, 0.0
    %vm1498 = vcmp.gt.f32.partialorder %v1453, 0.0
    %vm1499 = vcmp.gt.f32.partialorder %v1457, 0.0
    %vm1500 = vcmp.gt.f32.partialorder %v1459, 0.0
    %v1501 = vmin.f32 %v1343, 0.0
    %v1502 = vmin.f32 %v1345, 0.0
    %v1503 = vmin.f32 %v1349, 0.0
    %v1504 = vmin.f32 %v1351, 0.0
    %v1505 = vmin.f32 %v1355, 0.0
    %v1506 = vmin.f32 %v1357, 0.0
    %v1507 = vmin.f32 %v1361, 0.0
    %v1508 = vmin.f32 %v1363, 0.0
    %v1509 = vmin.f32 %v1367, 0.0
    %v1510 = vmin.f32 %v1369, 0.0
    %v1511 = vmin.f32 %v1373, 0.0
    %v1512 = vmin.f32 %v1375, 0.0
    %v1513 = vmin.f32 %v1379, 0.0
    %v1514 = vmin.f32 %v1381, 0.0
    %v1515 = vmin.f32 %v1385, 0.0
    %v1516 = vmin.f32 %v1387, 0.0
    %v1517 = vmin.f32 %v1391, 0.0
    %v1518 = vmin.f32 %v1393, 0.0
    %v1519 = vmin.f32 %v1397, 0.0
    %v1520 = vmin.f32 %v1399, 0.0
    %v1521 = vmin.f32 %v1403, 0.0
    %v1522 = vmin.f32 %v1405, 0.0
    %v1523 = vmin.f32 %v1409, 0.0
    %v1524 = vmin.f32 %v1411, 0.0
    %v1525 = vmin.f32 %v1415, 0.0
    %v1526 = vmin.f32 %v1417, 0.0
    %v1527 = vmin.f32 %v1421, 0.0
    %v1528 = vmin.f32 %v1423, 0.0
    %v1529 = vmin.f32 %v1427, 0.0
    %v1530 = vmin.f32 %v1429, 0.0
    %v1531 = vmin.f32 %v1433, 0.0
    %v1532 = vmin.f32 %v1435, 0.0
    %v1533 = vmin.f32 %v1439, 0.0
    %v1534 = vmin.f32 %v1441, 0.0
    %v1535 = vmin.f32 %v1445, 0.0
    %v1536 = vmin.f32 %v1447, 0.0
    %v1537 = vmin.f32 %v1451, 0.0
    %v1538 = vmin.f32 %v1453, 0.0
    %v1539 = vmin.f32 %v1457, 0.0
    %v1540 = vmin.f32 %v1459, 0.0
    %v1541 = vmul.f32 %v1501, 1.442695
    %v1542 = vpow.pop %v1541
    %v1543 = vmul.f32 %v1502, 1.442695
    %v1544 = vpow.pop %v1543
    %v1545 = vmul.f32 %v1503, 1.442695
    %v1546 = vpow.pop %v1545
    %v1547 = vmul.f32 %v1504, 1.442695
    %v1548 = vpow.pop %v1547
    %v1549 = vmul.f32 %v1505, 1.442695
    %v1550 = vpow.pop %v1549
    %v1551 = vmul.f32 %v1506, 1.442695
    %v1552 = vpow.pop %v1551
    %v1553 = vmul.f32 %v1507, 1.442695
    %v1554 = vpow.pop %v1553
    %v1555 = vmul.f32 %v1508, 1.442695
    %v1556 = vpow.pop %v1555
    %v1557 = vmul.f32 %v1509, 1.442695
    %v1558 = vpow.pop %v1557
    %v1559 = vmul.f32 %v1510, 1.442695
    %v1560 = vpow.pop %v1559
    %v1561 = vmul.f32 %v1511, 1.442695
    %v1562 = vpow.pop %v1561
    %v1563 = vmul.f32 %v1512, 1.442695
    %v1564 = vpow.pop %v1563
    %v1565 = vmul.f32 %v1513, 1.442695
    %v1566 = vpow.pop %v1565
    %v1567 = vmul.f32 %v1514, 1.442695
    %v1568 = vpow.pop %v1567
    %v1569 = vmul.f32 %v1515, 1.442695
    %v1570 = vpow.pop %v1569
    %v1571 = vmul.f32 %v1516, 1.442695
    %v1572 = vpow.pop %v1571
    %v1573 = vmul.f32 %v1517, 1.442695
    %v1574 = vpow.pop %v1573
    %v1575 = vmul.f32 %v1518, 1.442695
    %v1576 = vpow.pop %v1575
    %v1577 = vmul.f32 %v1519, 1.442695
    %v1578 = vpow.pop %v1577
    %v1579 = vmul.f32 %v1520, 1.442695
    %v1580 = vpow.pop %v1579
    %v1581 = vmul.f32 %v1521, 1.442695
    %v1582 = vpow.pop %v1581
    %v1583 = vmul.f32 %v1522, 1.442695
    %v1584 = vpow.pop %v1583
    %v1585 = vmul.f32 %v1523, 1.442695
    %v1586 = vpow.pop %v1585
    %v1587 = vmul.f32 %v1524, 1.442695
    %v1588 = vpow.pop %v1587
    %v1589 = vmul.f32 %v1525, 1.442695
    %v1590 = vpow.pop %v1589
    %v1591 = vmul.f32 %v1526, 1.442695
    %v1592 = vpow.pop %v1591
    %v1593 = vmul.f32 %v1527, 1.442695
    %v1594 = vpow.pop %v1593
    %v1595 = vmul.f32 %v1528, 1.442695
    %v1596 = vpow.pop %v1595
    %v1597 = vmul.f32 %v1529, 1.442695
    %v1598 = vpow.pop %v1597
    %v1599 = vmul.f32 %v1530, 1.442695
    %v1600 = vpow.pop %v1599
    %v1601 = vmul.f32 %v1531, 1.442695
    %v1602 = vpow.pop %v1601
    %v1603 = vmul.f32 %v1532, 1.442695
    %v1604 = vpow.pop %v1603
    %v1605 = vmul.f32 %v1533, 1.442695
    %v1606 = vpow.pop %v1605
    %v1607 = vmul.f32 %v1534, 1.442695
    %v1608 = vpow.pop %v1607
    %v1609 = vmul.f32 %v1535, 1.442695
    %v1610 = vpow.pop %v1609
    %v1611 = vmul.f32 %v1536, 1.442695
    %v1612 = vpow.pop %v1611
    %v1613 = vmul.f32 %v1537, 1.442695
    %v1614 = vpow.pop %v1613
    %v1615 = vmul.f32 %v1538, 1.442695
    %v1616 = vpow.pop %v1615
    %v1617 = vmul.f32 %v1539, 1.442695
    %v1618 = vpow.pop %v1617
    %v1619 = vmul.f32 %v1540, 1.442695
    %v1620 = vpow.pop %v1619
    %v1621 = vsub.f32 %v1542, 1.0
    %v1622 = vsub.f32 %v1544, 1.0
    %v1623 = vsub.f32 %v1546, 1.0
    %v1624 = vsub.f32 %v1548, 1.0
    %v1625 = vsub.f32 %v1550, 1.0
    %v1626 = vsub.f32 %v1552, 1.0
    %v1627 = vsub.f32 %v1554, 1.0
    %v1628 = vsub.f32 %v1556, 1.0
    %v1629 = vsub.f32 %v1558, 1.0
    %v1630 = vsub.f32 %v1560, 1.0
    %v1631 = vsub.f32 %v1562, 1.0
    %v1632 = vsub.f32 %v1564, 1.0
    %v1633 = vsub.f32 %v1566, 1.0
    %v1634 = vsub.f32 %v1568, 1.0
    %v1635 = vsub.f32 %v1570, 1.0
    %v1636 = vsub.f32 %v1572, 1.0
    %v1637 = vsub.f32 %v1574, 1.0
    %v1638 = vsub.f32 %v1576, 1.0
    %v1639 = vsub.f32 %v1578, 1.0
    %v1640 = vsub.f32 %v1580, 1.0
    %v1641 = vsub.f32 %v1582, 1.0
    %v1642 = vsub.f32 %v1584, 1.0
    %v1643 = vsub.f32 %v1586, 1.0
    %v1644 = vsub.f32 %v1588, 1.0
    %v1645 = vsub.f32 %v1590, 1.0
    %v1646 = vsub.f32 %v1592, 1.0
    %v1647 = vsub.f32 %v1594, 1.0
    %v1648 = vsub.f32 %v1596, 1.0
    %v1649 = vsub.f32 %v1598, 1.0
    %v1650 = vsub.f32 %v1600, 1.0
    %v1651 = vsub.f32 %v1602, 1.0
    %v1652 = vsub.f32 %v1604, 1.0
    %v1653 = vsub.f32 %v1606, 1.0
    %v1654 = vsub.f32 %v1608, 1.0
    %v1655 = vsub.f32 %v1610, 1.0
    %v1656 = vsub.f32 %v1612, 1.0
    %v1657 = vsub.f32 %v1614, 1.0
    %v1658 = vsub.f32 %v1616, 1.0
    %v1659 = vsub.f32 %v1618, 1.0
    %v1660 = vsub.f32 %v1620, 1.0
    %v1661 = vsel %vm1461, %v1343, %v1621
    %v1662 = vsel %vm1462, %v1345, %v1622
    %v1663 = vsel %vm1463, %v1349, %v1623
    %v1664 = vsel %vm1464, %v1351, %v1624
    %v1665 = vsel %vm1465, %v1355, %v1625
    %v1666 = vsel %vm1466, %v1357, %v1626
    %v1667 = vsel %vm1467, %v1361, %v1627
    %v1668 = vsel %vm1468, %v1363, %v1628
    %v1669 = vsel %vm1469, %v1367, %v1629
    %v1670 = vsel %vm1470, %v1369, %v1630
    %v1671 = vsel %vm1471, %v1373, %v1631
    %v1672 = vsel %vm1472, %v1375, %v1632
    %v1673 = vsel %vm1473, %v1379, %v1633
    %v1674 = vsel %vm1474, %v1381, %v1634
    %v1675 = vsel %vm1475, %v1385, %v1635
    %v1676 = vsel %vm1476, %v1387, %v1636
    %v1677 = vsel %vm1477, %v1391, %v1637
    %v1678 = vsel %vm1478, %v1393, %v1638
    %v1679 = vsel %vm1479, %v1397, %v1639
    %v1680 = vsel %vm1480, %v1399, %v1640
    %v1681 = vsel %vm1481, %v1403, %v1641
    %v1682 = vsel %vm1482, %v1405, %v1642
    %v1683 = vsel %vm1483, %v1409, %v1643
    %v1684 = vsel %vm1484, %v1411, %v1644
    %v1685 = vsel %vm1485, %v1415, %v1645
    %v1686 = vsel %vm1486, %v1417, %v1646
    %v1687 = vsel %vm1487, %v1421, %v1647
    %v1688 = vsel %vm1488, %v1423, %v1648
    %v1689 = vsel %vm1489, %v1427, %v1649
    %v1690 = vsel %vm1490, %v1429, %v1650
    %v1691 = vsel %vm1491, %v1433, %v1651
    %v1692 = vsel %vm1492, %v1435, %v1652
    %v1693 = vsel %vm1493, %v1439, %v1653
    %v1694 = vsel %vm1494, %v1441, %v1654
    %v1695 = vsel %vm1495, %v1445, %v1655
    %v1696 = vsel %vm1496, %v1447, %v1656
    %v1697 = vsel %vm1497, %v1451, %v1657
    %v1698 = vsel %vm1498, %v1453, %v1658
    %v1699 = vsel %vm1499, %v1457, %v1659
    %v1700 = vsel %vm1500, %v1459, %v1660
    %v1701 = vld [vmem:[%s5] sm:$0xff]
    %v1702 = vld [vmem:[%s5 + $0x8] sm:$0xff]
    %v1703 = vld [vmem:[%s5 + $0x10] sm:$0xff]
    %v1704 = vld [vmem:[%s5 + $0x18] sm:$0xff]
    %v1705 = vld [vmem:[%s5 + $0x20] sm:$0xff]
    %v1706 = vld [vmem:[%s5 + $0x28] sm:$0xff]
    %v1707 = vld [vmem:[%s5 + $0x30] sm:$0xff]
    %v1708 = vld [vmem:[%s5 + $0x38] sm:$0xff]
    %v1709 = vld [vmem:[%s5 + $0x40] sm:$0xff]
    %v1710 = vld [vmem:[%s5 + $0x48] sm:$0xff]
    %v1711 = vld [vmem:[%s5 + $0x50] sm:$0xff]
    %v1712 = vld [vmem:[%s5 + $0x58] sm:$0xff]
    %v1713 = vld [vmem:[%s5 + $0x60] sm:$0xff]
    %v1714 = vld [vmem:[%s5 + $0x68] sm:$0xff]
    %v1715 = vld [vmem:[%s5 + $0x70] sm:$0xff]
    %v1716 = vld [vmem:[%s5 + $0x78] sm:$0xff]
    %v1717 = vld [vmem:[%s5 + $0x80] sm:$0xff]
    %v1718 = vld [vmem:[%s5 + $0x88] sm:$0xff]
    %v1719 = vld [vmem:[%s5 + $0x90] sm:$0xff]
    %v1720 = vld [vmem:[%s5 + $0x98] sm:$0xff]
    %v1721 = vld [vmem:[%s5 + $0xa0] sm:$0xff]
    %v1722 = vld [vmem:[%s5 + $0xa8] sm:$0xff]
    %v1723 = vld [vmem:[%s5 + $0xb0] sm:$0xff]
    %v1724 = vld [vmem:[%s5 + $0xb8] sm:$0xff]
    %v1725 = vld [vmem:[%s5 + $0xc0] sm:$0xff]
    %v1726 = vld [vmem:[%s5 + $0xc8] sm:$0xff]
    %v1727 = vld [vmem:[%s5 + $0xd0] sm:$0xff]
    %v1728 = vld [vmem:[%s5 + $0xd8] sm:$0xff]
    %v1729 = vld [vmem:[%s5 + $0xe0] sm:$0xff]
    %v1730 = vld [vmem:[%s5 + $0xe8] sm:$0xff]
    %v1731 = vld [vmem:[%s5 + $0xf0] sm:$0xff]
    %v1732 = vld [vmem:[%s5 + $0xf8] sm:$0xff]
    %v1733 = vld [vmem:[%s5 + $0x100] sm:$0xff]
    %v1734 = vld [vmem:[%s5 + $0x108] sm:$0xff]
    %v1735 = vld [vmem:[%s5 + $0x110] sm:$0xff]
    %v1736 = vld [vmem:[%s5 + $0x118] sm:$0xff]
    %v1737 = vld [vmem:[%s5 + $0x120] sm:$0xff]
    %v1738 = vld [vmem:[%s5 + $0x128] sm:$0xff]
    %v1739 = vld [vmem:[%s5 + $0x130] sm:$0xff]
    %v1740 = vld [vmem:[%s5 + $0x138] sm:$0xff]
    %v1741 = vld [vmem:[%s5 + $0x140] sm:$0xff]
    %v1742 = vld [vmem:[%s5 + $0x148] sm:$0xff]
    %v1743 = vld [vmem:[%s5 + $0x150] sm:$0xff]
    %v1744 = vld [vmem:[%s5 + $0x158] sm:$0xff]
    %v1745 = vld [vmem:[%s5 + $0x160] sm:$0xff]
    %v1746 = vld [vmem:[%s5 + $0x168] sm:$0xff]
    %v1747 = vld [vmem:[%s5 + $0x170] sm:$0xff]
    %v1748 = vld [vmem:[%s5 + $0x178] sm:$0xff]
    %v1749 = vld [vmem:[%s5 + $0x180] sm:$0xff]
    %v1750 = vld [vmem:[%s5 + $0x188] sm:$0xff]
    %v1751 = vld [vmem:[%s5 + $0x190] sm:$0xff]
    %v1752 = vld [vmem:[%s5 + $0x198] sm:$0xff]
    %v1753 = vld [vmem:[%s5 + $0x1a0] sm:$0xff]
    %v1754 = vld [vmem:[%s5 + $0x1a8] sm:$0xff]
    %v1755 = vld [vmem:[%s5 + $0x1b0] sm:$0xff]
    %v1756 = vld [vmem:[%s5 + $0x1b8] sm:$0xff]
    %v1757 = vld [vmem:[%s5 + $0x1c0] sm:$0xff]
    %v1758 = vld [vmem:[%s5 + $0x1c8] sm:$0xff]
    %v1759 = vld [vmem:[%s5 + $0x1d0] sm:$0xff]
    %v1760 = vld [vmem:[%s5 + $0x1d8] sm:$0xff]
    %v1761 = vld [vmem:[%s5 + $0x1e0] sm:$0xff]
    %v1762 = vld [vmem:[%s5 + $0x1e8] sm:$0xff]
    %v1763 = vld [vmem:[%s5 + $0x1f0] sm:$0xff]
    %v1764 = vld [vmem:[%s5 + $0x1f8] sm:$0xff]
    %v1765 = vld [vmem:[%s5 + $0x200] sm:$0xff]
    %v1766 = vld [vmem:[%s5 + $0x208] sm:$0xff]
    %v1767 = vld [vmem:[%s5 + $0x210] sm:$0xff]
    %v1768 = vld [vmem:[%s5 + $0x218] sm:$0xff]
    %v1769 = vld [vmem:[%s5 + $0x220] sm:$0xff]
    %v1770 = vld [vmem:[%s5 + $0x228] sm:$0xff]
    %v1771 = vld [vmem:[%s5 + $0x230] sm:$0xff]
    %v1772 = vld [vmem:[%s5 + $0x238] sm:$0xff]
    %v1773 = vld [vmem:[%s5 + $0x240] sm:$0xff]
    %v1774 = vld [vmem:[%s5 + $0x248] sm:$0xff]
    %v1775 = vld [vmem:[%s5 + $0x250] sm:$0xff]
    %v1776 = vld [vmem:[%s5 + $0x258] sm:$0xff]
    %v1777 = vld [vmem:[%s5 + $0x260] sm:$0xff]
    %v1778 = vld [vmem:[%s5 + $0x268] sm:$0xff]
    %v1779 = vld [vmem:[%s5 + $0x270] sm:$0xff]
    %v1780 = vld [vmem:[%s5 + $0x278] sm:$0xff]
    %vm1781 = vcmask 228352
    %v1783 = vsel %vm1781, %v1702, 0
    %v1786 = vsel %vm1781, %v1704, 0
    %v1789 = vsel %vm1781, %v1706, 0
    %v1792 = vsel %vm1781, %v1708, 0
    %v1795 = vsel %vm1781, %v1710, 0
    %v1798 = vsel %vm1781, %v1712, 0
    %v1801 = vsel %vm1781, %v1714, 0
    %v1804 = vsel %vm1781, %v1716, 0
    %v1807 = vsel %vm1781, %v1718, 0
    %v1810 = vsel %vm1781, %v1720, 0
    %v1813 = vsel %vm1781, %v1722, 0
    %v1816 = vsel %vm1781, %v1724, 0
    %v1819 = vsel %vm1781, %v1726, 0
    %v1822 = vsel %vm1781, %v1728, 0
    %v1825 = vsel %vm1781, %v1730, 0
    %v1828 = vsel %vm1781, %v1732, 0
    %v1831 = vsel %vm1781, %v1734, 0
    %v1834 = vsel %vm1781, %v1736, 0
    %v1837 = vsel %vm1781, %v1738, 0
    %v1840 = vsel %vm1781, %v1740, 0
    %v1843 = vsel %vm1781, %v1742, 0
    %v1846 = vsel %vm1781, %v1744, 0
    %v1849 = vsel %vm1781, %v1746, 0
    %v1852 = vsel %vm1781, %v1748, 0
    %v1855 = vsel %vm1781, %v1750, 0
    %v1858 = vsel %vm1781, %v1752, 0
    %v1861 = vsel %vm1781, %v1754, 0
    %v1864 = vsel %vm1781, %v1756, 0
    %v1867 = vsel %vm1781, %v1758, 0
    %v1870 = vsel %vm1781, %v1760, 0
    %v1873 = vsel %vm1781, %v1762, 0
    %v1876 = vsel %vm1781, %v1764, 0
    %v1879 = vsel %vm1781, %v1766, 0
    %v1882 = vsel %vm1781, %v1768, 0
    %v1885 = vsel %vm1781, %v1770, 0
    %v1888 = vsel %vm1781, %v1772, 0
    %v1891 = vsel %vm1781, %v1774, 0
    %v1894 = vsel %vm1781, %v1776, 0
    %v1897 = vsel %vm1781, %v1778, 0
    %v1900 = vsel %vm1781, %v1780, 0
    %vm1902 = vcmask 1043456
    %v1904 = vsel %vm1902, %v1699, 0
    %v1907 = vsel %vm1902, %v1700, 0
    %1909 = vmatprep.subr.mxu0 %v1662
    %1910 = vmatpush1.msra.mxu0 %v1661
    %1911 = vmatprep.subr.mxu0 %v1664
    %1912 = vmatpush1.msra.mxu0 %v1663
    %1913 = vmatprep.subr.mxu0 %v1666
    %1914 = vmatpush1.msra.mxu0 %v1665
    %1915 = vmatprep.subr.mxu0 %v1668
    %1916 = vmatpush1.msra.mxu0 %v1667
    %1917 = vmatprep.subr.mxu0 %v1670
    %1918 = vmatpush1.msra.mxu0 %v1669
    %1919 = vmatprep.subr.mxu0 %v1672
    %1920 = vmatpush1.msra.mxu0 %v1671
    %1921 = vmatprep.subr.mxu0 %v1674
    %1922 = vmatpush1.msra.mxu0 %v1673
    %1923 = vmatprep.subr.mxu0 %v1676
    %1924 = vmatpush1.msra.mxu0 %v1675
    %1925 = vmatprep.subr.mxu0 %v1678
    %1926 = vmatpush1.msra.mxu0 %v1677
    %1927 = vmatprep.subr.mxu0 %v1680
    %1928 = vmatpush1.msra.mxu0 %v1679
    %1929 = vmatprep.subr.mxu0 %v1682
    %1930 = vmatpush1.msra.mxu0 %v1681
    %1931 = vmatprep.subr.mxu0 %v1684
    %1932 = vmatpush1.msra.mxu0 %v1683
    %1933 = vmatprep.subr.mxu0 %v1686
    %1934 = vmatpush1.msra.mxu0 %v1685
    %1935 = vmatprep.subr.mxu0 %v1688
    %1936 = vmatpush1.msra.mxu0 %v1687
    %1937 = vmatprep.subr.mxu0 %v1690
    %1938 = vmatpush1.msra.mxu0 %v1689
    %1939 = vmatprep.subr.mxu0 %v1692
    %1940 = vmatpush1.msra.mxu0 %v1691
    %1941 = vmatprep.subr.mxu0 %v1694
    %1942 = vmatpush1.msra.mxu0 %v1693
    %1943 = vmatprep.subr.mxu0 %v1696
    %1944 = vmatpush1.msra.mxu0 %v1695
    %1945 = vmatprep.subr.mxu0 %v1698
    %1946 = vmatpush1.msra.mxu0 %v1697
    %1947 = vmatprep.subr.mxu0 %v1907
    %1948 = vmatpush1.msra.mxu0 %v1904
    %1949 = vmatprep.subr.mxu0 0.0
    %1950 = vmatpush1.msra.mxu0 0.0
    %1951 = vmatprep.subr.mxu0 0.0
    %1952 = vmatpush1.msra.mxu0 0.0
    %1953 = vmatprep.subr.mxu0 0.0
    %1954 = vmatpush1.msra.mxu0 0.0
    %1955 = vmatprep.subr.mxu0 0.0
    %1956 = vmatpush1.msra.mxu0 0.0
    %1957 = vmatprep.subr.mxu0 0.0
    %1958 = vmatpush1.msra.mxu0 0.0
    %1959 = vmatprep.subr.mxu0 0.0
    %1960 = vmatpush1.msra.mxu0 0.0
    %1961 = vmatprep.subr.mxu0 0.0
    %1962 = vmatpush1.msra.mxu0 0.0
    %1963 = vmatprep.subr.mxu0 0.0
    %1964 = vmatpush1.msra.mxu0 0.0
    %1965 = vmatprep.subr.mxu0 0.0
    %1966 = vmatpush1.msra.mxu0 0.0
    %1967 = vmatprep.subr.mxu0 0.0
    %1968 = vmatpush1.msra.mxu0 0.0
    %1969 = vmatprep.subr.mxu0 0.0
    %1970 = vmatpush1.msra.mxu0 0.0
    %1971 = vmatprep.subr.mxu0 0.0
    %1972 = vmatpush1.msra.mxu0 0.0
    %1973 = vmatprep.mubr.f32.mxu0 %v1783
    %1974 = vmatmul.mubr.f32.gmra.mrb[0].mxu0 %v1701
    %v1975 = vpop.f32.mrb[0].mxu0
    %v1976 = vadd.f32 0.0, %v1975
    %v1977 = vpop.f32.mrb[0].mxu0
    %v1978 = vadd.f32 0.0, %v1977
    %1979 = vmatprep.mubr.f32.mxu0 %v1786
    %1980 = vmatmul.mubr.f32.gmra.mrb[0].mxu0 %v1703
    %v1981 = vpop.f32.mrb[0].mxu0
    %v1982 = vadd.f32 0.0, %v1981
    %v1983 = vpop.f32.mrb[0].mxu0
    %v1984 = vadd.f32 0.0, %v1983
    %1985 = vmatprep.mubr.f32.mxu0 %v1789
    %1986 = vmatmul.mubr.f32.gmra.mrb[0].mxu0 %v1705
    %v1987 = vpop.f32.mrb[0].mxu0
    %v1988 = vadd.f32 0.0, %v1987
    %v1989 = vpop.f32.mrb[0].mxu0
    %v1990 = vadd.f32 0.0, %v1989
    %1991 = vmatprep.mubr.f32.mxu0 %v1792
    %1992 = vmatmul.mubr.f32.gmra.mrb[0].mxu0 %v1707
    %v1993 = vpop.f32.mrb[0].mxu0
    %v1994 = vadd.f32 0.0, %v1993
    %v1995 = vpop.f32.mrb[0].mxu0
    %v1996 = vadd.f32 0.0, %v1995
    %1997 = vmatprep.mubr.f32.mxu0 %v1795
    %1998 = vmatmul.mubr.f32.gmra.mrb[0].mxu0 %v1709
    %v1999 = vpop.f32.mrb[0].mxu0
    %v2000 = vadd.f32 0.0, %v1999
    %v2001 = vpop.f32.mrb[0].mxu0
    %v2002 = vadd.f32 0.0, %v2001
    %2003 = vmatprep.mubr.f32.mxu0 %v1798
    %2004 = vmatmul.mubr.f32.gmra.mrb[0].mxu0 %v1711
    %v2005 = vpop.f32.mrb[0].mxu0
    %v2006 = vadd.f32 0.0, %v2005
    %v2007 = vpop.f32.mrb[0].mxu0
    %v2008 = vadd.f32 0.0, %v2007
    %2009 = vmatprep.mubr.f32.mxu0 %v1801
    %2010 = vmatmul.mubr.f32.gmra.mrb[0].mxu0 %v1713
    %v2011 = vpop.f32.mrb[0].mxu0
    %v2012 = vadd.f32 0.0, %v2011
    %v2013 = vpop.f32.mrb[0].mxu0
    %v2014 = vadd.f32 0.0, %v2013
    %2015 = vmatprep.mubr.f32.mxu0 %v1804
    %2016 = vmatmul.mubr.f32.gmra.mrb[0].mxu0 %v1715
    %v2017 = vpop.f32.mrb[0].mxu0
    %v2018 = vadd.f32 0.0, %v2017
    %v2019 = vpop.f32.mrb[0].mxu0
    %v2020 = vadd.f32 0.0, %v2019
    %2021 = vmatprep.mubr.f32.mxu0 %v1807
    %2022 = vmatmul.mubr.f32.gmra.mrb[0].mxu0 %v1717
    %v2023 = vpop.f32.mrb[0].mxu0
    %v2024 = vadd.f32 0.0, %v2023
    %v2025 = vpop.f32.mrb[0].mxu0
    %v2026 = vadd.f32 0.0, %v2025
    %2027 = vmatprep.mubr.f32.mxu0 %v1810
    %2028 = vmatmul.mubr.f32.gmra.mrb[0].mxu0 %v1719
    %v2029 = vpop.f32.mrb[0].mxu0
    %v2030 = vadd.f32 0.0, %v2029
    %v2031 = vpop.f32.mrb[0].mxu0
    %v2032 = vadd.f32 0.0, %v2031
    %2033 = vmatprep.mubr.f32.mxu0 %v1813
    %2034 = vmatmul.mubr.f32.gmra.mrb[0].mxu0 %v1721
    %v2035 = vpop.f32.mrb[0].mxu0
    %v2036 = vadd.f32 0.0, %v2035
    %v2037 = vpop.f32.mrb[0].mxu0
    %v2038 = vadd.f32 0.0, %v2037
    %2039 = vmatprep.mubr.f32.mxu0 %v1816
    %2040 = vmatmul.mubr.f32.gmra.mrb[0].mxu0 %v1723
    %v2041 = vpop.f32.mrb[0].mxu0
    %v2042 = vadd.f32 0.0, %v2041
    %v2043 = vpop.f32.mrb[0].mxu0
    %v2044 = vadd.f32 0.0, %v2043
    %2045 = vmatprep.mubr.f32.mxu0 %v1819
    %2046 = vmatmul.mubr.f32.gmra.mrb[0].mxu0 %v1725
    %v2047 = vpop.f32.mrb[0].mxu0
    %v2048 = vadd.f32 0.0, %v2047
    %v2049 = vpop.f32.mrb[0].mxu0
    %v2050 = vadd.f32 0.0, %v2049
    %2051 = vmatprep.mubr.f32.mxu0 %v1822
    %2052 = vmatmul.mubr.f32.gmra.mrb[0].mxu0 %v1727
    %v2053 = vpop.f32.mrb[0].mxu0
    %v2054 = vadd.f32 0.0, %v2053
    %v2055 = vpop.f32.mrb[0].mxu0
    %v2056 = vadd.f32 0.0, %v2055
    %2057 = vmatprep.mubr.f32.mxu0 %v1825
    %2058 = vmatmul.mubr.f32.gmra.mrb[0].mxu0 %v1729
    %v2059 = vpop.f32.mrb[0].mxu0
    %v2060 = vadd.f32 0.0, %v2059
    %v2061 = vpop.f32.mrb[0].mxu0
    %v2062 = vadd.f32 0.0, %v2061
    %2063 = vmatprep.mubr.f32.mxu0 %v1828
    %2064 = vmatmul.mubr.f32.gmra.mrb[0].mxu0 %v1731
    %v2065 = vpop.f32.mrb[0].mxu0
    %v2066 = vadd.f32 0.0, %v2065
    %v2067 = vpop.f32.mrb[0].mxu0
    %v2068 = vadd.f32 0.0, %v2067
    %2069 = vmatprep.mubr.f32.mxu0 %v1831
    %2070 = vmatmul.mubr.f32.gmra.mrb[0].mxu0 %v1733
    %v2071 = vpop.f32.mrb[0].mxu0
    %v2072 = vadd.f32 0.0, %v2071
    %v2073 = vpop.f32.mrb[0].mxu0
    %v2074 = vadd.f32 0.0, %v2073
    %2075 = vmatprep.mubr.f32.mxu0 %v1834
    %2076 = vmatmul.mubr.f32.gmra.mrb[0].mxu0 %v1735
    %v2077 = vpop.f32.mrb[0].mxu0
    %v2078 = vadd.f32 0.0, %v2077
    %v2079 = vpop.f32.mrb[0].mxu0
    %v2080 = vadd.f32 0.0, %v2079
    %2081 = vmatprep.mubr.f32.mxu0 %v1837
    %2082 = vmatmul.mubr.f32.gmra.mrb[0].mxu0 %v1737
    %v2083 = vpop.f32.mrb[0].mxu0
    %v2084 = vadd.f32 0.0, %v2083
    %v2085 = vpop.f32.mrb[0].mxu0
    %v2086 = vadd.f32 0.0, %v2085
    %2087 = vmatprep.mubr.f32.mxu0 %v1840
    %2088 = vmatmul.mubr.f32.gmra.mrb[0].mxu0 %v1739
    %v2089 = vpop.f32.mrb[0].mxu0
    %v2090 = vadd.f32 0.0, %v2089
    %v2091 = vpop.f32.mrb[0].mxu0
    %v2092 = vadd.f32 0.0, %v2091
    %2093 = vmatprep.mubr.f32.mxu0 %v1843
    %2094 = vmatmul.mubr.f32.gmra.mrb[0].mxu0 %v1741
    %v2095 = vpop.f32.mrb[0].mxu0
    %v2096 = vadd.f32 0.0, %v2095
    %v2097 = vpop.f32.mrb[0].mxu0
    %v2098 = vadd.f32 0.0, %v2097
    %2099 = vmatprep.mubr.f32.mxu0 %v1846
    %2100 = vmatmul.mubr.f32.gmra.mrb[0].mxu0 %v1743
    %v2101 = vpop.f32.mrb[0].mxu0
    %v2102 = vadd.f32 0.0, %v2101
    %v2103 = vpop.f32.mrb[0].mxu0
    %v2104 = vadd.f32 0.0, %v2103
    %2105 = vmatprep.mubr.f32.mxu0 %v1849
    %2106 = vmatmul.mubr.f32.gmra.mrb[0].mxu0 %v1745
    %v2107 = vpop.f32.mrb[0].mxu0
    %v2108 = vadd.f32 0.0, %v2107
    %v2109 = vpop.f32.mrb[0].mxu0
    %v2110 = vadd.f32 0.0, %v2109
    %2111 = vmatprep.mubr.f32.mxu0 %v1852
    %2112 = vmatmul.mubr.f32.gmra.mrb[0].mxu0 %v1747
    %v2113 = vpop.f32.mrb[0].mxu0
    %v2114 = vadd.f32 0.0, %v2113
    %v2115 = vpop.f32.mrb[0].mxu0
    %v2116 = vadd.f32 0.0, %v2115
    %2117 = vmatprep.mubr.f32.mxu0 %v1855
    %2118 = vmatmul.mubr.f32.gmra.mrb[0].mxu0 %v1749
    %v2119 = vpop.f32.mrb[0].mxu0
    %v2120 = vadd.f32 0.0, %v2119
    %v2121 = vpop.f32.mrb[0].mxu0
    %v2122 = vadd.f32 0.0, %v2121
    %2123 = vmatprep.mubr.f32.mxu0 %v1858
    %2124 = vmatmul.mubr.f32.gmra.mrb[0].mxu0 %v1751
    %v2125 = vpop.f32.mrb[0].mxu0
    %v2126 = vadd.f32 0.0, %v2125
    %v2127 = vpop.f32.mrb[0].mxu0
    %v2128 = vadd.f32 0.0, %v2127
    %2129 = vmatprep.mubr.f32.mxu0 %v1861
    %2130 = vmatmul.mubr.f32.gmra.mrb[0].mxu0 %v1753
    %v2131 = vpop.f32.mrb[0].mxu0
    %v2132 = vadd.f32 0.0, %v2131
    %v2133 = vpop.f32.mrb[0].mxu0
    %v2134 = vadd.f32 0.0, %v2133
    %2135 = vmatprep.mubr.f32.mxu0 %v1864
    %2136 = vmatmul.mubr.f32.gmra.mrb[0].mxu0 %v1755
    %v2137 = vpop.f32.mrb[0].mxu0
    %v2138 = vadd.f32 0.0, %v2137
    %v2139 = vpop.f32.mrb[0].mxu0
    %v2140 = vadd.f32 0.0, %v2139
    %2141 = vmatprep.mubr.f32.mxu0 %v1867
    %2142 = vmatmul.mubr.f32.gmra.mrb[0].mxu0 %v1757
    %v2143 = vpop.f32.mrb[0].mxu0
    %v2144 = vadd.f32 0.0, %v2143
    %v2145 = vpop.f32.mrb[0].mxu0
    %v2146 = vadd.f32 0.0, %v2145
    %2147 = vmatprep.mubr.f32.mxu0 %v1870
    %2148 = vmatmul.mubr.f32.gmra.mrb[0].mxu0 %v1759
    %v2149 = vpop.f32.mrb[0].mxu0
    %v2150 = vadd.f32 0.0, %v2149
    %v2151 = vpop.f32.mrb[0].mxu0
    %v2152 = vadd.f32 0.0, %v2151
    %2153 = vmatprep.mubr.f32.mxu0 %v1873
    %2154 = vmatmul.mubr.f32.gmra.mrb[0].mxu0 %v1761
    %v2155 = vpop.f32.mrb[0].mxu0
    %v2156 = vadd.f32 0.0, %v2155
    %v2157 = vpop.f32.mrb[0].mxu0
    %v2158 = vadd.f32 0.0, %v2157
    %2159 = vmatprep.mubr.f32.mxu0 %v1876
    %2160 = vmatmul.mubr.f32.gmra.mrb[0].mxu0 %v1763
    %v2161 = vpop.f32.mrb[0].mxu0
    %v2162 = vadd.f32 0.0, %v2161
    %v2163 = vpop.f32.mrb[0].mxu0
    %v2164 = vadd.f32 0.0, %v2163
    %2165 = vmatprep.mubr.f32.mxu0 %v1879
    %2166 = vmatmul.mubr.f32.gmra.mrb[0].mxu0 %v1765
    %v2167 = vpop.f32.mrb[0].mxu0
    %v2168 = vadd.f32 0.0, %v2167
    %v2169 = vpop.f32.mrb[0].mxu0
    %v2170 = vadd.f32 0.0, %v2169
    %2171 = vmatprep.mubr.f32.mxu0 %v1882
    %2172 = vmatmul.mubr.f32.gmra.mrb[0].mxu0 %v1767
    %v2173 = vpop.f32.mrb[0].mxu0
    %v2174 = vadd.f32 0.0, %v2173
    %v2175 = vpop.f32.mrb[0].mxu0
    %v2176 = vadd.f32 0.0, %v2175
    %2177 = vmatprep.mubr.f32.mxu0 %v1885
    %2178 = vmatmul.mubr.f32.gmra.mrb[0].mxu0 %v1769
    %v2179 = vpop.f32.mrb[0].mxu0
    %v2180 = vadd.f32 0.0, %v2179
    %v2181 = vpop.f32.mrb[0].mxu0
    %v2182 = vadd.f32 0.0, %v2181
    %2183 = vmatprep.mubr.f32.mxu0 %v1888
    %2184 = vmatmul.mubr.f32.gmra.mrb[0].mxu0 %v1771
    %v2185 = vpop.f32.mrb[0].mxu0
    %v2186 = vadd.f32 0.0, %v2185
    %v2187 = vpop.f32.mrb[0].mxu0
    %v2188 = vadd.f32 0.0, %v2187
    %2189 = vmatprep.mubr.f32.mxu0 %v1891
    %2190 = vmatmul.mubr.f32.gmra.mrb[0].mxu0 %v1773
    %v2191 = vpop.f32.mrb[0].mxu0
    %v2192 = vadd.f32 0.0, %v2191
    %v2193 = vpop.f32.mrb[0].mxu0
    %v2194 = vadd.f32 0.0, %v2193
    %2195 = vmatprep.mubr.f32.mxu0 %v1894
    %2196 = vmatmul.mubr.f32.gmra.mrb[0].mxu0 %v1775
    %v2197 = vpop.f32.mrb[0].mxu0
    %v2198 = vadd.f32 0.0, %v2197
    %v2199 = vpop.f32.mrb[0].mxu0
    %v2200 = vadd.f32 0.0, %v2199
    %2201 = vmatprep.mubr.f32.mxu0 %v1897
    %2202 = vmatmul.mubr.f32.gmra.mrb[0].mxu0 %v1777
    %v2203 = vpop.f32.mrb[0].mxu0
    %v2204 = vadd.f32 0.0, %v2203
    %v2205 = vpop.f32.mrb[0].mxu0
    %v2206 = vadd.f32 0.0, %v2205
    %2207 = vmatprep.mubr.f32.mxu0 %v1900
    %2208 = vmatmul.mubr.f32.gmra.mrb[0].mxu0 %v1779
    %v2209 = vpop.f32.mrb[0].mxu0
    %v2210 = vadd.f32 0.0, %v2209
    %v2211 = vpop.f32.mrb[0].mxu0
    %v2212 = vadd.f32 0.0, %v2211
    %2213 = vdwg.mxu0
    %v2214 = vld [vmem:[%s6] sm:$0xff]
    %v2215 = vld [vmem:[%s6 + $0x8] sm:$0xff]
    %v2216 = vld [vmem:[%s6 + $0x10] sm:$0xff]
    %v2217 = vld [vmem:[%s6 + $0x18] sm:$0xff]
    %v2218 = vld [vmem:[%s6 + $0x20] sm:$0xff]
    %v2219 = vld [vmem:[%s6 + $0x28] sm:$0xff]
    %v2220 = vld [vmem:[%s6 + $0x30] sm:$0xff]
    %v2221 = vld [vmem:[%s6 + $0x38] sm:$0xff]
    %v2222 = vld [vmem:[%s6 + $0x40] sm:$0xff]
    %v2223 = vld [vmem:[%s6 + $0x48] sm:$0xff]
    %v2224 = vld [vmem:[%s6 + $0x50] sm:$0xff]
    %v2225 = vld [vmem:[%s6 + $0x58] sm:$0xff]
    %v2226 = vld [vmem:[%s6 + $0x60] sm:$0xff]
    %v2227 = vld [vmem:[%s6 + $0x68] sm:$0xff]
    %v2228 = vld [vmem:[%s6 + $0x70] sm:$0xff]
    %v2229 = vld [vmem:[%s6 + $0x78] sm:$0xff]
    %v2230 = vld [vmem:[%s6 + $0x80] sm:$0xff]
    %v2231 = vld [vmem:[%s6 + $0x88] sm:$0xff]
    %v2232 = vld [vmem:[%s6 + $0x90] sm:$0xff]
    %v2233 = vld [vmem:[%s6 + $0x98] sm:$0xff]
    %v2234 = vld [vmem:[%s6 + $0xa0] sm:$0xff]
    %v2235 = vld [vmem:[%s6 + $0xa8] sm:$0xff]
    %v2236 = vld [vmem:[%s6 + $0xb0] sm:$0xff]
    %v2237 = vld [vmem:[%s6 + $0xb8] sm:$0xff]
    %v2238 = vld [vmem:[%s6 + $0xc0] sm:$0xff]
    %v2239 = vld [vmem:[%s6 + $0xc8] sm:$0xff]
    %v2240 = vld [vmem:[%s6 + $0xd0] sm:$0xff]
    %v2241 = vld [vmem:[%s6 + $0xd8] sm:$0xff]
    %v2242 = vld [vmem:[%s6 + $0xe0] sm:$0xff]
    %v2243 = vld [vmem:[%s6 + $0xe8] sm:$0xff]
    %v2244 = vld [vmem:[%s6 + $0xf0] sm:$0xff]
    %v2245 = vld [vmem:[%s6 + $0xf8] sm:$0xff]
    %v2246 = vld [vmem:[%s6 + $0x100] sm:$0xff]
    %v2247 = vld [vmem:[%s6 + $0x108] sm:$0xff]
    %v2248 = vld [vmem:[%s6 + $0x110] sm:$0xff]
    %v2249 = vld [vmem:[%s6 + $0x118] sm:$0xff]
    %v2250 = vld [vmem:[%s6 + $0x120] sm:$0xff]
    %v2251 = vld [vmem:[%s6 + $0x128] sm:$0xff]
    %v2252 = vld [vmem:[%s6 + $0x130] sm:$0xff]
    %v2253 = vld [vmem:[%s6 + $0x138] sm:$0xff]
    %v2254 = vld [vmem:[%s6 + $0x140] sm:$0xff]
    %v2255 = vld [vmem:[%s6 + $0x148] sm:$0xff]
    %v2256 = vld [vmem:[%s6 + $0x150] sm:$0xff]
    %v2257 = vld [vmem:[%s6 + $0x158] sm:$0xff]
    %v2258 = vld [vmem:[%s6 + $0x160] sm:$0xff]
    %v2259 = vld [vmem:[%s6 + $0x168] sm:$0xff]
    %v2260 = vld [vmem:[%s6 + $0x170] sm:$0xff]
    %v2261 = vld [vmem:[%s6 + $0x178] sm:$0xff]
    %v2262 = vld [vmem:[%s6 + $0x180] sm:$0xff]
    %v2263 = vld [vmem:[%s6 + $0x188] sm:$0xff]
    %v2264 = vld [vmem:[%s6 + $0x190] sm:$0xff]
    %v2265 = vld [vmem:[%s6 + $0x198] sm:$0xff]
    %v2266 = vld [vmem:[%s6 + $0x1a0] sm:$0xff]
    %v2267 = vld [vmem:[%s6 + $0x1a8] sm:$0xff]
    %v2268 = vld [vmem:[%s6 + $0x1b0] sm:$0xff]
    %v2269 = vld [vmem:[%s6 + $0x1b8] sm:$0xff]
    %v2270 = vld [vmem:[%s6 + $0x1c0] sm:$0xff]
    %v2271 = vld [vmem:[%s6 + $0x1c8] sm:$0xff]
    %v2272 = vld [vmem:[%s6 + $0x1d0] sm:$0xff]
    %v2273 = vld [vmem:[%s6 + $0x1d8] sm:$0xff]
    %v2274 = vld [vmem:[%s6 + $0x1e0] sm:$0xff]
    %v2275 = vld [vmem:[%s6 + $0x1e8] sm:$0xff]
    %v2276 = vld [vmem:[%s6 + $0x1f0] sm:$0xff]
    %v2277 = vld [vmem:[%s6 + $0x1f8] sm:$0xff]
    %v2278 = vld [vmem:[%s6 + $0x200] sm:$0xff]
    %v2279 = vld [vmem:[%s6 + $0x208] sm:$0xff]
    %v2280 = vld [vmem:[%s6 + $0x210] sm:$0xff]
    %v2281 = vld [vmem:[%s6 + $0x218] sm:$0xff]
    %v2282 = vld [vmem:[%s6 + $0x220] sm:$0xff]
    %v2283 = vld [vmem:[%s6 + $0x228] sm:$0xff]
    %v2284 = vld [vmem:[%s6 + $0x230] sm:$0xff]
    %v2285 = vld [vmem:[%s6 + $0x238] sm:$0xff]
    %v2286 = vld [vmem:[%s6 + $0x240] sm:$0xff]
    %v2287 = vld [vmem:[%s6 + $0x248] sm:$0xff]
    %v2288 = vld [vmem:[%s6 + $0x250] sm:$0xff]
    %v2289 = vld [vmem:[%s6 + $0x258] sm:$0xff]
    %v2290 = vld [vmem:[%s6 + $0x260] sm:$0xff]
    %v2291 = vld [vmem:[%s6 + $0x268] sm:$0xff]
    %v2292 = vld [vmem:[%s6 + $0x270] sm:$0xff]
    %v2293 = vld [vmem:[%s6 + $0x278] sm:$0xff]
    %v2294 = vld [vmem:[%s6 + $0x280] sm:$0xff]
    %v2295 = vld [vmem:[%s6 + $0x288] sm:$0xff]
    %v2296 = vld [vmem:[%s6 + $0x290] sm:$0xff]
    %v2297 = vld [vmem:[%s6 + $0x298] sm:$0xff]
    %v2298 = vld [vmem:[%s6 + $0x2a0] sm:$0xff]
    %v2299 = vld [vmem:[%s6 + $0x2a8] sm:$0xff]
    %v2300 = vld [vmem:[%s6 + $0x2b0] sm:$0xff]
    %v2301 = vld [vmem:[%s6 + $0x2b8] sm:$0xff]
    %v2302 = vld [vmem:[%s6 + $0x2c0] sm:$0xff]
    %v2303 = vld [vmem:[%s6 + $0x2c8] sm:$0xff]
    %v2304 = vld [vmem:[%s6 + $0x2d0] sm:$0xff]
    %v2305 = vld [vmem:[%s6 + $0x2d8] sm:$0xff]
    %v2306 = vld [vmem:[%s6 + $0x2e0] sm:$0xff]
    %v2307 = vld [vmem:[%s6 + $0x2e8] sm:$0xff]
    %v2308 = vld [vmem:[%s6 + $0x2f0] sm:$0xff]
    %v2309 = vld [vmem:[%s6 + $0x2f8] sm:$0xff]
    %vm2310 = vcmask 523264
    %v2312 = vsel %vm2310, %v2008, 0
    %v2315 = vsel %vm2310, %v2014, 0
    %v2318 = vsel %vm2310, %v2020, 0
    %v2321 = vsel %vm2310, %v2026, 0
    %v2324 = vsel %vm2310, %v2032, 0
    %2326 = vmatprep.subr.mxu0 %v2263
    %2327 = vmatpush1.msra.mxu0 %v2262
    %2328 = vmatprep.subr.mxu0 %v2265
    %2329 = vmatpush1.msra.mxu0 %v2264
    %2330 = vmatprep.subr.mxu0 %v2267
    %2331 = vmatpush1.msra.mxu0 %v2266
    %2332 = vmatprep.subr.mxu0 %v2269
    %2333 = vmatpush1.msra.mxu0 %v2268
    %2334 = vmatprep.subr.mxu0 %v2271
    %2335 = vmatpush1.msra.mxu0 %v2270
    %2336 = vmatprep.subr.mxu0 %v2273
    %2337 = vmatpush1.msra.mxu0 %v2272
    %2338 = vmatprep.subr.mxu0 %v2275
    %2339 = vmatpush1.msra.mxu0 %v2274
    %2340 = vmatprep.subr.mxu0 %v2277
    %2341 = vmatpush1.msra.mxu0 %v2276
    %2342 = vmatprep.subr.mxu0 %v2279
    %2343 = vmatpush1.msra.mxu0 %v2278
    %2344 = vmatprep.subr.mxu0 %v2281
    %2345 = vmatpush1.msra.mxu0 %v2280
    %2346 = vmatprep.subr.mxu0 %v2283
    %2347 = vmatpush1.msra.mxu0 %v2282
    %2348 = vmatprep.subr.mxu0 %v2285
    %2349 = vmatpush1.msra.mxu0 %v2284
    %2350 = vmatprep.subr.mxu0 %v2287
    %2351 = vmatpush1.msra.mxu0 %v2286
    %2352 = vmatprep.subr.mxu0 %v2289
    %2353 = vmatpush1.msra.mxu0 %v2288
    %2354 = vmatprep.subr.mxu0 %v2291
    %2355 = vmatpush1.msra.mxu0 %v2290
    %2356 = vmatprep.subr.mxu0 %v2293
    %2357 = vmatpush1.msra.mxu0 %v2292
    %2358 = vmatprep.subr.mxu0 %v2295
    %2359 = vmatpush1.msra.mxu0 %v2294
    %2360 = vmatprep.subr.mxu0 %v2297
    %2361 = vmatpush1.msra.mxu0 %v2296
    %2362 = vmatprep.subr.mxu0 %v2299
    %2363 = vmatpush1.msra.mxu0 %v2298
    %2364 = vmatprep.subr.mxu0 %v2301
    %2365 = vmatpush1.msra.mxu0 %v2300
    %2366 = vmatprep.subr.mxu0 %v2303
    %2367 = vmatpush1.msra.mxu0 %v2302
    %2368 = vmatprep.subr.mxu0 %v2305
    %2369 = vmatpush1.msra.mxu0 %v2304
    %2370 = vmatprep.subr.mxu0 %v2307
    %2371 = vmatpush1.msra.mxu0 %v2306
    %2372 = vmatprep.subr.mxu0 %v2309
    %2373 = vmatpush1.msra.mxu0 %v2308
    %2374 = vmatprep.subr.mxu0 0.0
    %2375 = vmatpush1.msra.mxu0 0.0
    %2376 = vmatprep.subr.mxu0 0.0
    %2377 = vmatpush1.msra.mxu0 0.0
    %2378 = vmatprep.subr.mxu0 0.0
    %2379 = vmatpush1.msra.mxu0 0.0
    %2380 = vmatprep.subr.mxu0 0.0
    %2381 = vmatpush1.msra.mxu0 0.0
    %2382 = vmatprep.subr.mxu0 0.0
    %2383 = vmatpush1.msra.mxu0 0.0
    %2384 = vmatprep.subr.mxu0 0.0
    %2385 = vmatpush1.msra.mxu0 0.0
    %2386 = vmatprep.subr.mxu0 0.0
    %2387 = vmatpush1.msra.mxu0 0.0
    %2388 = vmatprep.subr.mxu0 0.0
    %2389 = vmatpush1.msra.mxu0 0.0
    %2390 = vmatprep.mubr.f32.mxu0 %v2312
    %2391 = vmatmul.mubr.f32.gmra.mrb[0].mxu0 %v2006
    %v2392 = vpop.f32.mrb[0].mxu0
    %v2393 = vadd.f32 0.0, %v2392
    %v2394 = vpop.f32.mrb[0].mxu0
    %v2395 = vadd.f32 0.0, %v2394
    %2396 = vmatprep.mubr.f32.mxu0 %v2315
    %2397 = vmatmul.mubr.f32.gmra.mrb[0].mxu0 %v2012
    %v2398 = vpop.f32.mrb[0].mxu0
    %v2399 = vadd.f32 0.0, %v2398
    %v2400 = vpop.f32.mrb[0].mxu0
    %v2401 = vadd.f32 0.0, %v2400
    %2402 = vmatprep.mubr.f32.mxu0 %v2318
    %2403 = vmatmul.mubr.f32.gmra.mrb[0].mxu0 %v2018
    %v2404 = vpop.f32.mrb[0].mxu0
    %v2405 = vadd.f32 0.0, %v2404
    %v2406 = vpop.f32.mrb[0].mxu0
    %v2407 = vadd.f32 0.0, %v2406
    %2408 = vmatprep.mubr.f32.mxu0 %v2321
    %2409 = vmatmul.mubr.f32.gmra.mrb[0].mxu0 %v2024
    %v2410 = vpop.f32.mrb[0].mxu0
    %v2411 = vadd.f32 0.0, %v2410
    %v2412 = vpop.f32.mrb[0].mxu0
    %v2413 = vadd.f32 0.0, %v2412
    %2414 = vmatprep.mubr.f32.mxu0 %v2324
    %2415 = vmatmul.mubr.f32.gmra.mrb[0].mxu0 %v2030
    %v2416 = vpop.f32.mrb[0].mxu0
    %v2417 = vadd.f32 0.0, %v2416
    %v2418 = vpop.f32.mrb[0].mxu0
    %v2419 = vadd.f32 0.0, %v2418
    %2420 = vdwg.mxu0
    %v2422 = vsel %vm2310, %v1978, 0
    %v2425 = vsel %vm2310, %v1984, 0
    %v2428 = vsel %vm2310, %v1990, 0
    %v2431 = vsel %vm2310, %v1996, 0
    %v2434 = vsel %vm2310, %v2002, 0
    %2436 = vmatprep.subr.mxu0 %v2215
    %2437 = vmatpush1.msra.mxu0 %v2214
    %2438 = vmatprep.subr.mxu0 %v2217
    %2439 = vmatpush1.msra.mxu0 %v2216
    %2440 = vmatprep.subr.mxu0 %v2219
    %2441 = vmatpush1.msra.mxu0 %v2218
    %2442 = vmatprep.subr.mxu0 %v2221
    %2443 = vmatpush1.msra.mxu0 %v2220
    %2444 = vmatprep.subr.mxu0 %v2223
    %2445 = vmatpush1.msra.mxu0 %v2222
    %2446 = vmatprep.subr.mxu0 %v2225
    %2447 = vmatpush1.msra.mxu0 %v2224
    %2448 = vmatprep.subr.mxu0 %v2227
    %2449 = vmatpush1.msra.mxu0 %v2226
    %2450 = vmatprep.subr.mxu0 %v2229
    %2451 = vmatpush1.msra.mxu0 %v2228
    %2452 = vmatprep.subr.mxu0 %v2231
    %2453 = vmatpush1.msra.mxu0 %v2230
    %2454 = vmatprep.subr.mxu0 %v2233
    %2455 = vmatpush1.msra.mxu0 %v2232
    %2456 = vmatprep.subr.mxu0 %v2235
    %2457 = vmatpush1.msra.mxu0 %v2234
    %2458 = vmatprep.subr.mxu0 %v2237
    %2459 = vmatpush1.msra.mxu0 %v2236
    %2460 = vmatprep.subr.mxu0 %v2239
    %2461 = vmatpush1.msra.mxu0 %v2238
    %2462 = vmatprep.subr.mxu0 %v2241
    %2463 = vmatpush1.msra.mxu0 %v2240
    %2464 = vmatprep.subr.mxu0 %v2243
    %2465 = vmatpush1.msra.mxu0 %v2242
    %2466 = vmatprep.subr.mxu0 %v2245
    %2467 = vmatpush1.msra.mxu0 %v2244
    %2468 = vmatprep.subr.mxu0 %v2247
    %2469 = vmatpush1.msra.mxu0 %v2246
    %2470 = vmatprep.subr.mxu0 %v2249
    %2471 = vmatpush1.msra.mxu0 %v2248
    %2472 = vmatprep.subr.mxu0 %v2251
    %2473 = vmatpush1.msra.mxu0 %v2250
    %2474 = vmatprep.subr.mxu0 %v2253
    %2475 = vmatpush1.msra.mxu0 %v2252
    %2476 = vmatprep.subr.mxu0 %v2255
    %2477 = vmatpush1.msra.mxu0 %v2254
    %2478 = vmatprep.subr.mxu0 %v2257
    %2479 = vmatpush1.msra.mxu0 %v2256
    %2480 = vmatprep.subr.mxu0 %v2259
    %2481 = vmatpush1.msra.mxu0 %v2258
    %2482 = vmatprep.subr.mxu0 %v2261
    %2483 = vmatpush1.msra.mxu0 %v2260
    %2484 = vmatprep.subr.mxu0 0.0
    %2485 = vmatpush1.msra.mxu0 0.0
    %2486 = vmatprep.subr.mxu0 0.0
    %2487 = vmatpush1.msra.mxu0 0.0
    %2488 = vmatprep.subr.mxu0 0.0
    %2489 = vmatpush1.msra.mxu0 0.0
    %2490 = vmatprep.subr.mxu0 0.0
    %2491 = vmatpush1.msra.mxu0 0.0
    %2492 = vmatprep.subr.mxu0 0.0
    %2493 = vmatpush1.msra.mxu0 0.0
    %2494 = vmatprep.subr.mxu0 0.0
    %2495 = vmatpush1.msra.mxu0 0.0
    %2496 = vmatprep.subr.mxu0 0.0
    %2497 = vmatpush1.msra.mxu0 0.0
    %2498 = vmatprep.subr.mxu0 0.0
    %2499 = vmatpush1.msra.mxu0 0.0
    %2500 = vmatprep.mubr.f32.mxu0 %v2422
    %2501 = vmatmul.mubr.f32.gmra.mrb[0].mxu0 %v1976
    %v2502 = vpop.f32.mrb[0].mxu0
    %v2503 = vadd.f32 %v2393, %v2502
    %v2504 = vpop.f32.mrb[0].mxu0
    %v2505 = vadd.f32 %v2395, %v2504
    %2506 = vmatprep.mubr.f32.mxu0 %v2425
    %2507 = vmatmul.mubr.f32.gmra.mrb[0].mxu0 %v1982
    %v2508 = vpop.f32.mrb[0].mxu0
    %v2509 = vadd.f32 %v2399, %v2508
    %v2510 = vpop.f32.mrb[0].mxu0
    %v2511 = vadd.f32 %v2401, %v2510
    %2512 = vmatprep.mubr.f32.mxu0 %v2428
    %2513 = vmatmul.mubr.f32.gmra.mrb[0].mxu0 %v1988
    %v2514 = vpop.f32.mrb[0].mxu0
    %v2515 = vadd.f32 %v2405, %v2514
    %v2516 = vpop.f32.mrb[0].mxu0
    %v2517 = vadd.f32 %v2407, %v2516
    %2518 = vmatprep.mubr.f32.mxu0 %v2431
    %2519 = vmatmul.mubr.f32.gmra.mrb[0].mxu0 %v1994
    %v2520 = vpop.f32.mrb[0].mxu0
    %v2521 = vadd.f32 %v2411, %v2520
    %v2522 = vpop.f32.mrb[0].mxu0
    %v2523 = vadd.f32 %v2413, %v2522
    %2524 = vmatprep.mubr.f32.mxu0 %v2434
    %2525 = vmatmul.mubr.f32.gmra.mrb[0].mxu0 %v2000
    %v2526 = vpop.f32.mrb[0].mxu0
    %v2527 = vadd.f32 %v2417, %v2526
    %v2528 = vpop.f32.mrb[0].mxu0
    %v2529 = vadd.f32 %v2419, %v2528
    %2530 = vdwg.mxu0
    %v2531 = vld [vmem:[%s6 + $0x300] sm:$0xff]
    %v2532 = vld [vmem:[%s6 + $0x308] sm:$0xff]
    %v2533 = vld [vmem:[%s6 + $0x310] sm:$0xff]
    %v2534 = vld [vmem:[%s6 + $0x318] sm:$0xff]
    %v2535 = vld [vmem:[%s6 + $0x320] sm:$0xff]
    %v2536 = vld [vmem:[%s6 + $0x328] sm:$0xff]
    %v2537 = vld [vmem:[%s6 + $0x330] sm:$0xff]
    %v2538 = vld [vmem:[%s6 + $0x338] sm:$0xff]
    %v2539 = vld [vmem:[%s6 + $0x340] sm:$0xff]
    %v2540 = vld [vmem:[%s6 + $0x348] sm:$0xff]
    %v2541 = vld [vmem:[%s6 + $0x350] sm:$0xff]
    %v2542 = vld [vmem:[%s6 + $0x358] sm:$0xff]
    %v2543 = vld [vmem:[%s6 + $0x360] sm:$0xff]
    %v2544 = vld [vmem:[%s6 + $0x368] sm:$0xff]
    %v2545 = vld [vmem:[%s6 + $0x370] sm:$0xff]
    %v2546 = vld [vmem:[%s6 + $0x378] sm:$0xff]
    %v2547 = vld [vmem:[%s6 + $0x380] sm:$0xff]
    %v2548 = vld [vmem:[%s6 + $0x388] sm:$0xff]
    %v2549 = vld [vmem:[%s6 + $0x390] sm:$0xff]
    %v2550 = vld [vmem:[%s6 + $0x398] sm:$0xff]
    %v2551 = vld [vmem:[%s6 + $0x3a0] sm:$0xff]
    %v2552 = vld [vmem:[%s6 + $0x3a8] sm:$0xff]
    %v2553 = vld [vmem:[%s6 + $0x3b0] sm:$0xff]
    %v2554 = vld [vmem:[%s6 + $0x3b8] sm:$0xff]
    %v2555 = vld [vmem:[%s6 + $0x3c0] sm:$0xff]
    %v2556 = vld [vmem:[%s6 + $0x3c8] sm:$0xff]
    %v2557 = vld [vmem:[%s6 + $0x3d0] sm:$0xff]
    %v2558 = vld [vmem:[%s6 + $0x3d8] sm:$0xff]
    %v2559 = vld [vmem:[%s6 + $0x3e0] sm:$0xff]
    %v2560 = vld [vmem:[%s6 + $0x3e8] sm:$0xff]
    %v2561 = vld [vmem:[%s6 + $0x3f0] sm:$0xff]
    %v2562 = vld [vmem:[%s6 + $0x3f8] sm:$0xff]
    %v2563 = vld [vmem:[%s6 + $0x400] sm:$0xff]
    %v2564 = vld [vmem:[%s6 + $0x408] sm:$0xff]
    %v2565 = vld [vmem:[%s6 + $0x410] sm:$0xff]
    %v2566 = vld [vmem:[%s6 + $0x418] sm:$0xff]
    %v2567 = vld [vmem:[%s6 + $0x420] sm:$0xff]
    %v2568 = vld [vmem:[%s6 + $0x428] sm:$0xff]
    %v2569 = vld [vmem:[%s6 + $0x430] sm:$0xff]
    %v2570 = vld [vmem:[%s6 + $0x438] sm:$0xff]
    %v2571 = vld [vmem:[%s6 + $0x440] sm:$0xff]
    %v2572 = vld [vmem:[%s6 + $0x448] sm:$0xff]
    %v2573 = vld [vmem:[%s6 + $0x450] sm:$0xff]
    %v2574 = vld [vmem:[%s6 + $0x458] sm:$0xff]
    %v2575 = vld [vmem:[%s6 + $0x460] sm:$0xff]
    %v2576 = vld [vmem:[%s6 + $0x468] sm:$0xff]
    %v2577 = vld [vmem:[%s6 + $0x470] sm:$0xff]
    %v2578 = vld [vmem:[%s6 + $0x478] sm:$0xff]
    %v2580 = vsel %vm2310, %v2038, 0
    %v2583 = vsel %vm2310, %v2044, 0
    %v2586 = vsel %vm2310, %v2050, 0
    %v2589 = vsel %vm2310, %v2056, 0
    %v2592 = vsel %vm2310, %v2062, 0
    %2594 = vmatprep.subr.mxu0 %v2532
    %2595 = vmatpush1.msra.mxu0 %v2531
    %2596 = vmatprep.subr.mxu0 %v2534
    %2597 = vmatpush1.msra.mxu0 %v2533
    %2598 = vmatprep.subr.mxu0 %v2536
    %2599 = vmatpush1.msra.mxu0 %v2535
    %2600 = vmatprep.subr.mxu0 %v2538
    %2601 = vmatpush1.msra.mxu0 %v2537
    %2602 = vmatprep.subr.mxu0 %v2540
    %2603 = vmatpush1.msra.mxu0 %v2539
    %2604 = vmatprep.subr.mxu0 %v2542
    %2605 = vmatpush1.msra.mxu0 %v2541
    %2606 = vmatprep.subr.mxu0 %v2544
    %2607 = vmatpush1.msra.mxu0 %v2543
    %2608 = vmatprep.subr.mxu0 %v2546
    %2609 = vmatpush1.msra.mxu0 %v2545
    %2610 = vmatprep.subr.mxu0 %v2548
    %2611 = vmatpush1.msra.mxu0 %v2547
    %2612 = vmatprep.subr.mxu0 %v2550
    %2613 = vmatpush1.msra.mxu0 %v2549
    %2614 = vmatprep.subr.mxu0 %v2552
    %2615 = vmatpush1.msra.mxu0 %v2551
    %2616 = vmatprep.subr.mxu0 %v2554
    %2617 = vmatpush1.msra.mxu0 %v2553
    %2618 = vmatprep.subr.mxu0 %v2556
    %2619 = vmatpush1.msra.mxu0 %v2555
    %2620 = vmatprep.subr.mxu0 %v2558
    %2621 = vmatpush1.msra.mxu0 %v2557
    %2622 = vmatprep.subr.mxu0 %v2560
    %2623 = vmatpush1.msra.mxu0 %v2559
    %2624 = vmatprep.subr.mxu0 %v2562
    %2625 = vmatpush1.msra.mxu0 %v2561
    %2626 = vmatprep.subr.mxu0 %v2564
    %2627 = vmatpush1.msra.mxu0 %v2563
    %2628 = vmatprep.subr.mxu0 %v2566
    %2629 = vmatpush1.msra.mxu0 %v2565
    %2630 = vmatprep.subr.mxu0 %v2568
    %2631 = vmatpush1.msra.mxu0 %v2567
    %2632 = vmatprep.subr.mxu0 %v2570
    %2633 = vmatpush1.msra.mxu0 %v2569
    %2634 = vmatprep.subr.mxu0 %v2572
    %2635 = vmatpush1.msra.mxu0 %v2571
    %2636 = vmatprep.subr.mxu0 %v2574
    %2637 = vmatpush1.msra.mxu0 %v2573
    %2638 = vmatprep.subr.mxu0 %v2576
    %2639 = vmatpush1.msra.mxu0 %v2575
    %2640 = vmatprep.subr.mxu0 %v2578
    %2641 = vmatpush1.msra.mxu0 %v2577
    %2642 = vmatprep.subr.mxu0 0.0
    %2643 = vmatpush1.msra.mxu0 0.0
    %2644 = vmatprep.subr.mxu0 0.0
    %2645 = vmatpush1.msra.mxu0 0.0
    %2646 = vmatprep.subr.mxu0 0.0
    %2647 = vmatpush1.msra.mxu0 0.0
    %2648 = vmatprep.subr.mxu0 0.0
    %2649 = vmatpush1.msra.mxu0 0.0
    %2650 = vmatprep.subr.mxu0 0.0
    %2651 = vmatpush1.msra.mxu0 0.0
    %2652 = vmatprep.subr.mxu0 0.0
    %2653 = vmatpush1.msra.mxu0 0.0
    %2654 = vmatprep.subr.mxu0 0.0
    %2655 = vmatpush1.msra.mxu0 0.0
    %2656 = vmatprep.subr.mxu0 0.0
    %2657 = vmatpush1.msra.mxu0 0.0
    %2658 = vmatprep.mubr.f32.mxu0 %v2580
    %2659 = vmatmul.mubr.f32.gmra.mrb[0].mxu0 %v2036
    %v2660 = vpop.f32.mrb[0].mxu0
    %v2661 = vadd.f32 0.0, %v2660
    %v2662 = vpop.f32.mrb[0].mxu0
    %v2663 = vadd.f32 0.0, %v2662
    %2664 = vmatprep.mubr.f32.mxu0 %v2583
    %2665 = vmatmul.mubr.f32.gmra.mrb[0].mxu0 %v2042
    %v2666 = vpop.f32.mrb[0].mxu0
    %v2667 = vadd.f32 0.0, %v2666
    %v2668 = vpop.f32.mrb[0].mxu0
    %v2669 = vadd.f32 0.0, %v2668
    %2670 = vmatprep.mubr.f32.mxu0 %v2586
    %2671 = vmatmul.mubr.f32.gmra.mrb[0].mxu0 %v2048
    %v2672 = vpop.f32.mrb[0].mxu0
    %v2673 = vadd.f32 0.0, %v2672
    %v2674 = vpop.f32.mrb[0].mxu0
    %v2675 = vadd.f32 0.0, %v2674
    %2676 = vmatprep.mubr.f32.mxu0 %v2589
    %2677 = vmatmul.mubr.f32.gmra.mrb[0].mxu0 %v2054
    %v2678 = vpop.f32.mrb[0].mxu0
    %v2679 = vadd.f32 0.0, %v2678
    %v2680 = vpop.f32.mrb[0].mxu0
    %v2681 = vadd.f32 0.0, %v2680
    %2682 = vmatprep.mubr.f32.mxu0 %v2592
    %2683 = vmatmul.mubr.f32.gmra.mrb[0].mxu0 %v2060
    %v2684 = vpop.f32.mrb[0].mxu0
    %v2685 = vadd.f32 0.0, %v2684
    %v2686 = vpop.f32.mrb[0].mxu0
    %v2687 = vadd.f32 0.0, %v2686
    %2688 = vdwg.mxu0
    %v2689 = vadd.f32 %v2503, %v2661
    %v2690 = vadd.f32 %v2505, %v2663
    %v2691 = vadd.f32 %v2509, %v2667
    %v2692 = vadd.f32 %v2511, %v2669
    %v2693 = vadd.f32 %v2515, %v2673
    %v2694 = vadd.f32 %v2517, %v2675
    %v2695 = vadd.f32 %v2521, %v2679
    %v2696 = vadd.f32 %v2523, %v2681
    %v2697 = vadd.f32 %v2527, %v2685
    %v2698 = vadd.f32 %v2529, %v2687
    %v2699 = vld [vmem:[%s6 + $0x480] sm:$0xff]
    %v2700 = vld [vmem:[%s6 + $0x488] sm:$0xff]
    %v2701 = vld [vmem:[%s6 + $0x490] sm:$0xff]
    %v2702 = vld [vmem:[%s6 + $0x498] sm:$0xff]
    %v2703 = vld [vmem:[%s6 + $0x4a0] sm:$0xff]
    %v2704 = vld [vmem:[%s6 + $0x4a8] sm:$0xff]
    %v2705 = vld [vmem:[%s6 + $0x4b0] sm:$0xff]
    %v2706 = vld [vmem:[%s6 + $0x4b8] sm:$0xff]
    %v2707 = vld [vmem:[%s6 + $0x4c0] sm:$0xff]
    %v2708 = vld [vmem:[%s6 + $0x4c8] sm:$0xff]
    %v2709 = vld [vmem:[%s6 + $0x4d0] sm:$0xff]
    %v2710 = vld [vmem:[%s6 + $0x4d8] sm:$0xff]
    %v2711 = vld [vmem:[%s6 + $0x4e0] sm:$0xff]
    %v2712 = vld [vmem:[%s6 + $0x4e8] sm:$0xff]
    %v2713 = vld [vmem:[%s6 + $0x4f0] sm:$0xff]
    %v2714 = vld [vmem:[%s6 + $0x4f8] sm:$0xff]
    %v2715 = vld [vmem:[%s6 + $0x500] sm:$0xff]
    %v2716 = vld [vmem:[%s6 + $0x508] sm:$0xff]
    %v2717 = vld [vmem:[%s6 + $0x510] sm:$0xff]
    %v2718 = vld [vmem:[%s6 + $0x518] sm:$0xff]
    %v2719 = vld [vmem:[%s6 + $0x520] sm:$0xff]
    %v2720 = vld [vmem:[%s6 + $0x528] sm:$0xff]
    %v2721 = vld [vmem:[%s6 + $0x530] sm:$0xff]
    %v2722 = vld [vmem:[%s6 + $0x538] sm:$0xff]
    %v2723 = vld [vmem:[%s6 + $0x540] sm:$0xff]
    %v2724 = vld [vmem:[%s6 + $0x548] sm:$0xff]
    %v2725 = vld [vmem:[%s6 + $0x550] sm:$0xff]
    %v2726 = vld [vmem:[%s6 + $0x558] sm:$0xff]
    %v2727 = vld [vmem:[%s6 + $0x560] sm:$0xff]
    %v2728 = vld [vmem:[%s6 + $0x568] sm:$0xff]
    %v2729 = vld [vmem:[%s6 + $0x570] sm:$0xff]
    %v2730 = vld [vmem:[%s6 + $0x578] sm:$0xff]
    %v2731 = vld [vmem:[%s6 + $0x580] sm:$0xff]
    %v2732 = vld [vmem:[%s6 + $0x588] sm:$0xff]
    %v2733 = vld [vmem:[%s6 + $0x590] sm:$0xff]
    %v2734 = vld [vmem:[%s6 + $0x598] sm:$0xff]
    %v2735 = vld [vmem:[%s6 + $0x5a0] sm:$0xff]
    %v2736 = vld [vmem:[%s6 + $0x5a8] sm:$0xff]
    %v2737 = vld [vmem:[%s6 + $0x5b0] sm:$0xff]
    %v2738 = vld [vmem:[%s6 + $0x5b8] sm:$0xff]
    %v2739 = vld [vmem:[%s6 + $0x5c0] sm:$0xff]
    %v2740 = vld [vmem:[%s6 + $0x5c8] sm:$0xff]
    %v2741 = vld [vmem:[%s6 + $0x5d0] sm:$0xff]
    %v2742 = vld [vmem:[%s6 + $0x5d8] sm:$0xff]
    %v2743 = vld [vmem:[%s6 + $0x5e0] sm:$0xff]
    %v2744 = vld [vmem:[%s6 + $0x5e8] sm:$0xff]
    %v2745 = vld [vmem:[%s6 + $0x5f0] sm:$0xff]
    %v2746 = vld [vmem:[%s6 + $0x5f8] sm:$0xff]
    %v2748 = vsel %vm2310, %v2068, 0
    %v2751 = vsel %vm2310, %v2074, 0
    %v2754 = vsel %vm2310, %v2080, 0
    %v2757 = vsel %vm2310, %v2086, 0
    %v2760 = vsel %vm2310, %v2092, 0
    %2762 = vmatprep.subr.mxu0 %v2700
    %2763 = vmatpush1.msra.mxu0 %v2699
    %2764 = vmatprep.subr.mxu0 %v2702
    %2765 = vmatpush1.msra.mxu0 %v2701
    %2766 = vmatprep.subr.mxu0 %v2704
    %2767 = vmatpush1.msra.mxu0 %v2703
    %2768 = vmatprep.subr.mxu0 %v2706
    %2769 = vmatpush1.msra.mxu0 %v2705
    %2770 = vmatprep.subr.mxu0 %v2708
    %2771 = vmatpush1.msra.mxu0 %v2707
    %2772 = vmatprep.subr.mxu0 %v2710
    %2773 = vmatpush1.msra.mxu0 %v2709
    %2774 = vmatprep.subr.mxu0 %v2712
    %2775 = vmatpush1.msra.mxu0 %v2711
    %2776 = vmatprep.subr.mxu0 %v2714
    %2777 = vmatpush1.msra.mxu0 %v2713
    %2778 = vmatprep.subr.mxu0 %v2716
    %2779 = vmatpush1.msra.mxu0 %v2715
    %2780 = vmatprep.subr.mxu0 %v2718
    %2781 = vmatpush1.msra.mxu0 %v2717
    %2782 = vmatprep.subr.mxu0 %v2720
    %2783 = vmatpush1.msra.mxu0 %v2719
    %2784 = vmatprep.subr.mxu0 %v2722
    %2785 = vmatpush1.msra.mxu0 %v2721
    %2786 = vmatprep.subr.mxu0 %v2724
    %2787 = vmatpush1.msra.mxu0 %v2723
    %2788 = vmatprep.subr.mxu0 %v2726
    %2789 = vmatpush1.msra.mxu0 %v2725
    %2790 = vmatprep.subr.mxu0 %v2728
    %2791 = vmatpush1.msra.mxu0 %v2727
    %2792 = vmatprep.subr.mxu0 %v2730
    %2793 = vmatpush1.msra.mxu0 %v2729
    %2794 = vmatprep.subr.mxu0 %v2732
    %2795 = vmatpush1.msra.mxu0 %v2731
    %2796 = vmatprep.subr.mxu0 %v2734
    %2797 = vmatpush1.msra.mxu0 %v2733
    %2798 = vmatprep.subr.mxu0 %v2736
    %2799 = vmatpush1.msra.mxu0 %v2735
    %2800 = vmatprep.subr.mxu0 %v2738
    %2801 = vmatpush1.msra.mxu0 %v2737
    %2802 = vmatprep.subr.mxu0 %v2740
    %2803 = vmatpush1.msra.mxu0 %v2739
    %2804 = vmatprep.subr.mxu0 %v2742
    %2805 = vmatpush1.msra.mxu0 %v2741
    %2806 = vmatprep.subr.mxu0 %v2744
    %2807 = vmatpush1.msra.mxu0 %v2743
    %2808 = vmatprep.subr.mxu0 %v2746
    %2809 = vmatpush1.msra.mxu0 %v2745
    %2810 = vmatprep.subr.mxu0 0.0
    %2811 = vmatpush1.msra.mxu0 0.0
    %2812 = vmatprep.subr.mxu0 0.0
    %2813 = vmatpush1.msra.mxu0 0.0
    %2814 = vmatprep.subr.mxu0 0.0
    %2815 = vmatpush1.msra.mxu0 0.0
    %2816 = vmatprep.subr.mxu0 0.0
    %2817 = vmatpush1.msra.mxu0 0.0
    %2818 = vmatprep.subr.mxu0 0.0
    %2819 = vmatpush1.msra.mxu0 0.0
    %2820 = vmatprep.subr.mxu0 0.0
    %2821 = vmatpush1.msra.mxu0 0.0
    %2822 = vmatprep.subr.mxu0 0.0
    %2823 = vmatpush1.msra.mxu0 0.0
    %2824 = vmatprep.subr.mxu0 0.0
    %2825 = vmatpush1.msra.mxu0 0.0
    %2826 = vmatprep.mubr.f32.mxu0 %v2748
    %2827 = vmatmul.mubr.f32.gmra.mrb[0].mxu0 %v2066
    %v2828 = vpop.f32.mrb[0].mxu0
    %v2829 = vadd.f32 0.0, %v2828
    %v2830 = vpop.f32.mrb[0].mxu0
    %v2831 = vadd.f32 0.0, %v2830
    %2832 = vmatprep.mubr.f32.mxu0 %v2751
    %2833 = vmatmul.mubr.f32.gmra.mrb[0].mxu0 %v2072
    %v2834 = vpop.f32.mrb[0].mxu0
    %v2835 = vadd.f32 0.0, %v2834
    %v2836 = vpop.f32.mrb[0].mxu0
    %v2837 = vadd.f32 0.0, %v2836
    %2838 = vmatprep.mubr.f32.mxu0 %v2754
    %2839 = vmatmul.mubr.f32.gmra.mrb[0].mxu0 %v2078
    %v2840 = vpop.f32.mrb[0].mxu0
    %v2841 = vadd.f32 0.0, %v2840
    %v2842 = vpop.f32.mrb[0].mxu0
    %v2843 = vadd.f32 0.0, %v2842
    %2844 = vmatprep.mubr.f32.mxu0 %v2757
    %2845 = vmatmul.mubr.f32.gmra.mrb[0].mxu0 %v2084
    %v2846 = vpop.f32.mrb[0].mxu0
    %v2847 = vadd.f32 0.0, %v2846
    %v2848 = vpop.f32.mrb[0].mxu0
    %v2849 = vadd.f32 0.0, %v2848
    %2850 = vmatprep.mubr.f32.mxu0 %v2760
    %2851 = vmatmul.mubr.f32.gmra.mrb[0].mxu0 %v2090
    %v2852 = vpop.f32.mrb[0].mxu0
    %v2853 = vadd.f32 0.0, %v2852
    %v2854 = vpop.f32.mrb[0].mxu0
    %v2855 = vadd.f32 0.0, %v2854
    %2856 = vdwg.mxu0
    %v2857 = vadd.f32 %v2689, %v2829
    %v2858 = vadd.f32 %v2690, %v2831
    %v2859 = vadd.f32 %v2691, %v2835
    %v2860 = vadd.f32 %v2692, %v2837
    %v2861 = vadd.f32 %v2693, %v2841
    %v2862 = vadd.f32 %v2694, %v2843
    %v2863 = vadd.f32 %v2695, %v2847
    %v2864 = vadd.f32 %v2696, %v2849
    %v2865 = vadd.f32 %v2697, %v2853
    %v2866 = vadd.f32 %v2698, %v2855
    %v2867 = vld [vmem:[%s6 + $0x600] sm:$0xff]
    %v2868 = vld [vmem:[%s6 + $0x608] sm:$0xff]
    %v2869 = vld [vmem:[%s6 + $0x610] sm:$0xff]
    %v2870 = vld [vmem:[%s6 + $0x618] sm:$0xff]
    %v2871 = vld [vmem:[%s6 + $0x620] sm:$0xff]
    %v2872 = vld [vmem:[%s6 + $0x628] sm:$0xff]
    %v2873 = vld [vmem:[%s6 + $0x630] sm:$0xff]
    %v2874 = vld [vmem:[%s6 + $0x638] sm:$0xff]
    %v2875 = vld [vmem:[%s6 + $0x640] sm:$0xff]
    %v2876 = vld [vmem:[%s6 + $0x648] sm:$0xff]
    %v2877 = vld [vmem:[%s6 + $0x650] sm:$0xff]
    %v2878 = vld [vmem:[%s6 + $0x658] sm:$0xff]
    %v2879 = vld [vmem:[%s6 + $0x660] sm:$0xff]
    %v2880 = vld [vmem:[%s6 + $0x668] sm:$0xff]
    %v2881 = vld [vmem:[%s6 + $0x670] sm:$0xff]
    %v2882 = vld [vmem:[%s6 + $0x678] sm:$0xff]
    %v2883 = vld [vmem:[%s6 + $0x680] sm:$0xff]
    %v2884 = vld [vmem:[%s6 + $0x688] sm:$0xff]
    %v2885 = vld [vmem:[%s6 + $0x690] sm:$0xff]
    %v2886 = vld [vmem:[%s6 + $0x698] sm:$0xff]
    %v2887 = vld [vmem:[%s6 + $0x6a0] sm:$0xff]
    %v2888 = vld [vmem:[%s6 + $0x6a8] sm:$0xff]
    %v2889 = vld [vmem:[%s6 + $0x6b0] sm:$0xff]
    %v2890 = vld [vmem:[%s6 + $0x6b8] sm:$0xff]
    %v2891 = vld [vmem:[%s6 + $0x6c0] sm:$0xff]
    %v2892 = vld [vmem:[%s6 + $0x6c8] sm:$0xff]
    %v2893 = vld [vmem:[%s6 + $0x6d0] sm:$0xff]
    %v2894 = vld [vmem:[%s6 + $0x6d8] sm:$0xff]
    %v2895 = vld [vmem:[%s6 + $0x6e0] sm:$0xff]
    %v2896 = vld [vmem:[%s6 + $0x6e8] sm:$0xff]
    %v2897 = vld [vmem:[%s6 + $0x6f0] sm:$0xff]
    %v2898 = vld [vmem:[%s6 + $0x6f8] sm:$0xff]
    %v2899 = vld [vmem:[%s6 + $0x700] sm:$0xff]
    %v2900 = vld [vmem:[%s6 + $0x708] sm:$0xff]
    %v2901 = vld [vmem:[%s6 + $0x710] sm:$0xff]
    %v2902 = vld [vmem:[%s6 + $0x718] sm:$0xff]
    %v2903 = vld [vmem:[%s6 + $0x720] sm:$0xff]
    %v2904 = vld [vmem:[%s6 + $0x728] sm:$0xff]
    %v2905 = vld [vmem:[%s6 + $0x730] sm:$0xff]
    %v2906 = vld [vmem:[%s6 + $0x738] sm:$0xff]
    %v2907 = vld [vmem:[%s6 + $0x740] sm:$0xff]
    %v2908 = vld [vmem:[%s6 + $0x748] sm:$0xff]
    %v2909 = vld [vmem:[%s6 + $0x750] sm:$0xff]
    %v2910 = vld [vmem:[%s6 + $0x758] sm:$0xff]
    %v2911 = vld [vmem:[%s6 + $0x760] sm:$0xff]
    %v2912 = vld [vmem:[%s6 + $0x768] sm:$0xff]
    %v2913 = vld [vmem:[%s6 + $0x770] sm:$0xff]
    %v2914 = vld [vmem:[%s6 + $0x778] sm:$0xff]
    %v2916 = vsel %vm2310, %v2098, 0
    %v2919 = vsel %vm2310, %v2104, 0
    %v2922 = vsel %vm2310, %v2110, 0
    %v2925 = vsel %vm2310, %v2116, 0
    %v2928 = vsel %vm2310, %v2122, 0
    %2930 = vmatprep.subr.mxu0 %v2868
    %2931 = vmatpush1.msra.mxu0 %v2867
    %2932 = vmatprep.subr.mxu0 %v2870
    %2933 = vmatpush1.msra.mxu0 %v2869
    %2934 = vmatprep.subr.mxu0 %v2872
    %2935 = vmatpush1.msra.mxu0 %v2871
    %2936 = vmatprep.subr.mxu0 %v2874
    %2937 = vmatpush1.msra.mxu0 %v2873
    %2938 = vmatprep.subr.mxu0 %v2876
    %2939 = vmatpush1.msra.mxu0 %v2875
    %2940 = vmatprep.subr.mxu0 %v2878
    %2941 = vmatpush1.msra.mxu0 %v2877
    %2942 = vmatprep.subr.mxu0 %v2880
    %2943 = vmatpush1.msra.mxu0 %v2879
    %2944 = vmatprep.subr.mxu0 %v2882
    %2945 = vmatpush1.msra.mxu0 %v2881
    %2946 = vmatprep.subr.mxu0 %v2884
    %2947 = vmatpush1.msra.mxu0 %v2883
    %2948 = vmatprep.subr.mxu0 %v2886
    %2949 = vmatpush1.msra.mxu0 %v2885
    %2950 = vmatprep.subr.mxu0 %v2888
    %2951 = vmatpush1.msra.mxu0 %v2887
    %2952 = vmatprep.subr.mxu0 %v2890
    %2953 = vmatpush1.msra.mxu0 %v2889
    %2954 = vmatprep.subr.mxu0 %v2892
    %2955 = vmatpush1.msra.mxu0 %v2891
    %2956 = vmatprep.subr.mxu0 %v2894
    %2957 = vmatpush1.msra.mxu0 %v2893
    %2958 = vmatprep.subr.mxu0 %v2896
    %2959 = vmatpush1.msra.mxu0 %v2895
    %2960 = vmatprep.subr.mxu0 %v2898
    %2961 = vmatpush1.msra.mxu0 %v2897
    %2962 = vmatprep.subr.mxu0 %v2900
    %2963 = vmatpush1.msra.mxu0 %v2899
    %2964 = vmatprep.subr.mxu0 %v2902
    %2965 = vmatpush1.msra.mxu0 %v2901
    %2966 = vmatprep.subr.mxu0 %v2904
    %2967 = vmatpush1.msra.mxu0 %v2903
    %2968 = vmatprep.subr.mxu0 %v2906
    %2969 = vmatpush1.msra.mxu0 %v2905
    %2970 = vmatprep.subr.mxu0 %v2908
    %2971 = vmatpush1.msra.mxu0 %v2907
    %2972 = vmatprep.subr.mxu0 %v2910
    %2973 = vmatpush1.msra.mxu0 %v2909
    %2974 = vmatprep.subr.mxu0 %v2912
    %2975 = vmatpush1.msra.mxu0 %v2911
    %2976 = vmatprep.subr.mxu0 %v2914
    %2977 = vmatpush1.msra.mxu0 %v2913
    %2978 = vmatprep.subr.mxu0 0.0
    %2979 = vmatpush1.msra.mxu0 0.0
    %2980 = vmatprep.subr.mxu0 0.0
    %2981 = vmatpush1.msra.mxu0 0.0
    %2982 = vmatprep.subr.mxu0 0.0
    %2983 = vmatpush1.msra.mxu0 0.0
    %2984 = vmatprep.subr.mxu0 0.0
    %2985 = vmatpush1.msra.mxu0 0.0
    %2986 = vmatprep.subr.mxu0 0.0
    %2987 = vmatpush1.msra.mxu0 0.0
    %2988 = vmatprep.subr.mxu0 0.0
    %2989 = vmatpush1.msra.mxu0 0.0
    %2990 = vmatprep.subr.mxu0 0.0
    %2991 = vmatpush1.msra.mxu0 0.0
    %2992 = vmatprep.subr.mxu0 0.0
    %2993 = vmatpush1.msra.mxu0 0.0
    %2994 = vmatprep.mubr.f32.mxu0 %v2916
    %2995 = vmatmul.mubr.f32.gmra.mrb[0].mxu0 %v2096
    %v2996 = vpop.f32.mrb[0].mxu0
    %v2997 = vadd.f32 0.0, %v2996
    %v2998 = vpop.f32.mrb[0].mxu0
    %v2999 = vadd.f32 0.0, %v2998
    %3000 = vmatprep.mubr.f32.mxu0 %v2919
    %3001 = vmatmul.mubr.f32.gmra.mrb[0].mxu0 %v2102
    %v3002 = vpop.f32.mrb[0].mxu0
    %v3003 = vadd.f32 0.0, %v3002
    %v3004 = vpop.f32.mrb[0].mxu0
    %v3005 = vadd.f32 0.0, %v3004
    %3006 = vmatprep.mubr.f32.mxu0 %v2922
    %3007 = vmatmul.mubr.f32.gmra.mrb[0].mxu0 %v2108
    %v3008 = vpop.f32.mrb[0].mxu0
    %v3009 = vadd.f32 0.0, %v3008
    %v3010 = vpop.f32.mrb[0].mxu0
    %v3011 = vadd.f32 0.0, %v3010
    %3012 = vmatprep.mubr.f32.mxu0 %v2925
    %3013 = vmatmul.mubr.f32.gmra.mrb[0].mxu0 %v2114
    %v3014 = vpop.f32.mrb[0].mxu0
    %v3015 = vadd.f32 0.0, %v3014
    %v3016 = vpop.f32.mrb[0].mxu0
    %v3017 = vadd.f32 0.0, %v3016
    %3018 = vmatprep.mubr.f32.mxu0 %v2928
    %3019 = vmatmul.mubr.f32.gmra.mrb[0].mxu0 %v2120
    %v3020 = vpop.f32.mrb[0].mxu0
    %v3021 = vadd.f32 0.0, %v3020
    %v3022 = vpop.f32.mrb[0].mxu0
    %v3023 = vadd.f32 0.0, %v3022
    %3024 = vdwg.mxu0
    %v3025 = vadd.f32 %v2857, %v2997
    %v3026 = vadd.f32 %v2858, %v2999
    %v3027 = vadd.f32 %v2859, %v3003
    %v3028 = vadd.f32 %v2860, %v3005
    %v3029 = vadd.f32 %v2861, %v3009
    %v3030 = vadd.f32 %v2862, %v3011
    %v3031 = vadd.f32 %v2863, %v3015
    %v3032 = vadd.f32 %v2864, %v3017
    %v3033 = vadd.f32 %v2865, %v3021
    %v3034 = vadd.f32 %v2866, %v3023
    %v3035 = vld [vmem:[%s6 + $0x780] sm:$0xff]
    %v3036 = vld [vmem:[%s6 + $0x788] sm:$0xff]
    %v3037 = vld [vmem:[%s6 + $0x790] sm:$0xff]
    %v3038 = vld [vmem:[%s6 + $0x798] sm:$0xff]
    %v3039 = vld [vmem:[%s6 + $0x7a0] sm:$0xff]
    %v3040 = vld [vmem:[%s6 + $0x7a8] sm:$0xff]
    %v3041 = vld [vmem:[%s6 + $0x7b0] sm:$0xff]
    %v3042 = vld [vmem:[%s6 + $0x7b8] sm:$0xff]
    %v3043 = vld [vmem:[%s6 + $0x7c0] sm:$0xff]
    %v3044 = vld [vmem:[%s6 + $0x7c8] sm:$0xff]
    %v3045 = vld [vmem:[%s6 + $0x7d0] sm:$0xff]
    %v3046 = vld [vmem:[%s6 + $0x7d8] sm:$0xff]
    %v3047 = vld [vmem:[%s6 + $0x7e0] sm:$0xff]
    %v3048 = vld [vmem:[%s6 + $0x7e8] sm:$0xff]
    %v3049 = vld [vmem:[%s6 + $0x7f0] sm:$0xff]
    %v3050 = vld [vmem:[%s6 + $0x7f8] sm:$0xff]
    %v3051 = vld [vmem:[%s6 + $0x800] sm:$0xff]
    %v3052 = vld [vmem:[%s6 + $0x808] sm:$0xff]
    %v3053 = vld [vmem:[%s6 + $0x810] sm:$0xff]
    %v3054 = vld [vmem:[%s6 + $0x818] sm:$0xff]
    %v3055 = vld [vmem:[%s6 + $0x820] sm:$0xff]
    %v3056 = vld [vmem:[%s6 + $0x828] sm:$0xff]
    %v3057 = vld [vmem:[%s6 + $0x830] sm:$0xff]
    %v3058 = vld [vmem:[%s6 + $0x838] sm:$0xff]
    %v3059 = vld [vmem:[%s6 + $0x840] sm:$0xff]
    %v3060 = vld [vmem:[%s6 + $0x848] sm:$0xff]
    %v3061 = vld [vmem:[%s6 + $0x850] sm:$0xff]
    %v3062 = vld [vmem:[%s6 + $0x858] sm:$0xff]
    %v3063 = vld [vmem:[%s6 + $0x860] sm:$0xff]
    %v3064 = vld [vmem:[%s6 + $0x868] sm:$0xff]
    %v3065 = vld [vmem:[%s6 + $0x870] sm:$0xff]
    %v3066 = vld [vmem:[%s6 + $0x878] sm:$0xff]
    %v3067 = vld [vmem:[%s6 + $0x880] sm:$0xff]
    %v3068 = vld [vmem:[%s6 + $0x888] sm:$0xff]
    %v3069 = vld [vmem:[%s6 + $0x890] sm:$0xff]
    %v3070 = vld [vmem:[%s6 + $0x898] sm:$0xff]
    %v3071 = vld [vmem:[%s6 + $0x8a0] sm:$0xff]
    %v3072 = vld [vmem:[%s6 + $0x8a8] sm:$0xff]
    %v3073 = vld [vmem:[%s6 + $0x8b0] sm:$0xff]
    %v3074 = vld [vmem:[%s6 + $0x8b8] sm:$0xff]
    %v3075 = vld [vmem:[%s6 + $0x8c0] sm:$0xff]
    %v3076 = vld [vmem:[%s6 + $0x8c8] sm:$0xff]
    %v3077 = vld [vmem:[%s6 + $0x8d0] sm:$0xff]
    %v3078 = vld [vmem:[%s6 + $0x8d8] sm:$0xff]
    %v3079 = vld [vmem:[%s6 + $0x8e0] sm:$0xff]
    %v3080 = vld [vmem:[%s6 + $0x8e8] sm:$0xff]
    %v3081 = vld [vmem:[%s6 + $0x8f0] sm:$0xff]
    %v3082 = vld [vmem:[%s6 + $0x8f8] sm:$0xff]
    %v3084 = vsel %vm2310, %v2128, 0
    %v3087 = vsel %vm2310, %v2134, 0
    %v3090 = vsel %vm2310, %v2140, 0
    %v3093 = vsel %vm2310, %v2146, 0
    %v3096 = vsel %vm2310, %v2152, 0
    %3098 = vmatprep.subr.mxu0 %v3036
    %3099 = vmatpush1.msra.mxu0 %v3035
    %3100 = vmatprep.subr.mxu0 %v3038
    %3101 = vmatpush1.msra.mxu0 %v3037
    %3102 = vmatprep.subr.mxu0 %v3040
    %3103 = vmatpush1.msra.mxu0 %v3039
    %3104 = vmatprep.subr.mxu0 %v3042
    %3105 = vmatpush1.msra.mxu0 %v3041
    %3106 = vmatprep.subr.mxu0 %v3044
    %3107 = vmatpush1.msra.mxu0 %v3043
    %3108 = vmatprep.subr.mxu0 %v3046
    %3109 = vmatpush1.msra.mxu0 %v3045
    %3110 = vmatprep.subr.mxu0 %v3048
    %3111 = vmatpush1.msra.mxu0 %v3047
    %3112 = vmatprep.subr.mxu0 %v3050
    %3113 = vmatpush1.msra.mxu0 %v3049
    %3114 = vmatprep.subr.mxu0 %v3052
    %3115 = vmatpush1.msra.mxu0 %v3051
    %3116 = vmatprep.subr.mxu0 %v3054
    %3117 = vmatpush1.msra.mxu0 %v3053
    %3118 = vmatprep.subr.mxu0 %v3056
    %3119 = vmatpush1.msra.mxu0 %v3055
    %3120 = vmatprep.subr.mxu0 %v3058
    %3121 = vmatpush1.msra.mxu0 %v3057
    %3122 = vmatprep.subr.mxu0 %v3060
    %3123 = vmatpush1.msra.mxu0 %v3059
    %3124 = vmatprep.subr.mxu0 %v3062
    %3125 = vmatpush1.msra.mxu0 %v3061
    %3126 = vmatprep.subr.mxu0 %v3064
    %3127 = vmatpush1.msra.mxu0 %v3063
    %3128 = vmatprep.subr.mxu0 %v3066
    %3129 = vmatpush1.msra.mxu0 %v3065
    %3130 = vmatprep.subr.mxu0 %v3068
    %3131 = vmatpush1.msra.mxu0 %v3067
    %3132 = vmatprep.subr.mxu0 %v3070
    %3133 = vmatpush1.msra.mxu0 %v3069
    %3134 = vmatprep.subr.mxu0 %v3072
    %3135 = vmatpush1.msra.mxu0 %v3071
    %3136 = vmatprep.subr.mxu0 %v3074
    %3137 = vmatpush1.msra.mxu0 %v3073
    %3138 = vmatprep.subr.mxu0 %v3076
    %3139 = vmatpush1.msra.mxu0 %v3075
    %3140 = vmatprep.subr.mxu0 %v3078
    %3141 = vmatpush1.msra.mxu0 %v3077
    %3142 = vmatprep.subr.mxu0 %v3080
    %3143 = vmatpush1.msra.mxu0 %v3079
    %3144 = vmatprep.subr.mxu0 %v3082
    %3145 = vmatpush1.msra.mxu0 %v3081
    %3146 = vmatprep.subr.mxu0 0.0
    %3147 = vmatpush1.msra.mxu0 0.0
    %3148 = vmatprep.subr.mxu0 0.0
    %3149 = vmatpush1.msra.mxu0 0.0
    %3150 = vmatprep.subr.mxu0 0.0
    %3151 = vmatpush1.msra.mxu0 0.0
    %3152 = vmatprep.subr.mxu0 0.0
    %3153 = vmatpush1.msra.mxu0 0.0
    %3154 = vmatprep.subr.mxu0 0.0
    %3155 = vmatpush1.msra.mxu0 0.0
    %3156 = vmatprep.subr.mxu0 0.0
    %3157 = vmatpush1.msra.mxu0 0.0
    %3158 = vmatprep.subr.mxu0 0.0
    %3159 = vmatpush1.msra.mxu0 0.0
    %3160 = vmatprep.subr.mxu0 0.0
    %3161 = vmatpush1.msra.mxu0 0.0
    %3162 = vmatprep.mubr.f32.mxu0 %v3084
    %3163 = vmatmul.mubr.f32.gmra.mrb[0].mxu0 %v2126
    %v3164 = vpop.f32.mrb[0].mxu0
    %v3165 = vadd.f32 0.0, %v3164
    %v3166 = vpop.f32.mrb[0].mxu0
    %v3167 = vadd.f32 0.0, %v3166
    %3168 = vmatprep.mubr.f32.mxu0 %v3087
    %3169 = vmatmul.mubr.f32.gmra.mrb[0].mxu0 %v2132
    %v3170 = vpop.f32.mrb[0].mxu0
    %v3171 = vadd.f32 0.0, %v3170
    %v3172 = vpop.f32.mrb[0].mxu0
    %v3173 = vadd.f32 0.0, %v3172
    %3174 = vmatprep.mubr.f32.mxu0 %v3090
    %3175 = vmatmul.mubr.f32.gmra.mrb[0].mxu0 %v2138
    %v3176 = vpop.f32.mrb[0].mxu0
    %v3177 = vadd.f32 0.0, %v3176
    %v3178 = vpop.f32.mrb[0].mxu0
    %v3179 = vadd.f32 0.0, %v3178
    %3180 = vmatprep.mubr.f32.mxu0 %v3093
    %3181 = vmatmul.mubr.f32.gmra.mrb[0].mxu0 %v2144
    %v3182 = vpop.f32.mrb[0].mxu0
    %v3183 = vadd.f32 0.0, %v3182
    %v3184 = vpop.f32.mrb[0].mxu0
    %v3185 = vadd.f32 0.0, %v3184
    %3186 = vmatprep.mubr.f32.mxu0 %v3096
    %3187 = vmatmul.mubr.f32.gmra.mrb[0].mxu0 %v2150
    %v3188 = vpop.f32.mrb[0].mxu0
    %v3189 = vadd.f32 0.0, %v3188
    %v3190 = vpop.f32.mrb[0].mxu0
    %v3191 = vadd.f32 0.0, %v3190
    %3192 = vdwg.mxu0
    %v3193 = vadd.f32 %v3025, %v3165
    %v3194 = vadd.f32 %v3026, %v3167
    %v3195 = vadd.f32 %v3027, %v3171
    %v3196 = vadd.f32 %v3028, %v3173
    %v3197 = vadd.f32 %v3029, %v3177
    %v3198 = vadd.f32 %v3030, %v3179
    %v3199 = vadd.f32 %v3031, %v3183
    %v3200 = vadd.f32 %v3032, %v3185
    %v3201 = vadd.f32 %v3033, %v3189
    %v3202 = vadd.f32 %v3034, %v3191
    %v3203 = vld [vmem:[%s6 + $0x900] sm:$0xff]
    %v3204 = vld [vmem:[%s6 + $0x908] sm:$0xff]
    %v3205 = vld [vmem:[%s6 + $0x910] sm:$0xff]
    %v3206 = vld [vmem:[%s6 + $0x918] sm:$0xff]
    %v3207 = vld [vmem:[%s6 + $0x920] sm:$0xff]
    %v3208 = vld [vmem:[%s6 + $0x928] sm:$0xff]
    %v3209 = vld [vmem:[%s6 + $0x930] sm:$0xff]
    %v3210 = vld [vmem:[%s6 + $0x938] sm:$0xff]
    %v3211 = vld [vmem:[%s6 + $0x940] sm:$0xff]
    %v3212 = vld [vmem:[%s6 + $0x948] sm:$0xff]
    %v3213 = vld [vmem:[%s6 + $0x950] sm:$0xff]
    %v3214 = vld [vmem:[%s6 + $0x958] sm:$0xff]
    %v3215 = vld [vmem:[%s6 + $0x960] sm:$0xff]
    %v3216 = vld [vmem:[%s6 + $0x968] sm:$0xff]
    %v3217 = vld [vmem:[%s6 + $0x970] sm:$0xff]
    %v3218 = vld [vmem:[%s6 + $0x978] sm:$0xff]
    %v3219 = vld [vmem:[%s6 + $0x980] sm:$0xff]
    %v3220 = vld [vmem:[%s6 + $0x988] sm:$0xff]
    %v3221 = vld [vmem:[%s6 + $0x990] sm:$0xff]
    %v3222 = vld [vmem:[%s6 + $0x998] sm:$0xff]
    %v3223 = vld [vmem:[%s6 + $0x9a0] sm:$0xff]
    %v3224 = vld [vmem:[%s6 + $0x9a8] sm:$0xff]
    %v3225 = vld [vmem:[%s6 + $0x9b0] sm:$0xff]
    %v3226 = vld [vmem:[%s6 + $0x9b8] sm:$0xff]
    %v3227 = vld [vmem:[%s6 + $0x9c0] sm:$0xff]
    %v3228 = vld [vmem:[%s6 + $0x9c8] sm:$0xff]
    %v3229 = vld [vmem:[%s6 + $0x9d0] sm:$0xff]
    %v3230 = vld [vmem:[%s6 + $0x9d8] sm:$0xff]
    %v3231 = vld [vmem:[%s6 + $0x9e0] sm:$0xff]
    %v3232 = vld [vmem:[%s6 + $0x9e8] sm:$0xff]
    %v3233 = vld [vmem:[%s6 + $0x9f0] sm:$0xff]
    %v3234 = vld [vmem:[%s6 + $0x9f8] sm:$0xff]
    %v3235 = vld [vmem:[%s6 + $0xa00] sm:$0xff]
    %v3236 = vld [vmem:[%s6 + $0xa08] sm:$0xff]
    %v3237 = vld [vmem:[%s6 + $0xa10] sm:$0xff]
    %v3238 = vld [vmem:[%s6 + $0xa18] sm:$0xff]
    %v3239 = vld [vmem:[%s6 + $0xa20] sm:$0xff]
    %v3240 = vld [vmem:[%s6 + $0xa28] sm:$0xff]
    %v3241 = vld [vmem:[%s6 + $0xa30] sm:$0xff]
    %v3242 = vld [vmem:[%s6 + $0xa38] sm:$0xff]
    %v3243 = vld [vmem:[%s6 + $0xa40] sm:$0xff]
    %v3244 = vld [vmem:[%s6 + $0xa48] sm:$0xff]
    %v3245 = vld [vmem:[%s6 + $0xa50] sm:$0xff]
    %v3246 = vld [vmem:[%s6 + $0xa58] sm:$0xff]
    %v3247 = vld [vmem:[%s6 + $0xa60] sm:$0xff]
    %v3248 = vld [vmem:[%s6 + $0xa68] sm:$0xff]
    %v3249 = vld [vmem:[%s6 + $0xa70] sm:$0xff]
    %v3250 = vld [vmem:[%s6 + $0xa78] sm:$0xff]
    %v3252 = vsel %vm2310, %v2158, 0
    %v3255 = vsel %vm2310, %v2164, 0
    %v3258 = vsel %vm2310, %v2170, 0
    %v3261 = vsel %vm2310, %v2176, 0
    %v3264 = vsel %vm2310, %v2182, 0
    %3266 = vmatprep.subr.mxu0 %v3204
    %3267 = vmatpush1.msra.mxu0 %v3203
    %3268 = vmatprep.subr.mxu0 %v3206
    %3269 = vmatpush1.msra.mxu0 %v3205
    %3270 = vmatprep.subr.mxu0 %v3208
    %3271 = vmatpush1.msra.mxu0 %v3207
    %3272 = vmatprep.subr.mxu0 %v3210
    %3273 = vmatpush1.msra.mxu0 %v3209
    %3274 = vmatprep.subr.mxu0 %v3212
    %3275 = vmatpush1.msra.mxu0 %v3211
    %3276 = vmatprep.subr.mxu0 %v3214
    %3277 = vmatpush1.msra.mxu0 %v3213
    %3278 = vmatprep.subr.mxu0 %v3216
    %3279 = vmatpush1.msra.mxu0 %v3215
    %3280 = vmatprep.subr.mxu0 %v3218
    %3281 = vmatpush1.msra.mxu0 %v3217
    %3282 = vmatprep.subr.mxu0 %v3220
    %3283 = vmatpush1.msra.mxu0 %v3219
    %3284 = vmatprep.subr.mxu0 %v3222
    %3285 = vmatpush1.msra.mxu0 %v3221
    %3286 = vmatprep.subr.mxu0 %v3224
    %3287 = vmatpush1.msra.mxu0 %v3223
    %3288 = vmatprep.subr.mxu0 %v3226
    %3289 = vmatpush1.msra.mxu0 %v3225
    %3290 = vmatprep.subr.mxu0 %v3228
    %3291 = vmatpush1.msra.mxu0 %v3227
    %3292 = vmatprep.subr.mxu0 %v3230
    %3293 = vmatpush1.msra.mxu0 %v3229
    %3294 = vmatprep.subr.mxu0 %v3232
    %3295 = vmatpush1.msra.mxu0 %v3231
    %3296 = vmatprep.subr.mxu0 %v3234
    %3297 = vmatpush1.msra.mxu0 %v3233
    %3298 = vmatprep.subr.mxu0 %v3236
    %3299 = vmatpush1.msra.mxu0 %v3235
    %3300 = vmatprep.subr.mxu0 %v3238
    %3301 = vmatpush1.msra.mxu0 %v3237
    %3302 = vmatprep.subr.mxu0 %v3240
    %3303 = vmatpush1.msra.mxu0 %v3239
    %3304 = vmatprep.subr.mxu0 %v3242
    %3305 = vmatpush1.msra.mxu0 %v3241
    %3306 = vmatprep.subr.mxu0 %v3244
    %3307 = vmatpush1.msra.mxu0 %v3243
    %3308 = vmatprep.subr.mxu0 %v3246
    %3309 = vmatpush1.msra.mxu0 %v3245
    %3310 = vmatprep.subr.mxu0 %v3248
    %3311 = vmatpush1.msra.mxu0 %v3247
    %3312 = vmatprep.subr.mxu0 %v3250
    %3313 = vmatpush1.msra.mxu0 %v3249
    %3314 = vmatprep.subr.mxu0 0.0
    %3315 = vmatpush1.msra.mxu0 0.0
    %3316 = vmatprep.subr.mxu0 0.0
    %3317 = vmatpush1.msra.mxu0 0.0
    %3318 = vmatprep.subr.mxu0 0.0
    %3319 = vmatpush1.msra.mxu0 0.0
    %3320 = vmatprep.subr.mxu0 0.0
    %3321 = vmatpush1.msra.mxu0 0.0
    %3322 = vmatprep.subr.mxu0 0.0
    %3323 = vmatpush1.msra.mxu0 0.0
    %3324 = vmatprep.subr.mxu0 0.0
    %3325 = vmatpush1.msra.mxu0 0.0
    %3326 = vmatprep.subr.mxu0 0.0
    %3327 = vmatpush1.msra.mxu0 0.0
    %3328 = vmatprep.subr.mxu0 0.0
    %3329 = vmatpush1.msra.mxu0 0.0
    %3330 = vmatprep.mubr.f32.mxu0 %v3252
    %3331 = vmatmul.mubr.f32.gmra.mrb[0].mxu0 %v2156
    %v3332 = vpop.f32.mrb[0].mxu0
    %v3333 = vadd.f32 0.0, %v3332
    %v3334 = vpop.f32.mrb[0].mxu0
    %v3335 = vadd.f32 0.0, %v3334
    %3336 = vmatprep.mubr.f32.mxu0 %v3255
    %3337 = vmatmul.mubr.f32.gmra.mrb[0].mxu0 %v2162
    %v3338 = vpop.f32.mrb[0].mxu0
    %v3339 = vadd.f32 0.0, %v3338
    %v3340 = vpop.f32.mrb[0].mxu0
    %v3341 = vadd.f32 0.0, %v3340
    %3342 = vmatprep.mubr.f32.mxu0 %v3258
    %3343 = vmatmul.mubr.f32.gmra.mrb[0].mxu0 %v2168
    %v3344 = vpop.f32.mrb[0].mxu0
    %v3345 = vadd.f32 0.0, %v3344
    %v3346 = vpop.f32.mrb[0].mxu0
    %v3347 = vadd.f32 0.0, %v3346
    %3348 = vmatprep.mubr.f32.mxu0 %v3261
    %3349 = vmatmul.mubr.f32.gmra.mrb[0].mxu0 %v2174
    %v3350 = vpop.f32.mrb[0].mxu0
    %v3351 = vadd.f32 0.0, %v3350
    %v3352 = vpop.f32.mrb[0].mxu0
    %v3353 = vadd.f32 0.0, %v3352
    %3354 = vmatprep.mubr.f32.mxu0 %v3264
    %3355 = vmatmul.mubr.f32.gmra.mrb[0].mxu0 %v2180
    %v3356 = vpop.f32.mrb[0].mxu0
    %v3357 = vadd.f32 0.0, %v3356
    %v3358 = vpop.f32.mrb[0].mxu0
    %v3359 = vadd.f32 0.0, %v3358
    %3360 = vdwg.mxu0
    %v3361 = vadd.f32 %v3193, %v3333
    %v3362 = vadd.f32 %v3194, %v3335
    %v3363 = vadd.f32 %v3195, %v3339
    %v3364 = vadd.f32 %v3196, %v3341
    %v3365 = vadd.f32 %v3197, %v3345
    %v3366 = vadd.f32 %v3198, %v3347
    %v3367 = vadd.f32 %v3199, %v3351
    %v3368 = vadd.f32 %v3200, %v3353
    %v3369 = vadd.f32 %v3201, %v3357
    %v3370 = vadd.f32 %v3202, %v3359
    %v3371 = vld [vmem:[%s6 + $0xa80] sm:$0xff]
    %v3372 = vld [vmem:[%s6 + $0xa88] sm:$0xff]
    %v3373 = vld [vmem:[%s6 + $0xa90] sm:$0xff]
    %v3374 = vld [vmem:[%s6 + $0xa98] sm:$0xff]
    %v3375 = vld [vmem:[%s6 + $0xaa0] sm:$0xff]
    %v3376 = vld [vmem:[%s6 + $0xaa8] sm:$0xff]
    %v3377 = vld [vmem:[%s6 + $0xab0] sm:$0xff]
    %v3378 = vld [vmem:[%s6 + $0xab8] sm:$0xff]
    %v3379 = vld [vmem:[%s6 + $0xac0] sm:$0xff]
    %v3380 = vld [vmem:[%s6 + $0xac8] sm:$0xff]
    %v3381 = vld [vmem:[%s6 + $0xad0] sm:$0xff]
    %v3382 = vld [vmem:[%s6 + $0xad8] sm:$0xff]
    %v3383 = vld [vmem:[%s6 + $0xae0] sm:$0xff]
    %v3384 = vld [vmem:[%s6 + $0xae8] sm:$0xff]
    %v3385 = vld [vmem:[%s6 + $0xaf0] sm:$0xff]
    %v3386 = vld [vmem:[%s6 + $0xaf8] sm:$0xff]
    %v3387 = vld [vmem:[%s6 + $0xb00] sm:$0xff]
    %v3388 = vld [vmem:[%s6 + $0xb08] sm:$0xff]
    %v3389 = vld [vmem:[%s6 + $0xb10] sm:$0xff]
    %v3390 = vld [vmem:[%s6 + $0xb18] sm:$0xff]
    %v3391 = vld [vmem:[%s6 + $0xb20] sm:$0xff]
    %v3392 = vld [vmem:[%s6 + $0xb28] sm:$0xff]
    %v3393 = vld [vmem:[%s6 + $0xb30] sm:$0xff]
    %v3394 = vld [vmem:[%s6 + $0xb38] sm:$0xff]
    %v3395 = vld [vmem:[%s6 + $0xb40] sm:$0xff]
    %v3396 = vld [vmem:[%s6 + $0xb48] sm:$0xff]
    %v3397 = vld [vmem:[%s6 + $0xb50] sm:$0xff]
    %v3398 = vld [vmem:[%s6 + $0xb58] sm:$0xff]
    %v3399 = vld [vmem:[%s6 + $0xb60] sm:$0xff]
    %v3400 = vld [vmem:[%s6 + $0xb68] sm:$0xff]
    %v3401 = vld [vmem:[%s6 + $0xb70] sm:$0xff]
    %v3402 = vld [vmem:[%s6 + $0xb78] sm:$0xff]
    %v3403 = vld [vmem:[%s6 + $0xb80] sm:$0xff]
    %v3404 = vld [vmem:[%s6 + $0xb88] sm:$0xff]
    %v3405 = vld [vmem:[%s6 + $0xb90] sm:$0xff]
    %v3406 = vld [vmem:[%s6 + $0xb98] sm:$0xff]
    %v3407 = vld [vmem:[%s6 + $0xba0] sm:$0xff]
    %v3408 = vld [vmem:[%s6 + $0xba8] sm:$0xff]
    %v3409 = vld [vmem:[%s6 + $0xbb0] sm:$0xff]
    %v3410 = vld [vmem:[%s6 + $0xbb8] sm:$0xff]
    %v3411 = vld [vmem:[%s6 + $0xbc0] sm:$0xff]
    %v3412 = vld [vmem:[%s6 + $0xbc8] sm:$0xff]
    %v3413 = vld [vmem:[%s6 + $0xbd0] sm:$0xff]
    %v3414 = vld [vmem:[%s6 + $0xbd8] sm:$0xff]
    %v3415 = vld [vmem:[%s6 + $0xbe0] sm:$0xff]
    %v3416 = vld [vmem:[%s6 + $0xbe8] sm:$0xff]
    %v3417 = vld [vmem:[%s6 + $0xbf0] sm:$0xff]
    %v3418 = vld [vmem:[%s6 + $0xbf8] sm:$0xff]
    %v3420 = vsel %vm2310, %v2188, 0
    %v3423 = vsel %vm2310, %v2194, 0
    %v3426 = vsel %vm2310, %v2200, 0
    %v3429 = vsel %vm2310, %v2206, 0
    %v3432 = vsel %vm2310, %v2212, 0
    %3434 = vmatprep.subr.mxu0 %v3372
    %3435 = vmatpush1.msra.mxu0 %v3371
    %3436 = vmatprep.subr.mxu0 %v3374
    %3437 = vmatpush1.msra.mxu0 %v3373
    %3438 = vmatprep.subr.mxu0 %v3376
    %3439 = vmatpush1.msra.mxu0 %v3375
    %3440 = vmatprep.subr.mxu0 %v3378
    %3441 = vmatpush1.msra.mxu0 %v3377
    %3442 = vmatprep.subr.mxu0 %v3380
    %3443 = vmatpush1.msra.mxu0 %v3379
    %3444 = vmatprep.subr.mxu0 %v3382
    %3445 = vmatpush1.msra.mxu0 %v3381
    %3446 = vmatprep.subr.mxu0 %v3384
    %3447 = vmatpush1.msra.mxu0 %v3383
    %3448 = vmatprep.subr.mxu0 %v3386
    %3449 = vmatpush1.msra.mxu0 %v3385
    %3450 = vmatprep.subr.mxu0 %v3388
    %3451 = vmatpush1.msra.mxu0 %v3387
    %3452 = vmatprep.subr.mxu0 %v3390
    %3453 = vmatpush1.msra.mxu0 %v3389
    %3454 = vmatprep.subr.mxu0 %v3392
    %3455 = vmatpush1.msra.mxu0 %v3391
    %3456 = vmatprep.subr.mxu0 %v3394
    %3457 = vmatpush1.msra.mxu0 %v3393
    %3458 = vmatprep.subr.mxu0 %v3396
    %3459 = vmatpush1.msra.mxu0 %v3395
    %3460 = vmatprep.subr.mxu0 %v3398
    %3461 = vmatpush1.msra.mxu0 %v3397
    %3462 = vmatprep.subr.mxu0 %v3400
    %3463 = vmatpush1.msra.mxu0 %v3399
    %3464 = vmatprep.subr.mxu0 %v3402
    %3465 = vmatpush1.msra.mxu0 %v3401
    %3466 = vmatprep.subr.mxu0 %v3404
    %3467 = vmatpush1.msra.mxu0 %v3403
    %3468 = vmatprep.subr.mxu0 %v3406
    %3469 = vmatpush1.msra.mxu0 %v3405
    %3470 = vmatprep.subr.mxu0 %v3408
    %3471 = vmatpush1.msra.mxu0 %v3407
    %3472 = vmatprep.subr.mxu0 %v3410
    %3473 = vmatpush1.msra.mxu0 %v3409
    %3474 = vmatprep.subr.mxu0 %v3412
    %3475 = vmatpush1.msra.mxu0 %v3411
    %3476 = vmatprep.subr.mxu0 %v3414
    %3477 = vmatpush1.msra.mxu0 %v3413
    %3478 = vmatprep.subr.mxu0 %v3416
    %3479 = vmatpush1.msra.mxu0 %v3415
    %3480 = vmatprep.subr.mxu0 %v3418
    %3481 = vmatpush1.msra.mxu0 %v3417
    %3482 = vmatprep.subr.mxu0 0.0
    %3483 = vmatpush1.msra.mxu0 0.0
    %3484 = vmatprep.subr.mxu0 0.0
    %3485 = vmatpush1.msra.mxu0 0.0
    %3486 = vmatprep.subr.mxu0 0.0
    %3487 = vmatpush1.msra.mxu0 0.0
    %3488 = vmatprep.subr.mxu0 0.0
    %3489 = vmatpush1.msra.mxu0 0.0
    %3490 = vmatprep.subr.mxu0 0.0
    %3491 = vmatpush1.msra.mxu0 0.0
    %3492 = vmatprep.subr.mxu0 0.0
    %3493 = vmatpush1.msra.mxu0 0.0
    %3494 = vmatprep.subr.mxu0 0.0
    %3495 = vmatpush1.msra.mxu0 0.0
    %3496 = vmatprep.subr.mxu0 0.0
    %3497 = vmatpush1.msra.mxu0 0.0
    %3498 = vmatprep.mubr.f32.mxu0 %v3420
    %3499 = vmatmul.mubr.f32.gmra.mrb[0].mxu0 %v2186
    %v3500 = vpop.f32.mrb[0].mxu0
    %v3501 = vadd.f32 0.0, %v3500
    %v3502 = vpop.f32.mrb[0].mxu0
    %v3503 = vadd.f32 0.0, %v3502
    %3504 = vmatprep.mubr.f32.mxu0 %v3423
    %3505 = vmatmul.mubr.f32.gmra.mrb[0].mxu0 %v2192
    %v3506 = vpop.f32.mrb[0].mxu0
    %v3507 = vadd.f32 0.0, %v3506
    %v3508 = vpop.f32.mrb[0].mxu0
    %v3509 = vadd.f32 0.0, %v3508
    %3510 = vmatprep.mubr.f32.mxu0 %v3426
    %3511 = vmatmul.mubr.f32.gmra.mrb[0].mxu0 %v2198
    %v3512 = vpop.f32.mrb[0].mxu0
    %v3513 = vadd.f32 0.0, %v3512
    %v3514 = vpop.f32.mrb[0].mxu0
    %v3515 = vadd.f32 0.0, %v3514
    %3516 = vmatprep.mubr.f32.mxu0 %v3429
    %3517 = vmatmul.mubr.f32.gmra.mrb[0].mxu0 %v2204
    %v3518 = vpop.f32.mrb[0].mxu0
    %v3519 = vadd.f32 0.0, %v3518
    %v3520 = vpop.f32.mrb[0].mxu0
    %v3521 = vadd.f32 0.0, %v3520
    %3522 = vmatprep.mubr.f32.mxu0 %v3432
    %3523 = vmatmul.mubr.f32.gmra.mrb[0].mxu0 %v2210
    %v3524 = vpop.f32.mrb[0].mxu0
    %v3525 = vadd.f32 0.0, %v3524
    %v3526 = vpop.f32.mrb[0].mxu0
    %v3527 = vadd.f32 0.0, %v3526
    %3528 = vdwg.mxu0
    %v3529 = vadd.f32 %v3361, %v3501
    %v3530 = vadd.f32 %v3362, %v3503
    %v3531 = vadd.f32 %v3363, %v3507
    %v3532 = vadd.f32 %v3364, %v3509
    %v3533 = vadd.f32 %v3365, %v3513
    %v3534 = vadd.f32 %v3366, %v3515
    %v3535 = vadd.f32 %v3367, %v3519
    %v3536 = vadd.f32 %v3368, %v3521
    %v3537 = vadd.f32 %v3369, %v3525
    %v3538 = vadd.f32 %v3370, %v3527
    %v3539 = vld [vmem:[%s7] sm:$0x3]
    %v3541 = vlaneseq
    %v3542 = vshrl.u32 %v3541, 7
    %v3543 = vsub.s32 0, %v3542
    %v3544 = vrot.slane %v3539, %v3543
    %v3545 = vlaneseq
    %v3546 = vshrl.u32 %v3545, 7
    %v3547 = vsub.s32 1, %v3546
    %v3548 = vrot.slane %v3539, %v3547
    %v3551 = vadd.f32 %v3529, %v3544
    %v3552 = vadd.f32 %v3530, %v3548
    %v3553 = vadd.f32 %v3531, %v3544
    %v3554 = vadd.f32 %v3532, %v3548
    %v3555 = vadd.f32 %v3533, %v3544
    %v3556 = vadd.f32 %v3534, %v3548
    %v3557 = vadd.f32 %v3535, %v3544
    %v3558 = vadd.f32 %v3536, %v3548
    %v3559 = vadd.f32 %v3537, %v3544
    %v3560 = vadd.f32 %v3538, %v3548
    %vm3561 = vcmp.gt.f32.partialorder %v3551, 0.0
    %vm3562 = vcmp.gt.f32.partialorder %v3552, 0.0
    %vm3563 = vcmp.gt.f32.partialorder %v3553, 0.0
    %vm3564 = vcmp.gt.f32.partialorder %v3554, 0.0
    %vm3565 = vcmp.gt.f32.partialorder %v3555, 0.0
    %vm3566 = vcmp.gt.f32.partialorder %v3556, 0.0
    %vm3567 = vcmp.gt.f32.partialorder %v3557, 0.0
    %vm3568 = vcmp.gt.f32.partialorder %v3558, 0.0
    %vm3569 = vcmp.gt.f32.partialorder %v3559, 0.0
    %vm3570 = vcmp.gt.f32.partialorder %v3560, 0.0
    %v3571 = vmin.f32 %v3551, 0.0
    %v3572 = vmin.f32 %v3552, 0.0
    %v3573 = vmin.f32 %v3553, 0.0
    %v3574 = vmin.f32 %v3554, 0.0
    %v3575 = vmin.f32 %v3555, 0.0
    %v3576 = vmin.f32 %v3556, 0.0
    %v3577 = vmin.f32 %v3557, 0.0
    %v3578 = vmin.f32 %v3558, 0.0
    %v3579 = vmin.f32 %v3559, 0.0
    %v3580 = vmin.f32 %v3560, 0.0
    %v3581 = vmul.f32 %v3571, 1.442695
    %v3582 = vpow.pop %v3581
    %v3583 = vmul.f32 %v3572, 1.442695
    %v3584 = vpow.pop %v3583
    %v3585 = vmul.f32 %v3573, 1.442695
    %v3586 = vpow.pop %v3585
    %v3587 = vmul.f32 %v3574, 1.442695
    %v3588 = vpow.pop %v3587
    %v3589 = vmul.f32 %v3575, 1.442695
    %v3590 = vpow.pop %v3589
    %v3591 = vmul.f32 %v3576, 1.442695
    %v3592 = vpow.pop %v3591
    %v3593 = vmul.f32 %v3577, 1.442695
    %v3594 = vpow.pop %v3593
    %v3595 = vmul.f32 %v3578, 1.442695
    %v3596 = vpow.pop %v3595
    %v3597 = vmul.f32 %v3579, 1.442695
    %v3598 = vpow.pop %v3597
    %v3599 = vmul.f32 %v3580, 1.442695
    %v3600 = vpow.pop %v3599
    %v3601 = vsub.f32 %v3582, 1.0
    %v3602 = vsub.f32 %v3584, 1.0
    %v3603 = vsub.f32 %v3586, 1.0
    %v3604 = vsub.f32 %v3588, 1.0
    %v3605 = vsub.f32 %v3590, 1.0
    %v3606 = vsub.f32 %v3592, 1.0
    %v3607 = vsub.f32 %v3594, 1.0
    %v3608 = vsub.f32 %v3596, 1.0
    %v3609 = vsub.f32 %v3598, 1.0
    %v3610 = vsub.f32 %v3600, 1.0
    %v3611 = vsel %vm3561, %v3551, %v3601
    %v3612 = vsel %vm3562, %v3552, %v3602
    %v3613 = vsel %vm3563, %v3553, %v3603
    %v3614 = vsel %vm3564, %v3554, %v3604
    %v3615 = vsel %vm3565, %v3555, %v3605
    %v3616 = vsel %vm3566, %v3556, %v3606
    %v3617 = vsel %vm3567, %v3557, %v3607
    %v3618 = vsel %vm3568, %v3558, %v3608
    %v3619 = vsel %vm3569, %v3559, %v3609
    %v3620 = vsel %vm3570, %v3560, %v3610
    %v3621 = vld [vmem:[%s8] sm:$0xff]
    %v3622 = vld [vmem:[%s8 + $0x8] sm:$0xff]
    %v3623 = vld [vmem:[%s8 + $0x10] sm:$0xff]
    %v3624 = vld [vmem:[%s8 + $0x18] sm:$0xff]
    %v3625 = vld [vmem:[%s8 + $0x20] sm:$0xff]
    %v3626 = vld [vmem:[%s8 + $0x28] sm:$0xff]
    %v3627 = vld [vmem:[%s8 + $0x30] sm:$0xff]
    %v3628 = vld [vmem:[%s8 + $0x38] sm:$0xff]
    %v3629 = vld [vmem:[%s8 + $0x40] sm:$0xff]
    %v3630 = vld [vmem:[%s8 + $0x48] sm:$0xff]
    %v3631 = vld [vmem:[%s8 + $0x50] sm:$0xff]
    %v3632 = vld [vmem:[%s8 + $0x58] sm:$0xff]
    %v3634 = vsel %vm175, %v3621, 0
    %v3637 = vsel %vm175, %v3622, 0
    %v3640 = vsel %vm175, %v3623, 0
    %v3643 = vsel %vm175, %v3624, 0
    %v3646 = vsel %vm175, %v3625, 0
    %v3649 = vsel %vm175, %v3626, 0
    %v3652 = vsel %vm175, %v3627, 0
    %v3655 = vsel %vm175, %v3628, 0
    %v3658 = vsel %vm175, %v3629, 0
    %v3661 = vsel %vm175, %v3630, 0
    %v3664 = vsel %vm175, %v3631, 0
    %v3667 = vsel %vm175, %v3632, 0
    %3669 = vmatprep.subr.mxu0 %v3612
    %3670 = vmatpush1.msra.mxu0 %v3611
    %3671 = vmatprep.subr.mxu0 %v3614
    %3672 = vmatpush1.msra.mxu0 %v3613
    %3673 = vmatprep.subr.mxu0 %v3616
    %3674 = vmatpush1.msra.mxu0 %v3615
    %3675 = vmatprep.subr.mxu0 %v3618
    %3676 = vmatpush1.msra.mxu0 %v3617
    %3677 = vmatprep.subr.mxu0 %v3620
    %3678 = vmatpush1.msra.mxu0 %v3619
    %3679 = vmatprep.subr.mxu0 0.0
    %3680 = vmatpush1.msra.mxu0 0.0
    %3681 = vmatprep.subr.mxu0 0.0
    %3682 = vmatpush1.msra.mxu0 0.0
    %3683 = vmatprep.subr.mxu0 0.0
    %3684 = vmatpush1.msra.mxu0 0.0
    %3685 = vmatprep.subr.mxu0 0.0
    %3686 = vmatpush1.msra.mxu0 0.0
    %3687 = vmatprep.subr.mxu0 0.0
    %3688 = vmatpush1.msra.mxu0 0.0
    %3689 = vmatprep.subr.mxu0 0.0
    %3690 = vmatpush1.msra.mxu0 0.0
    %3691 = vmatprep.subr.mxu0 0.0
    %3692 = vmatpush1.msra.mxu0 0.0
    %3693 = vmatprep.subr.mxu0 0.0
    %3694 = vmatpush1.msra.mxu0 0.0
    %3695 = vmatprep.subr.mxu0 0.0
    %3696 = vmatpush1.msra.mxu0 0.0
    %3697 = vmatprep.subr.mxu0 0.0
    %3698 = vmatpush1.msra.mxu0 0.0
    %3699 = vmatprep.subr.mxu0 0.0
    %3700 = vmatpush1.msra.mxu0 0.0
    %3701 = vmatprep.subr.mxu0 0.0
    %3702 = vmatpush1.msra.mxu0 0.0
    %3703 = vmatprep.subr.mxu0 0.0
    %3704 = vmatpush1.msra.mxu0 0.0
    %3705 = vmatprep.subr.mxu0 0.0
    %3706 = vmatpush1.msra.mxu0 0.0
    %3707 = vmatprep.subr.mxu0 0.0
    %3708 = vmatpush1.msra.mxu0 0.0
    %3709 = vmatprep.subr.mxu0 0.0
    %3710 = vmatpush1.msra.mxu0 0.0
    %3711 = vmatprep.subr.mxu0 0.0
    %3712 = vmatpush1.msra.mxu0 0.0
    %3713 = vmatprep.subr.mxu0 0.0
    %3714 = vmatpush1.msra.mxu0 0.0
    %3715 = vmatprep.subr.mxu0 0.0
    %3716 = vmatpush1.msra.mxu0 0.0
    %3717 = vmatprep.subr.mxu0 0.0
    %3718 = vmatpush1.msra.mxu0 0.0
    %3719 = vmatprep.subr.mxu0 0.0
    %3720 = vmatpush1.msra.mxu0 0.0
    %3721 = vmatprep.subr.mxu0 0.0
    %3722 = vmatpush1.msra.mxu0 0.0
    %3723 = vmatprep.subr.mxu0 0.0
    %3724 = vmatpush1.msra.mxu0 0.0
    %3725 = vmatprep.subr.mxu0 0.0
    %3726 = vmatpush1.msra.mxu0 0.0
    %3727 = vmatprep.subr.mxu0 0.0
    %3728 = vmatpush1.msra.mxu0 0.0
    %3729 = vmatprep.subr.mxu0 0.0
    %3730 = vmatpush1.msra.mxu0 0.0
    %3731 = vmatprep.subr.mxu0 0.0
    %3732 = vmatpush1.msra.mxu0 0.0
    %3733 = vmatprep.mubr.f32.mxu0 0.0
    %3734 = vmatmul.mubr.f32.gmra.mrb[0].mxu0 %v3634
    %v3735 = vpop.f32.mrb[0].mxu0
    %v3736 = vadd.f32 0.0, %v3735
    %v3737 = vpop.f32.mrb[0].mxu0
    %v3738 = vadd.f32 0.0, %v3737
    %3739 = vmatprep.mubr.f32.mxu0 0.0
    %3740 = vmatmul.mubr.f32.gmra.mrb[0].mxu0 %v3637
    %v3741 = vpop.f32.mrb[0].mxu0
    %v3742 = vadd.f32 0.0, %v3741
    %v3743 = vpop.f32.mrb[0].mxu0
    %v3744 = vadd.f32 0.0, %v3743
    %3745 = vmatprep.mubr.f32.mxu0 0.0
    %3746 = vmatmul.mubr.f32.gmra.mrb[0].mxu0 %v3640
    %v3747 = vpop.f32.mrb[0].mxu0
    %v3748 = vadd.f32 0.0, %v3747
    %v3749 = vpop.f32.mrb[0].mxu0
    %v3750 = vadd.f32 0.0, %v3749
    %3751 = vmatprep.mubr.f32.mxu0 0.0
    %3752 = vmatmul.mubr.f32.gmra.mrb[0].mxu0 %v3643
    %v3753 = vpop.f32.mrb[0].mxu0
    %v3754 = vadd.f32 0.0, %v3753
    %v3755 = vpop.f32.mrb[0].mxu0
    %v3756 = vadd.f32 0.0, %v3755
    %3757 = vmatprep.mubr.f32.mxu0 0.0
    %3758 = vmatmul.mubr.f32.gmra.mrb[0].mxu0 %v3646
    %v3759 = vpop.f32.mrb[0].mxu0
    %v3760 = vadd.f32 0.0, %v3759
    %v3761 = vpop.f32.mrb[0].mxu0
    %v3762 = vadd.f32 0.0, %v3761
    %3763 = vmatprep.mubr.f32.mxu0 0.0
    %3764 = vmatmul.mubr.f32.gmra.mrb[0].mxu0 %v3649
    %v3765 = vpop.f32.mrb[0].mxu0
    %v3766 = vadd.f32 0.0, %v3765
    %v3767 = vpop.f32.mrb[0].mxu0
    %v3768 = vadd.f32 0.0, %v3767
    %3769 = vmatprep.mubr.f32.mxu0 0.0
    %3770 = vmatmul.mubr.f32.gmra.mrb[0].mxu0 %v3652
    %v3771 = vpop.f32.mrb[0].mxu0
    %v3772 = vadd.f32 0.0, %v3771
    %v3773 = vpop.f32.mrb[0].mxu0
    %v3774 = vadd.f32 0.0, %v3773
    %3775 = vmatprep.mubr.f32.mxu0 0.0
    %3776 = vmatmul.mubr.f32.gmra.mrb[0].mxu0 %v3655
    %v3777 = vpop.f32.mrb[0].mxu0
    %v3778 = vadd.f32 0.0, %v3777
    %v3779 = vpop.f32.mrb[0].mxu0
    %v3780 = vadd.f32 0.0, %v3779
    %3781 = vmatprep.mubr.f32.mxu0 0.0
    %3782 = vmatmul.mubr.f32.gmra.mrb[0].mxu0 %v3658
    %v3783 = vpop.f32.mrb[0].mxu0
    %v3784 = vadd.f32 0.0, %v3783
    %v3785 = vpop.f32.mrb[0].mxu0
    %v3786 = vadd.f32 0.0, %v3785
    %3787 = vmatprep.mubr.f32.mxu0 0.0
    %3788 = vmatmul.mubr.f32.gmra.mrb[0].mxu0 %v3661
    %v3789 = vpop.f32.mrb[0].mxu0
    %v3790 = vadd.f32 0.0, %v3789
    %v3791 = vpop.f32.mrb[0].mxu0
    %v3792 = vadd.f32 0.0, %v3791
    %3793 = vmatprep.mubr.f32.mxu0 0.0
    %3794 = vmatmul.mubr.f32.gmra.mrb[0].mxu0 %v3664
    %v3795 = vpop.f32.mrb[0].mxu0
    %v3796 = vadd.f32 0.0, %v3795
    %v3797 = vpop.f32.mrb[0].mxu0
    %v3798 = vadd.f32 0.0, %v3797
    %3799 = vmatprep.mubr.f32.mxu0 0.0
    %3800 = vmatmul.mubr.f32.gmra.mrb[0].mxu0 %v3667
    %v3801 = vpop.f32.mrb[0].mxu0
    %v3802 = vadd.f32 0.0, %v3801
    %v3803 = vpop.f32.mrb[0].mxu0
    %v3804 = vadd.f32 0.0, %v3803
    %3805 = vdwg.mxu0
    %v3806 = vld [vmem:[%s9] sm:$0xff]
    %v3807 = vld [vmem:[%s9 + $0x8] sm:$0xff]
    %v3808 = vld [vmem:[%s9 + $0x10] sm:$0xff]
    %v3809 = vld [vmem:[%s9 + $0x18] sm:$0xff]
    %v3810 = vld [vmem:[%s9 + $0x20] sm:$0xff]
    %v3811 = vld [vmem:[%s9 + $0x28] sm:$0xff]
    %v3812 = vld [vmem:[%s9 + $0x30] sm:$0xff]
    %v3813 = vld [vmem:[%s9 + $0x38] sm:$0xff]
    %v3814 = vld [vmem:[%s9 + $0x40] sm:$0xff]
    %v3815 = vld [vmem:[%s9 + $0x48] sm:$0xff]
    %v3816 = vld [vmem:[%s9 + $0x50] sm:$0xff]
    %v3817 = vld [vmem:[%s9 + $0x58] sm:$0xff]
    %v3818 = vld [vmem:[%s9 + $0x60] sm:$0xff]
    %v3819 = vld [vmem:[%s9 + $0x68] sm:$0xff]
    %v3820 = vld [vmem:[%s9 + $0x70] sm:$0xff]
    %v3821 = vld [vmem:[%s9 + $0x78] sm:$0xff]
    %v3822 = vld [vmem:[%s9 + $0x80] sm:$0xff]
    %v3823 = vld [vmem:[%s9 + $0x88] sm:$0xff]
    %v3824 = vld [vmem:[%s9 + $0x90] sm:$0xff]
    %v3825 = vld [vmem:[%s9 + $0x98] sm:$0xff]
    %v3826 = vld [vmem:[%s9 + $0xa0] sm:$0xff]
    %v3827 = vld [vmem:[%s9 + $0xa8] sm:$0xff]
    %v3828 = vld [vmem:[%s9 + $0xb0] sm:$0xff]
    %v3829 = vld [vmem:[%s9 + $0xb8] sm:$0xff]
    %v3830 = vld [vmem:[%s9 + $0xc0] sm:$0xff]
    %v3831 = vld [vmem:[%s9 + $0xc8] sm:$0xff]
    %v3832 = vld [vmem:[%s9 + $0xd0] sm:$0xff]
    %v3833 = vld [vmem:[%s9 + $0xd8] sm:$0xff]
    %v3834 = vld [vmem:[%s9 + $0xe0] sm:$0xff]
    %v3835 = vld [vmem:[%s9 + $0xe8] sm:$0xff]
    %v3836 = vld [vmem:[%s9 + $0xf0] sm:$0xff]
    %v3837 = vld [vmem:[%s9 + $0xf8] sm:$0xff]
    %v3838 = vld [vmem:[%s9 + $0x100] sm:$0xff]
    %v3839 = vld [vmem:[%s9 + $0x108] sm:$0xff]
    %v3840 = vld [vmem:[%s9 + $0x110] sm:$0xff]
    %v3841 = vld [vmem:[%s9 + $0x118] sm:$0xff]
    %v3842 = vld [vmem:[%s9 + $0x120] sm:$0xff]
    %v3843 = vld [vmem:[%s9 + $0x128] sm:$0xff]
    %v3844 = vld [vmem:[%s9 + $0x130] sm:$0xff]
    %v3845 = vld [vmem:[%s9 + $0x138] sm:$0xff]
    %v3846 = vld [vmem:[%s9 + $0x140] sm:$0xff]
    %v3847 = vld [vmem:[%s9 + $0x148] sm:$0xff]
    %v3848 = vld [vmem:[%s9 + $0x150] sm:$0xff]
    %v3849 = vld [vmem:[%s9 + $0x158] sm:$0xff]
    %v3850 = vld [vmem:[%s9 + $0x160] sm:$0xff]
    %v3851 = vld [vmem:[%s9 + $0x168] sm:$0xff]
    %v3852 = vld [vmem:[%s9 + $0x170] sm:$0xff]
    %v3853 = vld [vmem:[%s9 + $0x178] sm:$0xff]
    %v3854 = vld [vmem:[%s9 + $0x180] sm:$0xff]
    %v3855 = vld [vmem:[%s9 + $0x188] sm:$0xff]
    %v3856 = vld [vmem:[%s9 + $0x190] sm:$0xff]
    %v3857 = vld [vmem:[%s9 + $0x198] sm:$0xff]
    %v3858 = vld [vmem:[%s9 + $0x1a0] sm:$0xff]
    %v3859 = vld [vmem:[%s9 + $0x1a8] sm:$0xff]
    %v3860 = vld [vmem:[%s9 + $0x1b0] sm:$0xff]
    %v3861 = vld [vmem:[%s9 + $0x1b8] sm:$0xff]
    %v3862 = vld [vmem:[%s9 + $0x1c0] sm:$0xff]
    %v3863 = vld [vmem:[%s9 + $0x1c8] sm:$0xff]
    %v3864 = vld [vmem:[%s9 + $0x1d0] sm:$0xff]
    %v3865 = vld [vmem:[%s9 + $0x1d8] sm:$0xff]
    %v3866 = vld [vmem:[%s9 + $0x1e0] sm:$0xff]
    %v3867 = vld [vmem:[%s9 + $0x1e8] sm:$0xff]
    %v3868 = vld [vmem:[%s9 + $0x1f0] sm:$0xff]
    %v3869 = vld [vmem:[%s9 + $0x1f8] sm:$0xff]
    %v3870 = vld [vmem:[%s9 + $0x200] sm:$0xff]
    %v3871 = vld [vmem:[%s9 + $0x208] sm:$0xff]
    %v3872 = vld [vmem:[%s9 + $0x210] sm:$0xff]
    %v3873 = vld [vmem:[%s9 + $0x218] sm:$0xff]
    %v3874 = vld [vmem:[%s9 + $0x220] sm:$0xff]
    %v3875 = vld [vmem:[%s9 + $0x228] sm:$0xff]
    %v3876 = vld [vmem:[%s9 + $0x230] sm:$0xff]
    %v3877 = vld [vmem:[%s9 + $0x238] sm:$0xff]
    %v3878 = vld [vmem:[%s9 + $0x240] sm:$0xff]
    %v3879 = vld [vmem:[%s9 + $0x248] sm:$0xff]
    %v3880 = vld [vmem:[%s9 + $0x250] sm:$0xff]
    %v3881 = vld [vmem:[%s9 + $0x258] sm:$0xff]
    %v3882 = vld [vmem:[%s9 + $0x260] sm:$0xff]
    %v3883 = vld [vmem:[%s9 + $0x268] sm:$0xff]
    %v3884 = vld [vmem:[%s9 + $0x270] sm:$0xff]
    %v3885 = vld [vmem:[%s9 + $0x278] sm:$0xff]
    %v3886 = vld [vmem:[%s9 + $0x280] sm:$0xff]
    %v3887 = vld [vmem:[%s9 + $0x288] sm:$0xff]
    %v3888 = vld [vmem:[%s9 + $0x290] sm:$0xff]
    %v3889 = vld [vmem:[%s9 + $0x298] sm:$0xff]
    %v3890 = vld [vmem:[%s9 + $0x2a0] sm:$0xff]
    %v3891 = vld [vmem:[%s9 + $0x2a8] sm:$0xff]
    %v3892 = vld [vmem:[%s9 + $0x2b0] sm:$0xff]
    %v3893 = vld [vmem:[%s9 + $0x2b8] sm:$0xff]
    %v3894 = vld [vmem:[%s9 + $0x2c0] sm:$0xff]
    %v3895 = vld [vmem:[%s9 + $0x2c8] sm:$0xff]
    %v3896 = vld [vmem:[%s9 + $0x2d0] sm:$0xff]
    %v3897 = vld [vmem:[%s9 + $0x2d8] sm:$0xff]
    %v3898 = vld [vmem:[%s9 + $0x2e0] sm:$0xff]
    %v3899 = vld [vmem:[%s9 + $0x2e8] sm:$0xff]
    %v3900 = vld [vmem:[%s9 + $0x2f0] sm:$0xff]
    %v3901 = vld [vmem:[%s9 + $0x2f8] sm:$0xff]
    %v3903 = vsel %vm2310, %v3756, 0
    %v3906 = vsel %vm2310, %v3762, 0
    %v3909 = vsel %vm2310, %v3768, 0
    %3911 = vmatprep.subr.mxu0 %v3855
    %3912 = vmatpush1.msra.mxu0 %v3854
    %3913 = vmatprep.subr.mxu0 %v3857
    %3914 = vmatpush1.msra.mxu0 %v3856
    %3915 = vmatprep.subr.mxu0 %v3859
    %3916 = vmatpush1.msra.mxu0 %v3858
    %3917 = vmatprep.subr.mxu0 %v3861
    %3918 = vmatpush1.msra.mxu0 %v3860
    %3919 = vmatprep.subr.mxu0 %v3863
    %3920 = vmatpush1.msra.mxu0 %v3862
    %3921 = vmatprep.subr.mxu0 %v3865
    %3922 = vmatpush1.msra.mxu0 %v3864
    %3923 = vmatprep.subr.mxu0 %v3867
    %3924 = vmatpush1.msra.mxu0 %v3866
    %3925 = vmatprep.subr.mxu0 %v3869
    %3926 = vmatpush1.msra.mxu0 %v3868
    %3927 = vmatprep.subr.mxu0 %v3871
    %3928 = vmatpush1.msra.mxu0 %v3870
    %3929 = vmatprep.subr.mxu0 %v3873
    %3930 = vmatpush1.msra.mxu0 %v3872
    %3931 = vmatprep.subr.mxu0 %v3875
    %3932 = vmatpush1.msra.mxu0 %v3874
    %3933 = vmatprep.subr.mxu0 %v3877
    %3934 = vmatpush1.msra.mxu0 %v3876
    %3935 = vmatprep.subr.mxu0 %v3879
    %3936 = vmatpush1.msra.mxu0 %v3878
    %3937 = vmatprep.subr.mxu0 %v3881
    %3938 = vmatpush1.msra.mxu0 %v3880
    %3939 = vmatprep.subr.mxu0 %v3883
    %3940 = vmatpush1.msra.mxu0 %v3882
    %3941 = vmatprep.subr.mxu0 %v3885
    %3942 = vmatpush1.msra.mxu0 %v3884
    %3943 = vmatprep.subr.mxu0 %v3887
    %3944 = vmatpush1.msra.mxu0 %v3886
    %3945 = vmatprep.subr.mxu0 %v3889
    %3946 = vmatpush1.msra.mxu0 %v3888
    %3947 = vmatprep.subr.mxu0 %v3891
    %3948 = vmatpush1.msra.mxu0 %v3890
    %3949 = vmatprep.subr.mxu0 %v3893
    %3950 = vmatpush1.msra.mxu0 %v3892
    %3951 = vmatprep.subr.mxu0 %v3895
    %3952 = vmatpush1.msra.mxu0 %v3894
    %3953 = vmatprep.subr.mxu0 %v3897
    %3954 = vmatpush1.msra.mxu0 %v3896
    %3955 = vmatprep.subr.mxu0 %v3899
    %3956 = vmatpush1.msra.mxu0 %v3898
    %3957 = vmatprep.subr.mxu0 %v3901
    %3958 = vmatpush1.msra.mxu0 %v3900
    %3959 = vmatprep.subr.mxu0 0.0
    %3960 = vmatpush1.msra.mxu0 0.0
    %3961 = vmatprep.subr.mxu0 0.0
    %3962 = vmatpush1.msra.mxu0 0.0
    %3963 = vmatprep.subr.mxu0 0.0
    %3964 = vmatpush1.msra.mxu0 0.0
    %3965 = vmatprep.subr.mxu0 0.0
    %3966 = vmatpush1.msra.mxu0 0.0
    %3967 = vmatprep.subr.mxu0 0.0
    %3968 = vmatpush1.msra.mxu0 0.0
    %3969 = vmatprep.subr.mxu0 0.0
    %3970 = vmatpush1.msra.mxu0 0.0
    %3971 = vmatprep.subr.mxu0 0.0
    %3972 = vmatpush1.msra.mxu0 0.0
    %3973 = vmatprep.subr.mxu0 0.0
    %3974 = vmatpush1.msra.mxu0 0.0
    %3975 = vmatprep.mubr.f32.mxu0 %v3903
    %3976 = vmatmul.mubr.f32.gmra.mrb[0].mxu0 %v3754
    %v3977 = vpop.f32.mrb[0].mxu0
    %v3978 = vadd.f32 0.0, %v3977
    %v3979 = vpop.f32.mrb[0].mxu0
    %v3980 = vadd.f32 0.0, %v3979
    %3981 = vmatprep.mubr.f32.mxu0 %v3906
    %3982 = vmatmul.mubr.f32.gmra.mrb[0].mxu0 %v3760
    %v3983 = vpop.f32.mrb[0].mxu0
    %v3984 = vadd.f32 0.0, %v3983
    %v3985 = vpop.f32.mrb[0].mxu0
    %v3986 = vadd.f32 0.0, %v3985
    %3987 = vmatprep.mubr.f32.mxu0 %v3909
    %3988 = vmatmul.mubr.f32.gmra.mrb[0].mxu0 %v3766
    %v3989 = vpop.f32.mrb[0].mxu0
    %v3990 = vadd.f32 0.0, %v3989
    %v3991 = vpop.f32.mrb[0].mxu0
    %v3992 = vadd.f32 0.0, %v3991
    %3993 = vdwg.mxu0
    %v3995 = vsel %vm2310, %v3738, 0
    %v3998 = vsel %vm2310, %v3744, 0
    %v4001 = vsel %vm2310, %v3750, 0
    %4003 = vmatprep.subr.mxu0 %v3807
    %4004 = vmatpush1.msra.mxu0 %v3806
    %4005 = vmatprep.subr.mxu0 %v3809
    %4006 = vmatpush1.msra.mxu0 %v3808
    %4007 = vmatprep.subr.mxu0 %v3811
    %4008 = vmatpush1.msra.mxu0 %v3810
    %4009 = vmatprep.subr.mxu0 %v3813
    %4010 = vmatpush1.msra.mxu0 %v3812
    %4011 = vmatprep.subr.mxu0 %v3815
    %4012 = vmatpush1.msra.mxu0 %v3814
    %4013 = vmatprep.subr.mxu0 %v3817
    %4014 = vmatpush1.msra.mxu0 %v3816
    %4015 = vmatprep.subr.mxu0 %v3819
    %4016 = vmatpush1.msra.mxu0 %v3818
    %4017 = vmatprep.subr.mxu0 %v3821
    %4018 = vmatpush1.msra.mxu0 %v3820
    %4019 = vmatprep.subr.mxu0 %v3823
    %4020 = vmatpush1.msra.mxu0 %v3822
    %4021 = vmatprep.subr.mxu0 %v3825
    %4022 = vmatpush1.msra.mxu0 %v3824
    %4023 = vmatprep.subr.mxu0 %v3827
    %4024 = vmatpush1.msra.mxu0 %v3826
    %4025 = vmatprep.subr.mxu0 %v3829
    %4026 = vmatpush1.msra.mxu0 %v3828
    %4027 = vmatprep.subr.mxu0 %v3831
    %4028 = vmatpush1.msra.mxu0 %v3830
    %4029 = vmatprep.subr.mxu0 %v3833
    %4030 = vmatpush1.msra.mxu0 %v3832
    %4031 = vmatprep.subr.mxu0 %v3835
    %4032 = vmatpush1.msra.mxu0 %v3834
    %4033 = vmatprep.subr.mxu0 %v3837
    %4034 = vmatpush1.msra.mxu0 %v3836
    %4035 = vmatprep.subr.mxu0 %v3839
    %4036 = vmatpush1.msra.mxu0 %v3838
    %4037 = vmatprep.subr.mxu0 %v3841
    %4038 = vmatpush1.msra.mxu0 %v3840
    %4039 = vmatprep.subr.mxu0 %v3843
    %4040 = vmatpush1.msra.mxu0 %v3842
    %4041 = vmatprep.subr.mxu0 %v3845
    %4042 = vmatpush1.msra.mxu0 %v3844
    %4043 = vmatprep.subr.mxu0 %v3847
    %4044 = vmatpush1.msra.mxu0 %v3846
    %4045 = vmatprep.subr.mxu0 %v3849
    %4046 = vmatpush1.msra.mxu0 %v3848
    %4047 = vmatprep.subr.mxu0 %v3851
    %4048 = vmatpush1.msra.mxu0 %v3850
    %4049 = vmatprep.subr.mxu0 %v3853
    %4050 = vmatpush1.msra.mxu0 %v3852
    %4051 = vmatprep.subr.mxu0 0.0
    %4052 = vmatpush1.msra.mxu0 0.0
    %4053 = vmatprep.subr.mxu0 0.0
    %4054 = vmatpush1.msra.mxu0 0.0
    %4055 = vmatprep.subr.mxu0 0.0
    %4056 = vmatpush1.msra.mxu0 0.0
    %4057 = vmatprep.subr.mxu0 0.0
    %4058 = vmatpush1.msra.mxu0 0.0
    %4059 = vmatprep.subr.mxu0 0.0
    %4060 = vmatpush1.msra.mxu0 0.0
    %4061 = vmatprep.subr.mxu0 0.0
    %4062 = vmatpush1.msra.mxu0 0.0
    %4063 = vmatprep.subr.mxu0 0.0
    %4064 = vmatpush1.msra.mxu0 0.0
    %4065 = vmatprep.subr.mxu0 0.0
    %4066 = vmatpush1.msra.mxu0 0.0
    %4067 = vmatprep.mubr.f32.mxu0 %v3995
    %4068 = vmatmul.mubr.f32.gmra.mrb[0].mxu0 %v3736
    %v4069 = vpop.f32.mrb[0].mxu0
    %v4070 = vadd.f32 %v3978, %v4069
    %v4071 = vpop.f32.mrb[0].mxu0
    %v4072 = vadd.f32 %v3980, %v4071
    %4073 = vmatprep.mubr.f32.mxu0 %v3998
    %4074 = vmatmul.mubr.f32.gmra.mrb[0].mxu0 %v3742
    %v4075 = vpop.f32.mrb[0].mxu0
    %v4076 = vadd.f32 %v3984, %v4075
    %v4077 = vpop.f32.mrb[0].mxu0
    %v4078 = vadd.f32 %v3986, %v4077
    %4079 = vmatprep.mubr.f32.mxu0 %v4001
    %4080 = vmatmul.mubr.f32.gmra.mrb[0].mxu0 %v3748
    %v4081 = vpop.f32.mrb[0].mxu0
    %v4082 = vadd.f32 %v3990, %v4081
    %v4083 = vpop.f32.mrb[0].mxu0
    %v4084 = vadd.f32 %v3992, %v4083
    %4085 = vdwg.mxu0
    %v4086 = vld [vmem:[%s9 + $0x300] sm:$0xff]
    %v4087 = vld [vmem:[%s9 + $0x308] sm:$0xff]
    %v4088 = vld [vmem:[%s9 + $0x310] sm:$0xff]
    %v4089 = vld [vmem:[%s9 + $0x318] sm:$0xff]
    %v4090 = vld [vmem:[%s9 + $0x320] sm:$0xff]
    %v4091 = vld [vmem:[%s9 + $0x328] sm:$0xff]
    %v4092 = vld [vmem:[%s9 + $0x330] sm:$0xff]
    %v4093 = vld [vmem:[%s9 + $0x338] sm:$0xff]
    %v4094 = vld [vmem:[%s9 + $0x340] sm:$0xff]
    %v4095 = vld [vmem:[%s9 + $0x348] sm:$0xff]
    %v4096 = vld [vmem:[%s9 + $0x350] sm:$0xff]
    %v4097 = vld [vmem:[%s9 + $0x358] sm:$0xff]
    %v4098 = vld [vmem:[%s9 + $0x360] sm:$0xff]
    %v4099 = vld [vmem:[%s9 + $0x368] sm:$0xff]
    %v4100 = vld [vmem:[%s9 + $0x370] sm:$0xff]
    %v4101 = vld [vmem:[%s9 + $0x378] sm:$0xff]
    %v4102 = vld [vmem:[%s9 + $0x380] sm:$0xff]
    %v4103 = vld [vmem:[%s9 + $0x388] sm:$0xff]
    %v4104 = vld [vmem:[%s9 + $0x390] sm:$0xff]
    %v4105 = vld [vmem:[%s9 + $0x398] sm:$0xff]
    %v4106 = vld [vmem:[%s9 + $0x3a0] sm:$0xff]
    %v4107 = vld [vmem:[%s9 + $0x3a8] sm:$0xff]
    %v4108 = vld [vmem:[%s9 + $0x3b0] sm:$0xff]
    %v4109 = vld [vmem:[%s9 + $0x3b8] sm:$0xff]
    %v4110 = vld [vmem:[%s9 + $0x3c0] sm:$0xff]
    %v4111 = vld [vmem:[%s9 + $0x3c8] sm:$0xff]
    %v4112 = vld [vmem:[%s9 + $0x3d0] sm:$0xff]
    %v4113 = vld [vmem:[%s9 + $0x3d8] sm:$0xff]
    %v4114 = vld [vmem:[%s9 + $0x3e0] sm:$0xff]
    %v4115 = vld [vmem:[%s9 + $0x3e8] sm:$0xff]
    %v4116 = vld [vmem:[%s9 + $0x3f0] sm:$0xff]
    %v4117 = vld [vmem:[%s9 + $0x3f8] sm:$0xff]
    %v4118 = vld [vmem:[%s9 + $0x400] sm:$0xff]
    %v4119 = vld [vmem:[%s9 + $0x408] sm:$0xff]
    %v4120 = vld [vmem:[%s9 + $0x410] sm:$0xff]
    %v4121 = vld [vmem:[%s9 + $0x418] sm:$0xff]
    %v4122 = vld [vmem:[%s9 + $0x420] sm:$0xff]
    %v4123 = vld [vmem:[%s9 + $0x428] sm:$0xff]
    %v4124 = vld [vmem:[%s9 + $0x430] sm:$0xff]
    %v4125 = vld [vmem:[%s9 + $0x438] sm:$0xff]
    %v4126 = vld [vmem:[%s9 + $0x440] sm:$0xff]
    %v4127 = vld [vmem:[%s9 + $0x448] sm:$0xff]
    %v4128 = vld [vmem:[%s9 + $0x450] sm:$0xff]
    %v4129 = vld [vmem:[%s9 + $0x458] sm:$0xff]
    %v4130 = vld [vmem:[%s9 + $0x460] sm:$0xff]
    %v4131 = vld [vmem:[%s9 + $0x468] sm:$0xff]
    %v4132 = vld [vmem:[%s9 + $0x470] sm:$0xff]
    %v4133 = vld [vmem:[%s9 + $0x478] sm:$0xff]
    %v4135 = vsel %vm2310, %v3774, 0
    %v4138 = vsel %vm2310, %v3780, 0
    %v4141 = vsel %vm2310, %v3786, 0
    %4143 = vmatprep.subr.mxu0 %v4087
    %4144 = vmatpush1.msra.mxu0 %v4086
    %4145 = vmatprep.subr.mxu0 %v4089
    %4146 = vmatpush1.msra.mxu0 %v4088
    %4147 = vmatprep.subr.mxu0 %v4091
    %4148 = vmatpush1.msra.mxu0 %v4090
    %4149 = vmatprep.subr.mxu0 %v4093
    %4150 = vmatpush1.msra.mxu0 %v4092
    %4151 = vmatprep.subr.mxu0 %v4095
    %4152 = vmatpush1.msra.mxu0 %v4094
    %4153 = vmatprep.subr.mxu0 %v4097
    %4154 = vmatpush1.msra.mxu0 %v4096
    %4155 = vmatprep.subr.mxu0 %v4099
    %4156 = vmatpush1.msra.mxu0 %v4098
    %4157 = vmatprep.subr.mxu0 %v4101
    %4158 = vmatpush1.msra.mxu0 %v4100
    %4159 = vmatprep.subr.mxu0 %v4103
    %4160 = vmatpush1.msra.mxu0 %v4102
    %4161 = vmatprep.subr.mxu0 %v4105
    %4162 = vmatpush1.msra.mxu0 %v4104
    %4163 = vmatprep.subr.mxu0 %v4107
    %4164 = vmatpush1.msra.mxu0 %v4106
    %4165 = vmatprep.subr.mxu0 %v4109
    %4166 = vmatpush1.msra.mxu0 %v4108
    %4167 = vmatprep.subr.mxu0 %v4111
    %4168 = vmatpush1.msra.mxu0 %v4110
    %4169 = vmatprep.subr.mxu0 %v4113
    %4170 = vmatpush1.msra.mxu0 %v4112
    %4171 = vmatprep.subr.mxu0 %v4115
    %4172 = vmatpush1.msra.mxu0 %v4114
    %4173 = vmatprep.subr.mxu0 %v4117
    %4174 = vmatpush1.msra.mxu0 %v4116
    %4175 = vmatprep.subr.mxu0 %v4119
    %4176 = vmatpush1.msra.mxu0 %v4118
    %4177 = vmatprep.subr.mxu0 %v4121
    %4178 = vmatpush1.msra.mxu0 %v4120
    %4179 = vmatprep.subr.mxu0 %v4123
    %4180 = vmatpush1.msra.mxu0 %v4122
    %4181 = vmatprep.subr.mxu0 %v4125
    %4182 = vmatpush1.msra.mxu0 %v4124
    %4183 = vmatprep.subr.mxu0 %v4127
    %4184 = vmatpush1.msra.mxu0 %v4126
    %4185 = vmatprep.subr.mxu0 %v4129
    %4186 = vmatpush1.msra.mxu0 %v4128
    %4187 = vmatprep.subr.mxu0 %v4131
    %4188 = vmatpush1.msra.mxu0 %v4130
    %4189 = vmatprep.subr.mxu0 %v4133
    %4190 = vmatpush1.msra.mxu0 %v4132
    %4191 = vmatprep.subr.mxu0 0.0
    %4192 = vmatpush1.msra.mxu0 0.0
    %4193 = vmatprep.subr.mxu0 0.0
    %4194 = vmatpush1.msra.mxu0 0.0
    %4195 = vmatprep.subr.mxu0 0.0
    %4196 = vmatpush1.msra.mxu0 0.0
    %4197 = vmatprep.subr.mxu0 0.0
    %4198 = vmatpush1.msra.mxu0 0.0
    %4199 = vmatprep.subr.mxu0 0.0
    %4200 = vmatpush1.msra.mxu0 0.0
    %4201 = vmatprep.subr.mxu0 0.0
    %4202 = vmatpush1.msra.mxu0 0.0
    %4203 = vmatprep.subr.mxu0 0.0
    %4204 = vmatpush1.msra.mxu0 0.0
    %4205 = vmatprep.subr.mxu0 0.0
    %4206 = vmatpush1.msra.mxu0 0.0
    %4207 = vmatprep.mubr.f32.mxu0 %v4135
    %4208 = vmatmul.mubr.f32.gmra.mrb[0].mxu0 %v3772
    %v4209 = vpop.f32.mrb[0].mxu0
    %v4210 = vadd.f32 0.0, %v4209
    %v4211 = vpop.f32.mrb[0].mxu0
    %v4212 = vadd.f32 0.0, %v4211
    %4213 = vmatprep.mubr.f32.mxu0 %v4138
    %4214 = vmatmul.mubr.f32.gmra.mrb[0].mxu0 %v3778
    %v4215 = vpop.f32.mrb[0].mxu0
    %v4216 = vadd.f32 0.0, %v4215
    %v4217 = vpop.f32.mrb[0].mxu0
    %v4218 = vadd.f32 0.0, %v4217
    %4219 = vmatprep.mubr.f32.mxu0 %v4141
    %4220 = vmatmul.mubr.f32.gmra.mrb[0].mxu0 %v3784
    %v4221 = vpop.f32.mrb[0].mxu0
    %v4222 = vadd.f32 0.0, %v4221
    %v4223 = vpop.f32.mrb[0].mxu0
    %v4224 = vadd.f32 0.0, %v4223
    %4225 = vdwg.mxu0
    %v4226 = vadd.f32 %v4070, %v4210
    %v4227 = vadd.f32 %v4072, %v4212
    %v4228 = vadd.f32 %v4076, %v4216
    %v4229 = vadd.f32 %v4078, %v4218
    %v4230 = vadd.f32 %v4082, %v4222
    %v4231 = vadd.f32 %v4084, %v4224
    %v4232 = vld [vmem:[%s9 + $0x480] sm:$0xff]
    %v4233 = vld [vmem:[%s9 + $0x488] sm:$0xff]
    %v4234 = vld [vmem:[%s9 + $0x490] sm:$0xff]
    %v4235 = vld [vmem:[%s9 + $0x498] sm:$0xff]
    %v4236 = vld [vmem:[%s9 + $0x4a0] sm:$0xff]
    %v4237 = vld [vmem:[%s9 + $0x4a8] sm:$0xff]
    %v4238 = vld [vmem:[%s9 + $0x4b0] sm:$0xff]
    %v4239 = vld [vmem:[%s9 + $0x4b8] sm:$0xff]
    %v4240 = vld [vmem:[%s9 + $0x4c0] sm:$0xff]
    %v4241 = vld [vmem:[%s9 + $0x4c8] sm:$0xff]
    %v4242 = vld [vmem:[%s9 + $0x4d0] sm:$0xff]
    %v4243 = vld [vmem:[%s9 + $0x4d8] sm:$0xff]
    %v4244 = vld [vmem:[%s9 + $0x4e0] sm:$0xff]
    %v4245 = vld [vmem:[%s9 + $0x4e8] sm:$0xff]
    %v4246 = vld [vmem:[%s9 + $0x4f0] sm:$0xff]
    %v4247 = vld [vmem:[%s9 + $0x4f8] sm:$0xff]
    %v4248 = vld [vmem:[%s9 + $0x500] sm:$0xff]
    %v4249 = vld [vmem:[%s9 + $0x508] sm:$0xff]
    %v4250 = vld [vmem:[%s9 + $0x510] sm:$0xff]
    %v4251 = vld [vmem:[%s9 + $0x518] sm:$0xff]
    %v4252 = vld [vmem:[%s9 + $0x520] sm:$0xff]
    %v4253 = vld [vmem:[%s9 + $0x528] sm:$0xff]
    %v4254 = vld [vmem:[%s9 + $0x530] sm:$0xff]
    %v4255 = vld [vmem:[%s9 + $0x538] sm:$0xff]
    %v4256 = vld [vmem:[%s9 + $0x540] sm:$0xff]
    %v4257 = vld [vmem:[%s9 + $0x548] sm:$0xff]
    %v4258 = vld [vmem:[%s9 + $0x550] sm:$0xff]
    %v4259 = vld [vmem:[%s9 + $0x558] sm:$0xff]
    %v4260 = vld [vmem:[%s9 + $0x560] sm:$0xff]
    %v4261 = vld [vmem:[%s9 + $0x568] sm:$0xff]
    %v4262 = vld [vmem:[%s9 + $0x570] sm:$0xff]
    %v4263 = vld [vmem:[%s9 + $0x578] sm:$0xff]
    %v4264 = vld [vmem:[%s9 + $0x580] sm:$0xff]
    %v4265 = vld [vmem:[%s9 + $0x588] sm:$0xff]
    %v4266 = vld [vmem:[%s9 + $0x590] sm:$0xff]
    %v4267 = vld [vmem:[%s9 + $0x598] sm:$0xff]
    %v4268 = vld [vmem:[%s9 + $0x5a0] sm:$0xff]
    %v4269 = vld [vmem:[%s9 + $0x5a8] sm:$0xff]
    %v4270 = vld [vmem:[%s9 + $0x5b0] sm:$0xff]
    %v4271 = vld [vmem:[%s9 + $0x5b8] sm:$0xff]
    %v4272 = vld [vmem:[%s9 + $0x5c0] sm:$0xff]
    %v4273 = vld [vmem:[%s9 + $0x5c8] sm:$0xff]
    %v4274 = vld [vmem:[%s9 + $0x5d0] sm:$0xff]
    %v4275 = vld [vmem:[%s9 + $0x5d8] sm:$0xff]
    %v4276 = vld [vmem:[%s9 + $0x5e0] sm:$0xff]
    %v4277 = vld [vmem:[%s9 + $0x5e8] sm:$0xff]
    %v4278 = vld [vmem:[%s9 + $0x5f0] sm:$0xff]
    %v4279 = vld [vmem:[%s9 + $0x5f8] sm:$0xff]
    %v4281 = vsel %vm2310, %v3792, 0
    %v4284 = vsel %vm2310, %v3798, 0
    %v4287 = vsel %vm2310, %v3804, 0
    %4289 = vmatprep.subr.mxu0 %v4233
    %4290 = vmatpush1.msra.mxu0 %v4232
    %4291 = vmatprep.subr.mxu0 %v4235
    %4292 = vmatpush1.msra.mxu0 %v4234
    %4293 = vmatprep.subr.mxu0 %v4237
    %4294 = vmatpush1.msra.mxu0 %v4236
    %4295 = vmatprep.subr.mxu0 %v4239
    %4296 = vmatpush1.msra.mxu0 %v4238
    %4297 = vmatprep.subr.mxu0 %v4241
    %4298 = vmatpush1.msra.mxu0 %v4240
    %4299 = vmatprep.subr.mxu0 %v4243
    %4300 = vmatpush1.msra.mxu0 %v4242
    %4301 = vmatprep.subr.mxu0 %v4245
    %4302 = vmatpush1.msra.mxu0 %v4244
    %4303 = vmatprep.subr.mxu0 %v4247
    %4304 = vmatpush1.msra.mxu0 %v4246
    %4305 = vmatprep.subr.mxu0 %v4249
    %4306 = vmatpush1.msra.mxu0 %v4248
    %4307 = vmatprep.subr.mxu0 %v4251
    %4308 = vmatpush1.msra.mxu0 %v4250
    %4309 = vmatprep.subr.mxu0 %v4253
    %4310 = vmatpush1.msra.mxu0 %v4252
    %4311 = vmatprep.subr.mxu0 %v4255
    %4312 = vmatpush1.msra.mxu0 %v4254
    %4313 = vmatprep.subr.mxu0 %v4257
    %4314 = vmatpush1.msra.mxu0 %v4256
    %4315 = vmatprep.subr.mxu0 %v4259
    %4316 = vmatpush1.msra.mxu0 %v4258
    %4317 = vmatprep.subr.mxu0 %v4261
    %4318 = vmatpush1.msra.mxu0 %v4260
    %4319 = vmatprep.subr.mxu0 %v4263
    %4320 = vmatpush1.msra.mxu0 %v4262
    %4321 = vmatprep.subr.mxu0 %v4265
    %4322 = vmatpush1.msra.mxu0 %v4264
    %4323 = vmatprep.subr.mxu0 %v4267
    %4324 = vmatpush1.msra.mxu0 %v4266
    %4325 = vmatprep.subr.mxu0 %v4269
    %4326 = vmatpush1.msra.mxu0 %v4268
    %4327 = vmatprep.subr.mxu0 %v4271
    %4328 = vmatpush1.msra.mxu0 %v4270
    %4329 = vmatprep.subr.mxu0 %v4273
    %4330 = vmatpush1.msra.mxu0 %v4272
    %4331 = vmatprep.subr.mxu0 %v4275
    %4332 = vmatpush1.msra.mxu0 %v4274
    %4333 = vmatprep.subr.mxu0 %v4277
    %4334 = vmatpush1.msra.mxu0 %v4276
    %4335 = vmatprep.subr.mxu0 %v4279
    %4336 = vmatpush1.msra.mxu0 %v4278
    %4337 = vmatprep.subr.mxu0 0.0
    %4338 = vmatpush1.msra.mxu0 0.0
    %4339 = vmatprep.subr.mxu0 0.0
    %4340 = vmatpush1.msra.mxu0 0.0
    %4341 = vmatprep.subr.mxu0 0.0
    %4342 = vmatpush1.msra.mxu0 0.0
    %4343 = vmatprep.subr.mxu0 0.0
    %4344 = vmatpush1.msra.mxu0 0.0
    %4345 = vmatprep.subr.mxu0 0.0
    %4346 = vmatpush1.msra.mxu0 0.0
    %4347 = vmatprep.subr.mxu0 0.0
    %4348 = vmatpush1.msra.mxu0 0.0
    %4349 = vmatprep.subr.mxu0 0.0
    %4350 = vmatpush1.msra.mxu0 0.0
    %4351 = vmatprep.subr.mxu0 0.0
    %4352 = vmatpush1.msra.mxu0 0.0
    %4353 = vmatprep.mubr.f32.mxu0 %v4281
    %4354 = vmatmul.mubr.f32.gmra.mrb[0].mxu0 %v3790
    %v4355 = vpop.f32.mrb[0].mxu0
    %v4356 = vadd.f32 0.0, %v4355
    %v4357 = vpop.f32.mrb[0].mxu0
    %v4358 = vadd.f32 0.0, %v4357
    %4359 = vmatprep.mubr.f32.mxu0 %v4284
    %4360 = vmatmul.mubr.f32.gmra.mrb[0].mxu0 %v3796
    %v4361 = vpop.f32.mrb[0].mxu0
    %v4362 = vadd.f32 0.0, %v4361
    %v4363 = vpop.f32.mrb[0].mxu0
    %v4364 = vadd.f32 0.0, %v4363
    %4365 = vmatprep.mubr.f32.mxu0 %v4287
    %4366 = vmatmul.mubr.f32.gmra.mrb[0].mxu0 %v3802
    %v4367 = vpop.f32.mrb[0].mxu0
    %v4368 = vadd.f32 0.0, %v4367
    %v4369 = vpop.f32.mrb[0].mxu0
    %v4370 = vadd.f32 0.0, %v4369
    %4371 = vdwg.mxu0
    %v4372 = vadd.f32 %v4226, %v4356
    %v4373 = vadd.f32 %v4227, %v4358
    %v4374 = vadd.f32 %v4228, %v4362
    %v4375 = vadd.f32 %v4229, %v4364
    %v4376 = vadd.f32 %v4230, %v4368
    %v4377 = vadd.f32 %v4231, %v4370
    %v4378 = vld [vmem:[%s10] sm:$0x3]
    %v4380 = vlaneseq
    %v4381 = vshrl.u32 %v4380, 7
    %v4382 = vsub.s32 0, %v4381
    %v4383 = vrot.slane %v4378, %v4382
    %v4384 = vlaneseq
    %v4385 = vshrl.u32 %v4384, 7
    %v4386 = vsub.s32 1, %v4385
    %v4387 = vrot.slane %v4378, %v4386
    %v4390 = vadd.f32 %v4372, %v4383
    %v4391 = vadd.f32 %v4373, %v4387
    %v4392 = vadd.f32 %v4374, %v4383
    %v4393 = vadd.f32 %v4375, %v4387
    %v4394 = vadd.f32 %v4376, %v4383
    %v4395 = vadd.f32 %v4377, %v4387
    %vm4396 = vcmp.gt.f32.partialorder %v4390, 0.0
    %vm4397 = vcmp.gt.f32.partialorder %v4391, 0.0
    %vm4398 = vcmp.gt.f32.partialorder %v4392, 0.0
    %vm4399 = vcmp.gt.f32.partialorder %v4393, 0.0
    %vm4400 = vcmp.gt.f32.partialorder %v4394, 0.0
    %vm4401 = vcmp.gt.f32.partialorder %v4395, 0.0
    %v4402 = vmin.f32 %v4390, 0.0
    %v4403 = vmin.f32 %v4391, 0.0
    %v4404 = vmin.f32 %v4392, 0.0
    %v4405 = vmin.f32 %v4393, 0.0
    %v4406 = vmin.f32 %v4394, 0.0
    %v4407 = vmin.f32 %v4395, 0.0
    %v4408 = vmul.f32 %v4402, 1.442695
    %v4409 = vpow.pop %v4408
    %v4410 = vmul.f32 %v4403, 1.442695
    %v4411 = vpow.pop %v4410
    %v4412 = vmul.f32 %v4404, 1.442695
    %v4413 = vpow.pop %v4412
    %v4414 = vmul.f32 %v4405, 1.442695
    %v4415 = vpow.pop %v4414
    %v4416 = vmul.f32 %v4406, 1.442695
    %v4417 = vpow.pop %v4416
    %v4418 = vmul.f32 %v4407, 1.442695
    %v4419 = vpow.pop %v4418
    %v4420 = vsub.f32 %v4409, 1.0
    %v4421 = vsub.f32 %v4411, 1.0
    %v4422 = vsub.f32 %v4413, 1.0
    %v4423 = vsub.f32 %v4415, 1.0
    %v4424 = vsub.f32 %v4417, 1.0
    %v4425 = vsub.f32 %v4419, 1.0
    %v4426 = vsel %vm4396, %v4390, %v4420
    %v4427 = vsel %vm4397, %v4391, %v4421
    %v4428 = vsel %vm4398, %v4392, %v4422
    %v4429 = vsel %vm4399, %v4393, %v4423
    %v4430 = vsel %vm4400, %v4394, %v4424
    %v4431 = vsel %vm4401, %v4395, %v4425
    %vm4435 = vcmask 1041408
    %v4436 = vrot.slane %v4426, 6
    %v4437 = vrot.slane %v4428, 6
    %v4438 = vsel %vm4435, %v4436, %v4437
    %v4439 = vrot.slane %v4430, 6
    %v4440 = vsel %vm4435, %v4437, %v4439
    %4441 = vrot.lane.b32.xlu0 %v4436, 64
    %v4442 = vpop.permute.xlu0 %4441
    %4443 = vrot.lane.b32.xlu0 %v4438, 64
    %v4444 = vpop.permute.xlu0 %4443
    %4445 = vrot.lane.b32.xlu0 %v4440, 64
    %v4446 = vpop.permute.xlu0 %4445
    %v4452 = vrot.slane %v4427, 4
    %v4453 = vrot.slane %v4429, 4
    %v4454 = vsel %vm1902, %v4452, %v4453
    %v4455 = vrot.slane %v4431, 4
    %v4456 = vsel %vm1902, %v4453, %v4455
    %v4459 = vsel %vm4435, %v4430, %v4442
    %v4460 = vsel %vm1902, %v4446, %v4452
    %vm4461 = vcmask 1045504
    %v4462 = vsel %vm4461, %v4456, 0.0
    %s4463 = scalar_lea.vmem %s0, 80
    %v4464 = vld [vmem:[%s4463] sm:$0xff]
    %v4465 = vld [vmem:[%s4463 + $0x8] sm:$0xff]
    %v4466 = vld [vmem:[%s4463 + $0x10] sm:$0xff]
    %v4467 = vld [vmem:[%s4463 + $0x18] sm:$0xff]
    %v4468 = vld [vmem:[%s4463 + $0x20] sm:$0xff]
    %v4469 = vld [vmem:[%s4463 + $0x28] sm:$0xff]
    %v4470 = vld [vmem:[%s4463 + $0x30] sm:$0xff]
    %v4471 = vld [vmem:[%s4463 + $0x38] sm:$0xff]
    %v4472 = vld [vmem:[%s4463 + $0x40] sm:$0xff]
    %v4473 = vld [vmem:[%s4463 + $0x48] sm:$0xff]
    %4474 = vxpose.xlu0.b32.start [1/16] %v4464, 128
    %4475 = vxpose.xlu0.b32.cont [2/16] %v4466, 128
    %4476 = vxpose.xlu0.b32.cont [3/16] %v4468, 128
    %4477 = vxpose.xlu0.b32.cont [4/16] %v4470, 128
    %4478 = vxpose.xlu0.b32.cont [5/16] %v4472, 128
    %4479 = vxpose.xlu0.b32.cont [6/16] 0.0, 128
    %4480 = vxpose.xlu0.b32.cont [7/16] 0.0, 128
    %4481 = vxpose.xlu0.b32.cont [8/16] 0.0, 128
    %4482 = vxpose.xlu0.b32.cont [9/16] 0.0, 128
    %4483 = vxpose.xlu0.b32.cont [10/16] 0.0, 128
    %4484 = vxpose.xlu0.b32.cont [11/16] 0.0, 128
    %4485 = vxpose.xlu0.b32.cont [12/16] 0.0, 128
    %4486 = vxpose.xlu0.b32.cont [13/16] 0.0, 128
    %4487 = vxpose.xlu0.b32.cont [14/16] 0.0, 128
    %4488 = vxpose.xlu0.b32.cont [15/16] 0.0, 128
    %4489 = vxpose.xlu0.b32.end [16/16] 0.0, 128
    %v4490 = vpop.trf.xlu0
    %v4491 = vpop.trf.xlu0
    %v4492 = vpop.trf.xlu0
    %v4493 = vpop.trf.xlu0
    %v4494 = vpop.trf.xlu0
    %v4495 = vpop.trf.xlu0
    %v4496 = vpop.trf.xlu0
    %v4497 = vpop.trf.xlu0
    %v4498 = vpop.trf.xlu0
    %v4499 = vpop.trf.xlu0
    %v4500 = vpop.trf.xlu0
    %v4501 = vpop.trf.xlu0
    %v4502 = vpop.trf.xlu0
    %v4503 = vpop.trf.xlu0
    %v4504 = vpop.trf.xlu0
    %v4505 = vpop.trf.xlu0
    %4506 = vxpose.xlu0.b32.start [1/16] %v4465, 128
    %4507 = vxpose.xlu0.b32.cont [2/16] %v4467, 128
    %4508 = vxpose.xlu0.b32.cont [3/16] %v4469, 128
    %4509 = vxpose.xlu0.b32.cont [4/16] %v4471, 128
    %4510 = vxpose.xlu0.b32.cont [5/16] %v4473, 128
    %4511 = vxpose.xlu0.b32.cont [6/16] 0.0, 128
    %4512 = vxpose.xlu0.b32.cont [7/16] 0.0, 128
    %4513 = vxpose.xlu0.b32.cont [8/16] 0.0, 128
    %4514 = vxpose.xlu0.b32.cont [9/16] 0.0, 128
    %4515 = vxpose.xlu0.b32.cont [10/16] 0.0, 128
    %4516 = vxpose.xlu0.b32.cont [11/16] 0.0, 128
    %4517 = vxpose.xlu0.b32.cont [12/16] 0.0, 128
    %4518 = vxpose.xlu0.b32.cont [13/16] 0.0, 128
    %4519 = vxpose.xlu0.b32.cont [14/16] 0.0, 128
    %4520 = vxpose.xlu0.b32.cont [15/16] 0.0, 128
    %4521 = vxpose.xlu0.b32.end [16/16] 0.0, 128
    %v4522 = vpop.trf.xlu0
    %v4523 = vpop.trf.xlu0
    %v4524 = vpop.trf.xlu0
    %v4525 = vpop.trf.xlu0
    %v4526 = vpop.trf.xlu0
    %v4527 = vpop.trf.xlu0
    %v4528 = vpop.trf.xlu0
    %v4529 = vpop.trf.xlu0
    %v4530 = vpop.trf.xlu0
    %v4531 = vpop.trf.xlu0
    %v4532 = vpop.trf.xlu0
    %v4533 = vpop.trf.xlu0
    %v4534 = vpop.trf.xlu0
    %v4535 = vpop.trf.xlu0
    %v4536 = vpop.trf.xlu0
    %v4537 = vpop.trf.xlu0
    %v4539 = vsel %vm175, %v4490, 0
    %v4542 = vsel %vm175, %v4491, 0
    %v4545 = vsel %vm175, %v4492, 0
    %v4548 = vsel %vm175, %v4493, 0
    %v4551 = vsel %vm175, %v4494, 0
    %v4554 = vsel %vm175, %v4495, 0
    %v4557 = vsel %vm175, %v4496, 0
    %v4560 = vsel %vm175, %v4497, 0
    %v4563 = vsel %vm175, %v4498, 0
    %v4566 = vsel %vm175, %v4499, 0
    %v4569 = vsel %vm175, %v4500, 0
    %v4572 = vsel %vm175, %v4501, 0
    %v4575 = vsel %vm175, %v4502, 0
    %v4578 = vsel %vm175, %v4503, 0
    %v4581 = vsel %vm175, %v4504, 0
    %v4584 = vsel %vm175, %v4505, 0
    %v4587 = vsel %vm175, %v4522, 0
    %v4590 = vsel %vm175, %v4523, 0
    %v4593 = vsel %vm175, %v4524, 0
    %v4596 = vsel %vm175, %v4525, 0
    %4598 = vmatprep.subr.mxu0 %v144
    %4599 = vmatpush1.msra.mxu0 %v143
    %4600 = vmatprep.subr.mxu0 %v147
    %4601 = vmatpush1.msra.mxu0 %v146
    %4602 = vmatprep.subr.mxu0 %v150
    %4603 = vmatpush1.msra.mxu0 %v149
    %4604 = vmatprep.subr.mxu0 %v153
    %4605 = vmatpush1.msra.mxu0 %v152
    %4606 = vmatprep.subr.mxu0 %v156
    %4607 = vmatpush1.msra.mxu0 %v155
    %4608 = vmatprep.subr.mxu0 0.0
    %4609 = vmatpush1.msra.mxu0 0.0
    %4610 = vmatprep.subr.mxu0 0.0
    %4611 = vmatpush1.msra.mxu0 0.0
    %4612 = vmatprep.subr.mxu0 0.0
    %4613 = vmatpush1.msra.mxu0 0.0
    %4614 = vmatprep.subr.mxu0 0.0
    %4615 = vmatpush1.msra.mxu0 0.0
    %4616 = vmatprep.subr.mxu0 0.0
    %4617 = vmatpush1.msra.mxu0 0.0
    %4618 = vmatprep.subr.mxu0 0.0
    %4619 = vmatpush1.msra.mxu0 0.0
    %4620 = vmatprep.subr.mxu0 0.0
    %4621 = vmatpush1.msra.mxu0 0.0
    %4622 = vmatprep.subr.mxu0 0.0
    %4623 = vmatpush1.msra.mxu0 0.0
    %4624 = vmatprep.subr.mxu0 0.0
    %4625 = vmatpush1.msra.mxu0 0.0
    %4626 = vmatprep.subr.mxu0 0.0
    %4627 = vmatpush1.msra.mxu0 0.0
    %4628 = vmatprep.subr.mxu0 0.0
    %4629 = vmatpush1.msra.mxu0 0.0
    %4630 = vmatprep.subr.mxu0 0.0
    %4631 = vmatpush1.msra.mxu0 0.0
    %4632 = vmatprep.subr.mxu0 0.0
    %4633 = vmatpush1.msra.mxu0 0.0
    %4634 = vmatprep.subr.mxu0 0.0
    %4635 = vmatpush1.msra.mxu0 0.0
    %4636 = vmatprep.subr.mxu0 0.0
    %4637 = vmatpush1.msra.mxu0 0.0
    %4638 = vmatprep.subr.mxu0 0.0
    %4639 = vmatpush1.msra.mxu0 0.0
    %4640 = vmatprep.subr.mxu0 0.0
    %4641 = vmatpush1.msra.mxu0 0.0
    %4642 = vmatprep.subr.mxu0 0.0
    %4643 = vmatpush1.msra.mxu0 0.0
    %4644 = vmatprep.subr.mxu0 0.0
    %4645 = vmatpush1.msra.mxu0 0.0
    %4646 = vmatprep.subr.mxu0 0.0
    %4647 = vmatpush1.msra.mxu0 0.0
    %4648 = vmatprep.subr.mxu0 0.0
    %4649 = vmatpush1.msra.mxu0 0.0
    %4650 = vmatprep.subr.mxu0 0.0
    %4651 = vmatpush1.msra.mxu0 0.0
    %4652 = vmatprep.subr.mxu0 0.0
    %4653 = vmatpush1.msra.mxu0 0.0
    %4654 = vmatprep.subr.mxu0 0.0
    %4655 = vmatpush1.msra.mxu0 0.0
    %4656 = vmatprep.subr.mxu0 0.0
    %4657 = vmatpush1.msra.mxu0 0.0
    %4658 = vmatprep.subr.mxu0 0.0
    %4659 = vmatpush1.msra.mxu0 0.0
    %4660 = vmatprep.subr.mxu0 0.0
    %4661 = vmatpush1.msra.mxu0 0.0
    %4662 = vmatprep.mubr.f32.mxu0 0.0
    %4663 = vmatmul.mubr.f32.gmra.mrb[0].mxu0 %v4539
    %v4664 = vpop.f32.mrb[0].mxu0
    %v4665 = vadd.f32 %v163, %v4664
    %v4666 = vpop.f32.mrb[0].mxu0
    %v4667 = vadd.f32 %v167, %v4666
    %4668 = vmatprep.mubr.f32.mxu0 0.0
    %4669 = vmatmul.mubr.f32.gmra.mrb[0].mxu0 %v4542
    %v4670 = vpop.f32.mrb[0].mxu0
    %v4671 = vadd.f32 %v163, %v4670
    %v4672 = vpop.f32.mrb[0].mxu0
    %v4673 = vadd.f32 %v167, %v4672
    %4674 = vmatprep.mubr.f32.mxu0 0.0
    %4675 = vmatmul.mubr.f32.gmra.mrb[0].mxu0 %v4545
    %v4676 = vpop.f32.mrb[0].mxu0
    %v4677 = vadd.f32 %v163, %v4676
    %v4678 = vpop.f32.mrb[0].mxu0
    %v4679 = vadd.f32 %v167, %v4678
    %4680 = vmatprep.mubr.f32.mxu0 0.0
    %4681 = vmatmul.mubr.f32.gmra.mrb[0].mxu0 %v4548
    %v4682 = vpop.f32.mrb[0].mxu0
    %v4683 = vadd.f32 %v163, %v4682
    %v4684 = vpop.f32.mrb[0].mxu0
    %v4685 = vadd.f32 %v167, %v4684
    %4686 = vmatprep.mubr.f32.mxu0 0.0
    %4687 = vmatmul.mubr.f32.gmra.mrb[0].mxu0 %v4551
    %v4688 = vpop.f32.mrb[0].mxu0
    %v4689 = vadd.f32 %v163, %v4688
    %v4690 = vpop.f32.mrb[0].mxu0
    %v4691 = vadd.f32 %v167, %v4690
    %4692 = vmatprep.mubr.f32.mxu0 0.0
    %4693 = vmatmul.mubr.f32.gmra.mrb[0].mxu0 %v4554
    %v4694 = vpop.f32.mrb[0].mxu0
    %v4695 = vadd.f32 %v163, %v4694
    %v4696 = vpop.f32.mrb[0].mxu0
    %v4697 = vadd.f32 %v167, %v4696
    %4698 = vmatprep.mubr.f32.mxu0 0.0
    %4699 = vmatmul.mubr.f32.gmra.mrb[0].mxu0 %v4557
    %v4700 = vpop.f32.mrb[0].mxu0
    %v4701 = vadd.f32 %v163, %v4700
    %v4702 = vpop.f32.mrb[0].mxu0
    %v4703 = vadd.f32 %v167, %v4702
    %4704 = vmatprep.mubr.f32.mxu0 0.0
    %4705 = vmatmul.mubr.f32.gmra.mrb[0].mxu0 %v4560
    %v4706 = vpop.f32.mrb[0].mxu0
    %v4707 = vadd.f32 %v163, %v4706
    %v4708 = vpop.f32.mrb[0].mxu0
    %v4709 = vadd.f32 %v167, %v4708
    %4710 = vmatprep.mubr.f32.mxu0 0.0
    %4711 = vmatmul.mubr.f32.gmra.mrb[0].mxu0 %v4563
    %v4712 = vpop.f32.mrb[0].mxu0
    %v4713 = vadd.f32 %v163, %v4712
    %v4714 = vpop.f32.mrb[0].mxu0
    %v4715 = vadd.f32 %v167, %v4714
    %4716 = vmatprep.mubr.f32.mxu0 0.0
    %4717 = vmatmul.mubr.f32.gmra.mrb[0].mxu0 %v4566
    %v4718 = vpop.f32.mrb[0].mxu0
    %v4719 = vadd.f32 %v163, %v4718
    %v4720 = vpop.f32.mrb[0].mxu0
    %v4721 = vadd.f32 %v167, %v4720
    %4722 = vmatprep.mubr.f32.mxu0 0.0
    %4723 = vmatmul.mubr.f32.gmra.mrb[0].mxu0 %v4569
    %v4724 = vpop.f32.mrb[0].mxu0
    %v4725 = vadd.f32 %v163, %v4724
    %v4726 = vpop.f32.mrb[0].mxu0
    %v4727 = vadd.f32 %v167, %v4726
    %4728 = vmatprep.mubr.f32.mxu0 0.0
    %4729 = vmatmul.mubr.f32.gmra.mrb[0].mxu0 %v4572
    %v4730 = vpop.f32.mrb[0].mxu0
    %v4731 = vadd.f32 %v163, %v4730
    %v4732 = vpop.f32.mrb[0].mxu0
    %v4733 = vadd.f32 %v167, %v4732
    %4734 = vmatprep.mubr.f32.mxu0 0.0
    %4735 = vmatmul.mubr.f32.gmra.mrb[0].mxu0 %v4575
    %v4736 = vpop.f32.mrb[0].mxu0
    %v4737 = vadd.f32 %v163, %v4736
    %v4738 = vpop.f32.mrb[0].mxu0
    %v4739 = vadd.f32 %v167, %v4738
    %4740 = vmatprep.mubr.f32.mxu0 0.0
    %4741 = vmatmul.mubr.f32.gmra.mrb[0].mxu0 %v4578
    %v4742 = vpop.f32.mrb[0].mxu0
    %v4743 = vadd.f32 %v163, %v4742
    %v4744 = vpop.f32.mrb[0].mxu0
    %v4745 = vadd.f32 %v167, %v4744
    %4746 = vmatprep.mubr.f32.mxu0 0.0
    %4747 = vmatmul.mubr.f32.gmra.mrb[0].mxu0 %v4581
    %v4748 = vpop.f32.mrb[0].mxu0
    %v4749 = vadd.f32 %v163, %v4748
    %v4750 = vpop.f32.mrb[0].mxu0
    %v4751 = vadd.f32 %v167, %v4750
    %4752 = vmatprep.mubr.f32.mxu0 0.0
    %4753 = vmatmul.mubr.f32.gmra.mrb[0].mxu0 %v4584
    %v4754 = vpop.f32.mrb[0].mxu0
    %v4755 = vadd.f32 %v163, %v4754
    %v4756 = vpop.f32.mrb[0].mxu0
    %v4757 = vadd.f32 %v167, %v4756
    %4758 = vmatprep.mubr.f32.mxu0 0.0
    %4759 = vmatmul.mubr.f32.gmra.mrb[0].mxu0 %v4587
    %v4760 = vpop.f32.mrb[0].mxu0
    %v4761 = vadd.f32 %v163, %v4760
    %v4762 = vpop.f32.mrb[0].mxu0
    %v4763 = vadd.f32 %v167, %v4762
    %4764 = vmatprep.mubr.f32.mxu0 0.0
    %4765 = vmatmul.mubr.f32.gmra.mrb[0].mxu0 %v4590
    %v4766 = vpop.f32.mrb[0].mxu0
    %v4767 = vadd.f32 %v163, %v4766
    %v4768 = vpop.f32.mrb[0].mxu0
    %v4769 = vadd.f32 %v167, %v4768
    %4770 = vmatprep.mubr.f32.mxu0 0.0
    %4771 = vmatmul.mubr.f32.gmra.mrb[0].mxu0 %v4593
    %v4772 = vpop.f32.mrb[0].mxu0
    %v4773 = vadd.f32 %v163, %v4772
    %v4774 = vpop.f32.mrb[0].mxu0
    %v4775 = vadd.f32 %v167, %v4774
    %4776 = vmatprep.mubr.f32.mxu0 0.0
    %4777 = vmatmul.mubr.f32.gmra.mrb[0].mxu0 %v4596
    %v4778 = vpop.f32.mrb[0].mxu0
    %v4779 = vadd.f32 %v163, %v4778
    %v4780 = vpop.f32.mrb[0].mxu0
    %v4781 = vadd.f32 %v167, %v4780
    %4782 = vdwg.mxu0
    %4783 = vmatprep.subr.mxu0 0.0
    %4784 = vmatpush1.msra.mxu0 %v145
    %4785 = vmatprep.subr.mxu0 0.0
    %4786 = vmatpush1.msra.mxu0 %v148
    %4787 = vmatprep.subr.mxu0 0.0
    %4788 = vmatpush1.msra.mxu0 %v151
    %4789 = vmatprep.subr.mxu0 0.0
    %4790 = vmatpush1.msra.mxu0 %v154
    %4791 = vmatprep.subr.mxu0 0.0
    %4792 = vmatpush1.msra.mxu0 %v157
    %4793 = vmatprep.subr.mxu0 0.0
    %4794 = vmatpush1.msra.mxu0 0.0
    %4795 = vmatprep.subr.mxu0 0.0
    %4796 = vmatpush1.msra.mxu0 0.0
    %4797 = vmatprep.subr.mxu0 0.0
    %4798 = vmatpush1.msra.mxu0 0.0
    %4799 = vmatprep.subr.mxu0 0.0
    %4800 = vmatpush1.msra.mxu0 0.0
    %4801 = vmatprep.subr.mxu0 0.0
    %4802 = vmatpush1.msra.mxu0 0.0
    %4803 = vmatprep.subr.mxu0 0.0
    %4804 = vmatpush1.msra.mxu0 0.0
    %4805 = vmatprep.subr.mxu0 0.0
    %4806 = vmatpush1.msra.mxu0 0.0
    %4807 = vmatprep.subr.mxu0 0.0
    %4808 = vmatpush1.msra.mxu0 0.0
    %4809 = vmatprep.subr.mxu0 0.0
    %4810 = vmatpush1.msra.mxu0 0.0
    %4811 = vmatprep.subr.mxu0 0.0
    %4812 = vmatpush1.msra.mxu0 0.0
    %4813 = vmatprep.subr.mxu0 0.0
    %4814 = vmatpush1.msra.mxu0 0.0
    %4815 = vmatprep.subr.mxu0 0.0
    %4816 = vmatpush1.msra.mxu0 0.0
    %4817 = vmatprep.subr.mxu0 0.0
    %4818 = vmatpush1.msra.mxu0 0.0
    %4819 = vmatprep.subr.mxu0 0.0
    %4820 = vmatpush1.msra.mxu0 0.0
    %4821 = vmatprep.subr.mxu0 0.0
    %4822 = vmatpush1.msra.mxu0 0.0
    %4823 = vmatprep.subr.mxu0 0.0
    %4824 = vmatpush1.msra.mxu0 0.0
    %4825 = vmatprep.subr.mxu0 0.0
    %4826 = vmatpush1.msra.mxu0 0.0
    %4827 = vmatprep.subr.mxu0 0.0
    %4828 = vmatpush1.msra.mxu0 0.0
    %4829 = vmatprep.subr.mxu0 0.0
    %4830 = vmatpush1.msra.mxu0 0.0
    %4831 = vmatprep.subr.mxu0 0.0
    %4832 = vmatpush1.msra.mxu0 0.0
    %4833 = vmatprep.subr.mxu0 0.0
    %4834 = vmatpush1.msra.mxu0 0.0
    %4835 = vmatprep.subr.mxu0 0.0
    %4836 = vmatpush1.msra.mxu0 0.0
    %4837 = vmatprep.subr.mxu0 0.0
    %4838 = vmatpush1.msra.mxu0 0.0
    %4839 = vmatprep.subr.mxu0 0.0
    %4840 = vmatpush1.msra.mxu0 0.0
    %4841 = vmatprep.subr.mxu0 0.0
    %4842 = vmatpush1.msra.mxu0 0.0
    %4843 = vmatprep.subr.mxu0 0.0
    %4844 = vmatpush1.msra.mxu0 0.0
    %4845 = vmatprep.subr.mxu0 0.0
    %4846 = vmatpush1.msra.mxu0 0.0
    %4847 = vmatprep.mubr.f32.mxu0 0.0
    %4848 = vmatmul.mubr.f32.gmra.mrb[0].mxu0 %v4539
    %v4849 = vpop.f32.mrb[0].mxu0
    %v4850 = vadd.f32 %v171, %v4849
    %v4851 = vpop.f32.mrb[0].mxu0
    %4852 = vmatprep.mubr.f32.mxu0 0.0
    %4853 = vmatmul.mubr.f32.gmra.mrb[0].mxu0 %v4542
    %v4854 = vpop.f32.mrb[0].mxu0
    %v4855 = vadd.f32 %v171, %v4854
    %v4856 = vpop.f32.mrb[0].mxu0
    %4857 = vmatprep.mubr.f32.mxu0 0.0
    %4858 = vmatmul.mubr.f32.gmra.mrb[0].mxu0 %v4545
    %v4859 = vpop.f32.mrb[0].mxu0
    %v4860 = vadd.f32 %v171, %v4859
    %v4861 = vpop.f32.mrb[0].mxu0
    %4862 = vmatprep.mubr.f32.mxu0 0.0
    %4863 = vmatmul.mubr.f32.gmra.mrb[0].mxu0 %v4548
    %v4864 = vpop.f32.mrb[0].mxu0
    %v4865 = vadd.f32 %v171, %v4864
    %v4866 = vpop.f32.mrb[0].mxu0
    %4867 = vmatprep.mubr.f32.mxu0 0.0
    %4868 = vmatmul.mubr.f32.gmra.mrb[0].mxu0 %v4551
    %v4869 = vpop.f32.mrb[0].mxu0
    %v4870 = vadd.f32 %v171, %v4869
    %v4871 = vpop.f32.mrb[0].mxu0
    %4872 = vmatprep.mubr.f32.mxu0 0.0
    %4873 = vmatmul.mubr.f32.gmra.mrb[0].mxu0 %v4554
    %v4874 = vpop.f32.mrb[0].mxu0
    %v4875 = vadd.f32 %v171, %v4874
    %v4876 = vpop.f32.mrb[0].mxu0
    %4877 = vmatprep.mubr.f32.mxu0 0.0
    %4878 = vmatmul.mubr.f32.gmra.mrb[0].mxu0 %v4557
    %v4879 = vpop.f32.mrb[0].mxu0
    %v4880 = vadd.f32 %v171, %v4879
    %v4881 = vpop.f32.mrb[0].mxu0
    %4882 = vmatprep.mubr.f32.mxu0 0.0
    %4883 = vmatmul.mubr.f32.gmra.mrb[0].mxu0 %v4560
    %v4884 = vpop.f32.mrb[0].mxu0
    %v4885 = vadd.f32 %v171, %v4884
    %v4886 = vpop.f32.mrb[0].mxu0
    %4887 = vmatprep.mubr.f32.mxu0 0.0
    %4888 = vmatmul.mubr.f32.gmra.mrb[0].mxu0 %v4563
    %v4889 = vpop.f32.mrb[0].mxu0
    %v4890 = vadd.f32 %v171, %v4889
    %v4891 = vpop.f32.mrb[0].mxu0
    %4892 = vmatprep.mubr.f32.mxu0 0.0
    %4893 = vmatmul.mubr.f32.gmra.mrb[0].mxu0 %v4566
    %v4894 = vpop.f32.mrb[0].mxu0
    %v4895 = vadd.f32 %v171, %v4894
    %v4896 = vpop.f32.mrb[0].mxu0
    %4897 = vmatprep.mubr.f32.mxu0 0.0
    %4898 = vmatmul.mubr.f32.gmra.mrb[0].mxu0 %v4569
    %v4899 = vpop.f32.mrb[0].mxu0
    %v4900 = vadd.f32 %v171, %v4899
    %v4901 = vpop.f32.mrb[0].mxu0
    %4902 = vmatprep.mubr.f32.mxu0 0.0
    %4903 = vmatmul.mubr.f32.gmra.mrb[0].mxu0 %v4572
    %v4904 = vpop.f32.mrb[0].mxu0
    %v4905 = vadd.f32 %v171, %v4904
    %v4906 = vpop.f32.mrb[0].mxu0
    %4907 = vmatprep.mubr.f32.mxu0 0.0
    %4908 = vmatmul.mubr.f32.gmra.mrb[0].mxu0 %v4575
    %v4909 = vpop.f32.mrb[0].mxu0
    %v4910 = vadd.f32 %v171, %v4909
    %v4911 = vpop.f32.mrb[0].mxu0
    %4912 = vmatprep.mubr.f32.mxu0 0.0
    %4913 = vmatmul.mubr.f32.gmra.mrb[0].mxu0 %v4578
    %v4914 = vpop.f32.mrb[0].mxu0
    %v4915 = vadd.f32 %v171, %v4914
    %v4916 = vpop.f32.mrb[0].mxu0
    %4917 = vmatprep.mubr.f32.mxu0 0.0
    %4918 = vmatmul.mubr.f32.gmra.mrb[0].mxu0 %v4581
    %v4919 = vpop.f32.mrb[0].mxu0
    %v4920 = vadd.f32 %v171, %v4919
    %v4921 = vpop.f32.mrb[0].mxu0
    %4922 = vmatprep.mubr.f32.mxu0 0.0
    %4923 = vmatmul.mubr.f32.gmra.mrb[0].mxu0 %v4584
    %v4924 = vpop.f32.mrb[0].mxu0
    %v4925 = vadd.f32 %v171, %v4924
    %v4926 = vpop.f32.mrb[0].mxu0
    %4927 = vmatprep.mubr.f32.mxu0 0.0
    %4928 = vmatmul.mubr.f32.gmra.mrb[0].mxu0 %v4587
    %v4929 = vpop.f32.mrb[0].mxu0
    %v4930 = vadd.f32 %v171, %v4929
    %v4931 = vpop.f32.mrb[0].mxu0
    %4932 = vmatprep.mubr.f32.mxu0 0.0
    %4933 = vmatmul.mubr.f32.gmra.mrb[0].mxu0 %v4590
    %v4934 = vpop.f32.mrb[0].mxu0
    %v4935 = vadd.f32 %v171, %v4934
    %v4936 = vpop.f32.mrb[0].mxu0
    %4937 = vmatprep.mubr.f32.mxu0 0.0
    %4938 = vmatmul.mubr.f32.gmra.mrb[0].mxu0 %v4593
    %v4939 = vpop.f32.mrb[0].mxu0
    %v4940 = vadd.f32 %v171, %v4939
    %v4941 = vpop.f32.mrb[0].mxu0
    %4942 = vmatprep.mubr.f32.mxu0 0.0
    %4943 = vmatmul.mubr.f32.gmra.mrb[0].mxu0 %v4596
    %v4944 = vpop.f32.mrb[0].mxu0
    %v4945 = vadd.f32 %v171, %v4944
    %v4946 = vpop.f32.mrb[0].mxu0
    %4947 = vdwg.mxu0
    %vm4948 = vcmp.gt.f32.partialorder %v4665, 0.0
    %vm4949 = vcmp.gt.f32.partialorder %v4667, 0.0
    %vm4950 = vcmp.gt.f32.partialorder %v4850, 0.0
    %vm4951 = vcmp.gt.f32.partialorder %v4671, 0.0
    %vm4952 = vcmp.gt.f32.partialorder %v4673, 0.0
    %vm4953 = vcmp.gt.f32.partialorder %v4855, 0.0
    %vm4954 = vcmp.gt.f32.partialorder %v4677, 0.0
    %vm4955 = vcmp.gt.f32.partialorder %v4679, 0.0
    %vm4956 = vcmp.gt.f32.partialorder %v4860, 0.0
    %vm4957 = vcmp.gt.f32.partialorder %v4683, 0.0
    %vm4958 = vcmp.gt.f32.partialorder %v4685, 0.0
    %vm4959 = vcmp.gt.f32.partialorder %v4865, 0.0
    %vm4960 = vcmp.gt.f32.partialorder %v4689, 0.0
    %vm4961 = vcmp.gt.f32.partialorder %v4691, 0.0
    %vm4962 = vcmp.gt.f32.partialorder %v4870, 0.0
    %vm4963 = vcmp.gt.f32.partialorder %v4695, 0.0
    %vm4964 = vcmp.gt.f32.partialorder %v4697, 0.0
    %vm4965 = vcmp.gt.f32.partialorder %v4875, 0.0
    %vm4966 = vcmp.gt.f32.partialorder %v4701, 0.0
    %vm4967 = vcmp.gt.f32.partialorder %v4703, 0.0
    %vm4968 = vcmp.gt.f32.partialorder %v4880, 0.0
    %vm4969 = vcmp.gt.f32.partialorder %v4707, 0.0
    %vm4970 = vcmp.gt.f32.partialorder %v4709, 0.0
    %vm4971 = vcmp.gt.f32.partialorder %v4885, 0.0
    %vm4972 = vcmp.gt.f32.partialorder %v4713, 0.0
    %vm4973 = vcmp.gt.f32.partialorder %v4715, 0.0
    %vm4974 = vcmp.gt.f32.partialorder %v4890, 0.0
    %vm4975 = vcmp.gt.f32.partialorder %v4719, 0.0
    %vm4976 = vcmp.gt.f32.partialorder %v4721, 0.0
    %vm4977 = vcmp.gt.f32.partialorder %v4895, 0.0
    %vm4978 = vcmp.gt.f32.partialorder %v4725, 0.0
    %vm4979 = vcmp.gt.f32.partialorder %v4727, 0.0
    %vm4980 = vcmp.gt.f32.partialorder %v4900, 0.0
    %vm4981 = vcmp.gt.f32.partialorder %v4731, 0.0
    %vm4982 = vcmp.gt.f32.partialorder %v4733, 0.0
    %vm4983 = vcmp.gt.f32.partialorder %v4905, 0.0
    %vm4984 = vcmp.gt.f32.partialorder %v4737, 0.0
    %vm4985 = vcmp.gt.f32.partialorder %v4739, 0.0
    %vm4986 = vcmp.gt.f32.partialorder %v4910, 0.0
    %vm4987 = vcmp.gt.f32.partialorder %v4743, 0.0
    %vm4988 = vcmp.gt.f32.partialorder %v4745, 0.0
    %vm4989 = vcmp.gt.f32.partialorder %v4915, 0.0
    %vm4990 = vcmp.gt.f32.partialorder %v4749, 0.0
    %vm4991 = vcmp.gt.f32.partialorder %v4751, 0.0
    %vm4992 = vcmp.gt.f32.partialorder %v4920, 0.0
    %vm4993 = vcmp.gt.f32.partialorder %v4755, 0.0
    %vm4994 = vcmp.gt.f32.partialorder %v4757, 0.0
    %vm4995 = vcmp.gt.f32.partialorder %v4925, 0.0
    %vm4996 = vcmp.gt.f32.partialorder %v4761, 0.0
    %vm4997 = vcmp.gt.f32.partialorder %v4763, 0.0
    %vm4998 = vcmp.gt.f32.partialorder %v4930, 0.0
    %vm4999 = vcmp.gt.f32.partialorder %v4767, 0.0
    %vm5000 = vcmp.gt.f32.partialorder %v4769, 0.0
    %vm5001 = vcmp.gt.f32.partialorder %v4935, 0.0
    %vm5002 = vcmp.gt.f32.partialorder %v4773, 0.0
    %vm5003 = vcmp.gt.f32.partialorder %v4775, 0.0
    %vm5004 = vcmp.gt.f32.partialorder %v4940, 0.0
    %vm5005 = vcmp.gt.f32.partialorder %v4779, 0.0
    %vm5006 = vcmp.gt.f32.partialorder %v4781, 0.0
    %vm5007 = vcmp.gt.f32.partialorder %v4945, 0.0
    %v5008 = vmin.f32 %v4665, 0.0
    %v5009 = vmin.f32 %v4667, 0.0
    %v5010 = vmin.f32 %v4850, 0.0
    %v5011 = vmin.f32 %v4671, 0.0
    %v5012 = vmin.f32 %v4673, 0.0
    %v5013 = vmin.f32 %v4855, 0.0
    %v5014 = vmin.f32 %v4677, 0.0
    %v5015 = vmin.f32 %v4679, 0.0
    %v5016 = vmin.f32 %v4860, 0.0
    %v5017 = vmin.f32 %v4683, 0.0
    %v5018 = vmin.f32 %v4685, 0.0
    %v5019 = vmin.f32 %v4865, 0.0
    %v5020 = vmin.f32 %v4689, 0.0
    %v5021 = vmin.f32 %v4691, 0.0
    %v5022 = vmin.f32 %v4870, 0.0
    %v5023 = vmin.f32 %v4695, 0.0
    %v5024 = vmin.f32 %v4697, 0.0
    %v5025 = vmin.f32 %v4875, 0.0
    %v5026 = vmin.f32 %v4701, 0.0
    %v5027 = vmin.f32 %v4703, 0.0
    %v5028 = vmin.f32 %v4880, 0.0
    %v5029 = vmin.f32 %v4707, 0.0
    %v5030 = vmin.f32 %v4709, 0.0
    %v5031 = vmin.f32 %v4885, 0.0
    %v5032 = vmin.f32 %v4713, 0.0
    %v5033 = vmin.f32 %v4715, 0.0
    %v5034 = vmin.f32 %v4890, 0.0
    %v5035 = vmin.f32 %v4719, 0.0
    %v5036 = vmin.f32 %v4721, 0.0
    %v5037 = vmin.f32 %v4895, 0.0
    %v5038 = vmin.f32 %v4725, 0.0
    %v5039 = vmin.f32 %v4727, 0.0
    %v5040 = vmin.f32 %v4900, 0.0
    %v5041 = vmin.f32 %v4731, 0.0
    %v5042 = vmin.f32 %v4733, 0.0
    %v5043 = vmin.f32 %v4905, 0.0
    %v5044 = vmin.f32 %v4737, 0.0
    %v5045 = vmin.f32 %v4739, 0.0
    %v5046 = vmin.f32 %v4910, 0.0
    %v5047 = vmin.f32 %v4743, 0.0
    %v5048 = vmin.f32 %v4745, 0.0
    %v5049 = vmin.f32 %v4915, 0.0
    %v5050 = vmin.f32 %v4749, 0.0
    %v5051 = vmin.f32 %v4751, 0.0
    %v5052 = vmin.f32 %v4920, 0.0
    %v5053 = vmin.f32 %v4755, 0.0
    %v5054 = vmin.f32 %v4757, 0.0
    %v5055 = vmin.f32 %v4925, 0.0
    %v5056 = vmin.f32 %v4761, 0.0
    %v5057 = vmin.f32 %v4763, 0.0
    %v5058 = vmin.f32 %v4930, 0.0
    %v5059 = vmin.f32 %v4767, 0.0
    %v5060 = vmin.f32 %v4769, 0.0
    %v5061 = vmin.f32 %v4935, 0.0
    %v5062 = vmin.f32 %v4773, 0.0
    %v5063 = vmin.f32 %v4775, 0.0
    %v5064 = vmin.f32 %v4940, 0.0
    %v5065 = vmin.f32 %v4779, 0.0
    %v5066 = vmin.f32 %v4781, 0.0
    %v5067 = vmin.f32 %v4945, 0.0
    %v5068 = vmul.f32 %v5008, 1.442695
    %v5069 = vpow.pop %v5068
    %v5070 = vmul.f32 %v5009, 1.442695
    %v5071 = vpow.pop %v5070
    %v5072 = vmul.f32 %v5010, 1.442695
    %v5073 = vpow.pop %v5072
    %v5074 = vmul.f32 %v5011, 1.442695
    %v5075 = vpow.pop %v5074
    %v5076 = vmul.f32 %v5012, 1.442695
    %v5077 = vpow.pop %v5076
    %v5078 = vmul.f32 %v5013, 1.442695
    %v5079 = vpow.pop %v5078
    %v5080 = vmul.f32 %v5014, 1.442695
    %v5081 = vpow.pop %v5080
    %v5082 = vmul.f32 %v5015, 1.442695
    %v5083 = vpow.pop %v5082
    %v5084 = vmul.f32 %v5016, 1.442695
    %v5085 = vpow.pop %v5084
    %v5086 = vmul.f32 %v5017, 1.442695
    %v5087 = vpow.pop %v5086
    %v5088 = vmul.f32 %v5018, 1.442695
    %v5089 = vpow.pop %v5088
    %v5090 = vmul.f32 %v5019, 1.442695
    %v5091 = vpow.pop %v5090
    %v5092 = vmul.f32 %v5020, 1.442695
    %v5093 = vpow.pop %v5092
    %v5094 = vmul.f32 %v5021, 1.442695
    %v5095 = vpow.pop %v5094
    %v5096 = vmul.f32 %v5022, 1.442695
    %v5097 = vpow.pop %v5096
    %v5098 = vmul.f32 %v5023, 1.442695
    %v5099 = vpow.pop %v5098
    %v5100 = vmul.f32 %v5024, 1.442695
    %v5101 = vpow.pop %v5100
    %v5102 = vmul.f32 %v5025, 1.442695
    %v5103 = vpow.pop %v5102
    %v5104 = vmul.f32 %v5026, 1.442695
    %v5105 = vpow.pop %v5104
    %v5106 = vmul.f32 %v5027, 1.442695
    %v5107 = vpow.pop %v5106
    %v5108 = vmul.f32 %v5028, 1.442695
    %v5109 = vpow.pop %v5108
    %v5110 = vmul.f32 %v5029, 1.442695
    %v5111 = vpow.pop %v5110
    %v5112 = vmul.f32 %v5030, 1.442695
    %v5113 = vpow.pop %v5112
    %v5114 = vmul.f32 %v5031, 1.442695
    %v5115 = vpow.pop %v5114
    %v5116 = vmul.f32 %v5032, 1.442695
    %v5117 = vpow.pop %v5116
    %v5118 = vmul.f32 %v5033, 1.442695
    %v5119 = vpow.pop %v5118
    %v5120 = vmul.f32 %v5034, 1.442695
    %v5121 = vpow.pop %v5120
    %v5122 = vmul.f32 %v5035, 1.442695
    %v5123 = vpow.pop %v5122
    %v5124 = vmul.f32 %v5036, 1.442695
    %v5125 = vpow.pop %v5124
    %v5126 = vmul.f32 %v5037, 1.442695
    %v5127 = vpow.pop %v5126
    %v5128 = vmul.f32 %v5038, 1.442695
    %v5129 = vpow.pop %v5128
    %v5130 = vmul.f32 %v5039, 1.442695
    %v5131 = vpow.pop %v5130
    %v5132 = vmul.f32 %v5040, 1.442695
    %v5133 = vpow.pop %v5132
    %v5134 = vmul.f32 %v5041, 1.442695
    %v5135 = vpow.pop %v5134
    %v5136 = vmul.f32 %v5042, 1.442695
    %v5137 = vpow.pop %v5136
    %v5138 = vmul.f32 %v5043, 1.442695
    %v5139 = vpow.pop %v5138
    %v5140 = vmul.f32 %v5044, 1.442695
    %v5141 = vpow.pop %v5140
    %v5142 = vmul.f32 %v5045, 1.442695
    %v5143 = vpow.pop %v5142
    %v5144 = vmul.f32 %v5046, 1.442695
    %v5145 = vpow.pop %v5144
    %v5146 = vmul.f32 %v5047, 1.442695
    %v5147 = vpow.pop %v5146
    %v5148 = vmul.f32 %v5048, 1.442695
    %v5149 = vpow.pop %v5148
    %v5150 = vmul.f32 %v5049, 1.442695
    %v5151 = vpow.pop %v5150
    %v5152 = vmul.f32 %v5050, 1.442695
    %v5153 = vpow.pop %v5152
    %v5154 = vmul.f32 %v5051, 1.442695
    %v5155 = vpow.pop %v5154
    %v5156 = vmul.f32 %v5052, 1.442695
    %v5157 = vpow.pop %v5156
    %v5158 = vmul.f32 %v5053, 1.442695
    %v5159 = vpow.pop %v5158
    %v5160 = vmul.f32 %v5054, 1.442695
    %v5161 = vpow.pop %v5160
    %v5162 = vmul.f32 %v5055, 1.442695
    %v5163 = vpow.pop %v5162
    %v5164 = vmul.f32 %v5056, 1.442695
    %v5165 = vpow.pop %v5164
    %v5166 = vmul.f32 %v5057, 1.442695
    %v5167 = vpow.pop %v5166
    %v5168 = vmul.f32 %v5058, 1.442695
    %v5169 = vpow.pop %v5168
    %v5170 = vmul.f32 %v5059, 1.442695
    %v5171 = vpow.pop %v5170
    %v5172 = vmul.f32 %v5060, 1.442695
    %v5173 = vpow.pop %v5172
    %v5174 = vmul.f32 %v5061, 1.442695
    %v5175 = vpow.pop %v5174
    %v5176 = vmul.f32 %v5062, 1.442695
    %v5177 = vpow.pop %v5176
    %v5178 = vmul.f32 %v5063, 1.442695
    %v5179 = vpow.pop %v5178
    %v5180 = vmul.f32 %v5064, 1.442695
    %v5181 = vpow.pop %v5180
    %v5182 = vmul.f32 %v5065, 1.442695
    %v5183 = vpow.pop %v5182
    %v5184 = vmul.f32 %v5066, 1.442695
    %v5185 = vpow.pop %v5184
    %v5186 = vmul.f32 %v5067, 1.442695
    %v5187 = vpow.pop %v5186
    %v5188 = vsub.f32 %v5069, 1.0
    %v5189 = vsub.f32 %v5071, 1.0
    %v5190 = vsub.f32 %v5073, 1.0
    %v5191 = vsub.f32 %v5075, 1.0
    %v5192 = vsub.f32 %v5077, 1.0
    %v5193 = vsub.f32 %v5079, 1.0
    %v5194 = vsub.f32 %v5081, 1.0
    %v5195 = vsub.f32 %v5083, 1.0
    %v5196 = vsub.f32 %v5085, 1.0
    %v5197 = vsub.f32 %v5087, 1.0
    %v5198 = vsub.f32 %v5089, 1.0
    %v5199 = vsub.f32 %v5091, 1.0
    %v5200 = vsub.f32 %v5093, 1.0
    %v5201 = vsub.f32 %v5095, 1.0
    %v5202 = vsub.f32 %v5097, 1.0
    %v5203 = vsub.f32 %v5099, 1.0
    %v5204 = vsub.f32 %v5101, 1.0
    %v5205 = vsub.f32 %v5103, 1.0
    %v5206 = vsub.f32 %v5105, 1.0
    %v5207 = vsub.f32 %v5107, 1.0
    %v5208 = vsub.f32 %v5109, 1.0
    %v5209 = vsub.f32 %v5111, 1.0
    %v5210 = vsub.f32 %v5113, 1.0
    %v5211 = vsub.f32 %v5115, 1.0
    %v5212 = vsub.f32 %v5117, 1.0
    %v5213 = vsub.f32 %v5119, 1.0
    %v5214 = vsub.f32 %v5121, 1.0
    %v5215 = vsub.f32 %v5123, 1.0
    %v5216 = vsub.f32 %v5125, 1.0
    %v5217 = vsub.f32 %v5127, 1.0
    %v5218 = vsub.f32 %v5129, 1.0
    %v5219 = vsub.f32 %v5131, 1.0
    %v5220 = vsub.f32 %v5133, 1.0
    %v5221 = vsub.f32 %v5135, 1.0
    %v5222 = vsub.f32 %v5137, 1.0
    %v5223 = vsub.f32 %v5139, 1.0
    %v5224 = vsub.f32 %v5141, 1.0
    %v5225 = vsub.f32 %v5143, 1.0
    %v5226 = vsub.f32 %v5145, 1.0
    %v5227 = vsub.f32 %v5147, 1.0
    %v5228 = vsub.f32 %v5149, 1.0
    %v5229 = vsub.f32 %v5151, 1.0
    %v5230 = vsub.f32 %v5153, 1.0
    %v5231 = vsub.f32 %v5155, 1.0
    %v5232 = vsub.f32 %v5157, 1.0
    %v5233 = vsub.f32 %v5159, 1.0
    %v5234 = vsub.f32 %v5161, 1.0
    %v5235 = vsub.f32 %v5163, 1.0
    %v5236 = vsub.f32 %v5165, 1.0
    %v5237 = vsub.f32 %v5167, 1.0
    %v5238 = vsub.f32 %v5169, 1.0
    %v5239 = vsub.f32 %v5171, 1.0
    %v5240 = vsub.f32 %v5173, 1.0
    %v5241 = vsub.f32 %v5175, 1.0
    %v5242 = vsub.f32 %v5177, 1.0
    %v5243 = vsub.f32 %v5179, 1.0
    %v5244 = vsub.f32 %v5181, 1.0
    %v5245 = vsub.f32 %v5183, 1.0
    %v5246 = vsub.f32 %v5185, 1.0
    %v5247 = vsub.f32 %v5187, 1.0
    %v5248 = vsel %vm4948, %v4665, %v5188
    %v5249 = vsel %vm4949, %v4667, %v5189
    %v5250 = vsel %vm4950, %v4850, %v5190
    %v5251 = vsel %vm4951, %v4671, %v5191
    %v5252 = vsel %vm4952, %v4673, %v5192
    %v5253 = vsel %vm4953, %v4855, %v5193
    %v5254 = vsel %vm4954, %v4677, %v5194
    %v5255 = vsel %vm4955, %v4679, %v5195
    %v5256 = vsel %vm4956, %v4860, %v5196
    %v5257 = vsel %vm4957, %v4683, %v5197
    %v5258 = vsel %vm4958, %v4685, %v5198
    %v5259 = vsel %vm4959, %v4865, %v5199
    %v5260 = vsel %vm4960, %v4689, %v5200
    %v5261 = vsel %vm4961, %v4691, %v5201
    %v5262 = vsel %vm4962, %v4870, %v5202
    %v5263 = vsel %vm4963, %v4695, %v5203
    %v5264 = vsel %vm4964, %v4697, %v5204
    %v5265 = vsel %vm4965, %v4875, %v5205
    %v5266 = vsel %vm4966, %v4701, %v5206
    %v5267 = vsel %vm4967, %v4703, %v5207
    %v5268 = vsel %vm4968, %v4880, %v5208
    %v5269 = vsel %vm4969, %v4707, %v5209
    %v5270 = vsel %vm4970, %v4709, %v5210
    %v5271 = vsel %vm4971, %v4885, %v5211
    %v5272 = vsel %vm4972, %v4713, %v5212
    %v5273 = vsel %vm4973, %v4715, %v5213
    %v5274 = vsel %vm4974, %v4890, %v5214
    %v5275 = vsel %vm4975, %v4719, %v5215
    %v5276 = vsel %vm4976, %v4721, %v5216
    %v5277 = vsel %vm4977, %v4895, %v5217
    %v5278 = vsel %vm4978, %v4725, %v5218
    %v5279 = vsel %vm4979, %v4727, %v5219
    %v5280 = vsel %vm4980, %v4900, %v5220
    %v5281 = vsel %vm4981, %v4731, %v5221
    %v5282 = vsel %vm4982, %v4733, %v5222
    %v5283 = vsel %vm4983, %v4905, %v5223
    %v5284 = vsel %vm4984, %v4737, %v5224
    %v5285 = vsel %vm4985, %v4739, %v5225
    %v5286 = vsel %vm4986, %v4910, %v5226
    %v5287 = vsel %vm4987, %v4743, %v5227
    %v5288 = vsel %vm4988, %v4745, %v5228
    %v5289 = vsel %vm4989, %v4915, %v5229
    %v5290 = vsel %vm4990, %v4749, %v5230
    %v5291 = vsel %vm4991, %v4751, %v5231
    %v5292 = vsel %vm4992, %v4920, %v5232
    %v5293 = vsel %vm4993, %v4755, %v5233
    %v5294 = vsel %vm4994, %v4757, %v5234
    %v5295 = vsel %vm4995, %v4925, %v5235
    %v5296 = vsel %vm4996, %v4761, %v5236
    %v5297 = vsel %vm4997, %v4763, %v5237
    %v5298 = vsel %vm4998, %v4930, %v5238
    %v5299 = vsel %vm4999, %v4767, %v5239
    %v5300 = vsel %vm5000, %v4769, %v5240
    %v5301 = vsel %vm5001, %v4935, %v5241
    %v5302 = vsel %vm5002, %v4773, %v5242
    %v5303 = vsel %vm5003, %v4775, %v5243
    %v5304 = vsel %vm5004, %v4940, %v5244
    %v5305 = vsel %vm5005, %v4779, %v5245
    %v5306 = vsel %vm5006, %v4781, %v5246
    %v5307 = vsel %vm5007, %v4945, %v5247
    %v5309 = vsel %vm1030, %v5250, 0
    %v5312 = vsel %vm1030, %v5253, 0
    %v5315 = vsel %vm1030, %v5256, 0
    %v5318 = vsel %vm1030, %v5259, 0
    %v5321 = vsel %vm1030, %v5262, 0
    %v5324 = vsel %vm1030, %v5265, 0
    %v5327 = vsel %vm1030, %v5268, 0
    %v5330 = vsel %vm1030, %v5271, 0
    %v5333 = vsel %vm1030, %v5274, 0
    %v5336 = vsel %vm1030, %v5277, 0
    %v5339 = vsel %vm1030, %v5280, 0
    %v5342 = vsel %vm1030, %v5283, 0
    %v5345 = vsel %vm1030, %v5286, 0
    %v5348 = vsel %vm1030, %v5289, 0
    %v5351 = vsel %vm1030, %v5292, 0
    %v5354 = vsel %vm1030, %v5295, 0
    %v5357 = vsel %vm1030, %v5298, 0
    %v5360 = vsel %vm1030, %v5301, 0
    %v5363 = vsel %vm1030, %v5304, 0
    %v5366 = vsel %vm1030, %v5307, 0
    %5368 = vmatprep.subr.mxu0 %v947
    %5369 = vmatpush1.msra.mxu0 %v946
    %5370 = vmatprep.subr.mxu0 %v949
    %5371 = vmatpush1.msra.mxu0 %v948
    %5372 = vmatprep.subr.mxu0 %v951
    %5373 = vmatpush1.msra.mxu0 %v950
    %5374 = vmatprep.subr.mxu0 %v953
    %5375 = vmatpush1.msra.mxu0 %v952
    %5376 = vmatprep.subr.mxu0 %v955
    %5377 = vmatpush1.msra.mxu0 %v954
    %5378 = vmatprep.subr.mxu0 %v957
    %5379 = vmatpush1.msra.mxu0 %v956
    %5380 = vmatprep.subr.mxu0 %v959
    %5381 = vmatpush1.msra.mxu0 %v958
    %5382 = vmatprep.subr.mxu0 %v961
    %5383 = vmatpush1.msra.mxu0 %v960
    %5384 = vmatprep.subr.mxu0 %v963
    %5385 = vmatpush1.msra.mxu0 %v962
    %5386 = vmatprep.subr.mxu0 %v965
    %5387 = vmatpush1.msra.mxu0 %v964
    %5388 = vmatprep.subr.mxu0 %v967
    %5389 = vmatpush1.msra.mxu0 %v966
    %5390 = vmatprep.subr.mxu0 %v969
    %5391 = vmatpush1.msra.mxu0 %v968
    %5392 = vmatprep.subr.mxu0 %v971
    %5393 = vmatpush1.msra.mxu0 %v970
    %5394 = vmatprep.subr.mxu0 %v973
    %5395 = vmatpush1.msra.mxu0 %v972
    %5396 = vmatprep.subr.mxu0 %v975
    %5397 = vmatpush1.msra.mxu0 %v974
    %5398 = vmatprep.subr.mxu0 %v977
    %5399 = vmatpush1.msra.mxu0 %v976
    %5400 = vmatprep.subr.mxu0 %v979
    %5401 = vmatpush1.msra.mxu0 %v978
    %5402 = vmatprep.subr.mxu0 %v981
    %5403 = vmatpush1.msra.mxu0 %v980
    %5404 = vmatprep.subr.mxu0 %v983
    %5405 = vmatpush1.msra.mxu0 %v982
    %5406 = vmatprep.subr.mxu0 %v985
    %5407 = vmatpush1.msra.mxu0 %v984
    %5408 = vmatprep.subr.mxu0 %v987
    %5409 = vmatpush1.msra.mxu0 %v986
    %5410 = vmatprep.subr.mxu0 %v989
    %5411 = vmatpush1.msra.mxu0 %v988
    %5412 = vmatprep.subr.mxu0 %v991
    %5413 = vmatpush1.msra.mxu0 %v990
    %5414 = vmatprep.subr.mxu0 %v993
    %5415 = vmatpush1.msra.mxu0 %v992
    %5416 = vmatprep.subr.mxu0 %v995
    %5417 = vmatpush1.msra.mxu0 %v994
    %5418 = vmatprep.subr.mxu0 %v997
    %5419 = vmatpush1.msra.mxu0 %v996
    %5420 = vmatprep.subr.mxu0 %v999
    %5421 = vmatpush1.msra.mxu0 %v998
    %5422 = vmatprep.subr.mxu0 %v1001
    %5423 = vmatpush1.msra.mxu0 %v1000
    %5424 = vmatprep.subr.mxu0 %v1003
    %5425 = vmatpush1.msra.mxu0 %v1002
    %5426 = vmatprep.subr.mxu0 %v1005
    %5427 = vmatpush1.msra.mxu0 %v1004
    %5428 = vmatprep.subr.mxu0 %v1007
    %5429 = vmatpush1.msra.mxu0 %v1006
    %5430 = vmatprep.subr.mxu0 %v1009
    %5431 = vmatpush1.msra.mxu0 %v1008
    %5432 = vmatprep.mubr.f32.mxu0 %v5249
    %5433 = vmatmul.mubr.f32.gmra.mrb[0].mxu0 %v5248
    %v5434 = vpop.f32.mrb[0].mxu0
    %v5435 = vadd.f32 %v1023, %v5434
    %v5436 = vpop.f32.mrb[0].mxu0
    %v5437 = vadd.f32 %v1027, %v5436
    %5438 = vmatprep.mubr.f32.mxu0 %v5252
    %5439 = vmatmul.mubr.f32.gmra.mrb[0].mxu0 %v5251
    %v5440 = vpop.f32.mrb[0].mxu0
    %v5441 = vadd.f32 %v1023, %v5440
    %v5442 = vpop.f32.mrb[0].mxu0
    %v5443 = vadd.f32 %v1027, %v5442
    %5444 = vmatprep.mubr.f32.mxu0 %v5255
    %5445 = vmatmul.mubr.f32.gmra.mrb[0].mxu0 %v5254
    %v5446 = vpop.f32.mrb[0].mxu0
    %v5447 = vadd.f32 %v1023, %v5446
    %v5448 = vpop.f32.mrb[0].mxu0
    %v5449 = vadd.f32 %v1027, %v5448
    %5450 = vmatprep.mubr.f32.mxu0 %v5258
    %5451 = vmatmul.mubr.f32.gmra.mrb[0].mxu0 %v5257
    %v5452 = vpop.f32.mrb[0].mxu0
    %v5453 = vadd.f32 %v1023, %v5452
    %v5454 = vpop.f32.mrb[0].mxu0
    %v5455 = vadd.f32 %v1027, %v5454
    %5456 = vmatprep.mubr.f32.mxu0 %v5261
    %5457 = vmatmul.mubr.f32.gmra.mrb[0].mxu0 %v5260
    %v5458 = vpop.f32.mrb[0].mxu0
    %v5459 = vadd.f32 %v1023, %v5458
    %v5460 = vpop.f32.mrb[0].mxu0
    %v5461 = vadd.f32 %v1027, %v5460
    %5462 = vmatprep.mubr.f32.mxu0 %v5264
    %5463 = vmatmul.mubr.f32.gmra.mrb[0].mxu0 %v5263
    %v5464 = vpop.f32.mrb[0].mxu0
    %v5465 = vadd.f32 %v1023, %v5464
    %v5466 = vpop.f32.mrb[0].mxu0
    %v5467 = vadd.f32 %v1027, %v5466
    %5468 = vmatprep.mubr.f32.mxu0 %v5267
    %5469 = vmatmul.mubr.f32.gmra.mrb[0].mxu0 %v5266
    %v5470 = vpop.f32.mrb[0].mxu0
    %v5471 = vadd.f32 %v1023, %v5470
    %v5472 = vpop.f32.mrb[0].mxu0
    %v5473 = vadd.f32 %v1027, %v5472
    %5474 = vmatprep.mubr.f32.mxu0 %v5270
    %5475 = vmatmul.mubr.f32.gmra.mrb[0].mxu0 %v5269
    %v5476 = vpop.f32.mrb[0].mxu0
    %v5477 = vadd.f32 %v1023, %v5476
    %v5478 = vpop.f32.mrb[0].mxu0
    %v5479 = vadd.f32 %v1027, %v5478
    %5480 = vmatprep.mubr.f32.mxu0 %v5273
    %5481 = vmatmul.mubr.f32.gmra.mrb[0].mxu0 %v5272
    %v5482 = vpop.f32.mrb[0].mxu0
    %v5483 = vadd.f32 %v1023, %v5482
    %v5484 = vpop.f32.mrb[0].mxu0
    %v5485 = vadd.f32 %v1027, %v5484
    %5486 = vmatprep.mubr.f32.mxu0 %v5276
    %5487 = vmatmul.mubr.f32.gmra.mrb[0].mxu0 %v5275
    %v5488 = vpop.f32.mrb[0].mxu0
    %v5489 = vadd.f32 %v1023, %v5488
    %v5490 = vpop.f32.mrb[0].mxu0
    %v5491 = vadd.f32 %v1027, %v5490
    %5492 = vmatprep.mubr.f32.mxu0 %v5279
    %5493 = vmatmul.mubr.f32.gmra.mrb[0].mxu0 %v5278
    %v5494 = vpop.f32.mrb[0].mxu0
    %v5495 = vadd.f32 %v1023, %v5494
    %v5496 = vpop.f32.mrb[0].mxu0
    %v5497 = vadd.f32 %v1027, %v5496
    %5498 = vmatprep.mubr.f32.mxu0 %v5282
    %5499 = vmatmul.mubr.f32.gmra.mrb[0].mxu0 %v5281
    %v5500 = vpop.f32.mrb[0].mxu0
    %v5501 = vadd.f32 %v1023, %v5500
    %v5502 = vpop.f32.mrb[0].mxu0
    %v5503 = vadd.f32 %v1027, %v5502
    %5504 = vmatprep.mubr.f32.mxu0 %v5285
    %5505 = vmatmul.mubr.f32.gmra.mrb[0].mxu0 %v5284
    %v5506 = vpop.f32.mrb[0].mxu0
    %v5507 = vadd.f32 %v1023, %v5506
    %v5508 = vpop.f32.mrb[0].mxu0
    %v5509 = vadd.f32 %v1027, %v5508
    %5510 = vmatprep.mubr.f32.mxu0 %v5288
    %5511 = vmatmul.mubr.f32.gmra.mrb[0].mxu0 %v5287
    %v5512 = vpop.f32.mrb[0].mxu0
    %v5513 = vadd.f32 %v1023, %v5512
    %v5514 = vpop.f32.mrb[0].mxu0
    %v5515 = vadd.f32 %v1027, %v5514
    %5516 = vmatprep.mubr.f32.mxu0 %v5291
    %5517 = vmatmul.mubr.f32.gmra.mrb[0].mxu0 %v5290
    %v5518 = vpop.f32.mrb[0].mxu0
    %v5519 = vadd.f32 %v1023, %v5518
    %v5520 = vpop.f32.mrb[0].mxu0
    %v5521 = vadd.f32 %v1027, %v5520
    %5522 = vmatprep.mubr.f32.mxu0 %v5294
    %5523 = vmatmul.mubr.f32.gmra.mrb[0].mxu0 %v5293
    %v5524 = vpop.f32.mrb[0].mxu0
    %v5525 = vadd.f32 %v1023, %v5524
    %v5526 = vpop.f32.mrb[0].mxu0
    %v5527 = vadd.f32 %v1027, %v5526
    %5528 = vmatprep.mubr.f32.mxu0 %v5297
    %5529 = vmatmul.mubr.f32.gmra.mrb[0].mxu0 %v5296
    %v5530 = vpop.f32.mrb[0].mxu0
    %v5531 = vadd.f32 %v1023, %v5530
    %v5532 = vpop.f32.mrb[0].mxu0
    %v5533 = vadd.f32 %v1027, %v5532
    %5534 = vmatprep.mubr.f32.mxu0 %v5300
    %5535 = vmatmul.mubr.f32.gmra.mrb[0].mxu0 %v5299
    %v5536 = vpop.f32.mrb[0].mxu0
    %v5537 = vadd.f32 %v1023, %v5536
    %v5538 = vpop.f32.mrb[0].mxu0
    %v5539 = vadd.f32 %v1027, %v5538
    %5540 = vmatprep.mubr.f32.mxu0 %v5303
    %5541 = vmatmul.mubr.f32.gmra.mrb[0].mxu0 %v5302
    %v5542 = vpop.f32.mrb[0].mxu0
    %v5543 = vadd.f32 %v1023, %v5542
    %v5544 = vpop.f32.mrb[0].mxu0
    %v5545 = vadd.f32 %v1027, %v5544
    %5546 = vmatprep.mubr.f32.mxu0 %v5306
    %5547 = vmatmul.mubr.f32.gmra.mrb[0].mxu0 %v5305
    %v5548 = vpop.f32.mrb[0].mxu0
    %v5549 = vadd.f32 %v1023, %v5548
    %v5550 = vpop.f32.mrb[0].mxu0
    %v5551 = vadd.f32 %v1027, %v5550
    %5552 = vdwg.mxu0
    %5553 = vmatprep.subr.mxu0 %v1011
    %5554 = vmatpush1.msra.mxu0 %v1010
    %5555 = vmatprep.subr.mxu0 %v1013
    %5556 = vmatpush1.msra.mxu0 %v1012
    %5557 = vmatprep.subr.mxu0 %v1015
    %5558 = vmatpush1.msra.mxu0 %v1014
    %5559 = vmatprep.subr.mxu0 %v1017
    %5560 = vmatpush1.msra.mxu0 %v1016
    %5561 = vmatprep.subr.mxu0 0.0
    %5562 = vmatpush1.msra.mxu0 0.0
    %5563 = vmatprep.subr.mxu0 0.0
    %5564 = vmatpush1.msra.mxu0 0.0
    %5565 = vmatprep.subr.mxu0 0.0
    %5566 = vmatpush1.msra.mxu0 0.0
    %5567 = vmatprep.subr.mxu0 0.0
    %5568 = vmatpush1.msra.mxu0 0.0
    %5569 = vmatprep.subr.mxu0 0.0
    %5570 = vmatpush1.msra.mxu0 0.0
    %5571 = vmatprep.subr.mxu0 0.0
    %5572 = vmatpush1.msra.mxu0 0.0
    %5573 = vmatprep.subr.mxu0 0.0
    %5574 = vmatpush1.msra.mxu0 0.0
    %5575 = vmatprep.subr.mxu0 0.0
    %5576 = vmatpush1.msra.mxu0 0.0
    %5577 = vmatprep.subr.mxu0 0.0
    %5578 = vmatpush1.msra.mxu0 0.0
    %5579 = vmatprep.subr.mxu0 0.0
    %5580 = vmatpush1.msra.mxu0 0.0
    %5581 = vmatprep.subr.mxu0 0.0
    %5582 = vmatpush1.msra.mxu0 0.0
    %5583 = vmatprep.subr.mxu0 0.0
    %5584 = vmatpush1.msra.mxu0 0.0
    %5585 = vmatprep.subr.mxu0 0.0
    %5586 = vmatpush1.msra.mxu0 0.0
    %5587 = vmatprep.subr.mxu0 0.0
    %5588 = vmatpush1.msra.mxu0 0.0
    %5589 = vmatprep.subr.mxu0 0.0
    %5590 = vmatpush1.msra.mxu0 0.0
    %5591 = vmatprep.subr.mxu0 0.0
    %5592 = vmatpush1.msra.mxu0 0.0
    %5593 = vmatprep.subr.mxu0 0.0
    %5594 = vmatpush1.msra.mxu0 0.0
    %5595 = vmatprep.subr.mxu0 0.0
    %5596 = vmatpush1.msra.mxu0 0.0
    %5597 = vmatprep.subr.mxu0 0.0
    %5598 = vmatpush1.msra.mxu0 0.0
    %5599 = vmatprep.subr.mxu0 0.0
    %5600 = vmatpush1.msra.mxu0 0.0
    %5601 = vmatprep.subr.mxu0 0.0
    %5602 = vmatpush1.msra.mxu0 0.0
    %5603 = vmatprep.subr.mxu0 0.0
    %5604 = vmatpush1.msra.mxu0 0.0
    %5605 = vmatprep.subr.mxu0 0.0
    %5606 = vmatpush1.msra.mxu0 0.0
    %5607 = vmatprep.subr.mxu0 0.0
    %5608 = vmatpush1.msra.mxu0 0.0
    %5609 = vmatprep.subr.mxu0 0.0
    %5610 = vmatpush1.msra.mxu0 0.0
    %5611 = vmatprep.subr.mxu0 0.0
    %5612 = vmatpush1.msra.mxu0 0.0
    %5613 = vmatprep.subr.mxu0 0.0
    %5614 = vmatpush1.msra.mxu0 0.0
    %5615 = vmatprep.subr.mxu0 0.0
    %5616 = vmatpush1.msra.mxu0 0.0
    %5617 = vmatprep.mubr.f32.mxu0 0.0
    %5618 = vmatmul.mubr.f32.gmra.mrb[0].mxu0 %v5309
    %v5619 = vpop.f32.mrb[0].mxu0
    %v5620 = vadd.f32 %v5435, %v5619
    %v5621 = vpop.f32.mrb[0].mxu0
    %v5622 = vadd.f32 %v5437, %v5621
    %5623 = vmatprep.mubr.f32.mxu0 0.0
    %5624 = vmatmul.mubr.f32.gmra.mrb[0].mxu0 %v5312
    %v5625 = vpop.f32.mrb[0].mxu0
    %v5626 = vadd.f32 %v5441, %v5625
    %v5627 = vpop.f32.mrb[0].mxu0
    %v5628 = vadd.f32 %v5443, %v5627
    %5629 = vmatprep.mubr.f32.mxu0 0.0
    %5630 = vmatmul.mubr.f32.gmra.mrb[0].mxu0 %v5315
    %v5631 = vpop.f32.mrb[0].mxu0
    %v5632 = vadd.f32 %v5447, %v5631
    %v5633 = vpop.f32.mrb[0].mxu0
    %v5634 = vadd.f32 %v5449, %v5633
    %5635 = vmatprep.mubr.f32.mxu0 0.0
    %5636 = vmatmul.mubr.f32.gmra.mrb[0].mxu0 %v5318
    %v5637 = vpop.f32.mrb[0].mxu0
    %v5638 = vadd.f32 %v5453, %v5637
    %v5639 = vpop.f32.mrb[0].mxu0
    %v5640 = vadd.f32 %v5455, %v5639
    %5641 = vmatprep.mubr.f32.mxu0 0.0
    %5642 = vmatmul.mubr.f32.gmra.mrb[0].mxu0 %v5321
    %v5643 = vpop.f32.mrb[0].mxu0
    %v5644 = vadd.f32 %v5459, %v5643
    %v5645 = vpop.f32.mrb[0].mxu0
    %v5646 = vadd.f32 %v5461, %v5645
    %5647 = vmatprep.mubr.f32.mxu0 0.0
    %5648 = vmatmul.mubr.f32.gmra.mrb[0].mxu0 %v5324
    %v5649 = vpop.f32.mrb[0].mxu0
    %v5650 = vadd.f32 %v5465, %v5649
    %v5651 = vpop.f32.mrb[0].mxu0
    %v5652 = vadd.f32 %v5467, %v5651
    %5653 = vmatprep.mubr.f32.mxu0 0.0
    %5654 = vmatmul.mubr.f32.gmra.mrb[0].mxu0 %v5327
    %v5655 = vpop.f32.mrb[0].mxu0
    %v5656 = vadd.f32 %v5471, %v5655
    %v5657 = vpop.f32.mrb[0].mxu0
    %v5658 = vadd.f32 %v5473, %v5657
    %5659 = vmatprep.mubr.f32.mxu0 0.0
    %5660 = vmatmul.mubr.f32.gmra.mrb[0].mxu0 %v5330
    %v5661 = vpop.f32.mrb[0].mxu0
    %v5662 = vadd.f32 %v5477, %v5661
    %v5663 = vpop.f32.mrb[0].mxu0
    %v5664 = vadd.f32 %v5479, %v5663
    %5665 = vmatprep.mubr.f32.mxu0 0.0
    %5666 = vmatmul.mubr.f32.gmra.mrb[0].mxu0 %v5333
    %v5667 = vpop.f32.mrb[0].mxu0
    %v5668 = vadd.f32 %v5483, %v5667
    %v5669 = vpop.f32.mrb[0].mxu0
    %v5670 = vadd.f32 %v5485, %v5669
    %5671 = vmatprep.mubr.f32.mxu0 0.0
    %5672 = vmatmul.mubr.f32.gmra.mrb[0].mxu0 %v5336
    %v5673 = vpop.f32.mrb[0].mxu0
    %v5674 = vadd.f32 %v5489, %v5673
    %v5675 = vpop.f32.mrb[0].mxu0
    %v5676 = vadd.f32 %v5491, %v5675
    %5677 = vmatprep.mubr.f32.mxu0 0.0
    %5678 = vmatmul.mubr.f32.gmra.mrb[0].mxu0 %v5339
    %v5679 = vpop.f32.mrb[0].mxu0
    %v5680 = vadd.f32 %v5495, %v5679
    %v5681 = vpop.f32.mrb[0].mxu0
    %v5682 = vadd.f32 %v5497, %v5681
    %5683 = vmatprep.mubr.f32.mxu0 0.0
    %5684 = vmatmul.mubr.f32.gmra.mrb[0].mxu0 %v5342
    %v5685 = vpop.f32.mrb[0].mxu0
    %v5686 = vadd.f32 %v5501, %v5685
    %v5687 = vpop.f32.mrb[0].mxu0
    %v5688 = vadd.f32 %v5503, %v5687
    %5689 = vmatprep.mubr.f32.mxu0 0.0
    %5690 = vmatmul.mubr.f32.gmra.mrb[0].mxu0 %v5345
    %v5691 = vpop.f32.mrb[0].mxu0
    %v5692 = vadd.f32 %v5507, %v5691
    %v5693 = vpop.f32.mrb[0].mxu0
    %v5694 = vadd.f32 %v5509, %v5693
    %5695 = vmatprep.mubr.f32.mxu0 0.0
    %5696 = vmatmul.mubr.f32.gmra.mrb[0].mxu0 %v5348
    %v5697 = vpop.f32.mrb[0].mxu0
    %v5698 = vadd.f32 %v5513, %v5697
    %v5699 = vpop.f32.mrb[0].mxu0
    %v5700 = vadd.f32 %v5515, %v5699
    %5701 = vmatprep.mubr.f32.mxu0 0.0
    %5702 = vmatmul.mubr.f32.gmra.mrb[0].mxu0 %v5351
    %v5703 = vpop.f32.mrb[0].mxu0
    %v5704 = vadd.f32 %v5519, %v5703
    %v5705 = vpop.f32.mrb[0].mxu0
    %v5706 = vadd.f32 %v5521, %v5705
    %5707 = vmatprep.mubr.f32.mxu0 0.0
    %5708 = vmatmul.mubr.f32.gmra.mrb[0].mxu0 %v5354
    %v5709 = vpop.f32.mrb[0].mxu0
    %v5710 = vadd.f32 %v5525, %v5709
    %v5711 = vpop.f32.mrb[0].mxu0
    %v5712 = vadd.f32 %v5527, %v5711
    %5713 = vmatprep.mubr.f32.mxu0 0.0
    %5714 = vmatmul.mubr.f32.gmra.mrb[0].mxu0 %v5357
    %v5715 = vpop.f32.mrb[0].mxu0
    %v5716 = vadd.f32 %v5531, %v5715
    %v5717 = vpop.f32.mrb[0].mxu0
    %v5718 = vadd.f32 %v5533, %v5717
    %5719 = vmatprep.mubr.f32.mxu0 0.0
    %5720 = vmatmul.mubr.f32.gmra.mrb[0].mxu0 %v5360
    %v5721 = vpop.f32.mrb[0].mxu0
    %v5722 = vadd.f32 %v5537, %v5721
    %v5723 = vpop.f32.mrb[0].mxu0
    %v5724 = vadd.f32 %v5539, %v5723
    %5725 = vmatprep.mubr.f32.mxu0 0.0
    %5726 = vmatmul.mubr.f32.gmra.mrb[0].mxu0 %v5363
    %v5727 = vpop.f32.mrb[0].mxu0
    %v5728 = vadd.f32 %v5543, %v5727
    %v5729 = vpop.f32.mrb[0].mxu0
    %v5730 = vadd.f32 %v5545, %v5729
    %5731 = vmatprep.mubr.f32.mxu0 0.0
    %5732 = vmatmul.mubr.f32.gmra.mrb[0].mxu0 %v5366
    %v5733 = vpop.f32.mrb[0].mxu0
    %v5734 = vadd.f32 %v5549, %v5733
    %v5735 = vpop.f32.mrb[0].mxu0
    %v5736 = vadd.f32 %v5551, %v5735
    %5737 = vdwg.mxu0
    %vm5738 = vcmp.gt.f32.partialorder %v5620, 0.0
    %vm5739 = vcmp.gt.f32.partialorder %v5622, 0.0
    %vm5740 = vcmp.gt.f32.partialorder %v5626, 0.0
    %vm5741 = vcmp.gt.f32.partialorder %v5628, 0.0
    %vm5742 = vcmp.gt.f32.partialorder %v5632, 0.0
    %vm5743 = vcmp.gt.f32.partialorder %v5634, 0.0
    %vm5744 = vcmp.gt.f32.partialorder %v5638, 0.0
    %vm5745 = vcmp.gt.f32.partialorder %v5640, 0.0
    %vm5746 = vcmp.gt.f32.partialorder %v5644, 0.0
    %vm5747 = vcmp.gt.f32.partialorder %v5646, 0.0
    %vm5748 = vcmp.gt.f32.partialorder %v5650, 0.0
    %vm5749 = vcmp.gt.f32.partialorder %v5652, 0.0
    %vm5750 = vcmp.gt.f32.partialorder %v5656, 0.0
    %vm5751 = vcmp.gt.f32.partialorder %v5658, 0.0
    %vm5752 = vcmp.gt.f32.partialorder %v5662, 0.0
    %vm5753 = vcmp.gt.f32.partialorder %v5664, 0.0
    %vm5754 = vcmp.gt.f32.partialorder %v5668, 0.0
    %vm5755 = vcmp.gt.f32.partialorder %v5670, 0.0
    %vm5756 = vcmp.gt.f32.partialorder %v5674, 0.0
    %vm5757 = vcmp.gt.f32.partialorder %v5676, 0.0
    %vm5758 = vcmp.gt.f32.partialorder %v5680, 0.0
    %vm5759 = vcmp.gt.f32.partialorder %v5682, 0.0
    %vm5760 = vcmp.gt.f32.partialorder %v5686, 0.0
    %vm5761 = vcmp.gt.f32.partialorder %v5688, 0.0
    %vm5762 = vcmp.gt.f32.partialorder %v5692, 0.0
    %vm5763 = vcmp.gt.f32.partialorder %v5694, 0.0
    %vm5764 = vcmp.gt.f32.partialorder %v5698, 0.0
    %vm5765 = vcmp.gt.f32.partialorder %v5700, 0.0
    %vm5766 = vcmp.gt.f32.partialorder %v5704, 0.0
    %vm5767 = vcmp.gt.f32.partialorder %v5706, 0.0
    %vm5768 = vcmp.gt.f32.partialorder %v5710, 0.0
    %vm5769 = vcmp.gt.f32.partialorder %v5712, 0.0
    %vm5770 = vcmp.gt.f32.partialorder %v5716, 0.0
    %vm5771 = vcmp.gt.f32.partialorder %v5718, 0.0
    %vm5772 = vcmp.gt.f32.partialorder %v5722, 0.0
    %vm5773 = vcmp.gt.f32.partialorder %v5724, 0.0
    %vm5774 = vcmp.gt.f32.partialorder %v5728, 0.0
    %vm5775 = vcmp.gt.f32.partialorder %v5730, 0.0
    %vm5776 = vcmp.gt.f32.partialorder %v5734, 0.0
    %vm5777 = vcmp.gt.f32.partialorder %v5736, 0.0
    %v5778 = vmin.f32 %v5620, 0.0
    %v5779 = vmin.f32 %v5622, 0.0
    %v5780 = vmin.f32 %v5626, 0.0
    %v5781 = vmin.f32 %v5628, 0.0
    %v5782 = vmin.f32 %v5632, 0.0
    %v5783 = vmin.f32 %v5634, 0.0
    %v5784 = vmin.f32 %v5638, 0.0
    %v5785 = vmin.f32 %v5640, 0.0
    %v5786 = vmin.f32 %v5644, 0.0
    %v5787 = vmin.f32 %v5646, 0.0
    %v5788 = vmin.f32 %v5650, 0.0
    %v5789 = vmin.f32 %v5652, 0.0
    %v5790 = vmin.f32 %v5656, 0.0
    %v5791 = vmin.f32 %v5658, 0.0
    %v5792 = vmin.f32 %v5662, 0.0
    %v5793 = vmin.f32 %v5664, 0.0
    %v5794 = vmin.f32 %v5668, 0.0
    %v5795 = vmin.f32 %v5670, 0.0
    %v5796 = vmin.f32 %v5674, 0.0
    %v5797 = vmin.f32 %v5676, 0.0
    %v5798 = vmin.f32 %v5680, 0.0
    %v5799 = vmin.f32 %v5682, 0.0
    %v5800 = vmin.f32 %v5686, 0.0
    %v5801 = vmin.f32 %v5688, 0.0
    %v5802 = vmin.f32 %v5692, 0.0
    %v5803 = vmin.f32 %v5694, 0.0
    %v5804 = vmin.f32 %v5698, 0.0
    %v5805 = vmin.f32 %v5700, 0.0
    %v5806 = vmin.f32 %v5704, 0.0
    %v5807 = vmin.f32 %v5706, 0.0
    %v5808 = vmin.f32 %v5710, 0.0
    %v5809 = vmin.f32 %v5712, 0.0
    %v5810 = vmin.f32 %v5716, 0.0
    %v5811 = vmin.f32 %v5718, 0.0
    %v5812 = vmin.f32 %v5722, 0.0
    %v5813 = vmin.f32 %v5724, 0.0
    %v5814 = vmin.f32 %v5728, 0.0
    %v5815 = vmin.f32 %v5730, 0.0
    %v5816 = vmin.f32 %v5734, 0.0
    %v5817 = vmin.f32 %v5736, 0.0
    %v5818 = vmul.f32 %v5778, 1.442695
    %v5819 = vpow.pop %v5818
    %v5820 = vmul.f32 %v5779, 1.442695
    %v5821 = vpow.pop %v5820
    %v5822 = vmul.f32 %v5780, 1.442695
    %v5823 = vpow.pop %v5822
    %v5824 = vmul.f32 %v5781, 1.442695
    %v5825 = vpow.pop %v5824
    %v5826 = vmul.f32 %v5782, 1.442695
    %v5827 = vpow.pop %v5826
    %v5828 = vmul.f32 %v5783, 1.442695
    %v5829 = vpow.pop %v5828
    %v5830 = vmul.f32 %v5784, 1.442695
    %v5831 = vpow.pop %v5830
    %v5832 = vmul.f32 %v5785, 1.442695
    %v5833 = vpow.pop %v5832
    %v5834 = vmul.f32 %v5786, 1.442695
    %v5835 = vpow.pop %v5834
    %v5836 = vmul.f32 %v5787, 1.442695
    %v5837 = vpow.pop %v5836
    %v5838 = vmul.f32 %v5788, 1.442695
    %v5839 = vpow.pop %v5838
    %v5840 = vmul.f32 %v5789, 1.442695
    %v5841 = vpow.pop %v5840
    %v5842 = vmul.f32 %v5790, 1.442695
    %v5843 = vpow.pop %v5842
    %v5844 = vmul.f32 %v5791, 1.442695
    %v5845 = vpow.pop %v5844
    %v5846 = vmul.f32 %v5792, 1.442695
    %v5847 = vpow.pop %v5846
    %v5848 = vmul.f32 %v5793, 1.442695
    %v5849 = vpow.pop %v5848
    %v5850 = vmul.f32 %v5794, 1.442695
    %v5851 = vpow.pop %v5850
    %v5852 = vmul.f32 %v5795, 1.442695
    %v5853 = vpow.pop %v5852
    %v5854 = vmul.f32 %v5796, 1.442695
    %v5855 = vpow.pop %v5854
    %v5856 = vmul.f32 %v5797, 1.442695
    %v5857 = vpow.pop %v5856
    %v5858 = vmul.f32 %v5798, 1.442695
    %v5859 = vpow.pop %v5858
    %v5860 = vmul.f32 %v5799, 1.442695
    %v5861 = vpow.pop %v5860
    %v5862 = vmul.f32 %v5800, 1.442695
    %v5863 = vpow.pop %v5862
    %v5864 = vmul.f32 %v5801, 1.442695
    %v5865 = vpow.pop %v5864
    %v5866 = vmul.f32 %v5802, 1.442695
    %v5867 = vpow.pop %v5866
    %v5868 = vmul.f32 %v5803, 1.442695
    %v5869 = vpow.pop %v5868
    %v5870 = vmul.f32 %v5804, 1.442695
    %v5871 = vpow.pop %v5870
    %v5872 = vmul.f32 %v5805, 1.442695
    %v5873 = vpow.pop %v5872
    %v5874 = vmul.f32 %v5806, 1.442695
    %v5875 = vpow.pop %v5874
    %v5876 = vmul.f32 %v5807, 1.442695
    %v5877 = vpow.pop %v5876
    %v5878 = vmul.f32 %v5808, 1.442695
    %v5879 = vpow.pop %v5878
    %v5880 = vmul.f32 %v5809, 1.442695
    %v5881 = vpow.pop %v5880
    %v5882 = vmul.f32 %v5810, 1.442695
    %v5883 = vpow.pop %v5882
    %v5884 = vmul.f32 %v5811, 1.442695
    %v5885 = vpow.pop %v5884
    %v5886 = vmul.f32 %v5812, 1.442695
    %v5887 = vpow.pop %v5886
    %v5888 = vmul.f32 %v5813, 1.442695
    %v5889 = vpow.pop %v5888
    %v5890 = vmul.f32 %v5814, 1.442695
    %v5891 = vpow.pop %v5890
    %v5892 = vmul.f32 %v5815, 1.442695
    %v5893 = vpow.pop %v5892
    %v5894 = vmul.f32 %v5816, 1.442695
    %v5895 = vpow.pop %v5894
    %v5896 = vmul.f32 %v5817, 1.442695
    %v5897 = vpow.pop %v5896
    %v5898 = vsub.f32 %v5819, 1.0
    %v5899 = vsub.f32 %v5821, 1.0
    %v5900 = vsub.f32 %v5823, 1.0
    %v5901 = vsub.f32 %v5825, 1.0
    %v5902 = vsub.f32 %v5827, 1.0
    %v5903 = vsub.f32 %v5829, 1.0
    %v5904 = vsub.f32 %v5831, 1.0
    %v5905 = vsub.f32 %v5833, 1.0
    %v5906 = vsub.f32 %v5835, 1.0
    %v5907 = vsub.f32 %v5837, 1.0
    %v5908 = vsub.f32 %v5839, 1.0
    %v5909 = vsub.f32 %v5841, 1.0
    %v5910 = vsub.f32 %v5843, 1.0
    %v5911 = vsub.f32 %v5845, 1.0
    %v5912 = vsub.f32 %v5847, 1.0
    %v5913 = vsub.f32 %v5849, 1.0
    %v5914 = vsub.f32 %v5851, 1.0
    %v5915 = vsub.f32 %v5853, 1.0
    %v5916 = vsub.f32 %v5855, 1.0
    %v5917 = vsub.f32 %v5857, 1.0
    %v5918 = vsub.f32 %v5859, 1.0
    %v5919 = vsub.f32 %v5861, 1.0
    %v5920 = vsub.f32 %v5863, 1.0
    %v5921 = vsub.f32 %v5865, 1.0
    %v5922 = vsub.f32 %v5867, 1.0
    %v5923 = vsub.f32 %v5869, 1.0
    %v5924 = vsub.f32 %v5871, 1.0
    %v5925 = vsub.f32 %v5873, 1.0
    %v5926 = vsub.f32 %v5875, 1.0
    %v5927 = vsub.f32 %v5877, 1.0
    %v5928 = vsub.f32 %v5879, 1.0
    %v5929 = vsub.f32 %v5881, 1.0
    %v5930 = vsub.f32 %v5883, 1.0
    %v5931 = vsub.f32 %v5885, 1.0
    %v5932 = vsub.f32 %v5887, 1.0
    %v5933 = vsub.f32 %v5889, 1.0
    %v5934 = vsub.f32 %v5891, 1.0
    %v5935 = vsub.f32 %v5893, 1.0
    %v5936 = vsub.f32 %v5895, 1.0
    %v5937 = vsub.f32 %v5897, 1.0
    %v5938 = vsel %vm5738, %v5620, %v5898
    %v5939 = vsel %vm5739, %v5622, %v5899
    %v5940 = vsel %vm5740, %v5626, %v5900
    %v5941 = vsel %vm5741, %v5628, %v5901
    %v5942 = vsel %vm5742, %v5632, %v5902
    %v5943 = vsel %vm5743, %v5634, %v5903
    %v5944 = vsel %vm5744, %v5638, %v5904
    %v5945 = vsel %vm5745, %v5640, %v5905
    %v5946 = vsel %vm5746, %v5644, %v5906
    %v5947 = vsel %vm5747, %v5646, %v5907
    %v5948 = vsel %vm5748, %v5650, %v5908
    %v5949 = vsel %vm5749, %v5652, %v5909
    %v5950 = vsel %vm5750, %v5656, %v5910
    %v5951 = vsel %vm5751, %v5658, %v5911
    %v5952 = vsel %vm5752, %v5662, %v5912
    %v5953 = vsel %vm5753, %v5664, %v5913
    %v5954 = vsel %vm5754, %v5668, %v5914
    %v5955 = vsel %vm5755, %v5670, %v5915
    %v5956 = vsel %vm5756, %v5674, %v5916
    %v5957 = vsel %vm5757, %v5676, %v5917
    %v5958 = vsel %vm5758, %v5680, %v5918
    %v5959 = vsel %vm5759, %v5682, %v5919
    %v5960 = vsel %vm5760, %v5686, %v5920
    %v5961 = vsel %vm5761, %v5688, %v5921
    %v5962 = vsel %vm5762, %v5692, %v5922
    %v5963 = vsel %vm5763, %v5694, %v5923
    %v5964 = vsel %vm5764, %v5698, %v5924
    %v5965 = vsel %vm5765, %v5700, %v5925
    %v5966 = vsel %vm5766, %v5704, %v5926
    %v5967 = vsel %vm5767, %v5706, %v5927
    %v5968 = vsel %vm5768, %v5710, %v5928
    %v5969 = vsel %vm5769, %v5712, %v5929
    %v5970 = vsel %vm5770, %v5716, %v5930
    %v5971 = vsel %vm5771, %v5718, %v5931
    %v5972 = vsel %vm5772, %v5722, %v5932
    %v5973 = vsel %vm5773, %v5724, %v5933
    %v5974 = vsel %vm5774, %v5728, %v5934
    %v5975 = vsel %vm5775, %v5730, %v5935
    %v5976 = vsel %vm5776, %v5734, %v5936
    %v5977 = vsel %vm5777, %v5736, %v5937
    %v5979 = vsel %vm1902, %v5976, 0
    %v5982 = vsel %vm1902, %v5977, 0
    %5984 = vmatprep.subr.mxu0 %v5939
    %5985 = vmatpush1.msra.mxu0 %v5938
    %5986 = vmatprep.subr.mxu0 %v5941
    %5987 = vmatpush1.msra.mxu0 %v5940
    %5988 = vmatprep.subr.mxu0 %v5943
    %5989 = vmatpush1.msra.mxu0 %v5942
    %5990 = vmatprep.subr.mxu0 %v5945
    %5991 = vmatpush1.msra.mxu0 %v5944
    %5992 = vmatprep.subr.mxu0 %v5947
    %5993 = vmatpush1.msra.mxu0 %v5946
    %5994 = vmatprep.subr.mxu0 %v5949
    %5995 = vmatpush1.msra.mxu0 %v5948
    %5996 = vmatprep.subr.mxu0 %v5951
    %5997 = vmatpush1.msra.mxu0 %v5950
    %5998 = vmatprep.subr.mxu0 %v5953
    %5999 = vmatpush1.msra.mxu0 %v5952
    %6000 = vmatprep.subr.mxu0 %v5955
    %6001 = vmatpush1.msra.mxu0 %v5954
    %6002 = vmatprep.subr.mxu0 %v5957
    %6003 = vmatpush1.msra.mxu0 %v5956
    %6004 = vmatprep.subr.mxu0 %v5959
    %6005 = vmatpush1.msra.mxu0 %v5958
    %6006 = vmatprep.subr.mxu0 %v5961
    %6007 = vmatpush1.msra.mxu0 %v5960
    %6008 = vmatprep.subr.mxu0 %v5963
    %6009 = vmatpush1.msra.mxu0 %v5962
    %6010 = vmatprep.subr.mxu0 %v5965
    %6011 = vmatpush1.msra.mxu0 %v5964
    %6012 = vmatprep.subr.mxu0 %v5967
    %6013 = vmatpush1.msra.mxu0 %v5966
    %6014 = vmatprep.subr.mxu0 %v5969
    %6015 = vmatpush1.msra.mxu0 %v5968
    %6016 = vmatprep.subr.mxu0 %v5971
    %6017 = vmatpush1.msra.mxu0 %v5970
    %6018 = vmatprep.subr.mxu0 %v5973
    %6019 = vmatpush1.msra.mxu0 %v5972
    %6020 = vmatprep.subr.mxu0 %v5975
    %6021 = vmatpush1.msra.mxu0 %v5974
    %6022 = vmatprep.subr.mxu0 %v5982
    %6023 = vmatpush1.msra.mxu0 %v5979
    %6024 = vmatprep.subr.mxu0 0.0
    %6025 = vmatpush1.msra.mxu0 0.0
    %6026 = vmatprep.subr.mxu0 0.0
    %6027 = vmatpush1.msra.mxu0 0.0
    %6028 = vmatprep.subr.mxu0 0.0
    %6029 = vmatpush1.msra.mxu0 0.0
    %6030 = vmatprep.subr.mxu0 0.0
    %6031 = vmatpush1.msra.mxu0 0.0
    %6032 = vmatprep.subr.mxu0 0.0
    %6033 = vmatpush1.msra.mxu0 0.0
    %6034 = vmatprep.subr.mxu0 0.0
    %6035 = vmatpush1.msra.mxu0 0.0
    %6036 = vmatprep.subr.mxu0 0.0
    %6037 = vmatpush1.msra.mxu0 0.0
    %6038 = vmatprep.subr.mxu0 0.0
    %6039 = vmatpush1.msra.mxu0 0.0
    %6040 = vmatprep.subr.mxu0 0.0
    %6041 = vmatpush1.msra.mxu0 0.0
    %6042 = vmatprep.subr.mxu0 0.0
    %6043 = vmatpush1.msra.mxu0 0.0
    %6044 = vmatprep.subr.mxu0 0.0
    %6045 = vmatpush1.msra.mxu0 0.0
    %6046 = vmatprep.subr.mxu0 0.0
    %6047 = vmatpush1.msra.mxu0 0.0
    %6048 = vmatprep.mubr.f32.mxu0 %v1783
    %6049 = vmatmul.mubr.f32.gmra.mrb[0].mxu0 %v1701
    %v6050 = vpop.f32.mrb[0].mxu0
    %v6051 = vadd.f32 0.0, %v6050
    %v6052 = vpop.f32.mrb[0].mxu0
    %v6053 = vadd.f32 0.0, %v6052
    %6054 = vmatprep.mubr.f32.mxu0 %v1786
    %6055 = vmatmul.mubr.f32.gmra.mrb[0].mxu0 %v1703
    %v6056 = vpop.f32.mrb[0].mxu0
    %v6057 = vadd.f32 0.0, %v6056
    %v6058 = vpop.f32.mrb[0].mxu0
    %v6059 = vadd.f32 0.0, %v6058
    %6060 = vmatprep.mubr.f32.mxu0 %v1789
    %6061 = vmatmul.mubr.f32.gmra.mrb[0].mxu0 %v1705
    %v6062 = vpop.f32.mrb[0].mxu0
    %v6063 = vadd.f32 0.0, %v6062
    %v6064 = vpop.f32.mrb[0].mxu0
    %v6065 = vadd.f32 0.0, %v6064
    %6066 = vmatprep.mubr.f32.mxu0 %v1792
    %6067 = vmatmul.mubr.f32.gmra.mrb[0].mxu0 %v1707
    %v6068 = vpop.f32.mrb[0].mxu0
    %v6069 = vadd.f32 0.0, %v6068
    %v6070 = vpop.f32.mrb[0].mxu0
    %v6071 = vadd.f32 0.0, %v6070
    %6072 = vmatprep.mubr.f32.mxu0 %v1795
    %6073 = vmatmul.mubr.f32.gmra.mrb[0].mxu0 %v1709
    %v6074 = vpop.f32.mrb[0].mxu0
    %v6075 = vadd.f32 0.0, %v6074
    %v6076 = vpop.f32.mrb[0].mxu0
    %v6077 = vadd.f32 0.0, %v6076
    %6078 = vmatprep.mubr.f32.mxu0 %v1798
    %6079 = vmatmul.mubr.f32.gmra.mrb[0].mxu0 %v1711
    %v6080 = vpop.f32.mrb[0].mxu0
    %v6081 = vadd.f32 0.0, %v6080
    %v6082 = vpop.f32.mrb[0].mxu0
    %v6083 = vadd.f32 0.0, %v6082
    %6084 = vmatprep.mubr.f32.mxu0 %v1801
    %6085 = vmatmul.mubr.f32.gmra.mrb[0].mxu0 %v1713
    %v6086 = vpop.f32.mrb[0].mxu0
    %v6087 = vadd.f32 0.0, %v6086
    %v6088 = vpop.f32.mrb[0].mxu0
    %v6089 = vadd.f32 0.0, %v6088
    %6090 = vmatprep.mubr.f32.mxu0 %v1804
    %6091 = vmatmul.mubr.f32.gmra.mrb[0].mxu0 %v1715
    %v6092 = vpop.f32.mrb[0].mxu0
    %v6093 = vadd.f32 0.0, %v6092
    %v6094 = vpop.f32.mrb[0].mxu0
    %v6095 = vadd.f32 0.0, %v6094
    %6096 = vmatprep.mubr.f32.mxu0 %v1807
    %6097 = vmatmul.mubr.f32.gmra.mrb[0].mxu0 %v1717
    %v6098 = vpop.f32.mrb[0].mxu0
    %v6099 = vadd.f32 0.0, %v6098
    %v6100 = vpop.f32.mrb[0].mxu0
    %v6101 = vadd.f32 0.0, %v6100
    %6102 = vmatprep.mubr.f32.mxu0 %v1810
    %6103 = vmatmul.mubr.f32.gmra.mrb[0].mxu0 %v1719
    %v6104 = vpop.f32.mrb[0].mxu0
    %v6105 = vadd.f32 0.0, %v6104
    %v6106 = vpop.f32.mrb[0].mxu0
    %v6107 = vadd.f32 0.0, %v6106
    %6108 = vmatprep.mubr.f32.mxu0 %v1813
    %6109 = vmatmul.mubr.f32.gmra.mrb[0].mxu0 %v1721
    %v6110 = vpop.f32.mrb[0].mxu0
    %v6111 = vadd.f32 0.0, %v6110
    %v6112 = vpop.f32.mrb[0].mxu0
    %v6113 = vadd.f32 0.0, %v6112
    %6114 = vmatprep.mubr.f32.mxu0 %v1816
    %6115 = vmatmul.mubr.f32.gmra.mrb[0].mxu0 %v1723
    %v6116 = vpop.f32.mrb[0].mxu0
    %v6117 = vadd.f32 0.0, %v6116
    %v6118 = vpop.f32.mrb[0].mxu0
    %v6119 = vadd.f32 0.0, %v6118
    %6120 = vmatprep.mubr.f32.mxu0 %v1819
    %6121 = vmatmul.mubr.f32.gmra.mrb[0].mxu0 %v1725
    %v6122 = vpop.f32.mrb[0].mxu0
    %v6123 = vadd.f32 0.0, %v6122
    %v6124 = vpop.f32.mrb[0].mxu0
    %v6125 = vadd.f32 0.0, %v6124
    %6126 = vmatprep.mubr.f32.mxu0 %v1822
    %6127 = vmatmul.mubr.f32.gmra.mrb[0].mxu0 %v1727
    %v6128 = vpop.f32.mrb[0].mxu0
    %v6129 = vadd.f32 0.0, %v6128
    %v6130 = vpop.f32.mrb[0].mxu0
    %v6131 = vadd.f32 0.0, %v6130
    %6132 = vmatprep.mubr.f32.mxu0 %v1825
    %6133 = vmatmul.mubr.f32.gmra.mrb[0].mxu0 %v1729
    %v6134 = vpop.f32.mrb[0].mxu0
    %v6135 = vadd.f32 0.0, %v6134
    %v6136 = vpop.f32.mrb[0].mxu0
    %v6137 = vadd.f32 0.0, %v6136
    %6138 = vmatprep.mubr.f32.mxu0 %v1828
    %6139 = vmatmul.mubr.f32.gmra.mrb[0].mxu0 %v1731
    %v6140 = vpop.f32.mrb[0].mxu0
    %v6141 = vadd.f32 0.0, %v6140
    %v6142 = vpop.f32.mrb[0].mxu0
    %v6143 = vadd.f32 0.0, %v6142
    %6144 = vmatprep.mubr.f32.mxu0 %v1831
    %6145 = vmatmul.mubr.f32.gmra.mrb[0].mxu0 %v1733
    %v6146 = vpop.f32.mrb[0].mxu0
    %v6147 = vadd.f32 0.0, %v6146
    %v6148 = vpop.f32.mrb[0].mxu0
    %v6149 = vadd.f32 0.0, %v6148
    %6150 = vmatprep.mubr.f32.mxu0 %v1834
    %6151 = vmatmul.mubr.f32.gmra.mrb[0].mxu0 %v1735
    %v6152 = vpop.f32.mrb[0].mxu0
    %v6153 = vadd.f32 0.0, %v6152
    %v6154 = vpop.f32.mrb[0].mxu0
    %v6155 = vadd.f32 0.0, %v6154
    %6156 = vmatprep.mubr.f32.mxu0 %v1837
    %6157 = vmatmul.mubr.f32.gmra.mrb[0].mxu0 %v1737
    %v6158 = vpop.f32.mrb[0].mxu0
    %v6159 = vadd.f32 0.0, %v6158
    %v6160 = vpop.f32.mrb[0].mxu0
    %v6161 = vadd.f32 0.0, %v6160
    %6162 = vmatprep.mubr.f32.mxu0 %v1840
    %6163 = vmatmul.mubr.f32.gmra.mrb[0].mxu0 %v1739
    %v6164 = vpop.f32.mrb[0].mxu0
    %v6165 = vadd.f32 0.0, %v6164
    %v6166 = vpop.f32.mrb[0].mxu0
    %v6167 = vadd.f32 0.0, %v6166
    %6168 = vmatprep.mubr.f32.mxu0 %v1843
    %6169 = vmatmul.mubr.f32.gmra.mrb[0].mxu0 %v1741
    %v6170 = vpop.f32.mrb[0].mxu0
    %v6171 = vadd.f32 0.0, %v6170
    %v6172 = vpop.f32.mrb[0].mxu0
    %v6173 = vadd.f32 0.0, %v6172
    %6174 = vmatprep.mubr.f32.mxu0 %v1846
    %6175 = vmatmul.mubr.f32.gmra.mrb[0].mxu0 %v1743
    %v6176 = vpop.f32.mrb[0].mxu0
    %v6177 = vadd.f32 0.0, %v6176
    %v6178 = vpop.f32.mrb[0].mxu0
    %v6179 = vadd.f32 0.0, %v6178
    %6180 = vmatprep.mubr.f32.mxu0 %v1849
    %6181 = vmatmul.mubr.f32.gmra.mrb[0].mxu0 %v1745
    %v6182 = vpop.f32.mrb[0].mxu0
    %v6183 = vadd.f32 0.0, %v6182
    %v6184 = vpop.f32.mrb[0].mxu0
    %v6185 = vadd.f32 0.0, %v6184
    %6186 = vmatprep.mubr.f32.mxu0 %v1852
    %6187 = vmatmul.mubr.f32.gmra.mrb[0].mxu0 %v1747
    %v6188 = vpop.f32.mrb[0].mxu0
    %v6189 = vadd.f32 0.0, %v6188
    %v6190 = vpop.f32.mrb[0].mxu0
    %v6191 = vadd.f32 0.0, %v6190
    %6192 = vmatprep.mubr.f32.mxu0 %v1855
    %6193 = vmatmul.mubr.f32.gmra.mrb[0].mxu0 %v1749
    %v6194 = vpop.f32.mrb[0].mxu0
    %v6195 = vadd.f32 0.0, %v6194
    %v6196 = vpop.f32.mrb[0].mxu0
    %v6197 = vadd.f32 0.0, %v6196
    %6198 = vmatprep.mubr.f32.mxu0 %v1858
    %6199 = vmatmul.mubr.f32.gmra.mrb[0].mxu0 %v1751
    %v6200 = vpop.f32.mrb[0].mxu0
    %v6201 = vadd.f32 0.0, %v6200
    %v6202 = vpop.f32.mrb[0].mxu0
    %v6203 = vadd.f32 0.0, %v6202
    %6204 = vmatprep.mubr.f32.mxu0 %v1861
    %6205 = vmatmul.mubr.f32.gmra.mrb[0].mxu0 %v1753
    %v6206 = vpop.f32.mrb[0].mxu0
    %v6207 = vadd.f32 0.0, %v6206
    %v6208 = vpop.f32.mrb[0].mxu0
    %v6209 = vadd.f32 0.0, %v6208
    %6210 = vmatprep.mubr.f32.mxu0 %v1864
    %6211 = vmatmul.mubr.f32.gmra.mrb[0].mxu0 %v1755
    %v6212 = vpop.f32.mrb[0].mxu0
    %v6213 = vadd.f32 0.0, %v6212
    %v6214 = vpop.f32.mrb[0].mxu0
    %v6215 = vadd.f32 0.0, %v6214
    %6216 = vmatprep.mubr.f32.mxu0 %v1867
    %6217 = vmatmul.mubr.f32.gmra.mrb[0].mxu0 %v1757
    %v6218 = vpop.f32.mrb[0].mxu0
    %v6219 = vadd.f32 0.0, %v6218
    %v6220 = vpop.f32.mrb[0].mxu0
    %v6221 = vadd.f32 0.0, %v6220
    %6222 = vmatprep.mubr.f32.mxu0 %v1870
    %6223 = vmatmul.mubr.f32.gmra.mrb[0].mxu0 %v1759
    %v6224 = vpop.f32.mrb[0].mxu0
    %v6225 = vadd.f32 0.0, %v6224
    %v6226 = vpop.f32.mrb[0].mxu0
    %v6227 = vadd.f32 0.0, %v6226
    %6228 = vmatprep.mubr.f32.mxu0 %v1873
    %6229 = vmatmul.mubr.f32.gmra.mrb[0].mxu0 %v1761
    %v6230 = vpop.f32.mrb[0].mxu0
    %v6231 = vadd.f32 0.0, %v6230
    %v6232 = vpop.f32.mrb[0].mxu0
    %v6233 = vadd.f32 0.0, %v6232
    %6234 = vmatprep.mubr.f32.mxu0 %v1876
    %6235 = vmatmul.mubr.f32.gmra.mrb[0].mxu0 %v1763
    %v6236 = vpop.f32.mrb[0].mxu0
    %v6237 = vadd.f32 0.0, %v6236
    %v6238 = vpop.f32.mrb[0].mxu0
    %v6239 = vadd.f32 0.0, %v6238
    %6240 = vmatprep.mubr.f32.mxu0 %v1879
    %6241 = vmatmul.mubr.f32.gmra.mrb[0].mxu0 %v1765
    %v6242 = vpop.f32.mrb[0].mxu0
    %v6243 = vadd.f32 0.0, %v6242
    %v6244 = vpop.f32.mrb[0].mxu0
    %v6245 = vadd.f32 0.0, %v6244
    %6246 = vmatprep.mubr.f32.mxu0 %v1882
    %6247 = vmatmul.mubr.f32.gmra.mrb[0].mxu0 %v1767
    %v6248 = vpop.f32.mrb[0].mxu0
    %v6249 = vadd.f32 0.0, %v6248
    %v6250 = vpop.f32.mrb[0].mxu0
    %v6251 = vadd.f32 0.0, %v6250
    %6252 = vmatprep.mubr.f32.mxu0 %v1885
    %6253 = vmatmul.mubr.f32.gmra.mrb[0].mxu0 %v1769
    %v6254 = vpop.f32.mrb[0].mxu0
    %v6255 = vadd.f32 0.0, %v6254
    %v6256 = vpop.f32.mrb[0].mxu0
    %v6257 = vadd.f32 0.0, %v6256
    %6258 = vmatprep.mubr.f32.mxu0 %v1888
    %6259 = vmatmul.mubr.f32.gmra.mrb[0].mxu0 %v1771
    %v6260 = vpop.f32.mrb[0].mxu0
    %v6261 = vadd.f32 0.0, %v6260
    %v6262 = vpop.f32.mrb[0].mxu0
    %v6263 = vadd.f32 0.0, %v6262
    %6264 = vmatprep.mubr.f32.mxu0 %v1891
    %6265 = vmatmul.mubr.f32.gmra.mrb[0].mxu0 %v1773
    %v6266 = vpop.f32.mrb[0].mxu0
    %v6267 = vadd.f32 0.0, %v6266
    %v6268 = vpop.f32.mrb[0].mxu0
    %v6269 = vadd.f32 0.0, %v6268
    %6270 = vmatprep.mubr.f32.mxu0 %v1894
    %6271 = vmatmul.mubr.f32.gmra.mrb[0].mxu0 %v1775
    %v6272 = vpop.f32.mrb[0].mxu0
    %v6273 = vadd.f32 0.0, %v6272
    %v6274 = vpop.f32.mrb[0].mxu0
    %v6275 = vadd.f32 0.0, %v6274
    %6276 = vmatprep.mubr.f32.mxu0 %v1897
    %6277 = vmatmul.mubr.f32.gmra.mrb[0].mxu0 %v1777
    %v6278 = vpop.f32.mrb[0].mxu0
    %v6279 = vadd.f32 0.0, %v6278
    %v6280 = vpop.f32.mrb[0].mxu0
    %v6281 = vadd.f32 0.0, %v6280
    %6282 = vmatprep.mubr.f32.mxu0 %v1900
    %6283 = vmatmul.mubr.f32.gmra.mrb[0].mxu0 %v1779
    %v6284 = vpop.f32.mrb[0].mxu0
    %v6285 = vadd.f32 0.0, %v6284
    %v6286 = vpop.f32.mrb[0].mxu0
    %v6287 = vadd.f32 0.0, %v6286
    %6288 = vdwg.mxu0
    %v6290 = vsel %vm2310, %v6083, 0
    %v6293 = vsel %vm2310, %v6089, 0
    %v6296 = vsel %vm2310, %v6095, 0
    %v6299 = vsel %vm2310, %v6101, 0
    %v6302 = vsel %vm2310, %v6107, 0
    %6304 = vmatprep.subr.mxu0 %v2263
    %6305 = vmatpush1.msra.mxu0 %v2262
    %6306 = vmatprep.subr.mxu0 %v2265
    %6307 = vmatpush1.msra.mxu0 %v2264
    %6308 = vmatprep.subr.mxu0 %v2267
    %6309 = vmatpush1.msra.mxu0 %v2266
    %6310 = vmatprep.subr.mxu0 %v2269
    %6311 = vmatpush1.msra.mxu0 %v2268
    %6312 = vmatprep.subr.mxu0 %v2271
    %6313 = vmatpush1.msra.mxu0 %v2270
    %6314 = vmatprep.subr.mxu0 %v2273
    %6315 = vmatpush1.msra.mxu0 %v2272
    %6316 = vmatprep.subr.mxu0 %v2275
    %6317 = vmatpush1.msra.mxu0 %v2274
    %6318 = vmatprep.subr.mxu0 %v2277
    %6319 = vmatpush1.msra.mxu0 %v2276
    %6320 = vmatprep.subr.mxu0 %v2279
    %6321 = vmatpush1.msra.mxu0 %v2278
    %6322 = vmatprep.subr.mxu0 %v2281
    %6323 = vmatpush1.msra.mxu0 %v2280
    %6324 = vmatprep.subr.mxu0 %v2283
    %6325 = vmatpush1.msra.mxu0 %v2282
    %6326 = vmatprep.subr.mxu0 %v2285
    %6327 = vmatpush1.msra.mxu0 %v2284
    %6328 = vmatprep.subr.mxu0 %v2287
    %6329 = vmatpush1.msra.mxu0 %v2286
    %6330 = vmatprep.subr.mxu0 %v2289
    %6331 = vmatpush1.msra.mxu0 %v2288
    %6332 = vmatprep.subr.mxu0 %v2291
    %6333 = vmatpush1.msra.mxu0 %v2290
    %6334 = vmatprep.subr.mxu0 %v2293
    %6335 = vmatpush1.msra.mxu0 %v2292
    %6336 = vmatprep.subr.mxu0 %v2295
    %6337 = vmatpush1.msra.mxu0 %v2294
    %6338 = vmatprep.subr.mxu0 %v2297
    %6339 = vmatpush1.msra.mxu0 %v2296
    %6340 = vmatprep.subr.mxu0 %v2299
    %6341 = vmatpush1.msra.mxu0 %v2298
    %6342 = vmatprep.subr.mxu0 %v2301
    %6343 = vmatpush1.msra.mxu0 %v2300
    %6344 = vmatprep.subr.mxu0 %v2303
    %6345 = vmatpush1.msra.mxu0 %v2302
    %6346 = vmatprep.subr.mxu0 %v2305
    %6347 = vmatpush1.msra.mxu0 %v2304
    %6348 = vmatprep.subr.mxu0 %v2307
    %6349 = vmatpush1.msra.mxu0 %v2306
    %6350 = vmatprep.subr.mxu0 %v2309
    %6351 = vmatpush1.msra.mxu0 %v2308
    %6352 = vmatprep.subr.mxu0 0.0
    %6353 = vmatpush1.msra.mxu0 0.0
    %6354 = vmatprep.subr.mxu0 0.0
    %6355 = vmatpush1.msra.mxu0 0.0
    %6356 = vmatprep.subr.mxu0 0.0
    %6357 = vmatpush1.msra.mxu0 0.0
    %6358 = vmatprep.subr.mxu0 0.0
    %6359 = vmatpush1.msra.mxu0 0.0
    %6360 = vmatprep.subr.mxu0 0.0
    %6361 = vmatpush1.msra.mxu0 0.0
    %6362 = vmatprep.subr.mxu0 0.0
    %6363 = vmatpush1.msra.mxu0 0.0
    %6364 = vmatprep.subr.mxu0 0.0
    %6365 = vmatpush1.msra.mxu0 0.0
    %6366 = vmatprep.subr.mxu0 0.0
    %6367 = vmatpush1.msra.mxu0 0.0
    %6368 = vmatprep.mubr.f32.mxu0 %v6290
    %6369 = vmatmul.mubr.f32.gmra.mrb[0].mxu0 %v6081
    %v6370 = vpop.f32.mrb[0].mxu0
    %v6371 = vadd.f32 0.0, %v6370
    %v6372 = vpop.f32.mrb[0].mxu0
    %v6373 = vadd.f32 0.0, %v6372
    %6374 = vmatprep.mubr.f32.mxu0 %v6293
    %6375 = vmatmul.mubr.f32.gmra.mrb[0].mxu0 %v6087
    %v6376 = vpop.f32.mrb[0].mxu0
    %v6377 = vadd.f32 0.0, %v6376
    %v6378 = vpop.f32.mrb[0].mxu0
    %v6379 = vadd.f32 0.0, %v6378
    %6380 = vmatprep.mubr.f32.mxu0 %v6296
    %6381 = vmatmul.mubr.f32.gmra.mrb[0].mxu0 %v6093
    %v6382 = vpop.f32.mrb[0].mxu0
    %v6383 = vadd.f32 0.0, %v6382
    %v6384 = vpop.f32.mrb[0].mxu0
    %v6385 = vadd.f32 0.0, %v6384
    %6386 = vmatprep.mubr.f32.mxu0 %v6299
    %6387 = vmatmul.mubr.f32.gmra.mrb[0].mxu0 %v6099
    %v6388 = vpop.f32.mrb[0].mxu0
    %v6389 = vadd.f32 0.0, %v6388
    %v6390 = vpop.f32.mrb[0].mxu0
    %v6391 = vadd.f32 0.0, %v6390
    %6392 = vmatprep.mubr.f32.mxu0 %v6302
    %6393 = vmatmul.mubr.f32.gmra.mrb[0].mxu0 %v6105
    %v6394 = vpop.f32.mrb[0].mxu0
    %v6395 = vadd.f32 0.0, %v6394
    %v6396 = vpop.f32.mrb[0].mxu0
    %v6397 = vadd.f32 0.0, %v6396
    %6398 = vdwg.mxu0
    %v6400 = vsel %vm2310, %v6053, 0
    %v6403 = vsel %vm2310, %v6059, 0
    %v6406 = vsel %vm2310, %v6065, 0
    %v6409 = vsel %vm2310, %v6071, 0
    %v6412 = vsel %vm2310, %v6077, 0
    %6414 = vmatprep.subr.mxu0 %v2215
    %6415 = vmatpush1.msra.mxu0 %v2214
    %6416 = vmatprep.subr.mxu0 %v2217
    %6417 = vmatpush1.msra.mxu0 %v2216
    %6418 = vmatprep.subr.mxu0 %v2219
    %6419 = vmatpush1.msra.mxu0 %v2218
    %6420 = vmatprep.subr.mxu0 %v2221
    %6421 = vmatpush1.msra.mxu0 %v2220
    %6422 = vmatprep.subr.mxu0 %v2223
    %6423 = vmatpush1.msra.mxu0 %v2222
    %6424 = vmatprep.subr.mxu0 %v2225
    %6425 = vmatpush1.msra.mxu0 %v2224
    %6426 = vmatprep.subr.mxu0 %v2227
    %6427 = vmatpush1.msra.mxu0 %v2226
    %6428 = vmatprep.subr.mxu0 %v2229
    %6429 = vmatpush1.msra.mxu0 %v2228
    %6430 = vmatprep.subr.mxu0 %v2231
    %6431 = vmatpush1.msra.mxu0 %v2230
    %6432 = vmatprep.subr.mxu0 %v2233
    %6433 = vmatpush1.msra.mxu0 %v2232
    %6434 = vmatprep.subr.mxu0 %v2235
    %6435 = vmatpush1.msra.mxu0 %v2234
    %6436 = vmatprep.subr.mxu0 %v2237
    %6437 = vmatpush1.msra.mxu0 %v2236
    %6438 = vmatprep.subr.mxu0 %v2239
    %6439 = vmatpush1.msra.mxu0 %v2238
    %6440 = vmatprep.subr.mxu0 %v2241
    %6441 = vmatpush1.msra.mxu0 %v2240
    %6442 = vmatprep.subr.mxu0 %v2243
    %6443 = vmatpush1.msra.mxu0 %v2242
    %6444 = vmatprep.subr.mxu0 %v2245
    %6445 = vmatpush1.msra.mxu0 %v2244
    %6446 = vmatprep.subr.mxu0 %v2247
    %6447 = vmatpush1.msra.mxu0 %v2246
    %6448 = vmatprep.subr.mxu0 %v2249
    %6449 = vmatpush1.msra.mxu0 %v2248
    %6450 = vmatprep.subr.mxu0 %v2251
    %6451 = vmatpush1.msra.mxu0 %v2250
    %6452 = vmatprep.subr.mxu0 %v2253
    %6453 = vmatpush1.msra.mxu0 %v2252
    %6454 = vmatprep.subr.mxu0 %v2255
    %6455 = vmatpush1.msra.mxu0 %v2254
    %6456 = vmatprep.subr.mxu0 %v2257
    %6457 = vmatpush1.msra.mxu0 %v2256
    %6458 = vmatprep.subr.mxu0 %v2259
    %6459 = vmatpush1.msra.mxu0 %v2258
    %6460 = vmatprep.subr.mxu0 %v2261
    %6461 = vmatpush1.msra.mxu0 %v2260
    %6462 = vmatprep.subr.mxu0 0.0
    %6463 = vmatpush1.msra.mxu0 0.0
    %6464 = vmatprep.subr.mxu0 0.0
    %6465 = vmatpush1.msra.mxu0 0.0
    %6466 = vmatprep.subr.mxu0 0.0
    %6467 = vmatpush1.msra.mxu0 0.0
    %6468 = vmatprep.subr.mxu0 0.0
    %6469 = vmatpush1.msra.mxu0 0.0
    %6470 = vmatprep.subr.mxu0 0.0
    %6471 = vmatpush1.msra.mxu0 0.0
    %6472 = vmatprep.subr.mxu0 0.0
    %6473 = vmatpush1.msra.mxu0 0.0
    %6474 = vmatprep.subr.mxu0 0.0
    %6475 = vmatpush1.msra.mxu0 0.0
    %6476 = vmatprep.subr.mxu0 0.0
    %6477 = vmatpush1.msra.mxu0 0.0
    %6478 = vmatprep.mubr.f32.mxu0 %v6400
    %6479 = vmatmul.mubr.f32.gmra.mrb[0].mxu0 %v6051
    %v6480 = vpop.f32.mrb[0].mxu0
    %v6481 = vadd.f32 %v6371, %v6480
    %v6482 = vpop.f32.mrb[0].mxu0
    %v6483 = vadd.f32 %v6373, %v6482
    %6484 = vmatprep.mubr.f32.mxu0 %v6403
    %6485 = vmatmul.mubr.f32.gmra.mrb[0].mxu0 %v6057
    %v6486 = vpop.f32.mrb[0].mxu0
    %v6487 = vadd.f32 %v6377, %v6486
    %v6488 = vpop.f32.mrb[0].mxu0
    %v6489 = vadd.f32 %v6379, %v6488
    %6490 = vmatprep.mubr.f32.mxu0 %v6406
    %6491 = vmatmul.mubr.f32.gmra.mrb[0].mxu0 %v6063
    %v6492 = vpop.f32.mrb[0].mxu0
    %v6493 = vadd.f32 %v6383, %v6492
    %v6494 = vpop.f32.mrb[0].mxu0
    %v6495 = vadd.f32 %v6385, %v6494
    %6496 = vmatprep.mubr.f32.mxu0 %v6409
    %6497 = vmatmul.mubr.f32.gmra.mrb[0].mxu0 %v6069
    %v6498 = vpop.f32.mrb[0].mxu0
    %v6499 = vadd.f32 %v6389, %v6498
    %v6500 = vpop.f32.mrb[0].mxu0
    %v6501 = vadd.f32 %v6391, %v6500
    %6502 = vmatprep.mubr.f32.mxu0 %v6412
    %6503 = vmatmul.mubr.f32.gmra.mrb[0].mxu0 %v6075
    %v6504 = vpop.f32.mrb[0].mxu0
    %v6505 = vadd.f32 %v6395, %v6504
    %v6506 = vpop.f32.mrb[0].mxu0
    %v6507 = vadd.f32 %v6397, %v6506
    %6508 = vdwg.mxu0
    %v6510 = vsel %vm2310, %v6113, 0
    %v6513 = vsel %vm2310, %v6119, 0
    %v6516 = vsel %vm2310, %v6125, 0
    %v6519 = vsel %vm2310, %v6131, 0
    %v6522 = vsel %vm2310, %v6137, 0
    %6524 = vmatprep.subr.mxu0 %v2532
    %6525 = vmatpush1.msra.mxu0 %v2531
    %6526 = vmatprep.subr.mxu0 %v2534
    %6527 = vmatpush1.msra.mxu0 %v2533
    %6528 = vmatprep.subr.mxu0 %v2536
    %6529 = vmatpush1.msra.mxu0 %v2535
    %6530 = vmatprep.subr.mxu0 %v2538
    %6531 = vmatpush1.msra.mxu0 %v2537
    %6532 = vmatprep.subr.mxu0 %v2540
    %6533 = vmatpush1.msra.mxu0 %v2539
    %6534 = vmatprep.subr.mxu0 %v2542
    %6535 = vmatpush1.msra.mxu0 %v2541
    %6536 = vmatprep.subr.mxu0 %v2544
    %6537 = vmatpush1.msra.mxu0 %v2543
    %6538 = vmatprep.subr.mxu0 %v2546
    %6539 = vmatpush1.msra.mxu0 %v2545
    %6540 = vmatprep.subr.mxu0 %v2548
    %6541 = vmatpush1.msra.mxu0 %v2547
    %6542 = vmatprep.subr.mxu0 %v2550
    %6543 = vmatpush1.msra.mxu0 %v2549
    %6544 = vmatprep.subr.mxu0 %v2552
    %6545 = vmatpush1.msra.mxu0 %v2551
    %6546 = vmatprep.subr.mxu0 %v2554
    %6547 = vmatpush1.msra.mxu0 %v2553
    %6548 = vmatprep.subr.mxu0 %v2556
    %6549 = vmatpush1.msra.mxu0 %v2555
    %6550 = vmatprep.subr.mxu0 %v2558
    %6551 = vmatpush1.msra.mxu0 %v2557
    %6552 = vmatprep.subr.mxu0 %v2560
    %6553 = vmatpush1.msra.mxu0 %v2559
    %6554 = vmatprep.subr.mxu0 %v2562
    %6555 = vmatpush1.msra.mxu0 %v2561
    %6556 = vmatprep.subr.mxu0 %v2564
    %6557 = vmatpush1.msra.mxu0 %v2563
    %6558 = vmatprep.subr.mxu0 %v2566
    %6559 = vmatpush1.msra.mxu0 %v2565
    %6560 = vmatprep.subr.mxu0 %v2568
    %6561 = vmatpush1.msra.mxu0 %v2567
    %6562 = vmatprep.subr.mxu0 %v2570
    %6563 = vmatpush1.msra.mxu0 %v2569
    %6564 = vmatprep.subr.mxu0 %v2572
    %6565 = vmatpush1.msra.mxu0 %v2571
    %6566 = vmatprep.subr.mxu0 %v2574
    %6567 = vmatpush1.msra.mxu0 %v2573
    %6568 = vmatprep.subr.mxu0 %v2576
    %6569 = vmatpush1.msra.mxu0 %v2575
    %6570 = vmatprep.subr.mxu0 %v2578
    %6571 = vmatpush1.msra.mxu0 %v2577
    %6572 = vmatprep.subr.mxu0 0.0
    %6573 = vmatpush1.msra.mxu0 0.0
    %6574 = vmatprep.subr.mxu0 0.0
    %6575 = vmatpush1.msra.mxu0 0.0
    %6576 = vmatprep.subr.mxu0 0.0
    %6577 = vmatpush1.msra.mxu0 0.0
    %6578 = vmatprep.subr.mxu0 0.0
    %6579 = vmatpush1.msra.mxu0 0.0
    %6580 = vmatprep.subr.mxu0 0.0
    %6581 = vmatpush1.msra.mxu0 0.0
    %6582 = vmatprep.subr.mxu0 0.0
    %6583 = vmatpush1.msra.mxu0 0.0
    %6584 = vmatprep.subr.mxu0 0.0
    %6585 = vmatpush1.msra.mxu0 0.0
    %6586 = vmatprep.subr.mxu0 0.0
    %6587 = vmatpush1.msra.mxu0 0.0
    %6588 = vmatprep.mubr.f32.mxu0 %v6510
    %6589 = vmatmul.mubr.f32.gmra.mrb[0].mxu0 %v6111
    %v6590 = vpop.f32.mrb[0].mxu0
    %v6591 = vadd.f32 0.0, %v6590
    %v6592 = vpop.f32.mrb[0].mxu0
    %v6593 = vadd.f32 0.0, %v6592
    %6594 = vmatprep.mubr.f32.mxu0 %v6513
    %6595 = vmatmul.mubr.f32.gmra.mrb[0].mxu0 %v6117
    %v6596 = vpop.f32.mrb[0].mxu0
    %v6597 = vadd.f32 0.0, %v6596
    %v6598 = vpop.f32.mrb[0].mxu0
    %v6599 = vadd.f32 0.0, %v6598
    %6600 = vmatprep.mubr.f32.mxu0 %v6516
    %6601 = vmatmul.mubr.f32.gmra.mrb[0].mxu0 %v6123
    %v6602 = vpop.f32.mrb[0].mxu0
    %v6603 = vadd.f32 0.0, %v6602
    %v6604 = vpop.f32.mrb[0].mxu0
    %v6605 = vadd.f32 0.0, %v6604
    %6606 = vmatprep.mubr.f32.mxu0 %v6519
    %6607 = vmatmul.mubr.f32.gmra.mrb[0].mxu0 %v6129
    %v6608 = vpop.f32.mrb[0].mxu0
    %v6609 = vadd.f32 0.0, %v6608
    %v6610 = vpop.f32.mrb[0].mxu0
    %v6611 = vadd.f32 0.0, %v6610
    %6612 = vmatprep.mubr.f32.mxu0 %v6522
    %6613 = vmatmul.mubr.f32.gmra.mrb[0].mxu0 %v6135
    %v6614 = vpop.f32.mrb[0].mxu0
    %v6615 = vadd.f32 0.0, %v6614
    %v6616 = vpop.f32.mrb[0].mxu0
    %v6617 = vadd.f32 0.0, %v6616
    %6618 = vdwg.mxu0
    %v6619 = vadd.f32 %v6481, %v6591
    %v6620 = vadd.f32 %v6483, %v6593
    %v6621 = vadd.f32 %v6487, %v6597
    %v6622 = vadd.f32 %v6489, %v6599
    %v6623 = vadd.f32 %v6493, %v6603
    %v6624 = vadd.f32 %v6495, %v6605
    %v6625 = vadd.f32 %v6499, %v6609
    %v6626 = vadd.f32 %v6501, %v6611
    %v6627 = vadd.f32 %v6505, %v6615
    %v6628 = vadd.f32 %v6507, %v6617
    %v6630 = vsel %vm2310, %v6143, 0
    %v6633 = vsel %vm2310, %v6149, 0
    %v6636 = vsel %vm2310, %v6155, 0
    %v6639 = vsel %vm2310, %v6161, 0
    %v6642 = vsel %vm2310, %v6167, 0
    %6644 = vmatprep.subr.mxu0 %v2700
    %6645 = vmatpush1.msra.mxu0 %v2699
    %6646 = vmatprep.subr.mxu0 %v2702
    %6647 = vmatpush1.msra.mxu0 %v2701
    %6648 = vmatprep.subr.mxu0 %v2704
    %6649 = vmatpush1.msra.mxu0 %v2703
    %6650 = vmatprep.subr.mxu0 %v2706
    %6651 = vmatpush1.msra.mxu0 %v2705
    %6652 = vmatprep.subr.mxu0 %v2708
    %6653 = vmatpush1.msra.mxu0 %v2707
    %6654 = vmatprep.subr.mxu0 %v2710
    %6655 = vmatpush1.msra.mxu0 %v2709
    %6656 = vmatprep.subr.mxu0 %v2712
    %6657 = vmatpush1.msra.mxu0 %v2711
    %6658 = vmatprep.subr.mxu0 %v2714
    %6659 = vmatpush1.msra.mxu0 %v2713
    %6660 = vmatprep.subr.mxu0 %v2716
    %6661 = vmatpush1.msra.mxu0 %v2715
    %6662 = vmatprep.subr.mxu0 %v2718
    %6663 = vmatpush1.msra.mxu0 %v2717
    %6664 = vmatprep.subr.mxu0 %v2720
    %6665 = vmatpush1.msra.mxu0 %v2719
    %6666 = vmatprep.subr.mxu0 %v2722
    %6667 = vmatpush1.msra.mxu0 %v2721
    %6668 = vmatprep.subr.mxu0 %v2724
    %6669 = vmatpush1.msra.mxu0 %v2723
    %6670 = vmatprep.subr.mxu0 %v2726
    %6671 = vmatpush1.msra.mxu0 %v2725
    %6672 = vmatprep.subr.mxu0 %v2728
    %6673 = vmatpush1.msra.mxu0 %v2727
    %6674 = vmatprep.subr.mxu0 %v2730
    %6675 = vmatpush1.msra.mxu0 %v2729
    %6676 = vmatprep.subr.mxu0 %v2732
    %6677 = vmatpush1.msra.mxu0 %v2731
    %6678 = vmatprep.subr.mxu0 %v2734
    %6679 = vmatpush1.msra.mxu0 %v2733
    %6680 = vmatprep.subr.mxu0 %v2736
    %6681 = vmatpush1.msra.mxu0 %v2735
    %6682 = vmatprep.subr.mxu0 %v2738
    %6683 = vmatpush1.msra.mxu0 %v2737
    %6684 = vmatprep.subr.mxu0 %v2740
    %6685 = vmatpush1.msra.mxu0 %v2739
    %6686 = vmatprep.subr.mxu0 %v2742
    %6687 = vmatpush1.msra.mxu0 %v2741
    %6688 = vmatprep.subr.mxu0 %v2744
    %6689 = vmatpush1.msra.mxu0 %v2743
    %6690 = vmatprep.subr.mxu0 %v2746
    %6691 = vmatpush1.msra.mxu0 %v2745
    %6692 = vmatprep.subr.mxu0 0.0
    %6693 = vmatpush1.msra.mxu0 0.0
    %6694 = vmatprep.subr.mxu0 0.0
    %6695 = vmatpush1.msra.mxu0 0.0
    %6696 = vmatprep.subr.mxu0 0.0
    %6697 = vmatpush1.msra.mxu0 0.0
    %6698 = vmatprep.subr.mxu0 0.0
    %6699 = vmatpush1.msra.mxu0 0.0
    %6700 = vmatprep.subr.mxu0 0.0
    %6701 = vmatpush1.msra.mxu0 0.0
    %6702 = vmatprep.subr.mxu0 0.0
    %6703 = vmatpush1.msra.mxu0 0.0
    %6704 = vmatprep.subr.mxu0 0.0
    %6705 = vmatpush1.msra.mxu0 0.0
    %6706 = vmatprep.subr.mxu0 0.0
    %6707 = vmatpush1.msra.mxu0 0.0
    %6708 = vmatprep.mubr.f32.mxu0 %v6630
    %6709 = vmatmul.mubr.f32.gmra.mrb[0].mxu0 %v6141
    %v6710 = vpop.f32.mrb[0].mxu0
    %v6711 = vadd.f32 0.0, %v6710
    %v6712 = vpop.f32.mrb[0].mxu0
    %v6713 = vadd.f32 0.0, %v6712
    %6714 = vmatprep.mubr.f32.mxu0 %v6633
    %6715 = vmatmul.mubr.f32.gmra.mrb[0].mxu0 %v6147
    %v6716 = vpop.f32.mrb[0].mxu0
    %v6717 = vadd.f32 0.0, %v6716
    %v6718 = vpop.f32.mrb[0].mxu0
    %v6719 = vadd.f32 0.0, %v6718
    %6720 = vmatprep.mubr.f32.mxu0 %v6636
    %6721 = vmatmul.mubr.f32.gmra.mrb[0].mxu0 %v6153
    %v6722 = vpop.f32.mrb[0].mxu0
    %v6723 = vadd.f32 0.0, %v6722
    %v6724 = vpop.f32.mrb[0].mxu0
    %v6725 = vadd.f32 0.0, %v6724
    %6726 = vmatprep.mubr.f32.mxu0 %v6639
    %6727 = vmatmul.mubr.f32.gmra.mrb[0].mxu0 %v6159
    %v6728 = vpop.f32.mrb[0].mxu0
    %v6729 = vadd.f32 0.0, %v6728
    %v6730 = vpop.f32.mrb[0].mxu0
    %v6731 = vadd.f32 0.0, %v6730
    %6732 = vmatprep.mubr.f32.mxu0 %v6642
    %6733 = vmatmul.mubr.f32.gmra.mrb[0].mxu0 %v6165
    %v6734 = vpop.f32.mrb[0].mxu0
    %v6735 = vadd.f32 0.0, %v6734
    %v6736 = vpop.f32.mrb[0].mxu0
    %v6737 = vadd.f32 0.0, %v6736
    %6738 = vdwg.mxu0
    %v6739 = vadd.f32 %v6619, %v6711
    %v6740 = vadd.f32 %v6620, %v6713
    %v6741 = vadd.f32 %v6621, %v6717
    %v6742 = vadd.f32 %v6622, %v6719
    %v6743 = vadd.f32 %v6623, %v6723
    %v6744 = vadd.f32 %v6624, %v6725
    %v6745 = vadd.f32 %v6625, %v6729
    %v6746 = vadd.f32 %v6626, %v6731
    %v6747 = vadd.f32 %v6627, %v6735
    %v6748 = vadd.f32 %v6628, %v6737
    %v6750 = vsel %vm2310, %v6173, 0
    %v6753 = vsel %vm2310, %v6179, 0
    %v6756 = vsel %vm2310, %v6185, 0
    %v6759 = vsel %vm2310, %v6191, 0
    %v6762 = vsel %vm2310, %v6197, 0
    %6764 = vmatprep.subr.mxu0 %v2868
    %6765 = vmatpush1.msra.mxu0 %v2867
    %6766 = vmatprep.subr.mxu0 %v2870
    %6767 = vmatpush1.msra.mxu0 %v2869
    %6768 = vmatprep.subr.mxu0 %v2872
    %6769 = vmatpush1.msra.mxu0 %v2871
    %6770 = vmatprep.subr.mxu0 %v2874
    %6771 = vmatpush1.msra.mxu0 %v2873
    %6772 = vmatprep.subr.mxu0 %v2876
    %6773 = vmatpush1.msra.mxu0 %v2875
    %6774 = vmatprep.subr.mxu0 %v2878
    %6775 = vmatpush1.msra.mxu0 %v2877
    %6776 = vmatprep.subr.mxu0 %v2880
    %6777 = vmatpush1.msra.mxu0 %v2879
    %6778 = vmatprep.subr.mxu0 %v2882
    %6779 = vmatpush1.msra.mxu0 %v2881
    %6780 = vmatprep.subr.mxu0 %v2884
    %6781 = vmatpush1.msra.mxu0 %v2883
    %6782 = vmatprep.subr.mxu0 %v2886
    %6783 = vmatpush1.msra.mxu0 %v2885
    %6784 = vmatprep.subr.mxu0 %v2888
    %6785 = vmatpush1.msra.mxu0 %v2887
    %6786 = vmatprep.subr.mxu0 %v2890
    %6787 = vmatpush1.msra.mxu0 %v2889
    %6788 = vmatprep.subr.mxu0 %v2892
    %6789 = vmatpush1.msra.mxu0 %v2891
    %6790 = vmatprep.subr.mxu0 %v2894
    %6791 = vmatpush1.msra.mxu0 %v2893
    %6792 = vmatprep.subr.mxu0 %v2896
    %6793 = vmatpush1.msra.mxu0 %v2895
    %6794 = vmatprep.subr.mxu0 %v2898
    %6795 = vmatpush1.msra.mxu0 %v2897
    %6796 = vmatprep.subr.mxu0 %v2900
    %6797 = vmatpush1.msra.mxu0 %v2899
    %6798 = vmatprep.subr.mxu0 %v2902
    %6799 = vmatpush1.msra.mxu0 %v2901
    %6800 = vmatprep.subr.mxu0 %v2904
    %6801 = vmatpush1.msra.mxu0 %v2903
    %6802 = vmatprep.subr.mxu0 %v2906
    %6803 = vmatpush1.msra.mxu0 %v2905
    %6804 = vmatprep.subr.mxu0 %v2908
    %6805 = vmatpush1.msra.mxu0 %v2907
    %6806 = vmatprep.subr.mxu0 %v2910
    %6807 = vmatpush1.msra.mxu0 %v2909
    %6808 = vmatprep.subr.mxu0 %v2912
    %6809 = vmatpush1.msra.mxu0 %v2911
    %6810 = vmatprep.subr.mxu0 %v2914
    %6811 = vmatpush1.msra.mxu0 %v2913
    %6812 = vmatprep.subr.mxu0 0.0
    %6813 = vmatpush1.msra.mxu0 0.0
    %6814 = vmatprep.subr.mxu0 0.0
    %6815 = vmatpush1.msra.mxu0 0.0
    %6816 = vmatprep.subr.mxu0 0.0
    %6817 = vmatpush1.msra.mxu0 0.0
    %6818 = vmatprep.subr.mxu0 0.0
    %6819 = vmatpush1.msra.mxu0 0.0
    %6820 = vmatprep.subr.mxu0 0.0
    %6821 = vmatpush1.msra.mxu0 0.0
    %6822 = vmatprep.subr.mxu0 0.0
    %6823 = vmatpush1.msra.mxu0 0.0
    %6824 = vmatprep.subr.mxu0 0.0
    %6825 = vmatpush1.msra.mxu0 0.0
    %6826 = vmatprep.subr.mxu0 0.0
    %6827 = vmatpush1.msra.mxu0 0.0
    %6828 = vmatprep.mubr.f32.mxu0 %v6750
    %6829 = vmatmul.mubr.f32.gmra.mrb[0].mxu0 %v6171
    %v6830 = vpop.f32.mrb[0].mxu0
    %v6831 = vadd.f32 0.0, %v6830
    %v6832 = vpop.f32.mrb[0].mxu0
    %v6833 = vadd.f32 0.0, %v6832
    %6834 = vmatprep.mubr.f32.mxu0 %v6753
    %6835 = vmatmul.mubr.f32.gmra.mrb[0].mxu0 %v6177
    %v6836 = vpop.f32.mrb[0].mxu0
    %v6837 = vadd.f32 0.0, %v6836
    %v6838 = vpop.f32.mrb[0].mxu0
    %v6839 = vadd.f32 0.0, %v6838
    %6840 = vmatprep.mubr.f32.mxu0 %v6756
    %6841 = vmatmul.mubr.f32.gmra.mrb[0].mxu0 %v6183
    %v6842 = vpop.f32.mrb[0].mxu0
    %v6843 = vadd.f32 0.0, %v6842
    %v6844 = vpop.f32.mrb[0].mxu0
    %v6845 = vadd.f32 0.0, %v6844
    %6846 = vmatprep.mubr.f32.mxu0 %v6759
    %6847 = vmatmul.mubr.f32.gmra.mrb[0].mxu0 %v6189
    %v6848 = vpop.f32.mrb[0].mxu0
    %v6849 = vadd.f32 0.0, %v6848
    %v6850 = vpop.f32.mrb[0].mxu0
    %v6851 = vadd.f32 0.0, %v6850
    %6852 = vmatprep.mubr.f32.mxu0 %v6762
    %6853 = vmatmul.mubr.f32.gmra.mrb[0].mxu0 %v6195
    %v6854 = vpop.f32.mrb[0].mxu0
    %v6855 = vadd.f32 0.0, %v6854
    %v6856 = vpop.f32.mrb[0].mxu0
    %v6857 = vadd.f32 0.0, %v6856
    %6858 = vdwg.mxu0
    %v6859 = vadd.f32 %v6739, %v6831
    %v6860 = vadd.f32 %v6740, %v6833
    %v6861 = vadd.f32 %v6741, %v6837
    %v6862 = vadd.f32 %v6742, %v6839
    %v6863 = vadd.f32 %v6743, %v6843
    %v6864 = vadd.f32 %v6744, %v6845
    %v6865 = vadd.f32 %v6745, %v6849
    %v6866 = vadd.f32 %v6746, %v6851
    %v6867 = vadd.f32 %v6747, %v6855
    %v6868 = vadd.f32 %v6748, %v6857
    %v6870 = vsel %vm2310, %v6203, 0
    %v6873 = vsel %vm2310, %v6209, 0
    %v6876 = vsel %vm2310, %v6215, 0
    %v6879 = vsel %vm2310, %v6221, 0
    %v6882 = vsel %vm2310, %v6227, 0
    %6884 = vmatprep.subr.mxu0 %v3036
    %6885 = vmatpush1.msra.mxu0 %v3035
    %6886 = vmatprep.subr.mxu0 %v3038
    %6887 = vmatpush1.msra.mxu0 %v3037
    %6888 = vmatprep.subr.mxu0 %v3040
    %6889 = vmatpush1.msra.mxu0 %v3039
    %6890 = vmatprep.subr.mxu0 %v3042
    %6891 = vmatpush1.msra.mxu0 %v3041
    %6892 = vmatprep.subr.mxu0 %v3044
    %6893 = vmatpush1.msra.mxu0 %v3043
    %6894 = vmatprep.subr.mxu0 %v3046
    %6895 = vmatpush1.msra.mxu0 %v3045
    %6896 = vmatprep.subr.mxu0 %v3048
    %6897 = vmatpush1.msra.mxu0 %v3047
    %6898 = vmatprep.subr.mxu0 %v3050
    %6899 = vmatpush1.msra.mxu0 %v3049
    %6900 = vmatprep.subr.mxu0 %v3052
    %6901 = vmatpush1.msra.mxu0 %v3051
    %6902 = vmatprep.subr.mxu0 %v3054
    %6903 = vmatpush1.msra.mxu0 %v3053
    %6904 = vmatprep.subr.mxu0 %v3056
    %6905 = vmatpush1.msra.mxu0 %v3055
    %6906 = vmatprep.subr.mxu0 %v3058
    %6907 = vmatpush1.msra.mxu0 %v3057
    %6908 = vmatprep.subr.mxu0 %v3060
    %6909 = vmatpush1.msra.mxu0 %v3059
    %6910 = vmatprep.subr.mxu0 %v3062
    %6911 = vmatpush1.msra.mxu0 %v3061
    %6912 = vmatprep.subr.mxu0 %v3064
    %6913 = vmatpush1.msra.mxu0 %v3063
    %6914 = vmatprep.subr.mxu0 %v3066
    %6915 = vmatpush1.msra.mxu0 %v3065
    %6916 = vmatprep.subr.mxu0 %v3068
    %6917 = vmatpush1.msra.mxu0 %v3067
    %6918 = vmatprep.subr.mxu0 %v3070
    %6919 = vmatpush1.msra.mxu0 %v3069
    %6920 = vmatprep.subr.mxu0 %v3072
    %6921 = vmatpush1.msra.mxu0 %v3071
    %6922 = vmatprep.subr.mxu0 %v3074
    %6923 = vmatpush1.msra.mxu0 %v3073
    %6924 = vmatprep.subr.mxu0 %v3076
    %6925 = vmatpush1.msra.mxu0 %v3075
    %6926 = vmatprep.subr.mxu0 %v3078
    %6927 = vmatpush1.msra.mxu0 %v3077
    %6928 = vmatprep.subr.mxu0 %v3080
    %6929 = vmatpush1.msra.mxu0 %v3079
    %6930 = vmatprep.subr.mxu0 %v3082
    %6931 = vmatpush1.msra.mxu0 %v3081
    %6932 = vmatprep.subr.mxu0 0.0
    %6933 = vmatpush1.msra.mxu0 0.0
    %6934 = vmatprep.subr.mxu0 0.0
    %6935 = vmatpush1.msra.mxu0 0.0
    %6936 = vmatprep.subr.mxu0 0.0
    %6937 = vmatpush1.msra.mxu0 0.0
    %6938 = vmatprep.subr.mxu0 0.0
    %6939 = vmatpush1.msra.mxu0 0.0
    %6940 = vmatprep.subr.mxu0 0.0
    %6941 = vmatpush1.msra.mxu0 0.0
    %6942 = vmatprep.subr.mxu0 0.0
    %6943 = vmatpush1.msra.mxu0 0.0
    %6944 = vmatprep.subr.mxu0 0.0
    %6945 = vmatpush1.msra.mxu0 0.0
    %6946 = vmatprep.subr.mxu0 0.0
    %6947 = vmatpush1.msra.mxu0 0.0
    %6948 = vmatprep.mubr.f32.mxu0 %v6870
    %6949 = vmatmul.mubr.f32.gmra.mrb[0].mxu0 %v6201
    %v6950 = vpop.f32.mrb[0].mxu0
    %v6951 = vadd.f32 0.0, %v6950
    %v6952 = vpop.f32.mrb[0].mxu0
    %v6953 = vadd.f32 0.0, %v6952
    %6954 = vmatprep.mubr.f32.mxu0 %v6873
    %6955 = vmatmul.mubr.f32.gmra.mrb[0].mxu0 %v6207
    %v6956 = vpop.f32.mrb[0].mxu0
    %v6957 = vadd.f32 0.0, %v6956
    %v6958 = vpop.f32.mrb[0].mxu0
    %v6959 = vadd.f32 0.0, %v6958
    %6960 = vmatprep.mubr.f32.mxu0 %v6876
    %6961 = vmatmul.mubr.f32.gmra.mrb[0].mxu0 %v6213
    %v6962 = vpop.f32.mrb[0].mxu0
    %v6963 = vadd.f32 0.0, %v6962
    %v6964 = vpop.f32.mrb[0].mxu0
    %v6965 = vadd.f32 0.0, %v6964
    %6966 = vmatprep.mubr.f32.mxu0 %v6879
    %6967 = vmatmul.mubr.f32.gmra.mrb[0].mxu0 %v6219
    %v6968 = vpop.f32.mrb[0].mxu0
    %v6969 = vadd.f32 0.0, %v6968
    %v6970 = vpop.f32.mrb[0].mxu0
    %v6971 = vadd.f32 0.0, %v6970
    %6972 = vmatprep.mubr.f32.mxu0 %v6882
    %6973 = vmatmul.mubr.f32.gmra.mrb[0].mxu0 %v6225
    %v6974 = vpop.f32.mrb[0].mxu0
    %v6975 = vadd.f32 0.0, %v6974
    %v6976 = vpop.f32.mrb[0].mxu0
    %v6977 = vadd.f32 0.0, %v6976
    %6978 = vdwg.mxu0
    %v6979 = vadd.f32 %v6859, %v6951
    %v6980 = vadd.f32 %v6860, %v6953
    %v6981 = vadd.f32 %v6861, %v6957
    %v6982 = vadd.f32 %v6862, %v6959
    %v6983 = vadd.f32 %v6863, %v6963
    %v6984 = vadd.f32 %v6864, %v6965
    %v6985 = vadd.f32 %v6865, %v6969
    %v6986 = vadd.f32 %v6866, %v6971
    %v6987 = vadd.f32 %v6867, %v6975
    %v6988 = vadd.f32 %v6868, %v6977
    %v6990 = vsel %vm2310, %v6233, 0
    %v6993 = vsel %vm2310, %v6239, 0
    %v6996 = vsel %vm2310, %v6245, 0
    %v6999 = vsel %vm2310, %v6251, 0
    %v7002 = vsel %vm2310, %v6257, 0
    %7004 = vmatprep.subr.mxu0 %v3204
    %7005 = vmatpush1.msra.mxu0 %v3203
    %7006 = vmatprep.subr.mxu0 %v3206
    %7007 = vmatpush1.msra.mxu0 %v3205
    %7008 = vmatprep.subr.mxu0 %v3208
    %7009 = vmatpush1.msra.mxu0 %v3207
    %7010 = vmatprep.subr.mxu0 %v3210
    %7011 = vmatpush1.msra.mxu0 %v3209
    %7012 = vmatprep.subr.mxu0 %v3212
    %7013 = vmatpush1.msra.mxu0 %v3211
    %7014 = vmatprep.subr.mxu0 %v3214
    %7015 = vmatpush1.msra.mxu0 %v3213
    %7016 = vmatprep.subr.mxu0 %v3216
    %7017 = vmatpush1.msra.mxu0 %v3215
    %7018 = vmatprep.subr.mxu0 %v3218
    %7019 = vmatpush1.msra.mxu0 %v3217
    %7020 = vmatprep.subr.mxu0 %v3220
    %7021 = vmatpush1.msra.mxu0 %v3219
    %7022 = vmatprep.subr.mxu0 %v3222
    %7023 = vmatpush1.msra.mxu0 %v3221
    %7024 = vmatprep.subr.mxu0 %v3224
    %7025 = vmatpush1.msra.mxu0 %v3223
    %7026 = vmatprep.subr.mxu0 %v3226
    %7027 = vmatpush1.msra.mxu0 %v3225
    %7028 = vmatprep.subr.mxu0 %v3228
    %7029 = vmatpush1.msra.mxu0 %v3227
    %7030 = vmatprep.subr.mxu0 %v3230
    %7031 = vmatpush1.msra.mxu0 %v3229
    %7032 = vmatprep.subr.mxu0 %v3232
    %7033 = vmatpush1.msra.mxu0 %v3231
    %7034 = vmatprep.subr.mxu0 %v3234
    %7035 = vmatpush1.msra.mxu0 %v3233
    %7036 = vmatprep.subr.mxu0 %v3236
    %7037 = vmatpush1.msra.mxu0 %v3235
    %7038 = vmatprep.subr.mxu0 %v3238
    %7039 = vmatpush1.msra.mxu0 %v3237
    %7040 = vmatprep.subr.mxu0 %v3240
    %7041 = vmatpush1.msra.mxu0 %v3239
    %7042 = vmatprep.subr.mxu0 %v3242
    %7043 = vmatpush1.msra.mxu0 %v3241
    %7044 = vmatprep.subr.mxu0 %v3244
    %7045 = vmatpush1.msra.mxu0 %v3243
    %7046 = vmatprep.subr.mxu0 %v3246
    %7047 = vmatpush1.msra.mxu0 %v3245
    %7048 = vmatprep.subr.mxu0 %v3248
    %7049 = vmatpush1.msra.mxu0 %v3247
    %7050 = vmatprep.subr.mxu0 %v3250
    %7051 = vmatpush1.msra.mxu0 %v3249
    %7052 = vmatprep.subr.mxu0 0.0
    %7053 = vmatpush1.msra.mxu0 0.0
    %7054 = vmatprep.subr.mxu0 0.0
    %7055 = vmatpush1.msra.mxu0 0.0
    %7056 = vmatprep.subr.mxu0 0.0
    %7057 = vmatpush1.msra.mxu0 0.0
    %7058 = vmatprep.subr.mxu0 0.0
    %7059 = vmatpush1.msra.mxu0 0.0
    %7060 = vmatprep.subr.mxu0 0.0
    %7061 = vmatpush1.msra.mxu0 0.0
    %7062 = vmatprep.subr.mxu0 0.0
    %7063 = vmatpush1.msra.mxu0 0.0
    %7064 = vmatprep.subr.mxu0 0.0
    %7065 = vmatpush1.msra.mxu0 0.0
    %7066 = vmatprep.subr.mxu0 0.0
    %7067 = vmatpush1.msra.mxu0 0.0
    %7068 = vmatprep.mubr.f32.mxu0 %v6990
    %7069 = vmatmul.mubr.f32.gmra.mrb[0].mxu0 %v6231
    %v7070 = vpop.f32.mrb[0].mxu0
    %v7071 = vadd.f32 0.0, %v7070
    %v7072 = vpop.f32.mrb[0].mxu0
    %v7073 = vadd.f32 0.0, %v7072
    %7074 = vmatprep.mubr.f32.mxu0 %v6993
    %7075 = vmatmul.mubr.f32.gmra.mrb[0].mxu0 %v6237
    %v7076 = vpop.f32.mrb[0].mxu0
    %v7077 = vadd.f32 0.0, %v7076
    %v7078 = vpop.f32.mrb[0].mxu0
    %v7079 = vadd.f32 0.0, %v7078
    %7080 = vmatprep.mubr.f32.mxu0 %v6996
    %7081 = vmatmul.mubr.f32.gmra.mrb[0].mxu0 %v6243
    %v7082 = vpop.f32.mrb[0].mxu0
    %v7083 = vadd.f32 0.0, %v7082
    %v7084 = vpop.f32.mrb[0].mxu0
    %v7085 = vadd.f32 0.0, %v7084
    %7086 = vmatprep.mubr.f32.mxu0 %v6999
    %7087 = vmatmul.mubr.f32.gmra.mrb[0].mxu0 %v6249
    %v7088 = vpop.f32.mrb[0].mxu0
    %v7089 = vadd.f32 0.0, %v7088
    %v7090 = vpop.f32.mrb[0].mxu0
    %v7091 = vadd.f32 0.0, %v7090
    %7092 = vmatprep.mubr.f32.mxu0 %v7002
    %7093 = vmatmul.mubr.f32.gmra.mrb[0].mxu0 %v6255
    %v7094 = vpop.f32.mrb[0].mxu0
    %v7095 = vadd.f32 0.0, %v7094
    %v7096 = vpop.f32.mrb[0].mxu0
    %v7097 = vadd.f32 0.0, %v7096
    %7098 = vdwg.mxu0
    %v7099 = vadd.f32 %v6979, %v7071
    %v7100 = vadd.f32 %v6980, %v7073
    %v7101 = vadd.f32 %v6981, %v7077
    %v7102 = vadd.f32 %v6982, %v7079
    %v7103 = vadd.f32 %v6983, %v7083
    %v7104 = vadd.f32 %v6984, %v7085
    %v7105 = vadd.f32 %v6985, %v7089
    %v7106 = vadd.f32 %v6986, %v7091
    %v7107 = vadd.f32 %v6987, %v7095
    %v7108 = vadd.f32 %v6988, %v7097
    %v7110 = vsel %vm2310, %v6263, 0
    %v7113 = vsel %vm2310, %v6269, 0
    %v7116 = vsel %vm2310, %v6275, 0
    %v7119 = vsel %vm2310, %v6281, 0
    %v7122 = vsel %vm2310, %v6287, 0
    %7124 = vmatprep.subr.mxu0 %v3372
    %7125 = vmatpush1.msra.mxu0 %v3371
    %7126 = vmatprep.subr.mxu0 %v3374
    %7127 = vmatpush1.msra.mxu0 %v3373
    %7128 = vmatprep.subr.mxu0 %v3376
    %7129 = vmatpush1.msra.mxu0 %v3375
    %7130 = vmatprep.subr.mxu0 %v3378
    %7131 = vmatpush1.msra.mxu0 %v3377
    %7132 = vmatprep.subr.mxu0 %v3380
    %7133 = vmatpush1.msra.mxu0 %v3379
    %7134 = vmatprep.subr.mxu0 %v3382
    %7135 = vmatpush1.msra.mxu0 %v3381
    %7136 = vmatprep.subr.mxu0 %v3384
    %7137 = vmatpush1.msra.mxu0 %v3383
    %7138 = vmatprep.subr.mxu0 %v3386
    %7139 = vmatpush1.msra.mxu0 %v3385
    %7140 = vmatprep.subr.mxu0 %v3388
    %7141 = vmatpush1.msra.mxu0 %v3387
    %7142 = vmatprep.subr.mxu0 %v3390
    %7143 = vmatpush1.msra.mxu0 %v3389
    %7144 = vmatprep.subr.mxu0 %v3392
    %7145 = vmatpush1.msra.mxu0 %v3391
    %7146 = vmatprep.subr.mxu0 %v3394
    %7147 = vmatpush1.msra.mxu0 %v3393
    %7148 = vmatprep.subr.mxu0 %v3396
    %7149 = vmatpush1.msra.mxu0 %v3395
    %7150 = vmatprep.subr.mxu0 %v3398
    %7151 = vmatpush1.msra.mxu0 %v3397
    %7152 = vmatprep.subr.mxu0 %v3400
    %7153 = vmatpush1.msra.mxu0 %v3399
    %7154 = vmatprep.subr.mxu0 %v3402
    %7155 = vmatpush1.msra.mxu0 %v3401
    %7156 = vmatprep.subr.mxu0 %v3404
    %7157 = vmatpush1.msra.mxu0 %v3403
    %7158 = vmatprep.subr.mxu0 %v3406
    %7159 = vmatpush1.msra.mxu0 %v3405
    %7160 = vmatprep.subr.mxu0 %v3408
    %7161 = vmatpush1.msra.mxu0 %v3407
    %7162 = vmatprep.subr.mxu0 %v3410
    %7163 = vmatpush1.msra.mxu0 %v3409
    %7164 = vmatprep.subr.mxu0 %v3412
    %7165 = vmatpush1.msra.mxu0 %v3411
    %7166 = vmatprep.subr.mxu0 %v3414
    %7167 = vmatpush1.msra.mxu0 %v3413
    %7168 = vmatprep.subr.mxu0 %v3416
    %7169 = vmatpush1.msra.mxu0 %v3415
    %7170 = vmatprep.subr.mxu0 %v3418
    %7171 = vmatpush1.msra.mxu0 %v3417
    %7172 = vmatprep.subr.mxu0 0.0
    %7173 = vmatpush1.msra.mxu0 0.0
    %7174 = vmatprep.subr.mxu0 0.0
    %7175 = vmatpush1.msra.mxu0 0.0
    %7176 = vmatprep.subr.mxu0 0.0
    %7177 = vmatpush1.msra.mxu0 0.0
    %7178 = vmatprep.subr.mxu0 0.0
    %7179 = vmatpush1.msra.mxu0 0.0
    %7180 = vmatprep.subr.mxu0 0.0
    %7181 = vmatpush1.msra.mxu0 0.0
    %7182 = vmatprep.subr.mxu0 0.0
    %7183 = vmatpush1.msra.mxu0 0.0
    %7184 = vmatprep.subr.mxu0 0.0
    %7185 = vmatpush1.msra.mxu0 0.0
    %7186 = vmatprep.subr.mxu0 0.0
    %7187 = vmatpush1.msra.mxu0 0.0
    %7188 = vmatprep.mubr.f32.mxu0 %v7110
    %7189 = vmatmul.mubr.f32.gmra.mrb[0].mxu0 %v6261
    %v7190 = vpop.f32.mrb[0].mxu0
    %v7191 = vadd.f32 0.0, %v7190
    %v7192 = vpop.f32.mrb[0].mxu0
    %v7193 = vadd.f32 0.0, %v7192
    %7194 = vmatprep.mubr.f32.mxu0 %v7113
    %7195 = vmatmul.mubr.f32.gmra.mrb[0].mxu0 %v6267
    %v7196 = vpop.f32.mrb[0].mxu0
    %v7197 = vadd.f32 0.0, %v7196
    %v7198 = vpop.f32.mrb[0].mxu0
    %v7199 = vadd.f32 0.0, %v7198
    %7200 = vmatprep.mubr.f32.mxu0 %v7116
    %7201 = vmatmul.mubr.f32.gmra.mrb[0].mxu0 %v6273
    %v7202 = vpop.f32.mrb[0].mxu0
    %v7203 = vadd.f32 0.0, %v7202
    %v7204 = vpop.f32.mrb[0].mxu0
    %v7205 = vadd.f32 0.0, %v7204
    %7206 = vmatprep.mubr.f32.mxu0 %v7119
    %7207 = vmatmul.mubr.f32.gmra.mrb[0].mxu0 %v6279
    %v7208 = vpop.f32.mrb[0].mxu0
    %v7209 = vadd.f32 0.0, %v7208
    %v7210 = vpop.f32.mrb[0].mxu0
    %v7211 = vadd.f32 0.0, %v7210
    %7212 = vmatprep.mubr.f32.mxu0 %v7122
    %7213 = vmatmul.mubr.f32.gmra.mrb[0].mxu0 %v6285
    %v7214 = vpop.f32.mrb[0].mxu0
    %v7215 = vadd.f32 0.0, %v7214
    %v7216 = vpop.f32.mrb[0].mxu0
    %v7217 = vadd.f32 0.0, %v7216
    %7218 = vdwg.mxu0
    %v7219 = vadd.f32 %v7099, %v7191
    %v7220 = vadd.f32 %v7100, %v7193
    %v7221 = vadd.f32 %v7101, %v7197
    %v7222 = vadd.f32 %v7102, %v7199
    %v7223 = vadd.f32 %v7103, %v7203
    %v7224 = vadd.f32 %v7104, %v7205
    %v7225 = vadd.f32 %v7105, %v7209
    %v7226 = vadd.f32 %v7106, %v7211
    %v7227 = vadd.f32 %v7107, %v7215
    %v7228 = vadd.f32 %v7108, %v7217
    %v7229 = vadd.f32 %v7219, %v3544
    %v7230 = vadd.f32 %v7220, %v3548
    %v7231 = vadd.f32 %v7221, %v3544
    %v7232 = vadd.f32 %v7222, %v3548
    %v7233 = vadd.f32 %v7223, %v3544
    %v7234 = vadd.f32 %v7224, %v3548
    %v7235 = vadd.f32 %v7225, %v3544
    %v7236 = vadd.f32 %v7226, %v3548
    %v7237 = vadd.f32 %v7227, %v3544
    %v7238 = vadd.f32 %v7228, %v3548
    %vm7239 = vcmp.gt.f32.partialorder %v7229, 0.0
    %vm7240 = vcmp.gt.f32.partialorder %v7230, 0.0
    %vm7241 = vcmp.gt.f32.partialorder %v7231, 0.0
    %vm7242 = vcmp.gt.f32.partialorder %v7232, 0.0
    %vm7243 = vcmp.gt.f32.partialorder %v7233, 0.0
    %vm7244 = vcmp.gt.f32.partialorder %v7234, 0.0
    %vm7245 = vcmp.gt.f32.partialorder %v7235, 0.0
    %vm7246 = vcmp.gt.f32.partialorder %v7236, 0.0
    %vm7247 = vcmp.gt.f32.partialorder %v7237, 0.0
    %vm7248 = vcmp.gt.f32.partialorder %v7238, 0.0
    %v7249 = vmin.f32 %v7229, 0.0
    %v7250 = vmin.f32 %v7230, 0.0
    %v7251 = vmin.f32 %v7231, 0.0
    %v7252 = vmin.f32 %v7232, 0.0
    %v7253 = vmin.f32 %v7233, 0.0
    %v7254 = vmin.f32 %v7234, 0.0
    %v7255 = vmin.f32 %v7235, 0.0
    %v7256 = vmin.f32 %v7236, 0.0
    %v7257 = vmin.f32 %v7237, 0.0
    %v7258 = vmin.f32 %v7238, 0.0
    %v7259 = vmul.f32 %v7249, 1.442695
    %v7260 = vpow.pop %v7259
    %v7261 = vmul.f32 %v7250, 1.442695
    %v7262 = vpow.pop %v7261
    %v7263 = vmul.f32 %v7251, 1.442695
    %v7264 = vpow.pop %v7263
    %v7265 = vmul.f32 %v7252, 1.442695
    %v7266 = vpow.pop %v7265
    %v7267 = vmul.f32 %v7253, 1.442695
    %v7268 = vpow.pop %v7267
    %v7269 = vmul.f32 %v7254, 1.442695
    %v7270 = vpow.pop %v7269
    %v7271 = vmul.f32 %v7255, 1.442695
    %v7272 = vpow.pop %v7271
    %v7273 = vmul.f32 %v7256, 1.442695
    %v7274 = vpow.pop %v7273
    %v7275 = vmul.f32 %v7257, 1.442695
    %v7276 = vpow.pop %v7275
    %v7277 = vmul.f32 %v7258, 1.442695
    %v7278 = vpow.pop %v7277
    %v7279 = vsub.f32 %v7260, 1.0
    %v7280 = vsub.f32 %v7262, 1.0
    %v7281 = vsub.f32 %v7264, 1.0
    %v7282 = vsub.f32 %v7266, 1.0
    %v7283 = vsub.f32 %v7268, 1.0
    %v7284 = vsub.f32 %v7270, 1.0
    %v7285 = vsub.f32 %v7272, 1.0
    %v7286 = vsub.f32 %v7274, 1.0
    %v7287 = vsub.f32 %v7276, 1.0
    %v7288 = vsub.f32 %v7278, 1.0
    %v7289 = vsel %vm7239, %v7229, %v7279
    %v7290 = vsel %vm7240, %v7230, %v7280
    %v7291 = vsel %vm7241, %v7231, %v7281
    %v7292 = vsel %vm7242, %v7232, %v7282
    %v7293 = vsel %vm7243, %v7233, %v7283
    %v7294 = vsel %vm7244, %v7234, %v7284
    %v7295 = vsel %vm7245, %v7235, %v7285
    %v7296 = vsel %vm7246, %v7236, %v7286
    %v7297 = vsel %vm7247, %v7237, %v7287
    %v7298 = vsel %vm7248, %v7238, %v7288
    %7299 = vmatprep.subr.mxu0 %v7290
    %7300 = vmatpush1.msra.mxu0 %v7289
    %7301 = vmatprep.subr.mxu0 %v7292
    %7302 = vmatpush1.msra.mxu0 %v7291
    %7303 = vmatprep.subr.mxu0 %v7294
    %7304 = vmatpush1.msra.mxu0 %v7293
    %7305 = vmatprep.subr.mxu0 %v7296
    %7306 = vmatpush1.msra.mxu0 %v7295
    %7307 = vmatprep.subr.mxu0 %v7298
    %7308 = vmatpush1.msra.mxu0 %v7297
    %7309 = vmatprep.subr.mxu0 0.0
    %7310 = vmatpush1.msra.mxu0 0.0
    %7311 = vmatprep.subr.mxu0 0.0
    %7312 = vmatpush1.msra.mxu0 0.0
    %7313 = vmatprep.subr.mxu0 0.0
    %7314 = vmatpush1.msra.mxu0 0.0
    %7315 = vmatprep.subr.mxu0 0.0
    %7316 = vmatpush1.msra.mxu0 0.0
    %7317 = vmatprep.subr.mxu0 0.0
    %7318 = vmatpush1.msra.mxu0 0.0
    %7319 = vmatprep.subr.mxu0 0.0
    %7320 = vmatpush1.msra.mxu0 0.0
    %7321 = vmatprep.subr.mxu0 0.0
    %7322 = vmatpush1.msra.mxu0 0.0
    %7323 = vmatprep.subr.mxu0 0.0
    %7324 = vmatpush1.msra.mxu0 0.0
    %7325 = vmatprep.subr.mxu0 0.0
    %7326 = vmatpush1.msra.mxu0 0.0
    %7327 = vmatprep.subr.mxu0 0.0
    %7328 = vmatpush1.msra.mxu0 0.0
    %7329 = vmatprep.subr.mxu0 0.0
    %7330 = vmatpush1.msra.mxu0 0.0
    %7331 = vmatprep.subr.mxu0 0.0
    %7332 = vmatpush1.msra.mxu0 0.0
    %7333 = vmatprep.subr.mxu0 0.0
    %7334 = vmatpush1.msra.mxu0 0.0
    %7335 = vmatprep.subr.mxu0 0.0
    %7336 = vmatpush1.msra.mxu0 0.0
    %7337 = vmatprep.subr.mxu0 0.0
    %7338 = vmatpush1.msra.mxu0 0.0
    %7339 = vmatprep.subr.mxu0 0.0
    %7340 = vmatpush1.msra.mxu0 0.0
    %7341 = vmatprep.subr.mxu0 0.0
    %7342 = vmatpush1.msra.mxu0 0.0
    %7343 = vmatprep.subr.mxu0 0.0
    %7344 = vmatpush1.msra.mxu0 0.0
    %7345 = vmatprep.subr.mxu0 0.0
    %7346 = vmatpush1.msra.mxu0 0.0
    %7347 = vmatprep.subr.mxu0 0.0
    %7348 = vmatpush1.msra.mxu0 0.0
    %7349 = vmatprep.subr.mxu0 0.0
    %7350 = vmatpush1.msra.mxu0 0.0
    %7351 = vmatprep.subr.mxu0 0.0
    %7352 = vmatpush1.msra.mxu0 0.0
    %7353 = vmatprep.subr.mxu0 0.0
    %7354 = vmatpush1.msra.mxu0 0.0
    %7355 = vmatprep.subr.mxu0 0.0
    %7356 = vmatpush1.msra.mxu0 0.0
    %7357 = vmatprep.subr.mxu0 0.0
    %7358 = vmatpush1.msra.mxu0 0.0
    %7359 = vmatprep.subr.mxu0 0.0
    %7360 = vmatpush1.msra.mxu0 0.0
    %7361 = vmatprep.subr.mxu0 0.0
    %7362 = vmatpush1.msra.mxu0 0.0
    %7363 = vmatprep.mubr.f32.mxu0 0.0
    %7364 = vmatmul.mubr.f32.gmra.mrb[0].mxu0 %v3634
    %v7365 = vpop.f32.mrb[0].mxu0
    %v7366 = vadd.f32 0.0, %v7365
    %v7367 = vpop.f32.mrb[0].mxu0
    %v7368 = vadd.f32 0.0, %v7367
    %7369 = vmatprep.mubr.f32.mxu0 0.0
    %7370 = vmatmul.mubr.f32.gmra.mrb[0].mxu0 %v3637
    %v7371 = vpop.f32.mrb[0].mxu0
    %v7372 = vadd.f32 0.0, %v7371
    %v7373 = vpop.f32.mrb[0].mxu0
    %v7374 = vadd.f32 0.0, %v7373
    %7375 = vmatprep.mubr.f32.mxu0 0.0
    %7376 = vmatmul.mubr.f32.gmra.mrb[0].mxu0 %v3640
    %v7377 = vpop.f32.mrb[0].mxu0
    %v7378 = vadd.f32 0.0, %v7377
    %v7379 = vpop.f32.mrb[0].mxu0
    %v7380 = vadd.f32 0.0, %v7379
    %7381 = vmatprep.mubr.f32.mxu0 0.0
    %7382 = vmatmul.mubr.f32.gmra.mrb[0].mxu0 %v3643
    %v7383 = vpop.f32.mrb[0].mxu0
    %v7384 = vadd.f32 0.0, %v7383
    %v7385 = vpop.f32.mrb[0].mxu0
    %v7386 = vadd.f32 0.0, %v7385
    %7387 = vmatprep.mubr.f32.mxu0 0.0
    %7388 = vmatmul.mubr.f32.gmra.mrb[0].mxu0 %v3646
    %v7389 = vpop.f32.mrb[0].mxu0
    %v7390 = vadd.f32 0.0, %v7389
    %v7391 = vpop.f32.mrb[0].mxu0
    %v7392 = vadd.f32 0.0, %v7391
    %7393 = vmatprep.mubr.f32.mxu0 0.0
    %7394 = vmatmul.mubr.f32.gmra.mrb[0].mxu0 %v3649
    %v7395 = vpop.f32.mrb[0].mxu0
    %v7396 = vadd.f32 0.0, %v7395
    %v7397 = vpop.f32.mrb[0].mxu0
    %v7398 = vadd.f32 0.0, %v7397
    %7399 = vmatprep.mubr.f32.mxu0 0.0
    %7400 = vmatmul.mubr.f32.gmra.mrb[0].mxu0 %v3652
    %v7401 = vpop.f32.mrb[0].mxu0
    %v7402 = vadd.f32 0.0, %v7401
    %v7403 = vpop.f32.mrb[0].mxu0
    %v7404 = vadd.f32 0.0, %v7403
    %7405 = vmatprep.mubr.f32.mxu0 0.0
    %7406 = vmatmul.mubr.f32.gmra.mrb[0].mxu0 %v3655
    %v7407 = vpop.f32.mrb[0].mxu0
    %v7408 = vadd.f32 0.0, %v7407
    %v7409 = vpop.f32.mrb[0].mxu0
    %v7410 = vadd.f32 0.0, %v7409
    %7411 = vmatprep.mubr.f32.mxu0 0.0
    %7412 = vmatmul.mubr.f32.gmra.mrb[0].mxu0 %v3658
    %v7413 = vpop.f32.mrb[0].mxu0
    %v7414 = vadd.f32 0.0, %v7413
    %v7415 = vpop.f32.mrb[0].mxu0
    %v7416 = vadd.f32 0.0, %v7415
    %7417 = vmatprep.mubr.f32.mxu0 0.0
    %7418 = vmatmul.mubr.f32.gmra.mrb[0].mxu0 %v3661
    %v7419 = vpop.f32.mrb[0].mxu0
    %v7420 = vadd.f32 0.0, %v7419
    %v7421 = vpop.f32.mrb[0].mxu0
    %v7422 = vadd.f32 0.0, %v7421
    %7423 = vmatprep.mubr.f32.mxu0 0.0
    %7424 = vmatmul.mubr.f32.gmra.mrb[0].mxu0 %v3664
    %v7425 = vpop.f32.mrb[0].mxu0
    %v7426 = vadd.f32 0.0, %v7425
    %v7427 = vpop.f32.mrb[0].mxu0
    %v7428 = vadd.f32 0.0, %v7427
    %7429 = vmatprep.mubr.f32.mxu0 0.0
    %7430 = vmatmul.mubr.f32.gmra.mrb[0].mxu0 %v3667
    %v7431 = vpop.f32.mrb[0].mxu0
    %v7432 = vadd.f32 0.0, %v7431
    %v7433 = vpop.f32.mrb[0].mxu0
    %v7434 = vadd.f32 0.0, %v7433
    %7435 = vdwg.mxu0
    %v7437 = vsel %vm2310, %v7386, 0
    %v7440 = vsel %vm2310, %v7392, 0
    %v7443 = vsel %vm2310, %v7398, 0
    %7445 = vmatprep.subr.mxu0 %v3855
    %7446 = vmatpush1.msra.mxu0 %v3854
    %7447 = vmatprep.subr.mxu0 %v3857
    %7448 = vmatpush1.msra.mxu0 %v3856
    %7449 = vmatprep.subr.mxu0 %v3859
    %7450 = vmatpush1.msra.mxu0 %v3858
    %7451 = vmatprep.subr.mxu0 %v3861
    %7452 = vmatpush1.msra.mxu0 %v3860
    %7453 = vmatprep.subr.mxu0 %v3863
    %7454 = vmatpush1.msra.mxu0 %v3862
    %7455 = vmatprep.subr.mxu0 %v3865
    %7456 = vmatpush1.msra.mxu0 %v3864
    %7457 = vmatprep.subr.mxu0 %v3867
    %7458 = vmatpush1.msra.mxu0 %v3866
    %7459 = vmatprep.subr.mxu0 %v3869
    %7460 = vmatpush1.msra.mxu0 %v3868
    %7461 = vmatprep.subr.mxu0 %v3871
    %7462 = vmatpush1.msra.mxu0 %v3870
    %7463 = vmatprep.subr.mxu0 %v3873
    %7464 = vmatpush1.msra.mxu0 %v3872
    %7465 = vmatprep.subr.mxu0 %v3875
    %7466 = vmatpush1.msra.mxu0 %v3874
    %7467 = vmatprep.subr.mxu0 %v3877
    %7468 = vmatpush1.msra.mxu0 %v3876
    %7469 = vmatprep.subr.mxu0 %v3879
    %7470 = vmatpush1.msra.mxu0 %v3878
    %7471 = vmatprep.subr.mxu0 %v3881
    %7472 = vmatpush1.msra.mxu0 %v3880
    %7473 = vmatprep.subr.mxu0 %v3883
    %7474 = vmatpush1.msra.mxu0 %v3882
    %7475 = vmatprep.subr.mxu0 %v3885
    %7476 = vmatpush1.msra.mxu0 %v3884
    %7477 = vmatprep.subr.mxu0 %v3887
    %7478 = vmatpush1.msra.mxu0 %v3886
    %7479 = vmatprep.subr.mxu0 %v3889
    %7480 = vmatpush1.msra.mxu0 %v3888
    %7481 = vmatprep.subr.mxu0 %v3891
    %7482 = vmatpush1.msra.mxu0 %v3890
    %7483 = vmatprep.subr.mxu0 %v3893
    %7484 = vmatpush1.msra.mxu0 %v3892
    %7485 = vmatprep.subr.mxu0 %v3895
    %7486 = vmatpush1.msra.mxu0 %v3894
    %7487 = vmatprep.subr.mxu0 %v3897
    %7488 = vmatpush1.msra.mxu0 %v3896
    %7489 = vmatprep.subr.mxu0 %v3899
    %7490 = vmatpush1.msra.mxu0 %v3898
    %7491 = vmatprep.subr.mxu0 %v3901
    %7492 = vmatpush1.msra.mxu0 %v3900
    %7493 = vmatprep.subr.mxu0 0.0
    %7494 = vmatpush1.msra.mxu0 0.0
    %7495 = vmatprep.subr.mxu0 0.0
    %7496 = vmatpush1.msra.mxu0 0.0
    %7497 = vmatprep.subr.mxu0 0.0
    %7498 = vmatpush1.msra.mxu0 0.0
    %7499 = vmatprep.subr.mxu0 0.0
    %7500 = vmatpush1.msra.mxu0 0.0
    %7501 = vmatprep.subr.mxu0 0.0
    %7502 = vmatpush1.msra.mxu0 0.0
    %7503 = vmatprep.subr.mxu0 0.0
    %7504 = vmatpush1.msra.mxu0 0.0
    %7505 = vmatprep.subr.mxu0 0.0
    %7506 = vmatpush1.msra.mxu0 0.0
    %7507 = vmatprep.subr.mxu0 0.0
    %7508 = vmatpush1.msra.mxu0 0.0
    %7509 = vmatprep.mubr.f32.mxu0 %v7437
    %7510 = vmatmul.mubr.f32.gmra.mrb[0].mxu0 %v7384
    %v7511 = vpop.f32.mrb[0].mxu0
    %v7512 = vadd.f32 0.0, %v7511
    %v7513 = vpop.f32.mrb[0].mxu0
    %v7514 = vadd.f32 0.0, %v7513
    %7515 = vmatprep.mubr.f32.mxu0 %v7440
    %7516 = vmatmul.mubr.f32.gmra.mrb[0].mxu0 %v7390
    %v7517 = vpop.f32.mrb[0].mxu0
    %v7518 = vadd.f32 0.0, %v7517
    %v7519 = vpop.f32.mrb[0].mxu0
    %v7520 = vadd.f32 0.0, %v7519
    %7521 = vmatprep.mubr.f32.mxu0 %v7443
    %7522 = vmatmul.mubr.f32.gmra.mrb[0].mxu0 %v7396
    %v7523 = vpop.f32.mrb[0].mxu0
    %v7524 = vadd.f32 0.0, %v7523
    %v7525 = vpop.f32.mrb[0].mxu0
    %v7526 = vadd.f32 0.0, %v7525
    %7527 = vdwg.mxu0
    %v7529 = vsel %vm2310, %v7368, 0
    %v7532 = vsel %vm2310, %v7374, 0
    %v7535 = vsel %vm2310, %v7380, 0
    %7537 = vmatprep.subr.mxu0 %v3807
    %7538 = vmatpush1.msra.mxu0 %v3806
    %7539 = vmatprep.subr.mxu0 %v3809
    %7540 = vmatpush1.msra.mxu0 %v3808
    %7541 = vmatprep.subr.mxu0 %v3811
    %7542 = vmatpush1.msra.mxu0 %v3810
    %7543 = vmatprep.subr.mxu0 %v3813
    %7544 = vmatpush1.msra.mxu0 %v3812
    %7545 = vmatprep.subr.mxu0 %v3815
    %7546 = vmatpush1.msra.mxu0 %v3814
    %7547 = vmatprep.subr.mxu0 %v3817
    %7548 = vmatpush1.msra.mxu0 %v3816
    %7549 = vmatprep.subr.mxu0 %v3819
    %7550 = vmatpush1.msra.mxu0 %v3818
    %7551 = vmatprep.subr.mxu0 %v3821
    %7552 = vmatpush1.msra.mxu0 %v3820
    %7553 = vmatprep.subr.mxu0 %v3823
    %7554 = vmatpush1.msra.mxu0 %v3822
    %7555 = vmatprep.subr.mxu0 %v3825
    %7556 = vmatpush1.msra.mxu0 %v3824
    %7557 = vmatprep.subr.mxu0 %v3827
    %7558 = vmatpush1.msra.mxu0 %v3826
    %7559 = vmatprep.subr.mxu0 %v3829
    %7560 = vmatpush1.msra.mxu0 %v3828
    %7561 = vmatprep.subr.mxu0 %v3831
    %7562 = vmatpush1.msra.mxu0 %v3830
    %7563 = vmatprep.subr.mxu0 %v3833
    %7564 = vmatpush1.msra.mxu0 %v3832
    %7565 = vmatprep.subr.mxu0 %v3835
    %7566 = vmatpush1.msra.mxu0 %v3834
    %7567 = vmatprep.subr.mxu0 %v3837
    %7568 = vmatpush1.msra.mxu0 %v3836
    %7569 = vmatprep.subr.mxu0 %v3839
    %7570 = vmatpush1.msra.mxu0 %v3838
    %7571 = vmatprep.subr.mxu0 %v3841
    %7572 = vmatpush1.msra.mxu0 %v3840
    %7573 = vmatprep.subr.mxu0 %v3843
    %7574 = vmatpush1.msra.mxu0 %v3842
    %7575 = vmatprep.subr.mxu0 %v3845
    %7576 = vmatpush1.msra.mxu0 %v3844
    %7577 = vmatprep.subr.mxu0 %v3847
    %7578 = vmatpush1.msra.mxu0 %v3846
    %7579 = vmatprep.subr.mxu0 %v3849
    %7580 = vmatpush1.msra.mxu0 %v3848
    %7581 = vmatprep.subr.mxu0 %v3851
    %7582 = vmatpush1.msra.mxu0 %v3850
    %7583 = vmatprep.subr.mxu0 %v3853
    %7584 = vmatpush1.msra.mxu0 %v3852
    %7585 = vmatprep.subr.mxu0 0.0
    %7586 = vmatpush1.msra.mxu0 0.0
    %7587 = vmatprep.subr.mxu0 0.0
    %7588 = vmatpush1.msra.mxu0 0.0
    %7589 = vmatprep.subr.mxu0 0.0
    %7590 = vmatpush1.msra.mxu0 0.0
    %7591 = vmatprep.subr.mxu0 0.0
    %7592 = vmatpush1.msra.mxu0 0.0
    %7593 = vmatprep.subr.mxu0 0.0
    %7594 = vmatpush1.msra.mxu0 0.0
    %7595 = vmatprep.subr.mxu0 0.0
    %7596 = vmatpush1.msra.mxu0 0.0
    %7597 = vmatprep.subr.mxu0 0.0
    %7598 = vmatpush1.msra.mxu0 0.0
    %7599 = vmatprep.subr.mxu0 0.0
    %7600 = vmatpush1.msra.mxu0 0.0
    %7601 = vmatprep.mubr.f32.mxu0 %v7529
    %7602 = vmatmul.mubr.f32.gmra.mrb[0].mxu0 %v7366
    %v7603 = vpop.f32.mrb[0].mxu0
    %v7604 = vadd.f32 %v7512, %v7603
    %v7605 = vpop.f32.mrb[0].mxu0
    %v7606 = vadd.f32 %v7514, %v7605
    %7607 = vmatprep.mubr.f32.mxu0 %v7532
    %7608 = vmatmul.mubr.f32.gmra.mrb[0].mxu0 %v7372
    %v7609 = vpop.f32.mrb[0].mxu0
    %v7610 = vadd.f32 %v7518, %v7609
    %v7611 = vpop.f32.mrb[0].mxu0
    %v7612 = vadd.f32 %v7520, %v7611
    %7613 = vmatprep.mubr.f32.mxu0 %v7535
    %7614 = vmatmul.mubr.f32.gmra.mrb[0].mxu0 %v7378
    %v7615 = vpop.f32.mrb[0].mxu0
    %v7616 = vadd.f32 %v7524, %v7615
    %v7617 = vpop.f32.mrb[0].mxu0
    %v7618 = vadd.f32 %v7526, %v7617
    %7619 = vdwg.mxu0
    %v7621 = vsel %vm2310, %v7404, 0
    %v7624 = vsel %vm2310, %v7410, 0
    %v7627 = vsel %vm2310, %v7416, 0
    %7629 = vmatprep.subr.mxu0 %v4087
    %7630 = vmatpush1.msra.mxu0 %v4086
    %7631 = vmatprep.subr.mxu0 %v4089
    %7632 = vmatpush1.msra.mxu0 %v4088
    %7633 = vmatprep.subr.mxu0 %v4091
    %7634 = vmatpush1.msra.mxu0 %v4090
    %7635 = vmatprep.subr.mxu0 %v4093
    %7636 = vmatpush1.msra.mxu0 %v4092
    %7637 = vmatprep.subr.mxu0 %v4095
    %7638 = vmatpush1.msra.mxu0 %v4094
    %7639 = vmatprep.subr.mxu0 %v4097
    %7640 = vmatpush1.msra.mxu0 %v4096
    %7641 = vmatprep.subr.mxu0 %v4099
    %7642 = vmatpush1.msra.mxu0 %v4098
    %7643 = vmatprep.subr.mxu0 %v4101
    %7644 = vmatpush1.msra.mxu0 %v4100
    %7645 = vmatprep.subr.mxu0 %v4103
    %7646 = vmatpush1.msra.mxu0 %v4102
    %7647 = vmatprep.subr.mxu0 %v4105
    %7648 = vmatpush1.msra.mxu0 %v4104
    %7649 = vmatprep.subr.mxu0 %v4107
    %7650 = vmatpush1.msra.mxu0 %v4106
    %7651 = vmatprep.subr.mxu0 %v4109
    %7652 = vmatpush1.msra.mxu0 %v4108
    %7653 = vmatprep.subr.mxu0 %v4111
    %7654 = vmatpush1.msra.mxu0 %v4110
    %7655 = vmatprep.subr.mxu0 %v4113
    %7656 = vmatpush1.msra.mxu0 %v4112
    %7657 = vmatprep.subr.mxu0 %v4115
    %7658 = vmatpush1.msra.mxu0 %v4114
    %7659 = vmatprep.subr.mxu0 %v4117
    %7660 = vmatpush1.msra.mxu0 %v4116
    %7661 = vmatprep.subr.mxu0 %v4119
    %7662 = vmatpush1.msra.mxu0 %v4118
    %7663 = vmatprep.subr.mxu0 %v4121
    %7664 = vmatpush1.msra.mxu0 %v4120
    %7665 = vmatprep.subr.mxu0 %v4123
    %7666 = vmatpush1.msra.mxu0 %v4122
    %7667 = vmatprep.subr.mxu0 %v4125
    %7668 = vmatpush1.msra.mxu0 %v4124
    %7669 = vmatprep.subr.mxu0 %v4127
    %7670 = vmatpush1.msra.mxu0 %v4126
    %7671 = vmatprep.subr.mxu0 %v4129
    %7672 = vmatpush1.msra.mxu0 %v4128
    %7673 = vmatprep.subr.mxu0 %v4131
    %7674 = vmatpush1.msra.mxu0 %v4130
    %7675 = vmatprep.subr.mxu0 %v4133
    %7676 = vmatpush1.msra.mxu0 %v4132
    %7677 = vmatprep.subr.mxu0 0.0
    %7678 = vmatpush1.msra.mxu0 0.0
    %7679 = vmatprep.subr.mxu0 0.0
    %7680 = vmatpush1.msra.mxu0 0.0
    %7681 = vmatprep.subr.mxu0 0.0
    %7682 = vmatpush1.msra.mxu0 0.0
    %7683 = vmatprep.subr.mxu0 0.0
    %7684 = vmatpush1.msra.mxu0 0.0
    %7685 = vmatprep.subr.mxu0 0.0
    %7686 = vmatpush1.msra.mxu0 0.0
    %7687 = vmatprep.subr.mxu0 0.0
    %7688 = vmatpush1.msra.mxu0 0.0
    %7689 = vmatprep.subr.mxu0 0.0
    %7690 = vmatpush1.msra.mxu0 0.0
    %7691 = vmatprep.subr.mxu0 0.0
    %7692 = vmatpush1.msra.mxu0 0.0
    %7693 = vmatprep.mubr.f32.mxu0 %v7621
    %7694 = vmatmul.mubr.f32.gmra.mrb[0].mxu0 %v7402
    %v7695 = vpop.f32.mrb[0].mxu0
    %v7696 = vadd.f32 0.0, %v7695
    %v7697 = vpop.f32.mrb[0].mxu0
    %v7698 = vadd.f32 0.0, %v7697
    %7699 = vmatprep.mubr.f32.mxu0 %v7624
    %7700 = vmatmul.mubr.f32.gmra.mrb[0].mxu0 %v7408
    %v7701 = vpop.f32.mrb[0].mxu0
    %v7702 = vadd.f32 0.0, %v7701
    %v7703 = vpop.f32.mrb[0].mxu0
    %v7704 = vadd.f32 0.0, %v7703
    %7705 = vmatprep.mubr.f32.mxu0 %v7627
    %7706 = vmatmul.mubr.f32.gmra.mrb[0].mxu0 %v7414
    %v7707 = vpop.f32.mrb[0].mxu0
    %v7708 = vadd.f32 0.0, %v7707
    %v7709 = vpop.f32.mrb[0].mxu0
    %v7710 = vadd.f32 0.0, %v7709
    %7711 = vdwg.mxu0
    %v7712 = vadd.f32 %v7604, %v7696
    %v7713 = vadd.f32 %v7606, %v7698
    %v7714 = vadd.f32 %v7610, %v7702
    %v7715 = vadd.f32 %v7612, %v7704
    %v7716 = vadd.f32 %v7616, %v7708
    %v7717 = vadd.f32 %v7618, %v7710
    %v7719 = vsel %vm2310, %v7422, 0
    %v7722 = vsel %vm2310, %v7428, 0
    %v7725 = vsel %vm2310, %v7434, 0
    %7727 = vmatprep.subr.mxu0 %v4233
    %7728 = vmatpush1.msra.mxu0 %v4232
    %7729 = vmatprep.subr.mxu0 %v4235
    %7730 = vmatpush1.msra.mxu0 %v4234
    %7731 = vmatprep.subr.mxu0 %v4237
    %7732 = vmatpush1.msra.mxu0 %v4236
    %7733 = vmatprep.subr.mxu0 %v4239
    %7734 = vmatpush1.msra.mxu0 %v4238
    %7735 = vmatprep.subr.mxu0 %v4241
    %7736 = vmatpush1.msra.mxu0 %v4240
    %7737 = vmatprep.subr.mxu0 %v4243
    %7738 = vmatpush1.msra.mxu0 %v4242
    %7739 = vmatprep.subr.mxu0 %v4245
    %7740 = vmatpush1.msra.mxu0 %v4244
    %7741 = vmatprep.subr.mxu0 %v4247
    %7742 = vmatpush1.msra.mxu0 %v4246
    %7743 = vmatprep.subr.mxu0 %v4249
    %7744 = vmatpush1.msra.mxu0 %v4248
    %7745 = vmatprep.subr.mxu0 %v4251
    %7746 = vmatpush1.msra.mxu0 %v4250
    %7747 = vmatprep.subr.mxu0 %v4253
    %7748 = vmatpush1.msra.mxu0 %v4252
    %7749 = vmatprep.subr.mxu0 %v4255
    %7750 = vmatpush1.msra.mxu0 %v4254
    %7751 = vmatprep.subr.mxu0 %v4257
    %7752 = vmatpush1.msra.mxu0 %v4256
    %7753 = vmatprep.subr.mxu0 %v4259
    %7754 = vmatpush1.msra.mxu0 %v4258
    %7755 = vmatprep.subr.mxu0 %v4261
    %7756 = vmatpush1.msra.mxu0 %v4260
    %7757 = vmatprep.subr.mxu0 %v4263
    %7758 = vmatpush1.msra.mxu0 %v4262
    %7759 = vmatprep.subr.mxu0 %v4265
    %7760 = vmatpush1.msra.mxu0 %v4264
    %7761 = vmatprep.subr.mxu0 %v4267
    %7762 = vmatpush1.msra.mxu0 %v4266
    %7763 = vmatprep.subr.mxu0 %v4269
    %7764 = vmatpush1.msra.mxu0 %v4268
    %7765 = vmatprep.subr.mxu0 %v4271
    %7766 = vmatpush1.msra.mxu0 %v4270
    %7767 = vmatprep.subr.mxu0 %v4273
    %7768 = vmatpush1.msra.mxu0 %v4272
    %7769 = vmatprep.subr.mxu0 %v4275
    %7770 = vmatpush1.msra.mxu0 %v4274
    %7771 = vmatprep.subr.mxu0 %v4277
    %7772 = vmatpush1.msra.mxu0 %v4276
    %7773 = vmatprep.subr.mxu0 %v4279
    %7774 = vmatpush1.msra.mxu0 %v4278
    %7775 = vmatprep.subr.mxu0 0.0
    %7776 = vmatpush1.msra.mxu0 0.0
    %7777 = vmatprep.subr.mxu0 0.0
    %7778 = vmatpush1.msra.mxu0 0.0
    %7779 = vmatprep.subr.mxu0 0.0
    %7780 = vmatpush1.msra.mxu0 0.0
    %7781 = vmatprep.subr.mxu0 0.0
    %7782 = vmatpush1.msra.mxu0 0.0
    %7783 = vmatprep.subr.mxu0 0.0
    %7784 = vmatpush1.msra.mxu0 0.0
    %7785 = vmatprep.subr.mxu0 0.0
    %7786 = vmatpush1.msra.mxu0 0.0
    %7787 = vmatprep.subr.mxu0 0.0
    %7788 = vmatpush1.msra.mxu0 0.0
    %7789 = vmatprep.subr.mxu0 0.0
    %7790 = vmatpush1.msra.mxu0 0.0
    %7791 = vmatprep.mubr.f32.mxu0 %v7719
    %7792 = vmatmul.mubr.f32.gmra.mrb[0].mxu0 %v7420
    %v7793 = vpop.f32.mrb[0].mxu0
    %v7794 = vadd.f32 0.0, %v7793
    %v7795 = vpop.f32.mrb[0].mxu0
    %v7796 = vadd.f32 0.0, %v7795
    %7797 = vmatprep.mubr.f32.mxu0 %v7722
    %7798 = vmatmul.mubr.f32.gmra.mrb[0].mxu0 %v7426
    %v7799 = vpop.f32.mrb[0].mxu0
    %v7800 = vadd.f32 0.0, %v7799
    %v7801 = vpop.f32.mrb[0].mxu0
    %v7802 = vadd.f32 0.0, %v7801
    %7803 = vmatprep.mubr.f32.mxu0 %v7725
    %7804 = vmatmul.mubr.f32.gmra.mrb[0].mxu0 %v7432
    %v7805 = vpop.f32.mrb[0].mxu0
    %v7806 = vadd.f32 0.0, %v7805
    %v7807 = vpop.f32.mrb[0].mxu0
    %v7808 = vadd.f32 0.0, %v7807
    %7809 = vdwg.mxu0
    %v7810 = vadd.f32 %v7712, %v7794
    %v7811 = vadd.f32 %v7713, %v7796
    %v7812 = vadd.f32 %v7714, %v7800
    %v7813 = vadd.f32 %v7715, %v7802
    %v7814 = vadd.f32 %v7716, %v7806
    %v7815 = vadd.f32 %v7717, %v7808
    %v7816 = vadd.f32 %v7810, %v4383
    %v7817 = vadd.f32 %v7811, %v4387
    %v7818 = vadd.f32 %v7812, %v4383
    %v7819 = vadd.f32 %v7813, %v4387
    %v7820 = vadd.f32 %v7814, %v4383
    %v7821 = vadd.f32 %v7815, %v4387
    %vm7822 = vcmp.gt.f32.partialorder %v7816, 0.0
    %vm7823 = vcmp.gt.f32.partialorder %v7817, 0.0
    %vm7824 = vcmp.gt.f32.partialorder %v7818, 0.0
    %vm7825 = vcmp.gt.f32.partialorder %v7819, 0.0
    %vm7826 = vcmp.gt.f32.partialorder %v7820, 0.0
    %vm7827 = vcmp.gt.f32.partialorder %v7821, 0.0
    %v7828 = vmin.f32 %v7816, 0.0
    %v7829 = vmin.f32 %v7817, 0.0
    %v7830 = vmin.f32 %v7818, 0.0
    %v7831 = vmin.f32 %v7819, 0.0
    %v7832 = vmin.f32 %v7820, 0.0
    %v7833 = vmin.f32 %v7821, 0.0
    %v7834 = vmul.f32 %v7828, 1.442695
    %v7835 = vpow.pop %v7834
    %v7836 = vmul.f32 %v7829, 1.442695
    %v7837 = vpow.pop %v7836
    %v7838 = vmul.f32 %v7830, 1.442695
    %v7839 = vpow.pop %v7838
    %v7840 = vmul.f32 %v7831, 1.442695
    %v7841 = vpow.pop %v7840
    %v7842 = vmul.f32 %v7832, 1.442695
    %v7843 = vpow.pop %v7842
    %v7844 = vmul.f32 %v7833, 1.442695
    %v7845 = vpow.pop %v7844
    %v7846 = vsub.f32 %v7835, 1.0
    %v7847 = vsub.f32 %v7837, 1.0
    %v7848 = vsub.f32 %v7839, 1.0
    %v7849 = vsub.f32 %v7841, 1.0
    %v7850 = vsub.f32 %v7843, 1.0
    %v7851 = vsub.f32 %v7845, 1.0
    %v7852 = vsel %vm7822, %v7816, %v7846
    %v7853 = vsel %vm7823, %v7817, %v7847
    %v7854 = vsel %vm7824, %v7818, %v7848
    %v7855 = vsel %vm7825, %v7819, %v7849
    %v7856 = vsel %vm7826, %v7820, %v7850
    %v7857 = vsel %vm7827, %v7821, %v7851
    %v7861 = vrot.slane %v7852, 6
    %v7862 = vrot.slane %v7854, 6
    %v7863 = vsel %vm4435, %v7861, %v7862
    %v7864 = vrot.slane %v7856, 6
    %v7865 = vsel %vm4435, %v7862, %v7864
    %7866 = vrot.lane.b32.xlu0 %v7861, 64
    %v7867 = vpop.permute.xlu0 %7866
    %7868 = vrot.lane.b32.xlu0 %v7863, 64
    %v7869 = vpop.permute.xlu0 %7868
    %7870 = vrot.lane.b32.xlu0 %v7865, 64
    %v7871 = vpop.permute.xlu0 %7870
    %v7877 = vrot.slane %v7853, 4
    %v7878 = vrot.slane %v7855, 4
    %v7879 = vsel %vm1902, %v7877, %v7878
    %v7880 = vrot.slane %v7857, 4
    %v7881 = vsel %vm1902, %v7878, %v7880
    %v7884 = vsel %vm4435, %v7856, %v7867
    %v7885 = vsel %vm1902, %v7871, %v7877
    %v7886 = vsel %vm4461, %v7881, 0.0
    %v7887 = vld [vmem:[%s11] sm:$0xff]
    %v7888 = vld [vmem:[%s11 + $0x8] sm:$0xff]
    %v7889 = vld [vmem:[%s11 + $0x10] sm:$0xff]
    %v7890 = vld [vmem:[%s11 + $0x18] sm:$0xff]
    %v7891 = vld [vmem:[%s11 + $0x20] sm:$0xff]
    %v7892 = vld [vmem:[%s11 + $0x28] sm:$0xff]
    %v7893 = vld [vmem:[%s11 + $0x30] sm:$0xff]
    %v7894 = vld [vmem:[%s11 + $0x38] sm:$0xff]
    %v7895 = vld [vmem:[%s11 + $0x40] sm:$0xff]
    %v7896 = vld [vmem:[%s11 + $0x48] sm:$0xff]
    %v7897 = vld [vmem:[%s11 + $0x50] sm:$0xff]
    %v7898 = vld [vmem:[%s11 + $0x58] sm:$0xff]
    %v7899 = vld [vmem:[%s11 + $0x60] sm:$0xff]
    %v7900 = vld [vmem:[%s11 + $0x68] sm:$0xff]
    %v7901 = vld [vmem:[%s11 + $0x70] sm:$0xff]
    %v7902 = vld [vmem:[%s11 + $0x78] sm:$0xff]
    %v7903 = vld [vmem:[%s11 + $0x80] sm:$0xff]
    %v7904 = vld [vmem:[%s11 + $0x88] sm:$0xff]
    %v7905 = vld [vmem:[%s11 + $0x90] sm:$0xff]
    %v7906 = vld [vmem:[%s11 + $0x98] sm:$0xff]
    %v7907 = vld [vmem:[%s11 + $0xa0] sm:$0xff]
    %v7908 = vld [vmem:[%s11 + $0xa8] sm:$0xff]
    %v7909 = vld [vmem:[%s11 + $0xb0] sm:$0xff]
    %v7910 = vld [vmem:[%s11 + $0xb8] sm:$0xff]
    %v7911 = vld [vmem:[%s11 + $0xc0] sm:$0xff]
    %v7912 = vld [vmem:[%s11 + $0xc8] sm:$0xff]
    %v7913 = vld [vmem:[%s11 + $0xd0] sm:$0xff]
    %v7914 = vld [vmem:[%s11 + $0xd8] sm:$0xff]
    %v7915 = vld [vmem:[%s11 + $0xe0] sm:$0xff]
    %v7916 = vld [vmem:[%s11 + $0xe8] sm:$0xff]
    %v7917 = vld [vmem:[%s11 + $0xf0] sm:$0xff]
    %v7918 = vld [vmem:[%s11 + $0xf8] sm:$0xff]
    %v7919 = vld [vmem:[%s11 + $0x100] sm:$0xff]
    %v7920 = vld [vmem:[%s11 + $0x108] sm:$0xff]
    %v7921 = vld [vmem:[%s11 + $0x110] sm:$0xff]
    %v7922 = vld [vmem:[%s11 + $0x118] sm:$0xff]
    %v7923 = vld [vmem:[%s11 + $0x120] sm:$0xff]
    %v7924 = vld [vmem:[%s11 + $0x128] sm:$0xff]
    %v7925 = vld [vmem:[%s11 + $0x130] sm:$0xff]
    %v7926 = vld [vmem:[%s11 + $0x138] sm:$0xff]
    %v7927 = vld [vmem:[%s11 + $0x140] sm:$0xff]
    %v7928 = vld [vmem:[%s11 + $0x148] sm:$0xff]
    %v7929 = vld [vmem:[%s11 + $0x150] sm:$0xff]
    %v7930 = vld [vmem:[%s11 + $0x158] sm:$0xff]
    %v7931 = vld [vmem:[%s11 + $0x160] sm:$0xff]
    %v7932 = vld [vmem:[%s11 + $0x168] sm:$0xff]
    %v7933 = vld [vmem:[%s11 + $0x170] sm:$0xff]
    %v7934 = vld [vmem:[%s11 + $0x178] sm:$0xff]
    %v7935 = vld [vmem:[%s11 + $0x180] sm:$0xff]
    %v7936 = vld [vmem:[%s11 + $0x188] sm:$0xff]
    %v7937 = vld [vmem:[%s11 + $0x190] sm:$0xff]
    %v7938 = vld [vmem:[%s11 + $0x198] sm:$0xff]
    %v7939 = vld [vmem:[%s11 + $0x1a0] sm:$0xff]
    %v7940 = vld [vmem:[%s11 + $0x1a8] sm:$0xff]
    %v7941 = vld [vmem:[%s11 + $0x1b0] sm:$0xff]
    %v7942 = vld [vmem:[%s11 + $0x1b8] sm:$0xff]
    %v7943 = vld [vmem:[%s11 + $0x1c0] sm:$0xff]
    %v7944 = vld [vmem:[%s11 + $0x1c8] sm:$0xff]
    %v7945 = vld [vmem:[%s11 + $0x1d0] sm:$0xff]
    %v7946 = vld [vmem:[%s11 + $0x1d8] sm:$0xff]
    %v7947 = vld [vmem:[%s11 + $0x1e0] sm:$0xff]
    %v7948 = vld [vmem:[%s11 + $0x1e8] sm:$0xff]
    %v7949 = vld [vmem:[%s11 + $0x1f0] sm:$0xff]
    %v7950 = vld [vmem:[%s11 + $0x1f8] sm:$0xff]
    %v7951 = vsel %vm2310, %v4426, 0
    %v7953 = vsel %vm2310, %v4428, 0
    %v7956 = vsel %vm2310, %v4459, 0
    %v7958 = vsel %vm2310, %v4444, 0
    %v7961 = vsel %vm2310, %v4460, 0
    %v7963 = vsel %vm2310, %v4454, 0
    %v7966 = vsel %vm2310, %v4462, 0
    %v7968 = vsel %vm2310, %v7852, 0
    %v7970 = vsel %vm2310, %v7854, 0
    %v7973 = vsel %vm2310, %v7884, 0
    %v7975 = vsel %vm2310, %v7869, 0
    %v7978 = vsel %vm2310, %v7885, 0
    %v7980 = vsel %vm2310, %v7879, 0
    %v7983 = vsel %vm2310, %v7886, 0
    %7985 = vmatprep.subr.mxu0 %v7888
    %7986 = vmatpush1.msra.mxu0 %v7887
    %7987 = vmatprep.subr.mxu0 %v7896
    %7988 = vmatpush1.msra.mxu0 %v7895
    %7989 = vmatprep.subr.mxu0 %v7904
    %7990 = vmatpush1.msra.mxu0 %v7903
    %7991 = vmatprep.subr.mxu0 %v7912
    %7992 = vmatpush1.msra.mxu0 %v7911
    %7993 = vmatprep.subr.mxu0 %v7920
    %7994 = vmatpush1.msra.mxu0 %v7919
    %7995 = vmatprep.subr.mxu0 %v7928
    %7996 = vmatpush1.msra.mxu0 %v7927
    %7997 = vmatprep.subr.mxu0 %v7936
    %7998 = vmatpush1.msra.mxu0 %v7935
    %7999 = vmatprep.subr.mxu0 %v7944
    %8000 = vmatpush1.msra.mxu0 %v7943
    %8001 = vmatprep.subr.mxu0 0.0
    %8002 = vmatpush1.msra.mxu0 0.0
    %8003 = vmatprep.subr.mxu0 0.0
    %8004 = vmatpush1.msra.mxu0 0.0
    %8005 = vmatprep.subr.mxu0 0.0
    %8006 = vmatpush1.msra.mxu0 0.0
    %8007 = vmatprep.subr.mxu0 0.0
    %8008 = vmatpush1.msra.mxu0 0.0
    %8009 = vmatprep.subr.mxu0 0.0
    %8010 = vmatpush1.msra.mxu0 0.0
    %8011 = vmatprep.subr.mxu0 0.0
    %8012 = vmatpush1.msra.mxu0 0.0
    %8013 = vmatprep.subr.mxu0 0.0
    %8014 = vmatpush1.msra.mxu0 0.0
    %8015 = vmatprep.subr.mxu0 0.0
    %8016 = vmatpush1.msra.mxu0 0.0
    %8017 = vmatprep.subr.mxu0 0.0
    %8018 = vmatpush1.msra.mxu0 0.0
    %8019 = vmatprep.subr.mxu0 0.0
    %8020 = vmatpush1.msra.mxu0 0.0
    %8021 = vmatprep.subr.mxu0 0.0
    %8022 = vmatpush1.msra.mxu0 0.0
    %8023 = vmatprep.subr.mxu0 0.0
    %8024 = vmatpush1.msra.mxu0 0.0
    %8025 = vmatprep.subr.mxu0 0.0
    %8026 = vmatpush1.msra.mxu0 0.0
    %8027 = vmatprep.subr.mxu0 0.0
    %8028 = vmatpush1.msra.mxu0 0.0
    %8029 = vmatprep.subr.mxu0 0.0
    %8030 = vmatpush1.msra.mxu0 0.0
    %8031 = vmatprep.subr.mxu0 0.0
    %8032 = vmatpush1.msra.mxu0 0.0
    %8033 = vmatprep.subr.mxu0 0.0
    %8034 = vmatpush1.msra.mxu0 0.0
    %8035 = vmatprep.subr.mxu0 0.0
    %8036 = vmatpush1.msra.mxu0 0.0
    %8037 = vmatprep.subr.mxu0 0.0
    %8038 = vmatpush1.msra.mxu0 0.0
    %8039 = vmatprep.subr.mxu0 0.0
    %8040 = vmatpush1.msra.mxu0 0.0
    %8041 = vmatprep.subr.mxu0 0.0
    %8042 = vmatpush1.msra.mxu0 0.0
    %8043 = vmatprep.subr.mxu0 0.0
    %8044 = vmatpush1.msra.mxu0 0.0
    %8045 = vmatprep.subr.mxu0 0.0
    %8046 = vmatpush1.msra.mxu0 0.0
    %8047 = vmatprep.subr.mxu0 0.0
    %8048 = vmatpush1.msra.mxu0 0.0
    %8049 = vmatprep.mubr.f32.mxu0 0.0
    %8050 = vmatmul.mubr.f32.gmra.mrb[0].mxu0 %v7951
    %v8051 = vpop.f32.mrb[0].mxu0
    %v8052 = vadd.f32 0.0, %v8051
    %v8053 = vpop.f32.mrb[0].mxu0
    %v8054 = vadd.f32 0.0, %v8053
    %8055 = vmatprep.mubr.f32.mxu0 0.0
    %8056 = vmatmul.mubr.f32.gmra.mrb[0].mxu0 %v7953
    %v8057 = vpop.f32.mrb[0].mxu0
    %v8058 = vadd.f32 0.0, %v8057
    %v8059 = vpop.f32.mrb[0].mxu0
    %v8060 = vadd.f32 0.0, %v8059
    %8061 = vmatprep.mubr.f32.mxu0 0.0
    %8062 = vmatmul.mubr.f32.gmra.mrb[0].mxu0 %v7956
    %v8063 = vpop.f32.mrb[0].mxu0
    %v8064 = vadd.f32 0.0, %v8063
    %v8065 = vpop.f32.mrb[0].mxu0
    %v8066 = vadd.f32 0.0, %v8065
    %8067 = vmatprep.mubr.f32.mxu0 0.0
    %8068 = vmatmul.mubr.f32.gmra.mrb[0].mxu0 %v7958
    %v8069 = vpop.f32.mrb[0].mxu0
    %v8070 = vadd.f32 0.0, %v8069
    %v8071 = vpop.f32.mrb[0].mxu0
    %v8072 = vadd.f32 0.0, %v8071
    %8073 = vmatprep.mubr.f32.mxu0 0.0
    %8074 = vmatmul.mubr.f32.gmra.mrb[0].mxu0 %v7961
    %v8075 = vpop.f32.mrb[0].mxu0
    %v8076 = vadd.f32 0.0, %v8075
    %v8077 = vpop.f32.mrb[0].mxu0
    %v8078 = vadd.f32 0.0, %v8077
    %8079 = vmatprep.mubr.f32.mxu0 0.0
    %8080 = vmatmul.mubr.f32.gmra.mrb[0].mxu0 %v7963
    %v8081 = vpop.f32.mrb[0].mxu0
    %v8082 = vadd.f32 0.0, %v8081
    %v8083 = vpop.f32.mrb[0].mxu0
    %v8084 = vadd.f32 0.0, %v8083
    %8085 = vmatprep.mubr.f32.mxu0 0.0
    %8086 = vmatmul.mubr.f32.gmra.mrb[0].mxu0 %v7966
    %v8087 = vpop.f32.mrb[0].mxu0
    %v8088 = vadd.f32 0.0, %v8087
    %v8089 = vpop.f32.mrb[0].mxu0
    %v8090 = vadd.f32 0.0, %v8089
    %8091 = vmatprep.mubr.f32.mxu0 0.0
    %8092 = vmatmul.mubr.f32.gmra.mrb[0].mxu0 %v7968
    %v8093 = vpop.f32.mrb[0].mxu0
    %v8094 = vadd.f32 0.0, %v8093
    %v8095 = vpop.f32.mrb[0].mxu0
    %v8096 = vadd.f32 0.0, %v8095
    %8097 = vmatprep.mubr.f32.mxu0 0.0
    %8098 = vmatmul.mubr.f32.gmra.mrb[0].mxu0 %v7970
    %v8099 = vpop.f32.mrb[0].mxu0
    %v8100 = vadd.f32 0.0, %v8099
    %v8101 = vpop.f32.mrb[0].mxu0
    %v8102 = vadd.f32 0.0, %v8101
    %8103 = vmatprep.mubr.f32.mxu0 0.0
    %8104 = vmatmul.mubr.f32.gmra.mrb[0].mxu0 %v7973
    %v8105 = vpop.f32.mrb[0].mxu0
    %v8106 = vadd.f32 0.0, %v8105
    %v8107 = vpop.f32.mrb[0].mxu0
    %v8108 = vadd.f32 0.0, %v8107
    %8109 = vmatprep.mubr.f32.mxu0 0.0
    %8110 = vmatmul.mubr.f32.gmra.mrb[0].mxu0 %v7975
    %v8111 = vpop.f32.mrb[0].mxu0
    %v8112 = vadd.f32 0.0, %v8111
    %v8113 = vpop.f32.mrb[0].mxu0
    %v8114 = vadd.f32 0.0, %v8113
    %8115 = vmatprep.mubr.f32.mxu0 0.0
    %8116 = vmatmul.mubr.f32.gmra.mrb[0].mxu0 %v7978
    %v8117 = vpop.f32.mrb[0].mxu0
    %v8118 = vadd.f32 0.0, %v8117
    %v8119 = vpop.f32.mrb[0].mxu0
    %v8120 = vadd.f32 0.0, %v8119
    %8121 = vmatprep.mubr.f32.mxu0 0.0
    %8122 = vmatmul.mubr.f32.gmra.mrb[0].mxu0 %v7980
    %v8123 = vpop.f32.mrb[0].mxu0
    %v8124 = vadd.f32 0.0, %v8123
    %v8125 = vpop.f32.mrb[0].mxu0
    %v8126 = vadd.f32 0.0, %v8125
    %8127 = vmatprep.mubr.f32.mxu0 0.0
    %8128 = vmatmul.mubr.f32.gmra.mrb[0].mxu0 %v7983
    %v8129 = vpop.f32.mrb[0].mxu0
    %v8130 = vadd.f32 0.0, %v8129
    %v8131 = vpop.f32.mrb[0].mxu0
    %v8132 = vadd.f32 0.0, %v8131
    %8133 = vdwg.mxu0
    %8134 = vmatprep.subr.mxu0 %v7890
    %8135 = vmatpush1.msra.mxu0 %v7889
    %8136 = vmatprep.subr.mxu0 %v7898
    %8137 = vmatpush1.msra.mxu0 %v7897
    %8138 = vmatprep.subr.mxu0 %v7906
    %8139 = vmatpush1.msra.mxu0 %v7905
    %8140 = vmatprep.subr.mxu0 %v7914
    %8141 = vmatpush1.msra.mxu0 %v7913
    %8142 = vmatprep.subr.mxu0 %v7922
    %8143 = vmatpush1.msra.mxu0 %v7921
    %8144 = vmatprep.subr.mxu0 %v7930
    %8145 = vmatpush1.msra.mxu0 %v7929
    %8146 = vmatprep.subr.mxu0 %v7938
    %8147 = vmatpush1.msra.mxu0 %v7937
    %8148 = vmatprep.subr.mxu0 %v7946
    %8149 = vmatpush1.msra.mxu0 %v7945
    %8150 = vmatprep.subr.mxu0 0.0
    %8151 = vmatpush1.msra.mxu0 0.0
    %8152 = vmatprep.subr.mxu0 0.0
    %8153 = vmatpush1.msra.mxu0 0.0
    %8154 = vmatprep.subr.mxu0 0.0
    %8155 = vmatpush1.msra.mxu0 0.0
    %8156 = vmatprep.subr.mxu0 0.0
    %8157 = vmatpush1.msra.mxu0 0.0
    %8158 = vmatprep.subr.mxu0 0.0
    %8159 = vmatpush1.msra.mxu0 0.0
    %8160 = vmatprep.subr.mxu0 0.0
    %8161 = vmatpush1.msra.mxu0 0.0
    %8162 = vmatprep.subr.mxu0 0.0
    %8163 = vmatpush1.msra.mxu0 0.0
    %8164 = vmatprep.subr.mxu0 0.0
    %8165 = vmatpush1.msra.mxu0 0.0
    %8166 = vmatprep.subr.mxu0 0.0
    %8167 = vmatpush1.msra.mxu0 0.0
    %8168 = vmatprep.subr.mxu0 0.0
    %8169 = vmatpush1.msra.mxu0 0.0
    %8170 = vmatprep.subr.mxu0 0.0
    %8171 = vmatpush1.msra.mxu0 0.0
    %8172 = vmatprep.subr.mxu0 0.0
    %8173 = vmatpush1.msra.mxu0 0.0
    %8174 = vmatprep.subr.mxu0 0.0
    %8175 = vmatpush1.msra.mxu0 0.0
    %8176 = vmatprep.subr.mxu0 0.0
    %8177 = vmatpush1.msra.mxu0 0.0
    %8178 = vmatprep.subr.mxu0 0.0
    %8179 = vmatpush1.msra.mxu0 0.0
    %8180 = vmatprep.subr.mxu0 0.0
    %8181 = vmatpush1.msra.mxu0 0.0
    %8182 = vmatprep.subr.mxu0 0.0
    %8183 = vmatpush1.msra.mxu0 0.0
    %8184 = vmatprep.subr.mxu0 0.0
    %8185 = vmatpush1.msra.mxu0 0.0
    %8186 = vmatprep.subr.mxu0 0.0
    %8187 = vmatpush1.msra.mxu0 0.0
    %8188 = vmatprep.subr.mxu0 0.0
    %8189 = vmatpush1.msra.mxu0 0.0
    %8190 = vmatprep.subr.mxu0 0.0
    %8191 = vmatpush1.msra.mxu0 0.0
    %8192 = vmatprep.subr.mxu0 0.0
    %8193 = vmatpush1.msra.mxu0 0.0
    %8194 = vmatprep.subr.mxu0 0.0
    %8195 = vmatpush1.msra.mxu0 0.0
    %8196 = vmatprep.subr.mxu0 0.0
    %8197 = vmatpush1.msra.mxu0 0.0
    %8198 = vmatprep.mubr.f32.mxu0 0.0
    %8199 = vmatmul.mubr.f32.gmra.mrb[0].mxu0 %v7951
    %v8200 = vpop.f32.mrb[0].mxu0
    %v8201 = vadd.f32 0.0, %v8200
    %v8202 = vpop.f32.mrb[0].mxu0
    %v8203 = vadd.f32 0.0, %v8202
    %8204 = vmatprep.mubr.f32.mxu0 0.0
    %8205 = vmatmul.mubr.f32.gmra.mrb[0].mxu0 %v7953
    %v8206 = vpop.f32.mrb[0].mxu0
    %v8207 = vadd.f32 0.0, %v8206
    %v8208 = vpop.f32.mrb[0].mxu0
    %v8209 = vadd.f32 0.0, %v8208
    %8210 = vmatprep.mubr.f32.mxu0 0.0
    %8211 = vmatmul.mubr.f32.gmra.mrb[0].mxu0 %v7956
    %v8212 = vpop.f32.mrb[0].mxu0
    %v8213 = vadd.f32 0.0, %v8212
    %v8214 = vpop.f32.mrb[0].mxu0
    %v8215 = vadd.f32 0.0, %v8214
    %8216 = vmatprep.mubr.f32.mxu0 0.0
    %8217 = vmatmul.mubr.f32.gmra.mrb[0].mxu0 %v7958
    %v8218 = vpop.f32.mrb[0].mxu0
    %v8219 = vadd.f32 0.0, %v8218
    %v8220 = vpop.f32.mrb[0].mxu0
    %v8221 = vadd.f32 0.0, %v8220
    %8222 = vmatprep.mubr.f32.mxu0 0.0
    %8223 = vmatmul.mubr.f32.gmra.mrb[0].mxu0 %v7961
    %v8224 = vpop.f32.mrb[0].mxu0
    %v8225 = vadd.f32 0.0, %v8224
    %v8226 = vpop.f32.mrb[0].mxu0
    %v8227 = vadd.f32 0.0, %v8226
    %8228 = vmatprep.mubr.f32.mxu0 0.0
    %8229 = vmatmul.mubr.f32.gmra.mrb[0].mxu0 %v7963
    %v8230 = vpop.f32.mrb[0].mxu0
    %v8231 = vadd.f32 0.0, %v8230
    %v8232 = vpop.f32.mrb[0].mxu0
    %v8233 = vadd.f32 0.0, %v8232
    %8234 = vmatprep.mubr.f32.mxu0 0.0
    %8235 = vmatmul.mubr.f32.gmra.mrb[0].mxu0 %v7966
    %v8236 = vpop.f32.mrb[0].mxu0
    %v8237 = vadd.f32 0.0, %v8236
    %v8238 = vpop.f32.mrb[0].mxu0
    %v8239 = vadd.f32 0.0, %v8238
    %8240 = vmatprep.mubr.f32.mxu0 0.0
    %8241 = vmatmul.mubr.f32.gmra.mrb[0].mxu0 %v7968
    %v8242 = vpop.f32.mrb[0].mxu0
    %v8243 = vadd.f32 0.0, %v8242
    %v8244 = vpop.f32.mrb[0].mxu0
    %v8245 = vadd.f32 0.0, %v8244
    %8246 = vmatprep.mubr.f32.mxu0 0.0
    %8247 = vmatmul.mubr.f32.gmra.mrb[0].mxu0 %v7970
    %v8248 = vpop.f32.mrb[0].mxu0
    %v8249 = vadd.f32 0.0, %v8248
    %v8250 = vpop.f32.mrb[0].mxu0
    %v8251 = vadd.f32 0.0, %v8250
    %8252 = vmatprep.mubr.f32.mxu0 0.0
    %8253 = vmatmul.mubr.f32.gmra.mrb[0].mxu0 %v7973
    %v8254 = vpop.f32.mrb[0].mxu0
    %v8255 = vadd.f32 0.0, %v8254
    %v8256 = vpop.f32.mrb[0].mxu0
    %v8257 = vadd.f32 0.0, %v8256
    %8258 = vmatprep.mubr.f32.mxu0 0.0
    %8259 = vmatmul.mubr.f32.gmra.mrb[0].mxu0 %v7975
    %v8260 = vpop.f32.mrb[0].mxu0
    %v8261 = vadd.f32 0.0, %v8260
    %v8262 = vpop.f32.mrb[0].mxu0
    %v8263 = vadd.f32 0.0, %v8262
    %8264 = vmatprep.mubr.f32.mxu0 0.0
    %8265 = vmatmul.mubr.f32.gmra.mrb[0].mxu0 %v7978
    %v8266 = vpop.f32.mrb[0].mxu0
    %v8267 = vadd.f32 0.0, %v8266
    %v8268 = vpop.f32.mrb[0].mxu0
    %v8269 = vadd.f32 0.0, %v8268
    %8270 = vmatprep.mubr.f32.mxu0 0.0
    %8271 = vmatmul.mubr.f32.gmra.mrb[0].mxu0 %v7980
    %v8272 = vpop.f32.mrb[0].mxu0
    %v8273 = vadd.f32 0.0, %v8272
    %v8274 = vpop.f32.mrb[0].mxu0
    %v8275 = vadd.f32 0.0, %v8274
    %8276 = vmatprep.mubr.f32.mxu0 0.0
    %8277 = vmatmul.mubr.f32.gmra.mrb[0].mxu0 %v7983
    %v8278 = vpop.f32.mrb[0].mxu0
    %v8279 = vadd.f32 0.0, %v8278
    %v8280 = vpop.f32.mrb[0].mxu0
    %v8281 = vadd.f32 0.0, %v8280
    %8282 = vdwg.mxu0
    %8283 = vmatprep.subr.mxu0 %v7892
    %8284 = vmatpush1.msra.mxu0 %v7891
    %8285 = vmatprep.subr.mxu0 %v7900
    %8286 = vmatpush1.msra.mxu0 %v7899
    %8287 = vmatprep.subr.mxu0 %v7908
    %8288 = vmatpush1.msra.mxu0 %v7907
    %8289 = vmatprep.subr.mxu0 %v7916
    %8290 = vmatpush1.msra.mxu0 %v7915
    %8291 = vmatprep.subr.mxu0 %v7924
    %8292 = vmatpush1.msra.mxu0 %v7923
    %8293 = vmatprep.subr.mxu0 %v7932
    %8294 = vmatpush1.msra.mxu0 %v7931
    %8295 = vmatprep.subr.mxu0 %v7940
    %8296 = vmatpush1.msra.mxu0 %v7939
    %8297 = vmatprep.subr.mxu0 %v7948
    %8298 = vmatpush1.msra.mxu0 %v7947
    %8299 = vmatprep.subr.mxu0 0.0
    %8300 = vmatpush1.msra.mxu0 0.0
    %8301 = vmatprep.subr.mxu0 0.0
    %8302 = vmatpush1.msra.mxu0 0.0
    %8303 = vmatprep.subr.mxu0 0.0
    %8304 = vmatpush1.msra.mxu0 0.0
    %8305 = vmatprep.subr.mxu0 0.0
    %8306 = vmatpush1.msra.mxu0 0.0
    %8307 = vmatprep.subr.mxu0 0.0
    %8308 = vmatpush1.msra.mxu0 0.0
    %8309 = vmatprep.subr.mxu0 0.0
    %8310 = vmatpush1.msra.mxu0 0.0
    %8311 = vmatprep.subr.mxu0 0.0
    %8312 = vmatpush1.msra.mxu0 0.0
    %8313 = vmatprep.subr.mxu0 0.0
    %8314 = vmatpush1.msra.mxu0 0.0
    %8315 = vmatprep.subr.mxu0 0.0
    %8316 = vmatpush1.msra.mxu0 0.0
    %8317 = vmatprep.subr.mxu0 0.0
    %8318 = vmatpush1.msra.mxu0 0.0
    %8319 = vmatprep.subr.mxu0 0.0
    %8320 = vmatpush1.msra.mxu0 0.0
    %8321 = vmatprep.subr.mxu0 0.0
    %8322 = vmatpush1.msra.mxu0 0.0
    %8323 = vmatprep.subr.mxu0 0.0
    %8324 = vmatpush1.msra.mxu0 0.0
    %8325 = vmatprep.subr.mxu0 0.0
    %8326 = vmatpush1.msra.mxu0 0.0
    %8327 = vmatprep.subr.mxu0 0.0
    %8328 = vmatpush1.msra.mxu0 0.0
    %8329 = vmatprep.subr.mxu0 0.0
    %8330 = vmatpush1.msra.mxu0 0.0
    %8331 = vmatprep.subr.mxu0 0.0
    %8332 = vmatpush1.msra.mxu0 0.0
    %8333 = vmatprep.subr.mxu0 0.0
    %8334 = vmatpush1.msra.mxu0 0.0
    %8335 = vmatprep.subr.mxu0 0.0
    %8336 = vmatpush1.msra.mxu0 0.0
    %8337 = vmatprep.subr.mxu0 0.0
    %8338 = vmatpush1.msra.mxu0 0.0
    %8339 = vmatprep.subr.mxu0 0.0
    %8340 = vmatpush1.msra.mxu0 0.0
    %8341 = vmatprep.subr.mxu0 0.0
    %8342 = vmatpush1.msra.mxu0 0.0
    %8343 = vmatprep.subr.mxu0 0.0
    %8344 = vmatpush1.msra.mxu0 0.0
    %8345 = vmatprep.subr.mxu0 0.0
    %8346 = vmatpush1.msra.mxu0 0.0
    %8347 = vmatprep.mubr.f32.mxu0 0.0
    %8348 = vmatmul.mubr.f32.gmra.mrb[0].mxu0 %v7951
    %v8349 = vpop.f32.mrb[0].mxu0
    %v8350 = vadd.f32 0.0, %v8349
    %v8351 = vpop.f32.mrb[0].mxu0
    %v8352 = vadd.f32 0.0, %v8351
    %8353 = vmatprep.mubr.f32.mxu0 0.0
    %8354 = vmatmul.mubr.f32.gmra.mrb[0].mxu0 %v7953
    %v8355 = vpop.f32.mrb[0].mxu0
    %v8356 = vadd.f32 0.0, %v8355
    %v8357 = vpop.f32.mrb[0].mxu0
    %v8358 = vadd.f32 0.0, %v8357
    %8359 = vmatprep.mubr.f32.mxu0 0.0
    %8360 = vmatmul.mubr.f32.gmra.mrb[0].mxu0 %v7956
    %v8361 = vpop.f32.mrb[0].mxu0
    %v8362 = vadd.f32 0.0, %v8361
    %v8363 = vpop.f32.mrb[0].mxu0
    %v8364 = vadd.f32 0.0, %v8363
    %8365 = vmatprep.mubr.f32.mxu0 0.0
    %8366 = vmatmul.mubr.f32.gmra.mrb[0].mxu0 %v7958
    %v8367 = vpop.f32.mrb[0].mxu0
    %v8368 = vadd.f32 0.0, %v8367
    %v8369 = vpop.f32.mrb[0].mxu0
    %v8370 = vadd.f32 0.0, %v8369
    %8371 = vmatprep.mubr.f32.mxu0 0.0
    %8372 = vmatmul.mubr.f32.gmra.mrb[0].mxu0 %v7961
    %v8373 = vpop.f32.mrb[0].mxu0
    %v8374 = vadd.f32 0.0, %v8373
    %v8375 = vpop.f32.mrb[0].mxu0
    %v8376 = vadd.f32 0.0, %v8375
    %8377 = vmatprep.mubr.f32.mxu0 0.0
    %8378 = vmatmul.mubr.f32.gmra.mrb[0].mxu0 %v7963
    %v8379 = vpop.f32.mrb[0].mxu0
    %v8380 = vadd.f32 0.0, %v8379
    %v8381 = vpop.f32.mrb[0].mxu0
    %v8382 = vadd.f32 0.0, %v8381
    %8383 = vmatprep.mubr.f32.mxu0 0.0
    %8384 = vmatmul.mubr.f32.gmra.mrb[0].mxu0 %v7966
    %v8385 = vpop.f32.mrb[0].mxu0
    %v8386 = vadd.f32 0.0, %v8385
    %v8387 = vpop.f32.mrb[0].mxu0
    %v8388 = vadd.f32 0.0, %v8387
    %8389 = vmatprep.mubr.f32.mxu0 0.0
    %8390 = vmatmul.mubr.f32.gmra.mrb[0].mxu0 %v7968
    %v8391 = vpop.f32.mrb[0].mxu0
    %v8392 = vadd.f32 0.0, %v8391
    %v8393 = vpop.f32.mrb[0].mxu0
    %v8394 = vadd.f32 0.0, %v8393
    %8395 = vmatprep.mubr.f32.mxu0 0.0
    %8396 = vmatmul.mubr.f32.gmra.mrb[0].mxu0 %v7970
    %v8397 = vpop.f32.mrb[0].mxu0
    %v8398 = vadd.f32 0.0, %v8397
    %v8399 = vpop.f32.mrb[0].mxu0
    %v8400 = vadd.f32 0.0, %v8399
    %8401 = vmatprep.mubr.f32.mxu0 0.0
    %8402 = vmatmul.mubr.f32.gmra.mrb[0].mxu0 %v7973
    %v8403 = vpop.f32.mrb[0].mxu0
    %v8404 = vadd.f32 0.0, %v8403
    %v8405 = vpop.f32.mrb[0].mxu0
    %v8406 = vadd.f32 0.0, %v8405
    %8407 = vmatprep.mubr.f32.mxu0 0.0
    %8408 = vmatmul.mubr.f32.gmra.mrb[0].mxu0 %v7975
    %v8409 = vpop.f32.mrb[0].mxu0
    %v8410 = vadd.f32 0.0, %v8409
    %v8411 = vpop.f32.mrb[0].mxu0
    %v8412 = vadd.f32 0.0, %v8411
    %8413 = vmatprep.mubr.f32.mxu0 0.0
    %8414 = vmatmul.mubr.f32.gmra.mrb[0].mxu0 %v7978
    %v8415 = vpop.f32.mrb[0].mxu0
    %v8416 = vadd.f32 0.0, %v8415
    %v8417 = vpop.f32.mrb[0].mxu0
    %v8418 = vadd.f32 0.0, %v8417
    %8419 = vmatprep.mubr.f32.mxu0 0.0
    %8420 = vmatmul.mubr.f32.gmra.mrb[0].mxu0 %v7980
    %v8421 = vpop.f32.mrb[0].mxu0
    %v8422 = vadd.f32 0.0, %v8421
    %v8423 = vpop.f32.mrb[0].mxu0
    %v8424 = vadd.f32 0.0, %v8423
    %8425 = vmatprep.mubr.f32.mxu0 0.0
    %8426 = vmatmul.mubr.f32.gmra.mrb[0].mxu0 %v7983
    %v8427 = vpop.f32.mrb[0].mxu0
    %v8428 = vadd.f32 0.0, %v8427
    %v8429 = vpop.f32.mrb[0].mxu0
    %v8430 = vadd.f32 0.0, %v8429
    %8431 = vdwg.mxu0
    %8432 = vmatprep.subr.mxu0 %v7894
    %8433 = vmatpush1.msra.mxu0 %v7893
    %8434 = vmatprep.subr.mxu0 %v7902
    %8435 = vmatpush1.msra.mxu0 %v7901
    %8436 = vmatprep.subr.mxu0 %v7910
    %8437 = vmatpush1.msra.mxu0 %v7909
    %8438 = vmatprep.subr.mxu0 %v7918
    %8439 = vmatpush1.msra.mxu0 %v7917
    %8440 = vmatprep.subr.mxu0 %v7926
    %8441 = vmatpush1.msra.mxu0 %v7925
    %8442 = vmatprep.subr.mxu0 %v7934
    %8443 = vmatpush1.msra.mxu0 %v7933
    %8444 = vmatprep.subr.mxu0 %v7942
    %8445 = vmatpush1.msra.mxu0 %v7941
    %8446 = vmatprep.subr.mxu0 %v7950
    %8447 = vmatpush1.msra.mxu0 %v7949
    %8448 = vmatprep.subr.mxu0 0.0
    %8449 = vmatpush1.msra.mxu0 0.0
    %8450 = vmatprep.subr.mxu0 0.0
    %8451 = vmatpush1.msra.mxu0 0.0
    %8452 = vmatprep.subr.mxu0 0.0
    %8453 = vmatpush1.msra.mxu0 0.0
    %8454 = vmatprep.subr.mxu0 0.0
    %8455 = vmatpush1.msra.mxu0 0.0
    %8456 = vmatprep.subr.mxu0 0.0
    %8457 = vmatpush1.msra.mxu0 0.0
    %8458 = vmatprep.subr.mxu0 0.0
    %8459 = vmatpush1.msra.mxu0 0.0
    %8460 = vmatprep.subr.mxu0 0.0
    %8461 = vmatpush1.msra.mxu0 0.0
    %8462 = vmatprep.subr.mxu0 0.0
    %8463 = vmatpush1.msra.mxu0 0.0
    %8464 = vmatprep.subr.mxu0 0.0
    %8465 = vmatpush1.msra.mxu0 0.0
    %8466 = vmatprep.subr.mxu0 0.0
    %8467 = vmatpush1.msra.mxu0 0.0
    %8468 = vmatprep.subr.mxu0 0.0
    %8469 = vmatpush1.msra.mxu0 0.0
    %8470 = vmatprep.subr.mxu0 0.0
    %8471 = vmatpush1.msra.mxu0 0.0
    %8472 = vmatprep.subr.mxu0 0.0
    %8473 = vmatpush1.msra.mxu0 0.0
    %8474 = vmatprep.subr.mxu0 0.0
    %8475 = vmatpush1.msra.mxu0 0.0
    %8476 = vmatprep.subr.mxu0 0.0
    %8477 = vmatpush1.msra.mxu0 0.0
    %8478 = vmatprep.subr.mxu0 0.0
    %8479 = vmatpush1.msra.mxu0 0.0
    %8480 = vmatprep.subr.mxu0 0.0
    %8481 = vmatpush1.msra.mxu0 0.0
    %8482 = vmatprep.subr.mxu0 0.0
    %8483 = vmatpush1.msra.mxu0 0.0
    %8484 = vmatprep.subr.mxu0 0.0
    %8485 = vmatpush1.msra.mxu0 0.0
    %8486 = vmatprep.subr.mxu0 0.0
    %8487 = vmatpush1.msra.mxu0 0.0
    %8488 = vmatprep.subr.mxu0 0.0
    %8489 = vmatpush1.msra.mxu0 0.0
    %8490 = vmatprep.subr.mxu0 0.0
    %8491 = vmatpush1.msra.mxu0 0.0
    %8492 = vmatprep.subr.mxu0 0.0
    %8493 = vmatpush1.msra.mxu0 0.0
    %8494 = vmatprep.subr.mxu0 0.0
    %8495 = vmatpush1.msra.mxu0 0.0
    %8496 = vmatprep.mubr.f32.mxu0 0.0
    %8497 = vmatmul.mubr.f32.gmra.mrb[0].mxu0 %v7951
    %v8498 = vpop.f32.mrb[0].mxu0
    %v8499 = vadd.f32 0.0, %v8498
    %v8500 = vpop.f32.mrb[0].mxu0
    %v8501 = vadd.f32 0.0, %v8500
    %8502 = vmatprep.mubr.f32.mxu0 0.0
    %8503 = vmatmul.mubr.f32.gmra.mrb[0].mxu0 %v7953
    %v8504 = vpop.f32.mrb[0].mxu0
    %v8505 = vadd.f32 0.0, %v8504
    %v8506 = vpop.f32.mrb[0].mxu0
    %v8507 = vadd.f32 0.0, %v8506
    %8508 = vmatprep.mubr.f32.mxu0 0.0
    %8509 = vmatmul.mubr.f32.gmra.mrb[0].mxu0 %v7956
    %v8510 = vpop.f32.mrb[0].mxu0
    %v8511 = vadd.f32 0.0, %v8510
    %v8512 = vpop.f32.mrb[0].mxu0
    %v8513 = vadd.f32 0.0, %v8512
    %8514 = vmatprep.mubr.f32.mxu0 0.0
    %8515 = vmatmul.mubr.f32.gmra.mrb[0].mxu0 %v7958
    %v8516 = vpop.f32.mrb[0].mxu0
    %v8517 = vadd.f32 0.0, %v8516
    %v8518 = vpop.f32.mrb[0].mxu0
    %v8519 = vadd.f32 0.0, %v8518
    %8520 = vmatprep.mubr.f32.mxu0 0.0
    %8521 = vmatmul.mubr.f32.gmra.mrb[0].mxu0 %v7961
    %v8522 = vpop.f32.mrb[0].mxu0
    %v8523 = vadd.f32 0.0, %v8522
    %v8524 = vpop.f32.mrb[0].mxu0
    %v8525 = vadd.f32 0.0, %v8524
    %8526 = vmatprep.mubr.f32.mxu0 0.0
    %8527 = vmatmul.mubr.f32.gmra.mrb[0].mxu0 %v7963
    %v8528 = vpop.f32.mrb[0].mxu0
    %v8529 = vadd.f32 0.0, %v8528
    %v8530 = vpop.f32.mrb[0].mxu0
    %v8531 = vadd.f32 0.0, %v8530
    %8532 = vmatprep.mubr.f32.mxu0 0.0
    %8533 = vmatmul.mubr.f32.gmra.mrb[0].mxu0 %v7966
    %v8534 = vpop.f32.mrb[0].mxu0
    %v8535 = vadd.f32 0.0, %v8534
    %v8536 = vpop.f32.mrb[0].mxu0
    %v8537 = vadd.f32 0.0, %v8536
    %8538 = vmatprep.mubr.f32.mxu0 0.0
    %8539 = vmatmul.mubr.f32.gmra.mrb[0].mxu0 %v7968
    %v8540 = vpop.f32.mrb[0].mxu0
    %v8541 = vadd.f32 0.0, %v8540
    %v8542 = vpop.f32.mrb[0].mxu0
    %v8543 = vadd.f32 0.0, %v8542
    %8544 = vmatprep.mubr.f32.mxu0 0.0
    %8545 = vmatmul.mubr.f32.gmra.mrb[0].mxu0 %v7970
    %v8546 = vpop.f32.mrb[0].mxu0
    %v8547 = vadd.f32 0.0, %v8546
    %v8548 = vpop.f32.mrb[0].mxu0
    %v8549 = vadd.f32 0.0, %v8548
    %8550 = vmatprep.mubr.f32.mxu0 0.0
    %8551 = vmatmul.mubr.f32.gmra.mrb[0].mxu0 %v7973
    %v8552 = vpop.f32.mrb[0].mxu0
    %v8553 = vadd.f32 0.0, %v8552
    %v8554 = vpop.f32.mrb[0].mxu0
    %v8555 = vadd.f32 0.0, %v8554
    %8556 = vmatprep.mubr.f32.mxu0 0.0
    %8557 = vmatmul.mubr.f32.gmra.mrb[0].mxu0 %v7975
    %v8558 = vpop.f32.mrb[0].mxu0
    %v8559 = vadd.f32 0.0, %v8558
    %v8560 = vpop.f32.mrb[0].mxu0
    %v8561 = vadd.f32 0.0, %v8560
    %8562 = vmatprep.mubr.f32.mxu0 0.0
    %8563 = vmatmul.mubr.f32.gmra.mrb[0].mxu0 %v7978
    %v8564 = vpop.f32.mrb[0].mxu0
    %v8565 = vadd.f32 0.0, %v8564
    %v8566 = vpop.f32.mrb[0].mxu0
    %v8567 = vadd.f32 0.0, %v8566
    %8568 = vmatprep.mubr.f32.mxu0 0.0
    %8569 = vmatmul.mubr.f32.gmra.mrb[0].mxu0 %v7980
    %v8570 = vpop.f32.mrb[0].mxu0
    %v8571 = vadd.f32 0.0, %v8570
    %v8572 = vpop.f32.mrb[0].mxu0
    %v8573 = vadd.f32 0.0, %v8572
    %8574 = vmatprep.mubr.f32.mxu0 0.0
    %8575 = vmatmul.mubr.f32.gmra.mrb[0].mxu0 %v7983
    %v8576 = vpop.f32.mrb[0].mxu0
    %v8577 = vadd.f32 0.0, %v8576
    %v8578 = vpop.f32.mrb[0].mxu0
    %v8579 = vadd.f32 0.0, %v8578
    %8580 = vdwg.mxu0
    %v8581 = vld [vmem:[%s12] sm:$0xff]
    %v8582 = vld [vmem:[%s12 + $0x8] sm:$0xff]
    %v8583 = vld [vmem:[%s12 + $0x10] sm:$0xff]
    %v8584 = vld [vmem:[%s12 + $0x18] sm:$0xff]
    %v8585 = vld [vmem:[%s12 + $0x20] sm:$0xff]
    %v8586 = vld [vmem:[%s12 + $0x28] sm:$0xff]
    %v8587 = vld [vmem:[%s12 + $0x30] sm:$0xff]
    %v8588 = vld [vmem:[%s12 + $0x38] sm:$0xff]
    %v8589 = vld [vmem:[%s12 + $0x40] sm:$0xff]
    %v8590 = vld [vmem:[%s12 + $0x48] sm:$0xff]
    %v8591 = vld [vmem:[%s12 + $0x50] sm:$0xff]
    %v8592 = vld [vmem:[%s12 + $0x58] sm:$0xff]
    %v8593 = vld [vmem:[%s12 + $0x60] sm:$0xff]
    %v8594 = vld [vmem:[%s12 + $0x68] sm:$0xff]
    %v8595 = vld [vmem:[%s12 + $0x70] sm:$0xff]
    %v8596 = vld [vmem:[%s12 + $0x78] sm:$0xff]
    %v8597 = vld [vmem:[%s12 + $0x80] sm:$0xff]
    %v8598 = vld [vmem:[%s12 + $0x88] sm:$0xff]
    %v8599 = vld [vmem:[%s12 + $0x90] sm:$0xff]
    %v8600 = vld [vmem:[%s12 + $0x98] sm:$0xff]
    %v8601 = vld [vmem:[%s12 + $0xa0] sm:$0xff]
    %v8602 = vld [vmem:[%s12 + $0xa8] sm:$0xff]
    %v8603 = vld [vmem:[%s12 + $0xb0] sm:$0xff]
    %v8604 = vld [vmem:[%s12 + $0xb8] sm:$0xff]
    %v8605 = vld [vmem:[%s12 + $0xc0] sm:$0xff]
    %v8606 = vld [vmem:[%s12 + $0xc8] sm:$0xff]
    %v8607 = vld [vmem:[%s12 + $0xd0] sm:$0xff]
    %v8608 = vld [vmem:[%s12 + $0xd8] sm:$0xff]
    %v8609 = vld [vmem:[%s12 + $0xe0] sm:$0xff]
    %v8610 = vld [vmem:[%s12 + $0xe8] sm:$0xff]
    %v8611 = vld [vmem:[%s12 + $0xf0] sm:$0xff]
    %v8612 = vld [vmem:[%s12 + $0xf8] sm:$0xff]
    %v8613 = vld [vmem:[%s12 + $0x100] sm:$0xff]
    %v8614 = vld [vmem:[%s12 + $0x108] sm:$0xff]
    %v8615 = vld [vmem:[%s12 + $0x110] sm:$0xff]
    %v8616 = vld [vmem:[%s12 + $0x118] sm:$0xff]
    %v8617 = vld [vmem:[%s12 + $0x120] sm:$0xff]
    %v8618 = vld [vmem:[%s12 + $0x128] sm:$0xff]
    %v8619 = vld [vmem:[%s12 + $0x130] sm:$0xff]
    %v8620 = vld [vmem:[%s12 + $0x138] sm:$0xff]
    %v8621 = vld [vmem:[%s12 + $0x140] sm:$0xff]
    %v8622 = vld [vmem:[%s12 + $0x148] sm:$0xff]
    %v8623 = vld [vmem:[%s12 + $0x150] sm:$0xff]
    %v8624 = vld [vmem:[%s12 + $0x158] sm:$0xff]
    %v8625 = vld [vmem:[%s12 + $0x160] sm:$0xff]
    %v8626 = vld [vmem:[%s12 + $0x168] sm:$0xff]
    %v8627 = vld [vmem:[%s12 + $0x170] sm:$0xff]
    %v8628 = vld [vmem:[%s12 + $0x178] sm:$0xff]
    %v8629 = vld [vmem:[%s12 + $0x180] sm:$0xff]
    %v8630 = vld [vmem:[%s12 + $0x188] sm:$0xff]
    %v8631 = vld [vmem:[%s12 + $0x190] sm:$0xff]
    %v8632 = vld [vmem:[%s12 + $0x198] sm:$0xff]
    %v8633 = vld [vmem:[%s12 + $0x1a0] sm:$0xff]
    %v8634 = vld [vmem:[%s12 + $0x1a8] sm:$0xff]
    %v8635 = vld [vmem:[%s12 + $0x1b0] sm:$0xff]
    %v8636 = vld [vmem:[%s12 + $0x1b8] sm:$0xff]
    %v8637 = vld [vmem:[%s12 + $0x1c0] sm:$0xff]
    %v8638 = vld [vmem:[%s12 + $0x1c8] sm:$0xff]
    %v8639 = vld [vmem:[%s12 + $0x1d0] sm:$0xff]
    %v8640 = vld [vmem:[%s12 + $0x1d8] sm:$0xff]
    %v8641 = vld [vmem:[%s12 + $0x1e0] sm:$0xff]
    %v8642 = vld [vmem:[%s12 + $0x1e8] sm:$0xff]
    %v8643 = vld [vmem:[%s12 + $0x1f0] sm:$0xff]
    %v8644 = vld [vmem:[%s12 + $0x1f8] sm:$0xff]
    %v8645 = vld [vmem:[%s14] sm:$0xf]
    %8646 = vmatprep.subr.mxu0 %v8582
    %8647 = vmatpush1.msra.mxu0 %v8581
    %8648 = vmatprep.subr.mxu0 %v8586
    %8649 = vmatpush1.msra.mxu0 %v8585
    %8650 = vmatprep.subr.mxu0 %v8590
    %8651 = vmatpush1.msra.mxu0 %v8589
    %8652 = vmatprep.subr.mxu0 %v8594
    %8653 = vmatpush1.msra.mxu0 %v8593
    %8654 = vmatprep.subr.mxu0 %v8598
    %8655 = vmatpush1.msra.mxu0 %v8597
    %8656 = vmatprep.subr.mxu0 %v8602
    %8657 = vmatpush1.msra.mxu0 %v8601
    %8658 = vmatprep.subr.mxu0 %v8606
    %8659 = vmatpush1.msra.mxu0 %v8605
    %8660 = vmatprep.subr.mxu0 %v8610
    %8661 = vmatpush1.msra.mxu0 %v8609
    %8662 = vmatprep.subr.mxu0 %v8614
    %8663 = vmatpush1.msra.mxu0 %v8613
    %8664 = vmatprep.subr.mxu0 %v8618
    %8665 = vmatpush1.msra.mxu0 %v8617
    %8666 = vmatprep.subr.mxu0 %v8622
    %8667 = vmatpush1.msra.mxu0 %v8621
    %8668 = vmatprep.subr.mxu0 %v8626
    %8669 = vmatpush1.msra.mxu0 %v8625
    %8670 = vmatprep.subr.mxu0 %v8630
    %8671 = vmatpush1.msra.mxu0 %v8629
    %8672 = vmatprep.subr.mxu0 %v8634
    %8673 = vmatpush1.msra.mxu0 %v8633
    %8674 = vmatprep.subr.mxu0 %v8638
    %8675 = vmatpush1.msra.mxu0 %v8637
    %8676 = vmatprep.subr.mxu0 %v8642
    %8677 = vmatpush1.msra.mxu0 %v8641
    %8678 = vmatprep.subr.mxu0 0.0
    %8679 = vmatpush1.msra.mxu0 0.0
    %8680 = vmatprep.subr.mxu0 0.0
    %8681 = vmatpush1.msra.mxu0 0.0
    %8682 = vmatprep.subr.mxu0 0.0
    %8683 = vmatpush1.msra.mxu0 0.0
    %8684 = vmatprep.subr.mxu0 0.0
    %8685 = vmatpush1.msra.mxu0 0.0
    %8686 = vmatprep.subr.mxu0 0.0
    %8687 = vmatpush1.msra.mxu0 0.0
    %8688 = vmatprep.subr.mxu0 0.0
    %8689 = vmatpush1.msra.mxu0 0.0
    %8690 = vmatprep.subr.mxu0 0.0
    %8691 = vmatpush1.msra.mxu0 0.0
    %8692 = vmatprep.subr.mxu0 0.0
    %8693 = vmatpush1.msra.mxu0 0.0
    %8694 = vmatprep.subr.mxu0 0.0
    %8695 = vmatpush1.msra.mxu0 0.0
    %8696 = vmatprep.subr.mxu0 0.0
    %8697 = vmatpush1.msra.mxu0 0.0
    %8698 = vmatprep.subr.mxu0 0.0
    %8699 = vmatpush1.msra.mxu0 0.0
    %8700 = vmatprep.subr.mxu0 0.0
    %8701 = vmatpush1.msra.mxu0 0.0
    %8702 = vmatprep.subr.mxu0 0.0
    %8703 = vmatpush1.msra.mxu0 0.0
    %8704 = vmatprep.subr.mxu0 0.0
    %8705 = vmatpush1.msra.mxu0 0.0
    %8706 = vmatprep.subr.mxu0 0.0
    %8707 = vmatpush1.msra.mxu0 0.0
    %8708 = vmatprep.subr.mxu0 0.0
    %8709 = vmatpush1.msra.mxu0 0.0
    %8710 = vmatprep.mubr.f32.mxu0 0.0
    %8711 = vmatmul.mubr.f32.gmra.mrb[0].mxu0 0.0
    %v8712 = vpop.f32.mrb[0].mxu0
    %v8713 = vadd.f32 0.0, %v8712
    %v8714 = vpop.f32.mrb[0].mxu0
    %v8715 = vadd.f32 0.0, %v8714
    %8716 = vmatprep.mubr.f32.mxu0 0.0
    %8717 = vmatmul.mubr.f32.gmra.mrb[0].mxu0 0.0
    %v8718 = vpop.f32.mrb[0].mxu0
    %v8719 = vadd.f32 0.0, %v8718
    %v8720 = vpop.f32.mrb[0].mxu0
    %v8721 = vadd.f32 0.0, %v8720
    %8722 = vmatprep.mubr.f32.mxu0 0.0
    %8723 = vmatmul.mubr.f32.gmra.mrb[0].mxu0 0.0
    %v8724 = vpop.f32.mrb[0].mxu0
    %v8725 = vadd.f32 0.0, %v8724
    %v8726 = vpop.f32.mrb[0].mxu0
    %v8727 = vadd.f32 0.0, %v8726
    %8728 = vmatprep.mubr.f32.mxu0 0.0
    %8729 = vmatmul.mubr.f32.gmra.mrb[0].mxu0 0.0
    %v8730 = vpop.f32.mrb[0].mxu0
    %v8731 = vadd.f32 0.0, %v8730
    %v8732 = vpop.f32.mrb[0].mxu0
    %v8733 = vadd.f32 0.0, %v8732
    %8734 = vmatprep.mubr.f32.mxu0 0.0
    %8735 = vmatmul.mubr.f32.gmra.mrb[0].mxu0 0.0
    %v8736 = vpop.f32.mrb[0].mxu0
    %v8737 = vadd.f32 0.0, %v8736
    %v8738 = vpop.f32.mrb[0].mxu0
    %v8739 = vadd.f32 0.0, %v8738
    %8740 = vmatprep.mubr.f32.mxu0 0.0
    %8741 = vmatmul.mubr.f32.gmra.mrb[0].mxu0 0.0
    %v8742 = vpop.f32.mrb[0].mxu0
    %v8743 = vadd.f32 0.0, %v8742
    %v8744 = vpop.f32.mrb[0].mxu0
    %v8745 = vadd.f32 0.0, %v8744
    %8746 = vmatprep.mubr.f32.mxu0 0.0
    %8747 = vmatmul.mubr.f32.gmra.mrb[0].mxu0 0.0
    %v8748 = vpop.f32.mrb[0].mxu0
    %v8749 = vadd.f32 0.0, %v8748
    %v8750 = vpop.f32.mrb[0].mxu0
    %v8751 = vadd.f32 0.0, %v8750
    %8752 = vdwg.mxu0
    %8753 = vmatprep.subr.mxu0 %v8584
    %8754 = vmatpush1.msra.mxu0 %v8583
    %8755 = vmatprep.subr.mxu0 %v8588
    %8756 = vmatpush1.msra.mxu0 %v8587
    %8757 = vmatprep.subr.mxu0 %v8592
    %8758 = vmatpush1.msra.mxu0 %v8591
    %8759 = vmatprep.subr.mxu0 %v8596
    %8760 = vmatpush1.msra.mxu0 %v8595
    %8761 = vmatprep.subr.mxu0 %v8600
    %8762 = vmatpush1.msra.mxu0 %v8599
    %8763 = vmatprep.subr.mxu0 %v8604
    %8764 = vmatpush1.msra.mxu0 %v8603
    %8765 = vmatprep.subr.mxu0 %v8608
    %8766 = vmatpush1.msra.mxu0 %v8607
    %8767 = vmatprep.subr.mxu0 %v8612
    %8768 = vmatpush1.msra.mxu0 %v8611
    %8769 = vmatprep.subr.mxu0 %v8616
    %8770 = vmatpush1.msra.mxu0 %v8615
    %8771 = vmatprep.subr.mxu0 %v8620
    %8772 = vmatpush1.msra.mxu0 %v8619
    %8773 = vmatprep.subr.mxu0 %v8624
    %8774 = vmatpush1.msra.mxu0 %v8623
    %8775 = vmatprep.subr.mxu0 %v8628
    %8776 = vmatpush1.msra.mxu0 %v8627
    %8777 = vmatprep.subr.mxu0 %v8632
    %8778 = vmatpush1.msra.mxu0 %v8631
    %8779 = vmatprep.subr.mxu0 %v8636
    %8780 = vmatpush1.msra.mxu0 %v8635
    %8781 = vmatprep.subr.mxu0 %v8640
    %8782 = vmatpush1.msra.mxu0 %v8639
    %8783 = vmatprep.subr.mxu0 %v8644
    %8784 = vmatpush1.msra.mxu0 %v8643
    %8785 = vmatprep.subr.mxu0 0.0
    %8786 = vmatpush1.msra.mxu0 0.0
    %8787 = vmatprep.subr.mxu0 0.0
    %8788 = vmatpush1.msra.mxu0 0.0
    %8789 = vmatprep.subr.mxu0 0.0
    %8790 = vmatpush1.msra.mxu0 0.0
    %8791 = vmatprep.subr.mxu0 0.0
    %8792 = vmatpush1.msra.mxu0 0.0
    %8793 = vmatprep.subr.mxu0 0.0
    %8794 = vmatpush1.msra.mxu0 0.0
    %8795 = vmatprep.subr.mxu0 0.0
    %8796 = vmatpush1.msra.mxu0 0.0
    %8797 = vmatprep.subr.mxu0 0.0
    %8798 = vmatpush1.msra.mxu0 0.0
    %8799 = vmatprep.subr.mxu0 0.0
    %8800 = vmatpush1.msra.mxu0 0.0
    %8801 = vmatprep.subr.mxu0 0.0
    %8802 = vmatpush1.msra.mxu0 0.0
    %8803 = vmatprep.subr.mxu0 0.0
    %8804 = vmatpush1.msra.mxu0 0.0
    %8805 = vmatprep.subr.mxu0 0.0
    %8806 = vmatpush1.msra.mxu0 0.0
    %8807 = vmatprep.subr.mxu0 0.0
    %8808 = vmatpush1.msra.mxu0 0.0
    %8809 = vmatprep.subr.mxu0 0.0
    %8810 = vmatpush1.msra.mxu0 0.0
    %8811 = vmatprep.subr.mxu0 0.0
    %8812 = vmatpush1.msra.mxu0 0.0
    %8813 = vmatprep.subr.mxu0 0.0
    %8814 = vmatpush1.msra.mxu0 0.0
    %8815 = vmatprep.subr.mxu0 0.0
    %8816 = vmatpush1.msra.mxu0 0.0
    %8817 = vmatprep.mubr.f32.mxu0 0.0
    %8818 = vmatmul.mubr.f32.gmra.mrb[0].mxu0 0.0
    %v8819 = vpop.f32.mrb[0].mxu0
    %v8820 = vadd.f32 0.0, %v8819
    %v8821 = vpop.f32.mrb[0].mxu0
    %v8822 = vadd.f32 0.0, %v8821
    %8823 = vmatprep.mubr.f32.mxu0 0.0
    %8824 = vmatmul.mubr.f32.gmra.mrb[0].mxu0 0.0
    %v8825 = vpop.f32.mrb[0].mxu0
    %v8826 = vadd.f32 0.0, %v8825
    %v8827 = vpop.f32.mrb[0].mxu0
    %v8828 = vadd.f32 0.0, %v8827
    %8829 = vmatprep.mubr.f32.mxu0 0.0
    %8830 = vmatmul.mubr.f32.gmra.mrb[0].mxu0 0.0
    %v8831 = vpop.f32.mrb[0].mxu0
    %v8832 = vadd.f32 0.0, %v8831
    %v8833 = vpop.f32.mrb[0].mxu0
    %v8834 = vadd.f32 0.0, %v8833
    %8835 = vmatprep.mubr.f32.mxu0 0.0
    %8836 = vmatmul.mubr.f32.gmra.mrb[0].mxu0 0.0
    %v8837 = vpop.f32.mrb[0].mxu0
    %v8838 = vadd.f32 0.0, %v8837
    %v8839 = vpop.f32.mrb[0].mxu0
    %v8840 = vadd.f32 0.0, %v8839
    %8841 = vmatprep.mubr.f32.mxu0 0.0
    %8842 = vmatmul.mubr.f32.gmra.mrb[0].mxu0 0.0
    %v8843 = vpop.f32.mrb[0].mxu0
    %v8844 = vadd.f32 0.0, %v8843
    %v8845 = vpop.f32.mrb[0].mxu0
    %v8846 = vadd.f32 0.0, %v8845
    %8847 = vmatprep.mubr.f32.mxu0 0.0
    %8848 = vmatmul.mubr.f32.gmra.mrb[0].mxu0 0.0
    %v8849 = vpop.f32.mrb[0].mxu0
    %v8850 = vadd.f32 0.0, %v8849
    %v8851 = vpop.f32.mrb[0].mxu0
    %v8852 = vadd.f32 0.0, %v8851
    %8853 = vmatprep.mubr.f32.mxu0 0.0
    %8854 = vmatmul.mubr.f32.gmra.mrb[0].mxu0 0.0
    %v8855 = vpop.f32.mrb[0].mxu0
    %v8856 = vadd.f32 0.0, %v8855
    %v8857 = vpop.f32.mrb[0].mxu0
    %v8858 = vadd.f32 0.0, %v8857
    %8859 = vdwg.mxu0
    %v8860 = vadd.f32 %v8052, %v8713
    %v8861 = vadd.f32 %v8054, %v8715
    %v8862 = vadd.f32 %v8201, %v8820
    %v8863 = vadd.f32 %v8203, %v8822
    %v8864 = vadd.f32 %v8058, %v8719
    %v8865 = vadd.f32 %v8060, %v8721
    %v8866 = vadd.f32 %v8207, %v8826
    %v8867 = vadd.f32 %v8209, %v8828
    %v8868 = vadd.f32 %v8064, %v8725
    %v8869 = vadd.f32 %v8066, %v8727
    %v8870 = vadd.f32 %v8213, %v8832
    %v8871 = vadd.f32 %v8215, %v8834
    %v8872 = vadd.f32 %v8070, %v8731
    %v8873 = vadd.f32 %v8072, %v8733
    %v8874 = vadd.f32 %v8219, %v8838
    %v8875 = vadd.f32 %v8221, %v8840
    %v8876 = vadd.f32 %v8076, %v8737
    %v8877 = vadd.f32 %v8078, %v8739
    %v8878 = vadd.f32 %v8225, %v8844
    %v8879 = vadd.f32 %v8227, %v8846
    %v8880 = vadd.f32 %v8082, %v8743
    %v8881 = vadd.f32 %v8084, %v8745
    %v8882 = vadd.f32 %v8231, %v8850
    %v8883 = vadd.f32 %v8233, %v8852
    %v8884 = vadd.f32 %v8088, %v8749
    %v8885 = vadd.f32 %v8090, %v8751
    %v8886 = vadd.f32 %v8237, %v8856
    %v8887 = vadd.f32 %v8239, %v8858
    %v8889 = vlaneseq
    %v8890 = vshrl.u32 %v8889, 7
    %v8891 = vsub.s32 0, %v8890
    %v8892 = vrot.slane %v8645, %v8891
    %v8893 = vlaneseq
    %v8894 = vshrl.u32 %v8893, 7
    %v8895 = vsub.s32 1, %v8894
    %v8896 = vrot.slane %v8645, %v8895
    %v8897 = vlaneseq
    %v8898 = vshrl.u32 %v8897, 7
    %v8899 = vsub.s32 2, %v8898
    %v8900 = vrot.slane %v8645, %v8899
    %v8901 = vlaneseq
    %v8902 = vshrl.u32 %v8901, 7
    %v8903 = vsub.s32 3, %v8902
    %v8904 = vrot.slane %v8645, %v8903
    %v8909 = vadd.f32 %v8860, %v8892
    %v8910 = vadd.f32 %v8861, %v8896
    %v8911 = vadd.f32 %v8862, %v8900
    %v8912 = vadd.f32 %v8863, %v8904
    %v8913 = vadd.f32 %v8864, %v8892
    %v8914 = vadd.f32 %v8865, %v8896
    %v8915 = vadd.f32 %v8866, %v8900
    %v8916 = vadd.f32 %v8867, %v8904
    %v8917 = vadd.f32 %v8868, %v8892
    %v8918 = vadd.f32 %v8869, %v8896
    %v8919 = vadd.f32 %v8870, %v8900
    %v8920 = vadd.f32 %v8871, %v8904
    %v8921 = vadd.f32 %v8872, %v8892
    %v8922 = vadd.f32 %v8873, %v8896
    %v8923 = vadd.f32 %v8874, %v8900
    %v8924 = vadd.f32 %v8875, %v8904
    %v8925 = vadd.f32 %v8876, %v8892
    %v8926 = vadd.f32 %v8877, %v8896
    %v8927 = vadd.f32 %v8878, %v8900
    %v8928 = vadd.f32 %v8879, %v8904
    %v8929 = vadd.f32 %v8880, %v8892
    %v8930 = vadd.f32 %v8881, %v8896
    %v8931 = vadd.f32 %v8882, %v8900
    %v8932 = vadd.f32 %v8883, %v8904
    %v8933 = vadd.f32 %v8884, %v8892
    %v8934 = vadd.f32 %v8885, %v8896
    %v8935 = vadd.f32 %v8886, %v8900
    %v8936 = vadd.f32 %v8887, %v8904
    %v8937 = vsub.f32 0.0, %v8909
    %v8938 = vsub.f32 0.0, %v8913
    %v8939 = vsub.f32 0.0, %v8917
    %v8940 = vsub.f32 0.0, %v8921
    %v8941 = vsub.f32 0.0, %v8925
    %v8942 = vsub.f32 0.0, %v8929
    %v8943 = vsub.f32 0.0, %v8933
    %v8944 = vmul.f32 %v8937, 1.442695
    %v8945 = vpow.pop %v8944
    %v8946 = vmul.f32 %v8938, 1.442695
    %v8947 = vpow.pop %v8946
    %v8948 = vmul.f32 %v8939, 1.442695
    %v8949 = vpow.pop %v8948
    %v8950 = vmul.f32 %v8940, 1.442695
    %v8951 = vpow.pop %v8950
    %v8952 = vmul.f32 %v8941, 1.442695
    %v8953 = vpow.pop %v8952
    %v8954 = vmul.f32 %v8942, 1.442695
    %v8955 = vpow.pop %v8954
    %v8956 = vmul.f32 %v8943, 1.442695
    %v8957 = vpow.pop %v8956
    %v8958 = vadd.f32 %v8945, 1.0
    %v8959 = vadd.f32 %v8947, 1.0
    %v8960 = vadd.f32 %v8949, 1.0
    %v8961 = vadd.f32 %v8951, 1.0
    %v8962 = vadd.f32 %v8953, 1.0
    %v8963 = vadd.f32 %v8955, 1.0
    %v8964 = vadd.f32 %v8957, 1.0
    %v8965 = vrcp.pop %v8958
    %v8966 = vmul.f32 1.0, %v8965
    %v8967 = vrcp.pop %v8959
    %v8968 = vmul.f32 1.0, %v8967
    %v8969 = vrcp.pop %v8960
    %v8970 = vmul.f32 1.0, %v8969
    %v8971 = vrcp.pop %v8961
    %v8972 = vmul.f32 1.0, %v8971
    %v8973 = vrcp.pop %v8962
    %v8974 = vmul.f32 1.0, %v8973
    %v8975 = vrcp.pop %v8963
    %v8976 = vmul.f32 1.0, %v8975
    %v8977 = vrcp.pop %v8964
    %v8978 = vmul.f32 1.0, %v8977
    %v8979 = vsub.f32 0.0, %v8910
    %v8980 = vsub.f32 0.0, %v8914
    %v8981 = vsub.f32 0.0, %v8918
    %v8982 = vsub.f32 0.0, %v8922
    %v8983 = vsub.f32 0.0, %v8926
    %v8984 = vsub.f32 0.0, %v8930
    %v8985 = vsub.f32 0.0, %v8934
    %v8986 = vmul.f32 %v8979, 1.442695
    %v8987 = vpow.pop %v8986
    %v8988 = vmul.f32 %v8980, 1.442695
    %v8989 = vpow.pop %v8988
    %v8990 = vmul.f32 %v8981, 1.442695
    %v8991 = vpow.pop %v8990
    %v8992 = vmul.f32 %v8982, 1.442695
    %v8993 = vpow.pop %v8992
    %v8994 = vmul.f32 %v8983, 1.442695
    %v8995 = vpow.pop %v8994
    %v8996 = vmul.f32 %v8984, 1.442695
    %v8997 = vpow.pop %v8996
    %v8998 = vmul.f32 %v8985, 1.442695
    %v8999 = vpow.pop %v8998
    %v9000 = vadd.f32 %v8987, 1.0
    %v9001 = vadd.f32 %v8989, 1.0
    %v9002 = vadd.f32 %v8991, 1.0
    %v9003 = vadd.f32 %v8993, 1.0
    %v9004 = vadd.f32 %v8995, 1.0
    %v9005 = vadd.f32 %v8997, 1.0
    %v9006 = vadd.f32 %v8999, 1.0
    %v9007 = vrcp.pop %v9000
    %v9008 = vmul.f32 1.0, %v9007
    %v9009 = vrcp.pop %v9001
    %v9010 = vmul.f32 1.0, %v9009
    %v9011 = vrcp.pop %v9002
    %v9012 = vmul.f32 1.0, %v9011
    %v9013 = vrcp.pop %v9003
    %v9014 = vmul.f32 1.0, %v9013
    %v9015 = vrcp.pop %v9004
    %v9016 = vmul.f32 1.0, %v9015
    %v9017 = vrcp.pop %v9005
    %v9018 = vmul.f32 1.0, %v9017
    %v9019 = vrcp.pop %v9006
    %v9020 = vmul.f32 1.0, %v9019
    %v9021 = vtanh.pop %v8911
    %v9022 = vtanh.pop %v8915
    %v9023 = vtanh.pop %v8919
    %v9024 = vtanh.pop %v8923
    %v9025 = vtanh.pop %v8927
    %v9026 = vtanh.pop %v8931
    %v9027 = vtanh.pop %v8935
    %v9028 = vsub.f32 0.0, %v8912
    %v9029 = vsub.f32 0.0, %v8916
    %v9030 = vsub.f32 0.0, %v8920
    %v9031 = vsub.f32 0.0, %v8924
    %v9032 = vsub.f32 0.0, %v8928
    %v9033 = vsub.f32 0.0, %v8932
    %v9034 = vsub.f32 0.0, %v8936
    %v9035 = vmul.f32 %v9028, 1.442695
    %v9036 = vpow.pop %v9035
    %v9037 = vmul.f32 %v9029, 1.442695
    %v9038 = vpow.pop %v9037
    %v9039 = vmul.f32 %v9030, 1.442695
    %v9040 = vpow.pop %v9039
    %v9041 = vmul.f32 %v9031, 1.442695
    %v9042 = vpow.pop %v9041
    %v9043 = vmul.f32 %v9032, 1.442695
    %v9044 = vpow.pop %v9043
    %v9045 = vmul.f32 %v9033, 1.442695
    %v9046 = vpow.pop %v9045
    %v9047 = vmul.f32 %v9034, 1.442695
    %v9048 = vpow.pop %v9047
    %v9049 = vadd.f32 %v9036, 1.0
    %v9050 = vadd.f32 %v9038, 1.0
    %v9051 = vadd.f32 %v9040, 1.0
    %v9052 = vadd.f32 %v9042, 1.0
    %v9053 = vadd.f32 %v9044, 1.0
    %v9054 = vadd.f32 %v9046, 1.0
    %v9055 = vadd.f32 %v9048, 1.0
    %v9056 = vrcp.pop %v9049
    %v9057 = vmul.f32 1.0, %v9056
    %v9058 = vrcp.pop %v9050
    %v9059 = vmul.f32 1.0, %v9058
    %v9060 = vrcp.pop %v9051
    %v9061 = vmul.f32 1.0, %v9060
    %v9062 = vrcp.pop %v9052
    %v9063 = vmul.f32 1.0, %v9062
    %v9064 = vrcp.pop %v9053
    %v9065 = vmul.f32 1.0, %v9064
    %v9066 = vrcp.pop %v9054
    %v9067 = vmul.f32 1.0, %v9066
    %v9068 = vrcp.pop %v9055
    %v9069 = vmul.f32 1.0, %v9068
    %v9070 = vmul.f32 %v9008, 0.0
    %v9071 = vmul.f32 %v9010, 0.0
    %v9072 = vmul.f32 %v9012, 0.0
    %v9073 = vmul.f32 %v9014, 0.0
    %v9074 = vmul.f32 %v9016, 0.0
    %v9075 = vmul.f32 %v9018, 0.0
    %v9076 = vmul.f32 %v9020, 0.0
    %v9077 = vmul.f32 %v8966, %v9021
    %v9078 = vmul.f32 %v8968, %v9022
    %v9079 = vmul.f32 %v8970, %v9023
    %v9080 = vmul.f32 %v8972, %v9024
    %v9081 = vmul.f32 %v8974, %v9025
    %v9082 = vmul.f32 %v8976, %v9026
    %v9083 = vmul.f32 %v8978, %v9027
    %v9084 = vadd.f32 %v9070, %v9077
    %v9085 = vadd.f32 %v9071, %v9078
    %v9086 = vadd.f32 %v9072, %v9079
    %v9087 = vadd.f32 %v9073, %v9080
    %v9088 = vadd.f32 %v9074, %v9081
    %v9089 = vadd.f32 %v9075, %v9082
    %v9090 = vadd.f32 %v9076, %v9083
    %v9091 = vtanh.pop %v9084
    %v9092 = vtanh.pop %v9085
    %v9093 = vtanh.pop %v9086
    %v9094 = vtanh.pop %v9087
    %v9095 = vtanh.pop %v9088
    %v9096 = vtanh.pop %v9089
    %v9097 = vtanh.pop %v9090
    %v9098 = vmul.f32 %v9057, %v9091
    %v9099 = vmul.f32 %v9059, %v9092
    %v9100 = vmul.f32 %v9061, %v9093
    %v9101 = vmul.f32 %v9063, %v9094
    %v9102 = vmul.f32 %v9065, %v9095
    %v9103 = vmul.f32 %v9067, %v9096
    %v9104 = vmul.f32 %v9069, %v9097
    %9105 = vmatprep.subr.mxu0 %v8582
    %9106 = vmatpush1.msra.mxu0 %v8581
    %9107 = vmatprep.subr.mxu0 %v8586
    %9108 = vmatpush1.msra.mxu0 %v8585
    %9109 = vmatprep.subr.mxu0 %v8590
    %9110 = vmatpush1.msra.mxu0 %v8589
    %9111 = vmatprep.subr.mxu0 %v8594
    %9112 = vmatpush1.msra.mxu0 %v8593
    %9113 = vmatprep.subr.mxu0 %v8598
    %9114 = vmatpush1.msra.mxu0 %v8597
    %9115 = vmatprep.subr.mxu0 %v8602
    %9116 = vmatpush1.msra.mxu0 %v8601
    %9117 = vmatprep.subr.mxu0 %v8606
    %9118 = vmatpush1.msra.mxu0 %v8605
    %9119 = vmatprep.subr.mxu0 %v8610
    %9120 = vmatpush1.msra.mxu0 %v8609
    %9121 = vmatprep.subr.mxu0 %v8614
    %9122 = vmatpush1.msra.mxu0 %v8613
    %9123 = vmatprep.subr.mxu0 %v8618
    %9124 = vmatpush1.msra.mxu0 %v8617
    %9125 = vmatprep.subr.mxu0 %v8622
    %9126 = vmatpush1.msra.mxu0 %v8621
    %9127 = vmatprep.subr.mxu0 %v8626
    %9128 = vmatpush1.msra.mxu0 %v8625
    %9129 = vmatprep.subr.mxu0 %v8630
    %9130 = vmatpush1.msra.mxu0 %v8629
    %9131 = vmatprep.subr.mxu0 %v8634
    %9132 = vmatpush1.msra.mxu0 %v8633
    %9133 = vmatprep.subr.mxu0 %v8638
    %9134 = vmatpush1.msra.mxu0 %v8637
    %9135 = vmatprep.subr.mxu0 %v8642
    %9136 = vmatpush1.msra.mxu0 %v8641
    %9137 = vmatprep.subr.mxu0 0.0
    %9138 = vmatpush1.msra.mxu0 0.0
    %9139 = vmatprep.subr.mxu0 0.0
    %9140 = vmatpush1.msra.mxu0 0.0
    %9141 = vmatprep.subr.mxu0 0.0
    %9142 = vmatpush1.msra.mxu0 0.0
    %9143 = vmatprep.subr.mxu0 0.0
    %9144 = vmatpush1.msra.mxu0 0.0
    %9145 = vmatprep.subr.mxu0 0.0
    %9146 = vmatpush1.msra.mxu0 0.0
    %9147 = vmatprep.subr.mxu0 0.0
    %9148 = vmatpush1.msra.mxu0 0.0
    %9149 = vmatprep.subr.mxu0 0.0
    %9150 = vmatpush1.msra.mxu0 0.0
    %9151 = vmatprep.subr.mxu0 0.0
    %9152 = vmatpush1.msra.mxu0 0.0
    %9153 = vmatprep.subr.mxu0 0.0
    %9154 = vmatpush1.msra.mxu0 0.0
    %9155 = vmatprep.subr.mxu0 0.0
    %9156 = vmatpush1.msra.mxu0 0.0
    %9157 = vmatprep.subr.mxu0 0.0
    %9158 = vmatpush1.msra.mxu0 0.0
    %9159 = vmatprep.subr.mxu0 0.0
    %9160 = vmatpush1.msra.mxu0 0.0
    %9161 = vmatprep.subr.mxu0 0.0
    %9162 = vmatpush1.msra.mxu0 0.0
    %9163 = vmatprep.subr.mxu0 0.0
    %9164 = vmatpush1.msra.mxu0 0.0
    %9165 = vmatprep.subr.mxu0 0.0
    %9166 = vmatpush1.msra.mxu0 0.0
    %9167 = vmatprep.subr.mxu0 0.0
    %9168 = vmatpush1.msra.mxu0 0.0
    %9169 = vmatprep.mubr.f32.mxu0 0.0
    %9170 = vmatmul.mubr.f32.gmra.mrb[0].mxu0 %v9098
    %v9171 = vpop.f32.mrb[0].mxu0
    %v9172 = vadd.f32 0.0, %v9171
    %v9173 = vpop.f32.mrb[0].mxu0
    %v9174 = vadd.f32 0.0, %v9173
    %9175 = vmatprep.mubr.f32.mxu0 0.0
    %9176 = vmatmul.mubr.f32.gmra.mrb[0].mxu0 %v9099
    %v9177 = vpop.f32.mrb[0].mxu0
    %v9178 = vadd.f32 0.0, %v9177
    %v9179 = vpop.f32.mrb[0].mxu0
    %v9180 = vadd.f32 0.0, %v9179
    %9181 = vmatprep.mubr.f32.mxu0 0.0
    %9182 = vmatmul.mubr.f32.gmra.mrb[0].mxu0 %v9100
    %v9183 = vpop.f32.mrb[0].mxu0
    %v9184 = vadd.f32 0.0, %v9183
    %v9185 = vpop.f32.mrb[0].mxu0
    %v9186 = vadd.f32 0.0, %v9185
    %9187 = vmatprep.mubr.f32.mxu0 0.0
    %9188 = vmatmul.mubr.f32.gmra.mrb[0].mxu0 %v9101
    %v9189 = vpop.f32.mrb[0].mxu0
    %v9190 = vadd.f32 0.0, %v9189
    %v9191 = vpop.f32.mrb[0].mxu0
    %v9192 = vadd.f32 0.0, %v9191
    %9193 = vmatprep.mubr.f32.mxu0 0.0
    %9194 = vmatmul.mubr.f32.gmra.mrb[0].mxu0 %v9102
    %v9195 = vpop.f32.mrb[0].mxu0
    %v9196 = vadd.f32 0.0, %v9195
    %v9197 = vpop.f32.mrb[0].mxu0
    %v9198 = vadd.f32 0.0, %v9197
    %9199 = vmatprep.mubr.f32.mxu0 0.0
    %9200 = vmatmul.mubr.f32.gmra.mrb[0].mxu0 %v9103
    %v9201 = vpop.f32.mrb[0].mxu0
    %v9202 = vadd.f32 0.0, %v9201
    %v9203 = vpop.f32.mrb[0].mxu0
    %v9204 = vadd.f32 0.0, %v9203
    %9205 = vmatprep.mubr.f32.mxu0 0.0
    %9206 = vmatmul.mubr.f32.gmra.mrb[0].mxu0 %v9104
    %v9207 = vpop.f32.mrb[0].mxu0
    %v9208 = vadd.f32 0.0, %v9207
    %v9209 = vpop.f32.mrb[0].mxu0
    %v9210 = vadd.f32 0.0, %v9209
    %9211 = vdwg.mxu0
    %9212 = vmatprep.subr.mxu0 %v8584
    %9213 = vmatpush1.msra.mxu0 %v8583
    %9214 = vmatprep.subr.mxu0 %v8588
    %9215 = vmatpush1.msra.mxu0 %v8587
    %9216 = vmatprep.subr.mxu0 %v8592
    %9217 = vmatpush1.msra.mxu0 %v8591
    %9218 = vmatprep.subr.mxu0 %v8596
    %9219 = vmatpush1.msra.mxu0 %v8595
    %9220 = vmatprep.subr.mxu0 %v8600
    %9221 = vmatpush1.msra.mxu0 %v8599
    %9222 = vmatprep.subr.mxu0 %v8604
    %9223 = vmatpush1.msra.mxu0 %v8603
    %9224 = vmatprep.subr.mxu0 %v8608
    %9225 = vmatpush1.msra.mxu0 %v8607
    %9226 = vmatprep.subr.mxu0 %v8612
    %9227 = vmatpush1.msra.mxu0 %v8611
    %9228 = vmatprep.subr.mxu0 %v8616
    %9229 = vmatpush1.msra.mxu0 %v8615
    %9230 = vmatprep.subr.mxu0 %v8620
    %9231 = vmatpush1.msra.mxu0 %v8619
    %9232 = vmatprep.subr.mxu0 %v8624
    %9233 = vmatpush1.msra.mxu0 %v8623
    %9234 = vmatprep.subr.mxu0 %v8628
    %9235 = vmatpush1.msra.mxu0 %v8627
    %9236 = vmatprep.subr.mxu0 %v8632
    %9237 = vmatpush1.msra.mxu0 %v8631
    %9238 = vmatprep.subr.mxu0 %v8636
    %9239 = vmatpush1.msra.mxu0 %v8635
    %9240 = vmatprep.subr.mxu0 %v8640
    %9241 = vmatpush1.msra.mxu0 %v8639
    %9242 = vmatprep.subr.mxu0 %v8644
    %9243 = vmatpush1.msra.mxu0 %v8643
    %9244 = vmatprep.subr.mxu0 0.0
    %9245 = vmatpush1.msra.mxu0 0.0
    %9246 = vmatprep.subr.mxu0 0.0
    %9247 = vmatpush1.msra.mxu0 0.0
    %9248 = vmatprep.subr.mxu0 0.0
    %9249 = vmatpush1.msra.mxu0 0.0
    %9250 = vmatprep.subr.mxu0 0.0
    %9251 = vmatpush1.msra.mxu0 0.0
    %9252 = vmatprep.subr.mxu0 0.0
    %9253 = vmatpush1.msra.mxu0 0.0
    %9254 = vmatprep.subr.mxu0 0.0
    %9255 = vmatpush1.msra.mxu0 0.0
    %9256 = vmatprep.subr.mxu0 0.0
    %9257 = vmatpush1.msra.mxu0 0.0
    %9258 = vmatprep.subr.mxu0 0.0
    %9259 = vmatpush1.msra.mxu0 0.0
    %9260 = vmatprep.subr.mxu0 0.0
    %9261 = vmatpush1.msra.mxu0 0.0
    %9262 = vmatprep.subr.mxu0 0.0
    %9263 = vmatpush1.msra.mxu0 0.0
    %9264 = vmatprep.subr.mxu0 0.0
    %9265 = vmatpush1.msra.mxu0 0.0
    %9266 = vmatprep.subr.mxu0 0.0
    %9267 = vmatpush1.msra.mxu0 0.0
    %9268 = vmatprep.subr.mxu0 0.0
    %9269 = vmatpush1.msra.mxu0 0.0
    %9270 = vmatprep.subr.mxu0 0.0
    %9271 = vmatpush1.msra.mxu0 0.0
    %9272 = vmatprep.subr.mxu0 0.0
    %9273 = vmatpush1.msra.mxu0 0.0
    %9274 = vmatprep.subr.mxu0 0.0
    %9275 = vmatpush1.msra.mxu0 0.0
    %9276 = vmatprep.mubr.f32.mxu0 0.0
    %9277 = vmatmul.mubr.f32.gmra.mrb[0].mxu0 %v9098
    %v9278 = vpop.f32.mrb[0].mxu0
    %v9279 = vadd.f32 0.0, %v9278
    %v9280 = vpop.f32.mrb[0].mxu0
    %v9281 = vadd.f32 0.0, %v9280
    %9282 = vmatprep.mubr.f32.mxu0 0.0
    %9283 = vmatmul.mubr.f32.gmra.mrb[0].mxu0 %v9099
    %v9284 = vpop.f32.mrb[0].mxu0
    %v9285 = vadd.f32 0.0, %v9284
    %v9286 = vpop.f32.mrb[0].mxu0
    %v9287 = vadd.f32 0.0, %v9286
    %9288 = vmatprep.mubr.f32.mxu0 0.0
    %9289 = vmatmul.mubr.f32.gmra.mrb[0].mxu0 %v9100
    %v9290 = vpop.f32.mrb[0].mxu0
    %v9291 = vadd.f32 0.0, %v9290
    %v9292 = vpop.f32.mrb[0].mxu0
    %v9293 = vadd.f32 0.0, %v9292
    %9294 = vmatprep.mubr.f32.mxu0 0.0
    %9295 = vmatmul.mubr.f32.gmra.mrb[0].mxu0 %v9101
    %v9296 = vpop.f32.mrb[0].mxu0
    %v9297 = vadd.f32 0.0, %v9296
    %v9298 = vpop.f32.mrb[0].mxu0
    %v9299 = vadd.f32 0.0, %v9298
    %9300 = vmatprep.mubr.f32.mxu0 0.0
    %9301 = vmatmul.mubr.f32.gmra.mrb[0].mxu0 %v9102
    %v9302 = vpop.f32.mrb[0].mxu0
    %v9303 = vadd.f32 0.0, %v9302
    %v9304 = vpop.f32.mrb[0].mxu0
    %v9305 = vadd.f32 0.0, %v9304
    %9306 = vmatprep.mubr.f32.mxu0 0.0
    %9307 = vmatmul.mubr.f32.gmra.mrb[0].mxu0 %v9103
    %v9308 = vpop.f32.mrb[0].mxu0
    %v9309 = vadd.f32 0.0, %v9308
    %v9310 = vpop.f32.mrb[0].mxu0
    %v9311 = vadd.f32 0.0, %v9310
    %9312 = vmatprep.mubr.f32.mxu0 0.0
    %9313 = vmatmul.mubr.f32.gmra.mrb[0].mxu0 %v9104
    %v9314 = vpop.f32.mrb[0].mxu0
    %v9315 = vadd.f32 0.0, %v9314
    %v9316 = vpop.f32.mrb[0].mxu0
    %v9317 = vadd.f32 0.0, %v9316
    %9318 = vdwg.mxu0
    %v9319 = vadd.f32 %v8094, %v9172
    %v9320 = vadd.f32 %v8096, %v9174
    %v9321 = vadd.f32 %v8243, %v9279
    %v9322 = vadd.f32 %v8245, %v9281
    %v9323 = vadd.f32 %v8100, %v9178
    %v9324 = vadd.f32 %v8102, %v9180
    %v9325 = vadd.f32 %v8249, %v9285
    %v9326 = vadd.f32 %v8251, %v9287
    %v9327 = vadd.f32 %v8106, %v9184
    %v9328 = vadd.f32 %v8108, %v9186
    %v9329 = vadd.f32 %v8255, %v9291
    %v9330 = vadd.f32 %v8257, %v9293
    %v9331 = vadd.f32 %v8112, %v9190
    %v9332 = vadd.f32 %v8114, %v9192
    %v9333 = vadd.f32 %v8261, %v9297
    %v9334 = vadd.f32 %v8263, %v9299
    %v9335 = vadd.f32 %v8118, %v9196
    %v9336 = vadd.f32 %v8120, %v9198
    %v9337 = vadd.f32 %v8267, %v9303
    %v9338 = vadd.f32 %v8269, %v9305
    %v9339 = vadd.f32 %v8124, %v9202
    %v9340 = vadd.f32 %v8126, %v9204
    %v9341 = vadd.f32 %v8273, %v9309
    %v9342 = vadd.f32 %v8275, %v9311
    %v9343 = vadd.f32 %v8130, %v9208
    %v9344 = vadd.f32 %v8132, %v9210
    %v9345 = vadd.f32 %v8279, %v9315
    %v9346 = vadd.f32 %v8281, %v9317
    %v9347 = vadd.f32 %v9319, %v8892
    %v9348 = vadd.f32 %v9320, %v8896
    %v9349 = vadd.f32 %v9321, %v8900
    %v9350 = vadd.f32 %v9322, %v8904
    %v9351 = vadd.f32 %v9323, %v8892
    %v9352 = vadd.f32 %v9324, %v8896
    %v9353 = vadd.f32 %v9325, %v8900
    %v9354 = vadd.f32 %v9326, %v8904
    %v9355 = vadd.f32 %v9327, %v8892
    %v9356 = vadd.f32 %v9328, %v8896
    %v9357 = vadd.f32 %v9329, %v8900
    %v9358 = vadd.f32 %v9330, %v8904
    %v9359 = vadd.f32 %v9331, %v8892
    %v9360 = vadd.f32 %v9332, %v8896
    %v9361 = vadd.f32 %v9333, %v8900
    %v9362 = vadd.f32 %v9334, %v8904
    %v9363 = vadd.f32 %v9335, %v8892
    %v9364 = vadd.f32 %v9336, %v8896
    %v9365 = vadd.f32 %v9337, %v8900
    %v9366 = vadd.f32 %v9338, %v8904
    %v9367 = vadd.f32 %v9339, %v8892
    %v9368 = vadd.f32 %v9340, %v8896
    %v9369 = vadd.f32 %v9341, %v8900
    %v9370 = vadd.f32 %v9342, %v8904
    %v9371 = vadd.f32 %v9343, %v8892
    %v9372 = vadd.f32 %v9344, %v8896
    %v9373 = vadd.f32 %v9345, %v8900
    %v9374 = vadd.f32 %v9346, %v8904
    %v9375 = vsub.f32 0.0, %v9347
    %v9376 = vsub.f32 0.0, %v9351
    %v9377 = vsub.f32 0.0, %v9355
    %v9378 = vsub.f32 0.0, %v9359
    %v9379 = vsub.f32 0.0, %v9363
    %v9380 = vsub.f32 0.0, %v9367
    %v9381 = vsub.f32 0.0, %v9371
    %v9382 = vmul.f32 %v9375, 1.442695
    %v9383 = vpow.pop %v9382
    %v9384 = vmul.f32 %v9376, 1.442695
    %v9385 = vpow.pop %v9384
    %v9386 = vmul.f32 %v9377, 1.442695
    %v9387 = vpow.pop %v9386
    %v9388 = vmul.f32 %v9378, 1.442695
    %v9389 = vpow.pop %v9388
    %v9390 = vmul.f32 %v9379, 1.442695
    %v9391 = vpow.pop %v9390
    %v9392 = vmul.f32 %v9380, 1.442695
    %v9393 = vpow.pop %v9392
    %v9394 = vmul.f32 %v9381, 1.442695
    %v9395 = vpow.pop %v9394
    %v9396 = vadd.f32 %v9383, 1.0
    %v9397 = vadd.f32 %v9385, 1.0
    %v9398 = vadd.f32 %v9387, 1.0
    %v9399 = vadd.f32 %v9389, 1.0
    %v9400 = vadd.f32 %v9391, 1.0
    %v9401 = vadd.f32 %v9393, 1.0
    %v9402 = vadd.f32 %v9395, 1.0
    %v9403 = vrcp.pop %v9396
    %v9404 = vmul.f32 1.0, %v9403
    %v9405 = vrcp.pop %v9397
    %v9406 = vmul.f32 1.0, %v9405
    %v9407 = vrcp.pop %v9398
    %v9408 = vmul.f32 1.0, %v9407
    %v9409 = vrcp.pop %v9399
    %v9410 = vmul.f32 1.0, %v9409
    %v9411 = vrcp.pop %v9400
    %v9412 = vmul.f32 1.0, %v9411
    %v9413 = vrcp.pop %v9401
    %v9414 = vmul.f32 1.0, %v9413
    %v9415 = vrcp.pop %v9402
    %v9416 = vmul.f32 1.0, %v9415
    %v9417 = vsub.f32 0.0, %v9348
    %v9418 = vsub.f32 0.0, %v9352
    %v9419 = vsub.f32 0.0, %v9356
    %v9420 = vsub.f32 0.0, %v9360
    %v9421 = vsub.f32 0.0, %v9364
    %v9422 = vsub.f32 0.0, %v9368
    %v9423 = vsub.f32 0.0, %v9372
    %v9424 = vmul.f32 %v9417, 1.442695
    %v9425 = vpow.pop %v9424
    %v9426 = vmul.f32 %v9418, 1.442695
    %v9427 = vpow.pop %v9426
    %v9428 = vmul.f32 %v9419, 1.442695
    %v9429 = vpow.pop %v9428
    %v9430 = vmul.f32 %v9420, 1.442695
    %v9431 = vpow.pop %v9430
    %v9432 = vmul.f32 %v9421, 1.442695
    %v9433 = vpow.pop %v9432
    %v9434 = vmul.f32 %v9422, 1.442695
    %v9435 = vpow.pop %v9434
    %v9436 = vmul.f32 %v9423, 1.442695
    %v9437 = vpow.pop %v9436
    %v9438 = vadd.f32 %v9425, 1.0
    %v9439 = vadd.f32 %v9427, 1.0
    %v9440 = vadd.f32 %v9429, 1.0
    %v9441 = vadd.f32 %v9431, 1.0
    %v9442 = vadd.f32 %v9433, 1.0
    %v9443 = vadd.f32 %v9435, 1.0
    %v9444 = vadd.f32 %v9437, 1.0
    %v9445 = vrcp.pop %v9438
    %v9446 = vmul.f32 1.0, %v9445
    %v9447 = vrcp.pop %v9439
    %v9448 = vmul.f32 1.0, %v9447
    %v9449 = vrcp.pop %v9440
    %v9450 = vmul.f32 1.0, %v9449
    %v9451 = vrcp.pop %v9441
    %v9452 = vmul.f32 1.0, %v9451
    %v9453 = vrcp.pop %v9442
    %v9454 = vmul.f32 1.0, %v9453
    %v9455 = vrcp.pop %v9443
    %v9456 = vmul.f32 1.0, %v9455
    %v9457 = vrcp.pop %v9444
    %v9458 = vmul.f32 1.0, %v9457
    %v9459 = vtanh.pop %v9349
    %v9460 = vtanh.pop %v9353
    %v9461 = vtanh.pop %v9357
    %v9462 = vtanh.pop %v9361
    %v9463 = vtanh.pop %v9365
    %v9464 = vtanh.pop %v9369
    %v9465 = vtanh.pop %v9373
    %v9466 = vsub.f32 0.0, %v9350
    %v9467 = vsub.f32 0.0, %v9354
    %v9468 = vsub.f32 0.0, %v9358
    %v9469 = vsub.f32 0.0, %v9362
    %v9470 = vsub.f32 0.0, %v9366
    %v9471 = vsub.f32 0.0, %v9370
    %v9472 = vsub.f32 0.0, %v9374
    %v9473 = vmul.f32 %v9466, 1.442695
    %v9474 = vpow.pop %v9473
    %v9475 = vmul.f32 %v9467, 1.442695
    %v9476 = vpow.pop %v9475
    %v9477 = vmul.f32 %v9468, 1.442695
    %v9478 = vpow.pop %v9477
    %v9479 = vmul.f32 %v9469, 1.442695
    %v9480 = vpow.pop %v9479
    %v9481 = vmul.f32 %v9470, 1.442695
    %v9482 = vpow.pop %v9481
    %v9483 = vmul.f32 %v9471, 1.442695
    %v9484 = vpow.pop %v9483
    %v9485 = vmul.f32 %v9472, 1.442695
    %v9486 = vpow.pop %v9485
    %v9487 = vadd.f32 %v9474, 1.0
    %v9488 = vadd.f32 %v9476, 1.0
    %v9489 = vadd.f32 %v9478, 1.0
    %v9490 = vadd.f32 %v9480, 1.0
    %v9491 = vadd.f32 %v9482, 1.0
    %v9492 = vadd.f32 %v9484, 1.0
    %v9493 = vadd.f32 %v9486, 1.0
    %v9494 = vrcp.pop %v9487
    %v9495 = vmul.f32 1.0, %v9494
    %v9496 = vrcp.pop %v9488
    %v9497 = vmul.f32 1.0, %v9496
    %v9498 = vrcp.pop %v9489
    %v9499 = vmul.f32 1.0, %v9498
    %v9500 = vrcp.pop %v9490
    %v9501 = vmul.f32 1.0, %v9500
    %v9502 = vrcp.pop %v9491
    %v9503 = vmul.f32 1.0, %v9502
    %v9504 = vrcp.pop %v9492
    %v9505 = vmul.f32 1.0, %v9504
    %v9506 = vrcp.pop %v9493
    %v9507 = vmul.f32 1.0, %v9506
    %v9508 = vmul.f32 %v9446, %v9084
    %v9509 = vmul.f32 %v9448, %v9085
    %v9510 = vmul.f32 %v9450, %v9086
    %v9511 = vmul.f32 %v9452, %v9087
    %v9512 = vmul.f32 %v9454, %v9088
    %v9513 = vmul.f32 %v9456, %v9089
    %v9514 = vmul.f32 %v9458, %v9090
    %v9515 = vmul.f32 %v9404, %v9459
    %v9516 = vmul.f32 %v9406, %v9460
    %v9517 = vmul.f32 %v9408, %v9461
    %v9518 = vmul.f32 %v9410, %v9462
    %v9519 = vmul.f32 %v9412, %v9463
    %v9520 = vmul.f32 %v9414, %v9464
    %v9521 = vmul.f32 %v9416, %v9465
    %v9522 = vadd.f32 %v9508, %v9515
    %v9523 = vadd.f32 %v9509, %v9516
    %v9524 = vadd.f32 %v9510, %v9517
    %v9525 = vadd.f32 %v9511, %v9518
    %v9526 = vadd.f32 %v9512, %v9519
    %v9527 = vadd.f32 %v9513, %v9520
    %v9528 = vadd.f32 %v9514, %v9521
    %v9529 = vtanh.pop %v9522
    %v9530 = vtanh.pop %v9523
    %v9531 = vtanh.pop %v9524
    %v9532 = vtanh.pop %v9525
    %v9533 = vtanh.pop %v9526
    %v9534 = vtanh.pop %v9527
    %v9535 = vtanh.pop %v9528
    %v9536 = vmul.f32 %v9495, %v9529
    %v9537 = vmul.f32 %v9497, %v9530
    %v9538 = vmul.f32 %v9499, %v9531
    %v9539 = vmul.f32 %v9501, %v9532
    %v9540 = vmul.f32 %v9503, %v9533
    %v9541 = vmul.f32 %v9505, %v9534
    %v9542 = vmul.f32 %v9507, %v9535
    %v9543 = vld [vmem:[%s13] sm:$0xff]
    %v9544 = vld [vmem:[%s13 + $0x8] sm:$0xff]
    %v9545 = vld [vmem:[%s13 + $0x10] sm:$0xff]
    %v9546 = vld [vmem:[%s13 + $0x18] sm:$0xff]
    %v9547 = vld [vmem:[%s13 + $0x20] sm:$0xff]
    %v9548 = vld [vmem:[%s13 + $0x28] sm:$0xff]
    %v9549 = vld [vmem:[%s13 + $0x30] sm:$0xff]
    %v9550 = vld [vmem:[%s13 + $0x38] sm:$0xff]
    %v9551 = vld [vmem:[%s13 + $0x40] sm:$0xff]
    %v9552 = vld [vmem:[%s13 + $0x48] sm:$0xff]
    %v9553 = vld [vmem:[%s13 + $0x50] sm:$0xff]
    %v9554 = vld [vmem:[%s13 + $0x58] sm:$0xff]
    %v9555 = vld [vmem:[%s13 + $0x60] sm:$0xff]
    %v9556 = vld [vmem:[%s13 + $0x68] sm:$0xff]
    %v9557 = vld [vmem:[%s13 + $0x70] sm:$0xff]
    %v9558 = vld [vmem:[%s13 + $0x78] sm:$0xff]
    %v9559 = vld [vmem:[%s13 + $0x80] sm:$0xff]
    %v9560 = vld [vmem:[%s13 + $0x88] sm:$0xff]
    %v9561 = vld [vmem:[%s13 + $0x90] sm:$0xff]
    %v9562 = vld [vmem:[%s13 + $0x98] sm:$0xff]
    %v9563 = vld [vmem:[%s13 + $0xa0] sm:$0xff]
    %v9564 = vld [vmem:[%s13 + $0xa8] sm:$0xff]
    %v9565 = vld [vmem:[%s13 + $0xb0] sm:$0xff]
    %v9566 = vld [vmem:[%s13 + $0xb8] sm:$0xff]
    %v9567 = vld [vmem:[%s13 + $0xc0] sm:$0xff]
    %v9568 = vld [vmem:[%s13 + $0xc8] sm:$0xff]
    %v9569 = vld [vmem:[%s13 + $0xd0] sm:$0xff]
    %v9570 = vld [vmem:[%s13 + $0xd8] sm:$0xff]
    %v9571 = vld [vmem:[%s13 + $0xe0] sm:$0xff]
    %v9572 = vld [vmem:[%s13 + $0xe8] sm:$0xff]
    %v9573 = vld [vmem:[%s13 + $0xf0] sm:$0xff]
    %v9574 = vld [vmem:[%s13 + $0xf8] sm:$0xff]
    %v9575 = vld [vmem:[%s13 + $0x100] sm:$0xff]
    %v9576 = vld [vmem:[%s13 + $0x108] sm:$0xff]
    %v9577 = vld [vmem:[%s13 + $0x110] sm:$0xff]
    %v9578 = vld [vmem:[%s13 + $0x118] sm:$0xff]
    %v9579 = vld [vmem:[%s13 + $0x120] sm:$0xff]
    %v9580 = vld [vmem:[%s13 + $0x128] sm:$0xff]
    %v9581 = vld [vmem:[%s13 + $0x130] sm:$0xff]
    %v9582 = vld [vmem:[%s13 + $0x138] sm:$0xff]
    %v9583 = vld [vmem:[%s13 + $0x140] sm:$0xff]
    %v9584 = vld [vmem:[%s13 + $0x148] sm:$0xff]
    %v9585 = vld [vmem:[%s13 + $0x150] sm:$0xff]
    %v9586 = vld [vmem:[%s13 + $0x158] sm:$0xff]
    %v9587 = vld [vmem:[%s13 + $0x160] sm:$0xff]
    %v9588 = vld [vmem:[%s13 + $0x168] sm:$0xff]
    %v9589 = vld [vmem:[%s13 + $0x170] sm:$0xff]
    %v9590 = vld [vmem:[%s13 + $0x178] sm:$0xff]
    %v9591 = vld [vmem:[%s13 + $0x180] sm:$0xff]
    %v9592 = vld [vmem:[%s13 + $0x188] sm:$0xff]
    %v9593 = vld [vmem:[%s13 + $0x190] sm:$0xff]
    %v9594 = vld [vmem:[%s13 + $0x198] sm:$0xff]
    %v9595 = vld [vmem:[%s13 + $0x1a0] sm:$0xff]
    %v9596 = vld [vmem:[%s13 + $0x1a8] sm:$0xff]
    %v9597 = vld [vmem:[%s13 + $0x1b0] sm:$0xff]
    %v9598 = vld [vmem:[%s13 + $0x1b8] sm:$0xff]
    %v9599 = vld [vmem:[%s13 + $0x1c0] sm:$0xff]
    %v9600 = vld [vmem:[%s13 + $0x1c8] sm:$0xff]
    %v9601 = vld [vmem:[%s13 + $0x1d0] sm:$0xff]
    %v9602 = vld [vmem:[%s13 + $0x1d8] sm:$0xff]
    %v9603 = vld [vmem:[%s13 + $0x1e0] sm:$0xff]
    %v9604 = vld [vmem:[%s13 + $0x1e8] sm:$0xff]
    %v9605 = vld [vmem:[%s13 + $0x1f0] sm:$0xff]
    %v9606 = vld [vmem:[%s13 + $0x1f8] sm:$0xff]
    %v9607 = vld [vmem:[%s15] sm:$0xf]
    %9608 = vmatprep.subr.mxu0 %v9544
    %9609 = vmatpush1.msra.mxu0 %v9543
    %9610 = vmatprep.subr.mxu0 %v9548
    %9611 = vmatpush1.msra.mxu0 %v9547
    %9612 = vmatprep.subr.mxu0 %v9552
    %9613 = vmatpush1.msra.mxu0 %v9551
    %9614 = vmatprep.subr.mxu0 %v9556
    %9615 = vmatpush1.msra.mxu0 %v9555
    %9616 = vmatprep.subr.mxu0 %v9560
    %9617 = vmatpush1.msra.mxu0 %v9559
    %9618 = vmatprep.subr.mxu0 %v9564
    %9619 = vmatpush1.msra.mxu0 %v9563
    %9620 = vmatprep.subr.mxu0 %v9568
    %9621 = vmatpush1.msra.mxu0 %v9567
    %9622 = vmatprep.subr.mxu0 %v9572
    %9623 = vmatpush1.msra.mxu0 %v9571
    %9624 = vmatprep.subr.mxu0 %v9576
    %9625 = vmatpush1.msra.mxu0 %v9575
    %9626 = vmatprep.subr.mxu0 %v9580
    %9627 = vmatpush1.msra.mxu0 %v9579
    %9628 = vmatprep.subr.mxu0 %v9584
    %9629 = vmatpush1.msra.mxu0 %v9583
    %9630 = vmatprep.subr.mxu0 %v9588
    %9631 = vmatpush1.msra.mxu0 %v9587
    %9632 = vmatprep.subr.mxu0 %v9592
    %9633 = vmatpush1.msra.mxu0 %v9591
    %9634 = vmatprep.subr.mxu0 %v9596
    %9635 = vmatpush1.msra.mxu0 %v9595
    %9636 = vmatprep.subr.mxu0 %v9600
    %9637 = vmatpush1.msra.mxu0 %v9599
    %9638 = vmatprep.subr.mxu0 %v9604
    %9639 = vmatpush1.msra.mxu0 %v9603
    %9640 = vmatprep.subr.mxu0 0.0
    %9641 = vmatpush1.msra.mxu0 0.0
    %9642 = vmatprep.subr.mxu0 0.0
    %9643 = vmatpush1.msra.mxu0 0.0
    %9644 = vmatprep.subr.mxu0 0.0
    %9645 = vmatpush1.msra.mxu0 0.0
    %9646 = vmatprep.subr.mxu0 0.0
    %9647 = vmatpush1.msra.mxu0 0.0
    %9648 = vmatprep.subr.mxu0 0.0
    %9649 = vmatpush1.msra.mxu0 0.0
    %9650 = vmatprep.subr.mxu0 0.0
    %9651 = vmatpush1.msra.mxu0 0.0
    %9652 = vmatprep.subr.mxu0 0.0
    %9653 = vmatpush1.msra.mxu0 0.0
    %9654 = vmatprep.subr.mxu0 0.0
    %9655 = vmatpush1.msra.mxu0 0.0
    %9656 = vmatprep.subr.mxu0 0.0
    %9657 = vmatpush1.msra.mxu0 0.0
    %9658 = vmatprep.subr.mxu0 0.0
    %9659 = vmatpush1.msra.mxu0 0.0
    %9660 = vmatprep.subr.mxu0 0.0
    %9661 = vmatpush1.msra.mxu0 0.0
    %9662 = vmatprep.subr.mxu0 0.0
    %9663 = vmatpush1.msra.mxu0 0.0
    %9664 = vmatprep.subr.mxu0 0.0
    %9665 = vmatpush1.msra.mxu0 0.0
    %9666 = vmatprep.subr.mxu0 0.0
    %9667 = vmatpush1.msra.mxu0 0.0
    %9668 = vmatprep.subr.mxu0 0.0
    %9669 = vmatpush1.msra.mxu0 0.0
    %9670 = vmatprep.subr.mxu0 0.0
    %9671 = vmatpush1.msra.mxu0 0.0
    %9672 = vmatprep.mubr.f32.mxu0 0.0
    %9673 = vmatmul.mubr.f32.gmra.mrb[0].mxu0 0.0
    %v9674 = vpop.f32.mrb[0].mxu0
    %v9675 = vadd.f32 0.0, %v9674
    %v9676 = vpop.f32.mrb[0].mxu0
    %v9677 = vadd.f32 0.0, %v9676
    %9678 = vmatprep.mubr.f32.mxu0 0.0
    %9679 = vmatmul.mubr.f32.gmra.mrb[0].mxu0 0.0
    %v9680 = vpop.f32.mrb[0].mxu0
    %v9681 = vadd.f32 0.0, %v9680
    %v9682 = vpop.f32.mrb[0].mxu0
    %v9683 = vadd.f32 0.0, %v9682
    %9684 = vmatprep.mubr.f32.mxu0 0.0
    %9685 = vmatmul.mubr.f32.gmra.mrb[0].mxu0 0.0
    %v9686 = vpop.f32.mrb[0].mxu0
    %v9687 = vadd.f32 0.0, %v9686
    %v9688 = vpop.f32.mrb[0].mxu0
    %v9689 = vadd.f32 0.0, %v9688
    %9690 = vmatprep.mubr.f32.mxu0 0.0
    %9691 = vmatmul.mubr.f32.gmra.mrb[0].mxu0 0.0
    %v9692 = vpop.f32.mrb[0].mxu0
    %v9693 = vadd.f32 0.0, %v9692
    %v9694 = vpop.f32.mrb[0].mxu0
    %v9695 = vadd.f32 0.0, %v9694
    %9696 = vmatprep.mubr.f32.mxu0 0.0
    %9697 = vmatmul.mubr.f32.gmra.mrb[0].mxu0 0.0
    %v9698 = vpop.f32.mrb[0].mxu0
    %v9699 = vadd.f32 0.0, %v9698
    %v9700 = vpop.f32.mrb[0].mxu0
    %v9701 = vadd.f32 0.0, %v9700
    %9702 = vmatprep.mubr.f32.mxu0 0.0
    %9703 = vmatmul.mubr.f32.gmra.mrb[0].mxu0 0.0
    %v9704 = vpop.f32.mrb[0].mxu0
    %v9705 = vadd.f32 0.0, %v9704
    %v9706 = vpop.f32.mrb[0].mxu0
    %v9707 = vadd.f32 0.0, %v9706
    %9708 = vmatprep.mubr.f32.mxu0 0.0
    %9709 = vmatmul.mubr.f32.gmra.mrb[0].mxu0 0.0
    %v9710 = vpop.f32.mrb[0].mxu0
    %v9711 = vadd.f32 0.0, %v9710
    %v9712 = vpop.f32.mrb[0].mxu0
    %v9713 = vadd.f32 0.0, %v9712
    %9714 = vdwg.mxu0
    %9715 = vmatprep.subr.mxu0 %v9546
    %9716 = vmatpush1.msra.mxu0 %v9545
    %9717 = vmatprep.subr.mxu0 %v9550
    %9718 = vmatpush1.msra.mxu0 %v9549
    %9719 = vmatprep.subr.mxu0 %v9554
    %9720 = vmatpush1.msra.mxu0 %v9553
    %9721 = vmatprep.subr.mxu0 %v9558
    %9722 = vmatpush1.msra.mxu0 %v9557
    %9723 = vmatprep.subr.mxu0 %v9562
    %9724 = vmatpush1.msra.mxu0 %v9561
    %9725 = vmatprep.subr.mxu0 %v9566
    %9726 = vmatpush1.msra.mxu0 %v9565
    %9727 = vmatprep.subr.mxu0 %v9570
    %9728 = vmatpush1.msra.mxu0 %v9569
    %9729 = vmatprep.subr.mxu0 %v9574
    %9730 = vmatpush1.msra.mxu0 %v9573
    %9731 = vmatprep.subr.mxu0 %v9578
    %9732 = vmatpush1.msra.mxu0 %v9577
    %9733 = vmatprep.subr.mxu0 %v9582
    %9734 = vmatpush1.msra.mxu0 %v9581
    %9735 = vmatprep.subr.mxu0 %v9586
    %9736 = vmatpush1.msra.mxu0 %v9585
    %9737 = vmatprep.subr.mxu0 %v9590
    %9738 = vmatpush1.msra.mxu0 %v9589
    %9739 = vmatprep.subr.mxu0 %v9594
    %9740 = vmatpush1.msra.mxu0 %v9593
    %9741 = vmatprep.subr.mxu0 %v9598
    %9742 = vmatpush1.msra.mxu0 %v9597
    %9743 = vmatprep.subr.mxu0 %v9602
    %9744 = vmatpush1.msra.mxu0 %v9601
    %9745 = vmatprep.subr.mxu0 %v9606
    %9746 = vmatpush1.msra.mxu0 %v9605
    %9747 = vmatprep.subr.mxu0 0.0
    %9748 = vmatpush1.msra.mxu0 0.0
    %9749 = vmatprep.subr.mxu0 0.0
    %9750 = vmatpush1.msra.mxu0 0.0
    %9751 = vmatprep.subr.mxu0 0.0
    %9752 = vmatpush1.msra.mxu0 0.0
    %9753 = vmatprep.subr.mxu0 0.0
    %9754 = vmatpush1.msra.mxu0 0.0
    %9755 = vmatprep.subr.mxu0 0.0
    %9756 = vmatpush1.msra.mxu0 0.0
    %9757 = vmatprep.subr.mxu0 0.0
    %9758 = vmatpush1.msra.mxu0 0.0
    %9759 = vmatprep.subr.mxu0 0.0
    %9760 = vmatpush1.msra.mxu0 0.0
    %9761 = vmatprep.subr.mxu0 0.0
    %9762 = vmatpush1.msra.mxu0 0.0
    %9763 = vmatprep.subr.mxu0 0.0
    %9764 = vmatpush1.msra.mxu0 0.0
    %9765 = vmatprep.subr.mxu0 0.0
    %9766 = vmatpush1.msra.mxu0 0.0
    %9767 = vmatprep.subr.mxu0 0.0
    %9768 = vmatpush1.msra.mxu0 0.0
    %9769 = vmatprep.subr.mxu0 0.0
    %9770 = vmatpush1.msra.mxu0 0.0
    %9771 = vmatprep.subr.mxu0 0.0
    %9772 = vmatpush1.msra.mxu0 0.0
    %9773 = vmatprep.subr.mxu0 0.0
    %9774 = vmatpush1.msra.mxu0 0.0
    %9775 = vmatprep.subr.mxu0 0.0
    %9776 = vmatpush1.msra.mxu0 0.0
    %9777 = vmatprep.subr.mxu0 0.0
    %9778 = vmatpush1.msra.mxu0 0.0
    %9779 = vmatprep.mubr.f32.mxu0 0.0
    %9780 = vmatmul.mubr.f32.gmra.mrb[0].mxu0 0.0
    %v9781 = vpop.f32.mrb[0].mxu0
    %v9782 = vadd.f32 0.0, %v9781
    %v9783 = vpop.f32.mrb[0].mxu0
    %v9784 = vadd.f32 0.0, %v9783
    %9785 = vmatprep.mubr.f32.mxu0 0.0
    %9786 = vmatmul.mubr.f32.gmra.mrb[0].mxu0 0.0
    %v9787 = vpop.f32.mrb[0].mxu0
    %v9788 = vadd.f32 0.0, %v9787
    %v9789 = vpop.f32.mrb[0].mxu0
    %v9790 = vadd.f32 0.0, %v9789
    %9791 = vmatprep.mubr.f32.mxu0 0.0
    %9792 = vmatmul.mubr.f32.gmra.mrb[0].mxu0 0.0
    %v9793 = vpop.f32.mrb[0].mxu0
    %v9794 = vadd.f32 0.0, %v9793
    %v9795 = vpop.f32.mrb[0].mxu0
    %v9796 = vadd.f32 0.0, %v9795
    %9797 = vmatprep.mubr.f32.mxu0 0.0
    %9798 = vmatmul.mubr.f32.gmra.mrb[0].mxu0 0.0
    %v9799 = vpop.f32.mrb[0].mxu0
    %v9800 = vadd.f32 0.0, %v9799
    %v9801 = vpop.f32.mrb[0].mxu0
    %v9802 = vadd.f32 0.0, %v9801
    %9803 = vmatprep.mubr.f32.mxu0 0.0
    %9804 = vmatmul.mubr.f32.gmra.mrb[0].mxu0 0.0
    %v9805 = vpop.f32.mrb[0].mxu0
    %v9806 = vadd.f32 0.0, %v9805
    %v9807 = vpop.f32.mrb[0].mxu0
    %v9808 = vadd.f32 0.0, %v9807
    %9809 = vmatprep.mubr.f32.mxu0 0.0
    %9810 = vmatmul.mubr.f32.gmra.mrb[0].mxu0 0.0
    %v9811 = vpop.f32.mrb[0].mxu0
    %v9812 = vadd.f32 0.0, %v9811
    %v9813 = vpop.f32.mrb[0].mxu0
    %v9814 = vadd.f32 0.0, %v9813
    %9815 = vmatprep.mubr.f32.mxu0 0.0
    %9816 = vmatmul.mubr.f32.gmra.mrb[0].mxu0 0.0
    %v9817 = vpop.f32.mrb[0].mxu0
    %v9818 = vadd.f32 0.0, %v9817
    %v9819 = vpop.f32.mrb[0].mxu0
    %v9820 = vadd.f32 0.0, %v9819
    %9821 = vdwg.mxu0
    %v9822 = vadd.f32 %v8392, %v9675
    %v9823 = vadd.f32 %v8394, %v9677
    %v9824 = vadd.f32 %v8541, %v9782
    %v9825 = vadd.f32 %v8543, %v9784
    %v9826 = vadd.f32 %v8398, %v9681
    %v9827 = vadd.f32 %v8400, %v9683
    %v9828 = vadd.f32 %v8547, %v9788
    %v9829 = vadd.f32 %v8549, %v9790
    %v9830 = vadd.f32 %v8404, %v9687
    %v9831 = vadd.f32 %v8406, %v9689
    %v9832 = vadd.f32 %v8553, %v9794
    %v9833 = vadd.f32 %v8555, %v9796
    %v9834 = vadd.f32 %v8410, %v9693
    %v9835 = vadd.f32 %v8412, %v9695
    %v9836 = vadd.f32 %v8559, %v9800
    %v9837 = vadd.f32 %v8561, %v9802
    %v9838 = vadd.f32 %v8416, %v9699
    %v9839 = vadd.f32 %v8418, %v9701
    %v9840 = vadd.f32 %v8565, %v9806
    %v9841 = vadd.f32 %v8567, %v9808
    %v9842 = vadd.f32 %v8422, %v9705
    %v9843 = vadd.f32 %v8424, %v9707
    %v9844 = vadd.f32 %v8571, %v9812
    %v9845 = vadd.f32 %v8573, %v9814
    %v9846 = vadd.f32 %v8428, %v9711
    %v9847 = vadd.f32 %v8430, %v9713
    %v9848 = vadd.f32 %v8577, %v9818
    %v9849 = vadd.f32 %v8579, %v9820
    %v9851 = vlaneseq
    %v9852 = vshrl.u32 %v9851, 7
    %v9853 = vsub.s32 0, %v9852
    %v9854 = vrot.slane %v9607, %v9853
    %v9855 = vlaneseq
    %v9856 = vshrl.u32 %v9855, 7
    %v9857 = vsub.s32 1, %v9856
    %v9858 = vrot.slane %v9607, %v9857
    %v9859 = vlaneseq
    %v9860 = vshrl.u32 %v9859, 7
    %v9861 = vsub.s32 2, %v9860
    %v9862 = vrot.slane %v9607, %v9861
    %v9863 = vlaneseq
    %v9864 = vshrl.u32 %v9863, 7
    %v9865 = vsub.s32 3, %v9864
    %v9866 = vrot.slane %v9607, %v9865
    %v9871 = vadd.f32 %v9822, %v9854
    %v9872 = vadd.f32 %v9823, %v9858
    %v9873 = vadd.f32 %v9824, %v9862
    %v9874 = vadd.f32 %v9825, %v9866
    %v9875 = vadd.f32 %v9826, %v9854
    %v9876 = vadd.f32 %v9827, %v9858
    %v9877 = vadd.f32 %v9828, %v9862
    %v9878 = vadd.f32 %v9829, %v9866
    %v9879 = vadd.f32 %v9830, %v9854
    %v9880 = vadd.f32 %v9831, %v9858
    %v9881 = vadd.f32 %v9832, %v9862
    %v9882 = vadd.f32 %v9833, %v9866
    %v9883 = vadd.f32 %v9834, %v9854
    %v9884 = vadd.f32 %v9835, %v9858
    %v9885 = vadd.f32 %v9836, %v9862
    %v9886 = vadd.f32 %v9837, %v9866
    %v9887 = vadd.f32 %v9838, %v9854
    %v9888 = vadd.f32 %v9839, %v9858
    %v9889 = vadd.f32 %v9840, %v9862
    %v9890 = vadd.f32 %v9841, %v9866
    %v9891 = vadd.f32 %v9842, %v9854
    %v9892 = vadd.f32 %v9843, %v9858
    %v9893 = vadd.f32 %v9844, %v9862
    %v9894 = vadd.f32 %v9845, %v9866
    %v9895 = vadd.f32 %v9846, %v9854
    %v9896 = vadd.f32 %v9847, %v9858
    %v9897 = vadd.f32 %v9848, %v9862
    %v9898 = vadd.f32 %v9849, %v9866
    %v9899 = vsub.f32 0.0, %v9871
    %v9900 = vsub.f32 0.0, %v9875
    %v9901 = vsub.f32 0.0, %v9879
    %v9902 = vsub.f32 0.0, %v9883
    %v9903 = vsub.f32 0.0, %v9887
    %v9904 = vsub.f32 0.0, %v9891
    %v9905 = vsub.f32 0.0, %v9895
    %v9906 = vmul.f32 %v9899, 1.442695
    %v9907 = vpow.pop %v9906
    %v9908 = vmul.f32 %v9900, 1.442695
    %v9909 = vpow.pop %v9908
    %v9910 = vmul.f32 %v9901, 1.442695
    %v9911 = vpow.pop %v9910
    %v9912 = vmul.f32 %v9902, 1.442695
    %v9913 = vpow.pop %v9912
    %v9914 = vmul.f32 %v9903, 1.442695
    %v9915 = vpow.pop %v9914
    %v9916 = vmul.f32 %v9904, 1.442695
    %v9917 = vpow.pop %v9916
    %v9918 = vmul.f32 %v9905, 1.442695
    %v9919 = vpow.pop %v9918
    %v9920 = vadd.f32 %v9907, 1.0
    %v9921 = vadd.f32 %v9909, 1.0
    %v9922 = vadd.f32 %v9911, 1.0
    %v9923 = vadd.f32 %v9913, 1.0
    %v9924 = vadd.f32 %v9915, 1.0
    %v9925 = vadd.f32 %v9917, 1.0
    %v9926 = vadd.f32 %v9919, 1.0
    %v9927 = vrcp.pop %v9920
    %v9928 = vmul.f32 1.0, %v9927
    %v9929 = vrcp.pop %v9921
    %v9930 = vmul.f32 1.0, %v9929
    %v9931 = vrcp.pop %v9922
    %v9932 = vmul.f32 1.0, %v9931
    %v9933 = vrcp.pop %v9923
    %v9934 = vmul.f32 1.0, %v9933
    %v9935 = vrcp.pop %v9924
    %v9936 = vmul.f32 1.0, %v9935
    %v9937 = vrcp.pop %v9925
    %v9938 = vmul.f32 1.0, %v9937
    %v9939 = vrcp.pop %v9926
    %v9940 = vmul.f32 1.0, %v9939
    %v9941 = vsub.f32 0.0, %v9872
    %v9942 = vsub.f32 0.0, %v9876
    %v9943 = vsub.f32 0.0, %v9880
    %v9944 = vsub.f32 0.0, %v9884
    %v9945 = vsub.f32 0.0, %v9888
    %v9946 = vsub.f32 0.0, %v9892
    %v9947 = vsub.f32 0.0, %v9896
    %v9948 = vmul.f32 %v9941, 1.442695
    %v9949 = vpow.pop %v9948
    %v9950 = vmul.f32 %v9942, 1.442695
    %v9951 = vpow.pop %v9950
    %v9952 = vmul.f32 %v9943, 1.442695
    %v9953 = vpow.pop %v9952
    %v9954 = vmul.f32 %v9944, 1.442695
    %v9955 = vpow.pop %v9954
    %v9956 = vmul.f32 %v9945, 1.442695
    %v9957 = vpow.pop %v9956
    %v9958 = vmul.f32 %v9946, 1.442695
    %v9959 = vpow.pop %v9958
    %v9960 = vmul.f32 %v9947, 1.442695
    %v9961 = vpow.pop %v9960
    %v9962 = vadd.f32 %v9949, 1.0
    %v9963 = vadd.f32 %v9951, 1.0
    %v9964 = vadd.f32 %v9953, 1.0
    %v9965 = vadd.f32 %v9955, 1.0
    %v9966 = vadd.f32 %v9957, 1.0
    %v9967 = vadd.f32 %v9959, 1.0
    %v9968 = vadd.f32 %v9961, 1.0
    %v9969 = vrcp.pop %v9962
    %v9970 = vmul.f32 1.0, %v9969
    %v9971 = vrcp.pop %v9963
    %v9972 = vmul.f32 1.0, %v9971
    %v9973 = vrcp.pop %v9964
    %v9974 = vmul.f32 1.0, %v9973
    %v9975 = vrcp.pop %v9965
    %v9976 = vmul.f32 1.0, %v9975
    %v9977 = vrcp.pop %v9966
    %v9978 = vmul.f32 1.0, %v9977
    %v9979 = vrcp.pop %v9967
    %v9980 = vmul.f32 1.0, %v9979
    %v9981 = vrcp.pop %v9968
    %v9982 = vmul.f32 1.0, %v9981
    %v9983 = vtanh.pop %v9873
    %v9984 = vtanh.pop %v9877
    %v9985 = vtanh.pop %v9881
    %v9986 = vtanh.pop %v9885
    %v9987 = vtanh.pop %v9889
    %v9988 = vtanh.pop %v9893
    %v9989 = vtanh.pop %v9897
    %v9990 = vsub.f32 0.0, %v9874
    %v9991 = vsub.f32 0.0, %v9878
    %v9992 = vsub.f32 0.0, %v9882
    %v9993 = vsub.f32 0.0, %v9886
    %v9994 = vsub.f32 0.0, %v9890
    %v9995 = vsub.f32 0.0, %v9894
    %v9996 = vsub.f32 0.0, %v9898
    %v9997 = vmul.f32 %v9990, 1.442695
    %v9998 = vpow.pop %v9997
    %v9999 = vmul.f32 %v9991, 1.442695
    %v10000 = vpow.pop %v9999
    %v10001 = vmul.f32 %v9992, 1.442695
    %v10002 = vpow.pop %v10001
    %v10003 = vmul.f32 %v9993, 1.442695
    %v10004 = vpow.pop %v10003
    %v10005 = vmul.f32 %v9994, 1.442695
    %v10006 = vpow.pop %v10005
    %v10007 = vmul.f32 %v9995, 1.442695
    %v10008 = vpow.pop %v10007
    %v10009 = vmul.f32 %v9996, 1.442695
    %v10010 = vpow.pop %v10009
    %v10011 = vadd.f32 %v9998, 1.0
    %v10012 = vadd.f32 %v10000, 1.0
    %v10013 = vadd.f32 %v10002, 1.0
    %v10014 = vadd.f32 %v10004, 1.0
    %v10015 = vadd.f32 %v10006, 1.0
    %v10016 = vadd.f32 %v10008, 1.0
    %v10017 = vadd.f32 %v10010, 1.0
    %v10018 = vrcp.pop %v10011
    %v10019 = vmul.f32 1.0, %v10018
    %v10020 = vrcp.pop %v10012
    %v10021 = vmul.f32 1.0, %v10020
    %v10022 = vrcp.pop %v10013
    %v10023 = vmul.f32 1.0, %v10022
    %v10024 = vrcp.pop %v10014
    %v10025 = vmul.f32 1.0, %v10024
    %v10026 = vrcp.pop %v10015
    %v10027 = vmul.f32 1.0, %v10026
    %v10028 = vrcp.pop %v10016
    %v10029 = vmul.f32 1.0, %v10028
    %v10030 = vrcp.pop %v10017
    %v10031 = vmul.f32 1.0, %v10030
    %v10032 = vmul.f32 %v9970, 0.0
    %v10033 = vmul.f32 %v9972, 0.0
    %v10034 = vmul.f32 %v9974, 0.0
    %v10035 = vmul.f32 %v9976, 0.0
    %v10036 = vmul.f32 %v9978, 0.0
    %v10037 = vmul.f32 %v9980, 0.0
    %v10038 = vmul.f32 %v9982, 0.0
    %v10039 = vmul.f32 %v9928, %v9983
    %v10040 = vmul.f32 %v9930, %v9984
    %v10041 = vmul.f32 %v9932, %v9985
    %v10042 = vmul.f32 %v9934, %v9986
    %v10043 = vmul.f32 %v9936, %v9987
    %v10044 = vmul.f32 %v9938, %v9988
    %v10045 = vmul.f32 %v9940, %v9989
    %v10046 = vadd.f32 %v10032, %v10039
    %v10047 = vadd.f32 %v10033, %v10040
    %v10048 = vadd.f32 %v10034, %v10041
    %v10049 = vadd.f32 %v10035, %v10042
    %v10050 = vadd.f32 %v10036, %v10043
    %v10051 = vadd.f32 %v10037, %v10044
    %v10052 = vadd.f32 %v10038, %v10045
    %v10053 = vtanh.pop %v10046
    %v10054 = vtanh.pop %v10047
    %v10055 = vtanh.pop %v10048
    %v10056 = vtanh.pop %v10049
    %v10057 = vtanh.pop %v10050
    %v10058 = vtanh.pop %v10051
    %v10059 = vtanh.pop %v10052
    %v10060 = vmul.f32 %v10019, %v10053
    %v10061 = vmul.f32 %v10021, %v10054
    %v10062 = vmul.f32 %v10023, %v10055
    %v10063 = vmul.f32 %v10025, %v10056
    %v10064 = vmul.f32 %v10027, %v10057
    %v10065 = vmul.f32 %v10029, %v10058
    %v10066 = vmul.f32 %v10031, %v10059
    %10067 = vmatprep.subr.mxu0 %v9544
    %10068 = vmatpush1.msra.mxu0 %v9543
    %10069 = vmatprep.subr.mxu0 %v9548
    %10070 = vmatpush1.msra.mxu0 %v9547
    %10071 = vmatprep.subr.mxu0 %v9552
    %10072 = vmatpush1.msra.mxu0 %v9551
    %10073 = vmatprep.subr.mxu0 %v9556
    %10074 = vmatpush1.msra.mxu0 %v9555
    %10075 = vmatprep.subr.mxu0 %v9560
    %10076 = vmatpush1.msra.mxu0 %v9559
    %10077 = vmatprep.subr.mxu0 %v9564
    %10078 = vmatpush1.msra.mxu0 %v9563
    %10079 = vmatprep.subr.mxu0 %v9568
    %10080 = vmatpush1.msra.mxu0 %v9567
    %10081 = vmatprep.subr.mxu0 %v9572
    %10082 = vmatpush1.msra.mxu0 %v9571
    %10083 = vmatprep.subr.mxu0 %v9576
    %10084 = vmatpush1.msra.mxu0 %v9575
    %10085 = vmatprep.subr.mxu0 %v9580
    %10086 = vmatpush1.msra.mxu0 %v9579
    %10087 = vmatprep.subr.mxu0 %v9584
    %10088 = vmatpush1.msra.mxu0 %v9583
    %10089 = vmatprep.subr.mxu0 %v9588
    %10090 = vmatpush1.msra.mxu0 %v9587
    %10091 = vmatprep.subr.mxu0 %v9592
    %10092 = vmatpush1.msra.mxu0 %v9591
    %10093 = vmatprep.subr.mxu0 %v9596
    %10094 = vmatpush1.msra.mxu0 %v9595
    %10095 = vmatprep.subr.mxu0 %v9600
    %10096 = vmatpush1.msra.mxu0 %v9599
    %10097 = vmatprep.subr.mxu0 %v9604
    %10098 = vmatpush1.msra.mxu0 %v9603
    %10099 = vmatprep.subr.mxu0 0.0
    %10100 = vmatpush1.msra.mxu0 0.0
    %10101 = vmatprep.subr.mxu0 0.0
    %10102 = vmatpush1.msra.mxu0 0.0
    %10103 = vmatprep.subr.mxu0 0.0
    %10104 = vmatpush1.msra.mxu0 0.0
    %10105 = vmatprep.subr.mxu0 0.0
    %10106 = vmatpush1.msra.mxu0 0.0
    %10107 = vmatprep.subr.mxu0 0.0
    %10108 = vmatpush1.msra.mxu0 0.0
    %10109 = vmatprep.subr.mxu0 0.0
    %10110 = vmatpush1.msra.mxu0 0.0
    %10111 = vmatprep.subr.mxu0 0.0
    %10112 = vmatpush1.msra.mxu0 0.0
    %10113 = vmatprep.subr.mxu0 0.0
    %10114 = vmatpush1.msra.mxu0 0.0
    %10115 = vmatprep.subr.mxu0 0.0
    %10116 = vmatpush1.msra.mxu0 0.0
    %10117 = vmatprep.subr.mxu0 0.0
    %10118 = vmatpush1.msra.mxu0 0.0
    %10119 = vmatprep.subr.mxu0 0.0
    %10120 = vmatpush1.msra.mxu0 0.0
    %10121 = vmatprep.subr.mxu0 0.0
    %10122 = vmatpush1.msra.mxu0 0.0
    %10123 = vmatprep.subr.mxu0 0.0
    %10124 = vmatpush1.msra.mxu0 0.0
    %10125 = vmatprep.subr.mxu0 0.0
    %10126 = vmatpush1.msra.mxu0 0.0
    %10127 = vmatprep.subr.mxu0 0.0
    %10128 = vmatpush1.msra.mxu0 0.0
    %10129 = vmatprep.subr.mxu0 0.0
    %10130 = vmatpush1.msra.mxu0 0.0
    %10131 = vmatprep.mubr.f32.mxu0 0.0
    %10132 = vmatmul.mubr.f32.gmra.mrb[0].mxu0 %v10060
    %v10133 = vpop.f32.mrb[0].mxu0
    %v10134 = vadd.f32 0.0, %v10133
    %v10135 = vpop.f32.mrb[0].mxu0
    %v10136 = vadd.f32 0.0, %v10135
    %10137 = vmatprep.mubr.f32.mxu0 0.0
    %10138 = vmatmul.mubr.f32.gmra.mrb[0].mxu0 %v10061
    %v10139 = vpop.f32.mrb[0].mxu0
    %v10140 = vadd.f32 0.0, %v10139
    %v10141 = vpop.f32.mrb[0].mxu0
    %v10142 = vadd.f32 0.0, %v10141
    %10143 = vmatprep.mubr.f32.mxu0 0.0
    %10144 = vmatmul.mubr.f32.gmra.mrb[0].mxu0 %v10062
    %v10145 = vpop.f32.mrb[0].mxu0
    %v10146 = vadd.f32 0.0, %v10145
    %v10147 = vpop.f32.mrb[0].mxu0
    %v10148 = vadd.f32 0.0, %v10147
    %10149 = vmatprep.mubr.f32.mxu0 0.0
    %10150 = vmatmul.mubr.f32.gmra.mrb[0].mxu0 %v10063
    %v10151 = vpop.f32.mrb[0].mxu0
    %v10152 = vadd.f32 0.0, %v10151
    %v10153 = vpop.f32.mrb[0].mxu0
    %v10154 = vadd.f32 0.0, %v10153
    %10155 = vmatprep.mubr.f32.mxu0 0.0
    %10156 = vmatmul.mubr.f32.gmra.mrb[0].mxu0 %v10064
    %v10157 = vpop.f32.mrb[0].mxu0
    %v10158 = vadd.f32 0.0, %v10157
    %v10159 = vpop.f32.mrb[0].mxu0
    %v10160 = vadd.f32 0.0, %v10159
    %10161 = vmatprep.mubr.f32.mxu0 0.0
    %10162 = vmatmul.mubr.f32.gmra.mrb[0].mxu0 %v10065
    %v10163 = vpop.f32.mrb[0].mxu0
    %v10164 = vadd.f32 0.0, %v10163
    %v10165 = vpop.f32.mrb[0].mxu0
    %v10166 = vadd.f32 0.0, %v10165
    %10167 = vmatprep.mubr.f32.mxu0 0.0
    %10168 = vmatmul.mubr.f32.gmra.mrb[0].mxu0 %v10066
    %v10169 = vpop.f32.mrb[0].mxu0
    %v10170 = vadd.f32 0.0, %v10169
    %v10171 = vpop.f32.mrb[0].mxu0
    %v10172 = vadd.f32 0.0, %v10171
    %10173 = vdwg.mxu0
    %10174 = vmatprep.subr.mxu0 %v9546
    %10175 = vmatpush1.msra.mxu0 %v9545
    %10176 = vmatprep.subr.mxu0 %v9550
    %10177 = vmatpush1.msra.mxu0 %v9549
    %10178 = vmatprep.subr.mxu0 %v9554
    %10179 = vmatpush1.msra.mxu0 %v9553
    %10180 = vmatprep.subr.mxu0 %v9558
    %10181 = vmatpush1.msra.mxu0 %v9557
    %10182 = vmatprep.subr.mxu0 %v9562
    %10183 = vmatpush1.msra.mxu0 %v9561
    %10184 = vmatprep.subr.mxu0 %v9566
    %10185 = vmatpush1.msra.mxu0 %v9565
    %10186 = vmatprep.subr.mxu0 %v9570
    %10187 = vmatpush1.msra.mxu0 %v9569
    %10188 = vmatprep.subr.mxu0 %v9574
    %10189 = vmatpush1.msra.mxu0 %v9573
    %10190 = vmatprep.subr.mxu0 %v9578
    %10191 = vmatpush1.msra.mxu0 %v9577
    %10192 = vmatprep.subr.mxu0 %v9582
    %10193 = vmatpush1.msra.mxu0 %v9581
    %10194 = vmatprep.subr.mxu0 %v9586
    %10195 = vmatpush1.msra.mxu0 %v9585
    %10196 = vmatprep.subr.mxu0 %v9590
    %10197 = vmatpush1.msra.mxu0 %v9589
    %10198 = vmatprep.subr.mxu0 %v9594
    %10199 = vmatpush1.msra.mxu0 %v9593
    %10200 = vmatprep.subr.mxu0 %v9598
    %10201 = vmatpush1.msra.mxu0 %v9597
    %10202 = vmatprep.subr.mxu0 %v9602
    %10203 = vmatpush1.msra.mxu0 %v9601
    %10204 = vmatprep.subr.mxu0 %v9606
    %10205 = vmatpush1.msra.mxu0 %v9605
    %10206 = vmatprep.subr.mxu0 0.0
    %10207 = vmatpush1.msra.mxu0 0.0
    %10208 = vmatprep.subr.mxu0 0.0
    %10209 = vmatpush1.msra.mxu0 0.0
    %10210 = vmatprep.subr.mxu0 0.0
    %10211 = vmatpush1.msra.mxu0 0.0
    %10212 = vmatprep.subr.mxu0 0.0
    %10213 = vmatpush1.msra.mxu0 0.0
    %10214 = vmatprep.subr.mxu0 0.0
    %10215 = vmatpush1.msra.mxu0 0.0
    %10216 = vmatprep.subr.mxu0 0.0
    %10217 = vmatpush1.msra.mxu0 0.0
    %10218 = vmatprep.subr.mxu0 0.0
    %10219 = vmatpush1.msra.mxu0 0.0
    %10220 = vmatprep.subr.mxu0 0.0
    %10221 = vmatpush1.msra.mxu0 0.0
    %10222 = vmatprep.subr.mxu0 0.0
    %10223 = vmatpush1.msra.mxu0 0.0
    %10224 = vmatprep.subr.mxu0 0.0
    %10225 = vmatpush1.msra.mxu0 0.0
    %10226 = vmatprep.subr.mxu0 0.0
    %10227 = vmatpush1.msra.mxu0 0.0
    %10228 = vmatprep.subr.mxu0 0.0
    %10229 = vmatpush1.msra.mxu0 0.0
    %10230 = vmatprep.subr.mxu0 0.0
    %10231 = vmatpush1.msra.mxu0 0.0
    %10232 = vmatprep.subr.mxu0 0.0
    %10233 = vmatpush1.msra.mxu0 0.0
    %10234 = vmatprep.subr.mxu0 0.0
    %10235 = vmatpush1.msra.mxu0 0.0
    %10236 = vmatprep.subr.mxu0 0.0
    %10237 = vmatpush1.msra.mxu0 0.0
    %10238 = vmatprep.mubr.f32.mxu0 0.0
    %10239 = vmatmul.mubr.f32.gmra.mrb[0].mxu0 %v10060
    %v10240 = vpop.f32.mrb[0].mxu0
    %v10241 = vadd.f32 0.0, %v10240
    %v10242 = vpop.f32.mrb[0].mxu0
    %v10243 = vadd.f32 0.0, %v10242
    %10244 = vmatprep.mubr.f32.mxu0 0.0
    %10245 = vmatmul.mubr.f32.gmra.mrb[0].mxu0 %v10061
    %v10246 = vpop.f32.mrb[0].mxu0
    %v10247 = vadd.f32 0.0, %v10246
    %v10248 = vpop.f32.mrb[0].mxu0
    %v10249 = vadd.f32 0.0, %v10248
    %10250 = vmatprep.mubr.f32.mxu0 0.0
    %10251 = vmatmul.mubr.f32.gmra.mrb[0].mxu0 %v10062
    %v10252 = vpop.f32.mrb[0].mxu0
    %v10253 = vadd.f32 0.0, %v10252
    %v10254 = vpop.f32.mrb[0].mxu0
    %v10255 = vadd.f32 0.0, %v10254
    %10256 = vmatprep.mubr.f32.mxu0 0.0
    %10257 = vmatmul.mubr.f32.gmra.mrb[0].mxu0 %v10063
    %v10258 = vpop.f32.mrb[0].mxu0
    %v10259 = vadd.f32 0.0, %v10258
    %v10260 = vpop.f32.mrb[0].mxu0
    %v10261 = vadd.f32 0.0, %v10260
    %10262 = vmatprep.mubr.f32.mxu0 0.0
    %10263 = vmatmul.mubr.f32.gmra.mrb[0].mxu0 %v10064
    %v10264 = vpop.f32.mrb[0].mxu0
    %v10265 = vadd.f32 0.0, %v10264
    %v10266 = vpop.f32.mrb[0].mxu0
    %v10267 = vadd.f32 0.0, %v10266
    %10268 = vmatprep.mubr.f32.mxu0 0.0
    %10269 = vmatmul.mubr.f32.gmra.mrb[0].mxu0 %v10065
    %v10270 = vpop.f32.mrb[0].mxu0
    %v10271 = vadd.f32 0.0, %v10270
    %v10272 = vpop.f32.mrb[0].mxu0
    %v10273 = vadd.f32 0.0, %v10272
    %10274 = vmatprep.mubr.f32.mxu0 0.0
    %10275 = vmatmul.mubr.f32.gmra.mrb[0].mxu0 %v10066
    %v10276 = vpop.f32.mrb[0].mxu0
    %v10277 = vadd.f32 0.0, %v10276
    %v10278 = vpop.f32.mrb[0].mxu0
    %v10279 = vadd.f32 0.0, %v10278
    %10280 = vdwg.mxu0
    %v10281 = vadd.f32 %v8350, %v10134
    %v10282 = vadd.f32 %v8352, %v10136
    %v10283 = vadd.f32 %v8499, %v10241
    %v10284 = vadd.f32 %v8501, %v10243
    %v10285 = vadd.f32 %v8356, %v10140
    %v10286 = vadd.f32 %v8358, %v10142
    %v10287 = vadd.f32 %v8505, %v10247
    %v10288 = vadd.f32 %v8507, %v10249
    %v10289 = vadd.f32 %v8362, %v10146
    %v10290 = vadd.f32 %v8364, %v10148
    %v10291 = vadd.f32 %v8511, %v10253
    %v10292 = vadd.f32 %v8513, %v10255
    %v10293 = vadd.f32 %v8368, %v10152
    %v10294 = vadd.f32 %v8370, %v10154
    %v10295 = vadd.f32 %v8517, %v10259
    %v10296 = vadd.f32 %v8519, %v10261
    %v10297 = vadd.f32 %v8374, %v10158
    %v10298 = vadd.f32 %v8376, %v10160
    %v10299 = vadd.f32 %v8523, %v10265
    %v10300 = vadd.f32 %v8525, %v10267
    %v10301 = vadd.f32 %v8380, %v10164
    %v10302 = vadd.f32 %v8382, %v10166
    %v10303 = vadd.f32 %v8529, %v10271
    %v10304 = vadd.f32 %v8531, %v10273
    %v10305 = vadd.f32 %v8386, %v10170
    %v10306 = vadd.f32 %v8388, %v10172
    %v10307 = vadd.f32 %v8535, %v10277
    %v10308 = vadd.f32 %v8537, %v10279
    %v10309 = vadd.f32 %v10281, %v9854
    %v10310 = vadd.f32 %v10282, %v9858
    %v10311 = vadd.f32 %v10283, %v9862
    %v10312 = vadd.f32 %v10284, %v9866
    %v10313 = vadd.f32 %v10285, %v9854
    %v10314 = vadd.f32 %v10286, %v9858
    %v10315 = vadd.f32 %v10287, %v9862
    %v10316 = vadd.f32 %v10288, %v9866
    %v10317 = vadd.f32 %v10289, %v9854
    %v10318 = vadd.f32 %v10290, %v9858
    %v10319 = vadd.f32 %v10291, %v9862
    %v10320 = vadd.f32 %v10292, %v9866
    %v10321 = vadd.f32 %v10293, %v9854
    %v10322 = vadd.f32 %v10294, %v9858
    %v10323 = vadd.f32 %v10295, %v9862
    %v10324 = vadd.f32 %v10296, %v9866
    %v10325 = vadd.f32 %v10297, %v9854
    %v10326 = vadd.f32 %v10298, %v9858
    %v10327 = vadd.f32 %v10299, %v9862
    %v10328 = vadd.f32 %v10300, %v9866
    %v10329 = vadd.f32 %v10301, %v9854
    %v10330 = vadd.f32 %v10302, %v9858
    %v10331 = vadd.f32 %v10303, %v9862
    %v10332 = vadd.f32 %v10304, %v9866
    %v10333 = vadd.f32 %v10305, %v9854
    %v10334 = vadd.f32 %v10306, %v9858
    %v10335 = vadd.f32 %v10307, %v9862
    %v10336 = vadd.f32 %v10308, %v9866
    %v10337 = vsub.f32 0.0, %v10309
    %v10338 = vsub.f32 0.0, %v10313
    %v10339 = vsub.f32 0.0, %v10317
    %v10340 = vsub.f32 0.0, %v10321
    %v10341 = vsub.f32 0.0, %v10325
    %v10342 = vsub.f32 0.0, %v10329
    %v10343 = vsub.f32 0.0, %v10333
    %v10344 = vmul.f32 %v10337, 1.442695
    %v10345 = vpow.pop %v10344
    %v10346 = vmul.f32 %v10338, 1.442695
    %v10347 = vpow.pop %v10346
    %v10348 = vmul.f32 %v10339, 1.442695
    %v10349 = vpow.pop %v10348
    %v10350 = vmul.f32 %v10340, 1.442695
    %v10351 = vpow.pop %v10350
    %v10352 = vmul.f32 %v10341, 1.442695
    %v10353 = vpow.pop %v10352
    %v10354 = vmul.f32 %v10342, 1.442695
    %v10355 = vpow.pop %v10354
    %v10356 = vmul.f32 %v10343, 1.442695
    %v10357 = vpow.pop %v10356
    %v10358 = vadd.f32 %v10345, 1.0
    %v10359 = vadd.f32 %v10347, 1.0
    %v10360 = vadd.f32 %v10349, 1.0
    %v10361 = vadd.f32 %v10351, 1.0
    %v10362 = vadd.f32 %v10353, 1.0
    %v10363 = vadd.f32 %v10355, 1.0
    %v10364 = vadd.f32 %v10357, 1.0
    %v10365 = vrcp.pop %v10358
    %v10366 = vmul.f32 1.0, %v10365
    %v10367 = vrcp.pop %v10359
    %v10368 = vmul.f32 1.0, %v10367
    %v10369 = vrcp.pop %v10360
    %v10370 = vmul.f32 1.0, %v10369
    %v10371 = vrcp.pop %v10361
    %v10372 = vmul.f32 1.0, %v10371
    %v10373 = vrcp.pop %v10362
    %v10374 = vmul.f32 1.0, %v10373
    %v10375 = vrcp.pop %v10363
    %v10376 = vmul.f32 1.0, %v10375
    %v10377 = vrcp.pop %v10364
    %v10378 = vmul.f32 1.0, %v10377
    %v10379 = vsub.f32 0.0, %v10310
    %v10380 = vsub.f32 0.0, %v10314
    %v10381 = vsub.f32 0.0, %v10318
    %v10382 = vsub.f32 0.0, %v10322
    %v10383 = vsub.f32 0.0, %v10326
    %v10384 = vsub.f32 0.0, %v10330
    %v10385 = vsub.f32 0.0, %v10334
    %v10386 = vmul.f32 %v10379, 1.442695
    %v10387 = vpow.pop %v10386
    %v10388 = vmul.f32 %v10380, 1.442695
    %v10389 = vpow.pop %v10388
    %v10390 = vmul.f32 %v10381, 1.442695
    %v10391 = vpow.pop %v10390
    %v10392 = vmul.f32 %v10382, 1.442695
    %v10393 = vpow.pop %v10392
    %v10394 = vmul.f32 %v10383, 1.442695
    %v10395 = vpow.pop %v10394
    %v10396 = vmul.f32 %v10384, 1.442695
    %v10397 = vpow.pop %v10396
    %v10398 = vmul.f32 %v10385, 1.442695
    %v10399 = vpow.pop %v10398
    %v10400 = vadd.f32 %v10387, 1.0
    %v10401 = vadd.f32 %v10389, 1.0
    %v10402 = vadd.f32 %v10391, 1.0
    %v10403 = vadd.f32 %v10393, 1.0
    %v10404 = vadd.f32 %v10395, 1.0
    %v10405 = vadd.f32 %v10397, 1.0
    %v10406 = vadd.f32 %v10399, 1.0
    %v10407 = vrcp.pop %v10400
    %v10408 = vmul.f32 1.0, %v10407
    %v10409 = vrcp.pop %v10401
    %v10410 = vmul.f32 1.0, %v10409
    %v10411 = vrcp.pop %v10402
    %v10412 = vmul.f32 1.0, %v10411
    %v10413 = vrcp.pop %v10403
    %v10414 = vmul.f32 1.0, %v10413
    %v10415 = vrcp.pop %v10404
    %v10416 = vmul.f32 1.0, %v10415
    %v10417 = vrcp.pop %v10405
    %v10418 = vmul.f32 1.0, %v10417
    %v10419 = vrcp.pop %v10406
    %v10420 = vmul.f32 1.0, %v10419
    %v10421 = vtanh.pop %v10311
    %v10422 = vtanh.pop %v10315
    %v10423 = vtanh.pop %v10319
    %v10424 = vtanh.pop %v10323
    %v10425 = vtanh.pop %v10327
    %v10426 = vtanh.pop %v10331
    %v10427 = vtanh.pop %v10335
    %v10428 = vsub.f32 0.0, %v10312
    %v10429 = vsub.f32 0.0, %v10316
    %v10430 = vsub.f32 0.0, %v10320
    %v10431 = vsub.f32 0.0, %v10324
    %v10432 = vsub.f32 0.0, %v10328
    %v10433 = vsub.f32 0.0, %v10332
    %v10434 = vsub.f32 0.0, %v10336
    %v10435 = vmul.f32 %v10428, 1.442695
    %v10436 = vpow.pop %v10435
    %v10437 = vmul.f32 %v10429, 1.442695
    %v10438 = vpow.pop %v10437
    %v10439 = vmul.f32 %v10430, 1.442695
    %v10440 = vpow.pop %v10439
    %v10441 = vmul.f32 %v10431, 1.442695
    %v10442 = vpow.pop %v10441
    %v10443 = vmul.f32 %v10432, 1.442695
    %v10444 = vpow.pop %v10443
    %v10445 = vmul.f32 %v10433, 1.442695
    %v10446 = vpow.pop %v10445
    %v10447 = vmul.f32 %v10434, 1.442695
    %v10448 = vpow.pop %v10447
    %v10449 = vadd.f32 %v10436, 1.0
    %v10450 = vadd.f32 %v10438, 1.0
    %v10451 = vadd.f32 %v10440, 1.0
    %v10452 = vadd.f32 %v10442, 1.0
    %v10453 = vadd.f32 %v10444, 1.0
    %v10454 = vadd.f32 %v10446, 1.0
    %v10455 = vadd.f32 %v10448, 1.0
    %v10456 = vrcp.pop %v10449
    %v10457 = vmul.f32 1.0, %v10456
    %v10458 = vrcp.pop %v10450
    %v10459 = vmul.f32 1.0, %v10458
    %v10460 = vrcp.pop %v10451
    %v10461 = vmul.f32 1.0, %v10460
    %v10462 = vrcp.pop %v10452
    %v10463 = vmul.f32 1.0, %v10462
    %v10464 = vrcp.pop %v10453
    %v10465 = vmul.f32 1.0, %v10464
    %v10466 = vrcp.pop %v10454
    %v10467 = vmul.f32 1.0, %v10466
    %v10468 = vrcp.pop %v10455
    %v10469 = vmul.f32 1.0, %v10468
    %v10470 = vmul.f32 %v10408, %v10046
    %v10471 = vmul.f32 %v10410, %v10047
    %v10472 = vmul.f32 %v10412, %v10048
    %v10473 = vmul.f32 %v10414, %v10049
    %v10474 = vmul.f32 %v10416, %v10050
    %v10475 = vmul.f32 %v10418, %v10051
    %v10476 = vmul.f32 %v10420, %v10052
    %v10477 = vmul.f32 %v10366, %v10421
    %v10478 = vmul.f32 %v10368, %v10422
    %v10479 = vmul.f32 %v10370, %v10423
    %v10480 = vmul.f32 %v10372, %v10424
    %v10481 = vmul.f32 %v10374, %v10425
    %v10482 = vmul.f32 %v10376, %v10426
    %v10483 = vmul.f32 %v10378, %v10427
    %v10484 = vadd.f32 %v10470, %v10477
    %v10485 = vadd.f32 %v10471, %v10478
    %v10486 = vadd.f32 %v10472, %v10479
    %v10487 = vadd.f32 %v10473, %v10480
    %v10488 = vadd.f32 %v10474, %v10481
    %v10489 = vadd.f32 %v10475, %v10482
    %v10490 = vadd.f32 %v10476, %v10483
    %v10491 = vtanh.pop %v10484
    %v10492 = vtanh.pop %v10485
    %v10493 = vtanh.pop %v10486
    %v10494 = vtanh.pop %v10487
    %v10495 = vtanh.pop %v10488
    %v10496 = vtanh.pop %v10489
    %v10497 = vtanh.pop %v10490
    %v10498 = vmul.f32 %v10457, %v10491
    %v10499 = vmul.f32 %v10459, %v10492
    %v10500 = vmul.f32 %v10461, %v10493
    %v10501 = vmul.f32 %v10463, %v10494
    %v10502 = vmul.f32 %v10465, %v10495
    %v10503 = vmul.f32 %v10467, %v10496
    %v10504 = vmul.f32 %v10469, %v10497
    %v10505 = vld [vmem:[%s16] sm:$0xff]
    %v10506 = vld [vmem:[%s16 + $0x8] sm:$0xff]
    %v10507 = vld [vmem:[%s16 + $0x10] sm:$0xff]
    %v10508 = vld [vmem:[%s16 + $0x18] sm:$0xff]
    %v10509 = vld [vmem:[%s16 + $0x20] sm:$0xff]
    %v10510 = vld [vmem:[%s16 + $0x28] sm:$0xff]
    %v10511 = vld [vmem:[%s16 + $0x30] sm:$0xff]
    %v10512 = vld [vmem:[%s16 + $0x38] sm:$0xff]
    %v10513 = vld [vmem:[%s16 + $0x40] sm:$0xff]
    %v10514 = vld [vmem:[%s16 + $0x48] sm:$0xff]
    %v10515 = vld [vmem:[%s16 + $0x50] sm:$0xff]
    %v10516 = vld [vmem:[%s16 + $0x58] sm:$0xff]
    %v10517 = vld [vmem:[%s16 + $0x60] sm:$0xff]
    %v10518 = vld [vmem:[%s16 + $0x68] sm:$0xff]
    %v10519 = vld [vmem:[%s16 + $0x70] sm:$0xff]
    %v10520 = vld [vmem:[%s16 + $0x78] sm:$0xff]
    %v10521 = vld [vmem:[%s16 + $0x80] sm:$0xff]
    %v10522 = vld [vmem:[%s16 + $0x88] sm:$0xff]
    %v10523 = vld [vmem:[%s16 + $0x90] sm:$0xff]
    %v10524 = vld [vmem:[%s16 + $0x98] sm:$0xff]
    %v10525 = vld [vmem:[%s16 + $0xa0] sm:$0xff]
    %v10526 = vld [vmem:[%s16 + $0xa8] sm:$0xff]
    %v10527 = vld [vmem:[%s16 + $0xb0] sm:$0xff]
    %v10528 = vld [vmem:[%s16 + $0xb8] sm:$0xff]
    %v10529 = vld [vmem:[%s16 + $0xc0] sm:$0xff]
    %v10530 = vld [vmem:[%s16 + $0xc8] sm:$0xff]
    %v10531 = vld [vmem:[%s16 + $0xd0] sm:$0xff]
    %v10532 = vld [vmem:[%s16 + $0xd8] sm:$0xff]
    %v10533 = vld [vmem:[%s16 + $0xe0] sm:$0xff]
    %v10534 = vld [vmem:[%s16 + $0xe8] sm:$0xff]
    %v10535 = vld [vmem:[%s16 + $0xf0] sm:$0xff]
    %v10536 = vld [vmem:[%s16 + $0xf8] sm:$0xff]
    %v10537 = vld [vmem:[%s16 + $0x100] sm:$0xff]
    %v10538 = vld [vmem:[%s16 + $0x108] sm:$0xff]
    %v10539 = vld [vmem:[%s16 + $0x110] sm:$0xff]
    %v10540 = vld [vmem:[%s16 + $0x118] sm:$0xff]
    %v10541 = vld [vmem:[%s16 + $0x120] sm:$0xff]
    %v10542 = vld [vmem:[%s16 + $0x128] sm:$0xff]
    %v10543 = vld [vmem:[%s16 + $0x130] sm:$0xff]
    %v10544 = vld [vmem:[%s16 + $0x138] sm:$0xff]
    %v10545 = vld [vmem:[%s16 + $0x140] sm:$0xff]
    %v10546 = vld [vmem:[%s16 + $0x148] sm:$0xff]
    %v10547 = vld [vmem:[%s16 + $0x150] sm:$0xff]
    %v10548 = vld [vmem:[%s16 + $0x158] sm:$0xff]
    %v10549 = vld [vmem:[%s16 + $0x160] sm:$0xff]
    %v10550 = vld [vmem:[%s16 + $0x168] sm:$0xff]
    %v10551 = vld [vmem:[%s16 + $0x170] sm:$0xff]
    %v10552 = vld [vmem:[%s16 + $0x178] sm:$0xff]
    %v10553 = vld [vmem:[%s16 + $0x180] sm:$0xff]
    %v10554 = vld [vmem:[%s16 + $0x188] sm:$0xff]
    %v10555 = vld [vmem:[%s16 + $0x190] sm:$0xff]
    %v10556 = vld [vmem:[%s16 + $0x198] sm:$0xff]
    %v10557 = vld [vmem:[%s16 + $0x1a0] sm:$0xff]
    %v10558 = vld [vmem:[%s16 + $0x1a8] sm:$0xff]
    %v10559 = vld [vmem:[%s16 + $0x1b0] sm:$0xff]
    %v10560 = vld [vmem:[%s16 + $0x1b8] sm:$0xff]
    %v10561 = vld [vmem:[%s16 + $0x1c0] sm:$0xff]
    %v10562 = vld [vmem:[%s16 + $0x1c8] sm:$0xff]
    %v10563 = vld [vmem:[%s16 + $0x1d0] sm:$0xff]
    %v10564 = vld [vmem:[%s16 + $0x1d8] sm:$0xff]
    %v10565 = vld [vmem:[%s16 + $0x1e0] sm:$0xff]
    %v10566 = vld [vmem:[%s16 + $0x1e8] sm:$0xff]
    %v10567 = vld [vmem:[%s16 + $0x1f0] sm:$0xff]
    %v10568 = vld [vmem:[%s16 + $0x1f8] sm:$0xff]
    %10569 = vmatprep.subr.mxu0 %v10506
    %10570 = vmatpush1.msra.mxu0 %v10505
    %10571 = vmatprep.subr.mxu0 %v10508
    %10572 = vmatpush1.msra.mxu0 %v10507
    %10573 = vmatprep.subr.mxu0 %v10510
    %10574 = vmatpush1.msra.mxu0 %v10509
    %10575 = vmatprep.subr.mxu0 %v10512
    %10576 = vmatpush1.msra.mxu0 %v10511
    %10577 = vmatprep.subr.mxu0 %v10514
    %10578 = vmatpush1.msra.mxu0 %v10513
    %10579 = vmatprep.subr.mxu0 %v10516
    %10580 = vmatpush1.msra.mxu0 %v10515
    %10581 = vmatprep.subr.mxu0 %v10518
    %10582 = vmatpush1.msra.mxu0 %v10517
    %10583 = vmatprep.subr.mxu0 %v10520
    %10584 = vmatpush1.msra.mxu0 %v10519
    %10585 = vmatprep.subr.mxu0 %v10522
    %10586 = vmatpush1.msra.mxu0 %v10521
    %10587 = vmatprep.subr.mxu0 %v10524
    %10588 = vmatpush1.msra.mxu0 %v10523
    %10589 = vmatprep.subr.mxu0 %v10526
    %10590 = vmatpush1.msra.mxu0 %v10525
    %10591 = vmatprep.subr.mxu0 %v10528
    %10592 = vmatpush1.msra.mxu0 %v10527
    %10593 = vmatprep.subr.mxu0 %v10530
    %10594 = vmatpush1.msra.mxu0 %v10529
    %10595 = vmatprep.subr.mxu0 %v10532
    %10596 = vmatpush1.msra.mxu0 %v10531
    %10597 = vmatprep.subr.mxu0 %v10534
    %10598 = vmatpush1.msra.mxu0 %v10533
    %10599 = vmatprep.subr.mxu0 %v10536
    %10600 = vmatpush1.msra.mxu0 %v10535
    %10601 = vmatprep.subr.mxu0 %v10538
    %10602 = vmatpush1.msra.mxu0 %v10537
    %10603 = vmatprep.subr.mxu0 %v10540
    %10604 = vmatpush1.msra.mxu0 %v10539
    %10605 = vmatprep.subr.mxu0 %v10542
    %10606 = vmatpush1.msra.mxu0 %v10541
    %10607 = vmatprep.subr.mxu0 %v10544
    %10608 = vmatpush1.msra.mxu0 %v10543
    %10609 = vmatprep.subr.mxu0 %v10546
    %10610 = vmatpush1.msra.mxu0 %v10545
    %10611 = vmatprep.subr.mxu0 %v10548
    %10612 = vmatpush1.msra.mxu0 %v10547
    %10613 = vmatprep.subr.mxu0 %v10550
    %10614 = vmatpush1.msra.mxu0 %v10549
    %10615 = vmatprep.subr.mxu0 %v10552
    %10616 = vmatpush1.msra.mxu0 %v10551
    %10617 = vmatprep.subr.mxu0 %v10554
    %10618 = vmatpush1.msra.mxu0 %v10553
    %10619 = vmatprep.subr.mxu0 %v10556
    %10620 = vmatpush1.msra.mxu0 %v10555
    %10621 = vmatprep.subr.mxu0 %v10558
    %10622 = vmatpush1.msra.mxu0 %v10557
    %10623 = vmatprep.subr.mxu0 %v10560
    %10624 = vmatpush1.msra.mxu0 %v10559
    %10625 = vmatprep.subr.mxu0 %v10562
    %10626 = vmatpush1.msra.mxu0 %v10561
    %10627 = vmatprep.subr.mxu0 %v10564
    %10628 = vmatpush1.msra.mxu0 %v10563
    %10629 = vmatprep.subr.mxu0 %v10566
    %10630 = vmatpush1.msra.mxu0 %v10565
    %10631 = vmatprep.subr.mxu0 %v10568
    %10632 = vmatpush1.msra.mxu0 %v10567
    %10633 = vmatprep.mubr.f32.mxu0 %v10498
    %10634 = vmatmul.mubr.f32.gmra.mrb[0].mxu0 %v9098
    %v10635 = vpop.f32.mrb[0].mxu0
    %v10636 = vadd.f32 0.0, %v10635
    %v10637 = vpop.f32.mrb[0].mxu0
    %v10638 = vadd.f32 0.0, %v10637
    %10639 = vmatprep.mubr.f32.mxu0 %v10499
    %10640 = vmatmul.mubr.f32.gmra.mrb[0].mxu0 %v9099
    %v10641 = vpop.f32.mrb[0].mxu0
    %v10642 = vadd.f32 0.0, %v10641
    %v10643 = vpop.f32.mrb[0].mxu0
    %v10644 = vadd.f32 0.0, %v10643
    %10645 = vmatprep.mubr.f32.mxu0 %v10500
    %10646 = vmatmul.mubr.f32.gmra.mrb[0].mxu0 %v9100
    %v10647 = vpop.f32.mrb[0].mxu0
    %v10648 = vadd.f32 0.0, %v10647
    %v10649 = vpop.f32.mrb[0].mxu0
    %v10650 = vadd.f32 0.0, %v10649
    %10651 = vmatprep.mubr.f32.mxu0 %v10501
    %10652 = vmatmul.mubr.f32.gmra.mrb[0].mxu0 %v9101
    %v10653 = vpop.f32.mrb[0].mxu0
    %v10654 = vadd.f32 0.0, %v10653
    %v10655 = vpop.f32.mrb[0].mxu0
    %v10656 = vadd.f32 0.0, %v10655
    %10657 = vmatprep.mubr.f32.mxu0 %v10502
    %10658 = vmatmul.mubr.f32.gmra.mrb[0].mxu0 %v9102
    %v10659 = vpop.f32.mrb[0].mxu0
    %v10660 = vadd.f32 0.0, %v10659
    %v10661 = vpop.f32.mrb[0].mxu0
    %v10662 = vadd.f32 0.0, %v10661
    %10663 = vmatprep.mubr.f32.mxu0 %v10503
    %10664 = vmatmul.mubr.f32.gmra.mrb[0].mxu0 %v9103
    %v10665 = vpop.f32.mrb[0].mxu0
    %v10666 = vadd.f32 0.0, %v10665
    %v10667 = vpop.f32.mrb[0].mxu0
    %v10668 = vadd.f32 0.0, %v10667
    %10669 = vmatprep.mubr.f32.mxu0 %v10504
    %10670 = vmatmul.mubr.f32.gmra.mrb[0].mxu0 %v9104
    %v10671 = vpop.f32.mrb[0].mxu0
    %v10672 = vadd.f32 0.0, %v10671
    %v10673 = vpop.f32.mrb[0].mxu0
    %v10674 = vadd.f32 0.0, %v10673
    %10675 = vmatprep.mubr.f32.mxu0 %v10060
    %10676 = vmatmul.mubr.f32.gmra.mrb[0].mxu0 %v9536
    %v10677 = vpop.f32.mrb[0].mxu0
    %v10678 = vadd.f32 0.0, %v10677
    %v10679 = vpop.f32.mrb[0].mxu0
    %v10680 = vadd.f32 0.0, %v10679
    %10681 = vmatprep.mubr.f32.mxu0 %v10061
    %10682 = vmatmul.mubr.f32.gmra.mrb[0].mxu0 %v9537
    %v10683 = vpop.f32.mrb[0].mxu0
    %v10684 = vadd.f32 0.0, %v10683
    %v10685 = vpop.f32.mrb[0].mxu0
    %v10686 = vadd.f32 0.0, %v10685
    %10687 = vmatprep.mubr.f32.mxu0 %v10062
    %10688 = vmatmul.mubr.f32.gmra.mrb[0].mxu0 %v9538
    %v10689 = vpop.f32.mrb[0].mxu0
    %v10690 = vadd.f32 0.0, %v10689
    %v10691 = vpop.f32.mrb[0].mxu0
    %v10692 = vadd.f32 0.0, %v10691
    %10693 = vmatprep.mubr.f32.mxu0 %v10063
    %10694 = vmatmul.mubr.f32.gmra.mrb[0].mxu0 %v9539
    %v10695 = vpop.f32.mrb[0].mxu0
    %v10696 = vadd.f32 0.0, %v10695
    %v10697 = vpop.f32.mrb[0].mxu0
    %v10698 = vadd.f32 0.0, %v10697
    %10699 = vmatprep.mubr.f32.mxu0 %v10064
    %10700 = vmatmul.mubr.f32.gmra.mrb[0].mxu0 %v9540
    %v10701 = vpop.f32.mrb[0].mxu0
    %v10702 = vadd.f32 0.0, %v10701
    %v10703 = vpop.f32.mrb[0].mxu0
    %v10704 = vadd.f32 0.0, %v10703
    %10705 = vmatprep.mubr.f32.mxu0 %v10065
    %10706 = vmatmul.mubr.f32.gmra.mrb[0].mxu0 %v9541
    %v10707 = vpop.f32.mrb[0].mxu0
    %v10708 = vadd.f32 0.0, %v10707
    %v10709 = vpop.f32.mrb[0].mxu0
    %v10710 = vadd.f32 0.0, %v10709
    %10711 = vmatprep.mubr.f32.mxu0 %v10066
    %10712 = vmatmul.mubr.f32.gmra.mrb[0].mxu0 %v9542
    %v10713 = vpop.f32.mrb[0].mxu0
    %v10714 = vadd.f32 0.0, %v10713
    %v10715 = vpop.f32.mrb[0].mxu0
    %v10716 = vadd.f32 0.0, %v10715
    %10717 = vdwg.mxu0
    %v10718 = vld [vmem:[%s17] sm:$0xff]
    %v10719 = vld [vmem:[%s17 + $0x8] sm:$0xff]
    %v10720 = vld [vmem:[%s17 + $0x10] sm:$0xff]
    %v10721 = vld [vmem:[%s17 + $0x18] sm:$0xff]
    %v10722 = vld [vmem:[%s17 + $0x20] sm:$0xff]
    %v10723 = vld [vmem:[%s17 + $0x28] sm:$0xff]
    %v10724 = vld [vmem:[%s17 + $0x30] sm:$0xff]
    %v10725 = vld [vmem:[%s17 + $0x38] sm:$0xff]
    %v10726 = vld [vmem:[%s17 + $0x40] sm:$0xff]
    %v10727 = vld [vmem:[%s17 + $0x48] sm:$0xff]
    %v10728 = vld [vmem:[%s17 + $0x50] sm:$0xff]
    %v10729 = vld [vmem:[%s17 + $0x58] sm:$0xff]
    %v10730 = vld [vmem:[%s17 + $0x60] sm:$0xff]
    %v10731 = vld [vmem:[%s17 + $0x68] sm:$0xff]
    %v10732 = vld [vmem:[%s17 + $0x70] sm:$0xff]
    %v10733 = vld [vmem:[%s17 + $0x78] sm:$0xff]
    %v10734 = vld [vmem:[%s17 + $0x80] sm:$0xff]
    %v10735 = vld [vmem:[%s17 + $0x88] sm:$0xff]
    %v10736 = vld [vmem:[%s17 + $0x90] sm:$0xff]
    %v10737 = vld [vmem:[%s17 + $0x98] sm:$0xff]
    %v10738 = vld [vmem:[%s17 + $0xa0] sm:$0xff]
    %v10739 = vld [vmem:[%s17 + $0xa8] sm:$0xff]
    %v10740 = vld [vmem:[%s17 + $0xb0] sm:$0xff]
    %v10741 = vld [vmem:[%s17 + $0xb8] sm:$0xff]
    %v10742 = vld [vmem:[%s17 + $0xc0] sm:$0xff]
    %v10743 = vld [vmem:[%s17 + $0xc8] sm:$0xff]
    %v10744 = vld [vmem:[%s17 + $0xd0] sm:$0xff]
    %v10745 = vld [vmem:[%s17 + $0xd8] sm:$0xff]
    %v10746 = vmul.f32 %v10636, %v10718
    %v10747 = vmul.f32 %v10638, %v10719
    %v10748 = vmul.f32 %v10642, %v10720
    %v10749 = vmul.f32 %v10644, %v10721
    %v10750 = vmul.f32 %v10648, %v10722
    %v10751 = vmul.f32 %v10650, %v10723
    %v10752 = vmul.f32 %v10654, %v10724
    %v10753 = vmul.f32 %v10656, %v10725
    %v10754 = vmul.f32 %v10660, %v10726
    %v10755 = vmul.f32 %v10662, %v10727
    %v10756 = vmul.f32 %v10666, %v10728
    %v10757 = vmul.f32 %v10668, %v10729
    %v10758 = vmul.f32 %v10672, %v10730
    %v10759 = vmul.f32 %v10674, %v10731
    %v10760 = vmul.f32 %v10678, %v10732
    %v10761 = vmul.f32 %v10680, %v10733
    %v10762 = vmul.f32 %v10684, %v10734
    %v10763 = vmul.f32 %v10686, %v10735
    %v10764 = vmul.f32 %v10690, %v10736
    %v10765 = vmul.f32 %v10692, %v10737
    %v10766 = vmul.f32 %v10696, %v10738
    %v10767 = vmul.f32 %v10698, %v10739
    %v10768 = vmul.f32 %v10702, %v10740
    %v10769 = vmul.f32 %v10704, %v10741
    %v10770 = vmul.f32 %v10708, %v10742
    %v10771 = vmul.f32 %v10710, %v10743
    %v10772 = vmul.f32 %v10714, %v10744
    %v10773 = vmul.f32 %v10716, %v10745
    %v10774 = vld [vmem:[%s18] sm:$0x3]
    %vm10775 = vcmask 916480
    %v10777 = vsel %vm10775, %v10774, 0
    %10779 = vmatprep.subr.mxu0 %v10747
    %10780 = vmatpush1.msra.mxu0 %v10746
    %10781 = vmatprep.subr.mxu0 %v10749
    %10782 = vmatpush1.msra.mxu0 %v10748
    %10783 = vmatprep.subr.mxu0 %v10751
    %10784 = vmatpush1.msra.mxu0 %v10750
    %10785 = vmatprep.subr.mxu0 %v10753
    %10786 = vmatpush1.msra.mxu0 %v10752
    %10787 = vmatprep.subr.mxu0 %v10755
    %10788 = vmatpush1.msra.mxu0 %v10754
    %10789 = vmatprep.subr.mxu0 %v10757
    %10790 = vmatpush1.msra.mxu0 %v10756
    %10791 = vmatprep.subr.mxu0 %v10759
    %10792 = vmatpush1.msra.mxu0 %v10758
    %10793 = vmatprep.subr.mxu0 %v10761
    %10794 = vmatpush1.msra.mxu0 %v10760
    %10795 = vmatprep.subr.mxu0 %v10763
    %10796 = vmatpush1.msra.mxu0 %v10762
    %10797 = vmatprep.subr.mxu0 %v10765
    %10798 = vmatpush1.msra.mxu0 %v10764
    %10799 = vmatprep.subr.mxu0 %v10767
    %10800 = vmatpush1.msra.mxu0 %v10766
    %10801 = vmatprep.subr.mxu0 %v10769
    %10802 = vmatpush1.msra.mxu0 %v10768
    %10803 = vmatprep.subr.mxu0 %v10771
    %10804 = vmatpush1.msra.mxu0 %v10770
    %10805 = vmatprep.subr.mxu0 %v10773
    %10806 = vmatpush1.msra.mxu0 %v10772
    %10807 = vmatprep.subr.mxu0 0.0
    %10808 = vmatpush1.msra.mxu0 0.0
    %10809 = vmatprep.subr.mxu0 0.0
    %10810 = vmatpush1.msra.mxu0 0.0
    %10811 = vmatprep.subr.mxu0 0.0
    %10812 = vmatpush1.msra.mxu0 0.0
    %10813 = vmatprep.subr.mxu0 0.0
    %10814 = vmatpush1.msra.mxu0 0.0
    %10815 = vmatprep.subr.mxu0 0.0
    %10816 = vmatpush1.msra.mxu0 0.0
    %10817 = vmatprep.subr.mxu0 0.0
    %10818 = vmatpush1.msra.mxu0 0.0
    %10819 = vmatprep.subr.mxu0 0.0
    %10820 = vmatpush1.msra.mxu0 0.0
    %10821 = vmatprep.subr.mxu0 0.0
    %10822 = vmatpush1.msra.mxu0 0.0
    %10823 = vmatprep.subr.mxu0 0.0
    %10824 = vmatpush1.msra.mxu0 0.0
    %10825 = vmatprep.subr.mxu0 0.0
    %10826 = vmatpush1.msra.mxu0 0.0
    %10827 = vmatprep.subr.mxu0 0.0
    %10828 = vmatpush1.msra.mxu0 0.0
    %10829 = vmatprep.subr.mxu0 0.0
    %10830 = vmatpush1.msra.mxu0 0.0
    %10831 = vmatprep.subr.mxu0 0.0
    %10832 = vmatpush1.msra.mxu0 0.0
    %10833 = vmatprep.subr.mxu0 0.0
    %10834 = vmatpush1.msra.mxu0 0.0
    %10835 = vmatprep.subr.mxu0 0.0
    %10836 = vmatpush1.msra.mxu0 0.0
    %10837 = vmatprep.subr.mxu0 0.0
    %10838 = vmatpush1.msra.mxu0 0.0
    %10839 = vmatprep.subr.mxu0 0.0
    %10840 = vmatpush1.msra.mxu0 0.0
    %10841 = vmatprep.subr.mxu0 0.0
    %10842 = vmatpush1.msra.mxu0 0.0
    %10843 = vmatprep.mubr.f32.mxu0 0.0
    %10844 = vmatmul.mubr.f32.gmra.mrb[0].mxu0 %v10777
    %v10845 = vpop.f32.mrb[0].mxu0
    %v10846 = vadd.f32 0.0, %v10845
    %v10847 = vpop.f32.mrb[0].mxu0
    %v10848 = vadd.f32 0.0, %v10847
    %10849 = vdwg.mxu0
    %v10850 = vld [vmem:[%s19] sm:$0xff]
    %v10851 = vld [vmem:[%s19 + $0x8] sm:$0xff]
    %v10852 = vld [vmem:[%s19 + $0x10] sm:$0xff]
    %v10853 = vld [vmem:[%s19 + $0x18] sm:$0xff]
    %v10854 = vld [vmem:[%s19 + $0x20] sm:$0xff]
    %v10855 = vld [vmem:[%s19 + $0x28] sm:$0xff]
    %v10856 = vld [vmem:[%s19 + $0x30] sm:$0xff]
    %v10857 = vld [vmem:[%s19 + $0x38] sm:$0xff]
    %v10858 = vld [vmem:[%s19 + $0x40] sm:$0xff]
    %v10859 = vld [vmem:[%s19 + $0x48] sm:$0xff]
    %v10860 = vld [vmem:[%s19 + $0x50] sm:$0xff]
    %v10861 = vld [vmem:[%s19 + $0x58] sm:$0xff]
    %v10862 = vld [vmem:[%s19 + $0x60] sm:$0xff]
    %v10863 = vld [vmem:[%s19 + $0x68] sm:$0xff]
    %v10864 = vld [vmem:[%s19 + $0x70] sm:$0xff]
    %v10865 = vld [vmem:[%s19 + $0x78] sm:$0xff]
    %v10866 = vld [vmem:[%s19 + $0x80] sm:$0xff]
    %v10867 = vld [vmem:[%s19 + $0x88] sm:$0xff]
    %v10868 = vld [vmem:[%s19 + $0x90] sm:$0xff]
    %v10869 = vld [vmem:[%s19 + $0x98] sm:$0xff]
    %v10870 = vld [vmem:[%s19 + $0xa0] sm:$0xff]
    %v10871 = vld [vmem:[%s19 + $0xa8] sm:$0xff]
    %v10872 = vld [vmem:[%s19 + $0xb0] sm:$0xff]
    %v10873 = vld [vmem:[%s19 + $0xb8] sm:$0xff]
    %v10874 = vld [vmem:[%s19 + $0xc0] sm:$0xff]
    %v10875 = vld [vmem:[%s19 + $0xc8] sm:$0xff]
    %v10876 = vld [vmem:[%s19 + $0xd0] sm:$0xff]
    %v10877 = vld [vmem:[%s20] sm:$0x1]
    %v10879 = vlaneseq
    %v10880 = vshrl.u32 %v10879, 7
    %v10881 = vsub.s32 0, %v10880
    %v10882 = vrot.slane %v10877, %v10881
    %vm10884 = vcmask 719872
    %v10886 = vsel %vm10884, %v10848, 0
    %10888 = vmatprep.subr.mxu0 0.0
    %10889 = vmatpush1.msra.mxu0 %v10850
    %10890 = vmatprep.subr.mxu0 0.0
    %10891 = vmatpush1.msra.mxu0 %v10851
    %10892 = vmatprep.subr.mxu0 0.0
    %10893 = vmatpush1.msra.mxu0 %v10852
    %10894 = vmatprep.subr.mxu0 0.0
    %10895 = vmatpush1.msra.mxu0 %v10853
    %10896 = vmatprep.subr.mxu0 0.0
    %10897 = vmatpush1.msra.mxu0 %v10854
    %10898 = vmatprep.subr.mxu0 0.0
    %10899 = vmatpush1.msra.mxu0 %v10855
    %10900 = vmatprep.subr.mxu0 0.0
    %10901 = vmatpush1.msra.mxu0 %v10856
    %10902 = vmatprep.subr.mxu0 0.0
    %10903 = vmatpush1.msra.mxu0 %v10857
    %10904 = vmatprep.subr.mxu0 0.0
    %10905 = vmatpush1.msra.mxu0 %v10858
    %10906 = vmatprep.subr.mxu0 0.0
    %10907 = vmatpush1.msra.mxu0 %v10859
    %10908 = vmatprep.subr.mxu0 0.0
    %10909 = vmatpush1.msra.mxu0 %v10860
    %10910 = vmatprep.subr.mxu0 0.0
    %10911 = vmatpush1.msra.mxu0 %v10861
    %10912 = vmatprep.subr.mxu0 0.0
    %10913 = vmatpush1.msra.mxu0 %v10862
    %10914 = vmatprep.subr.mxu0 0.0
    %10915 = vmatpush1.msra.mxu0 %v10863
    %10916 = vmatprep.subr.mxu0 0.0
    %10917 = vmatpush1.msra.mxu0 %v10864
    %10918 = vmatprep.subr.mxu0 0.0
    %10919 = vmatpush1.msra.mxu0 %v10865
    %10920 = vmatprep.subr.mxu0 0.0
    %10921 = vmatpush1.msra.mxu0 %v10866
    %10922 = vmatprep.subr.mxu0 0.0
    %10923 = vmatpush1.msra.mxu0 %v10867
    %10924 = vmatprep.subr.mxu0 0.0
    %10925 = vmatpush1.msra.mxu0 %v10868
    %10926 = vmatprep.subr.mxu0 0.0
    %10927 = vmatpush1.msra.mxu0 %v10869
    %10928 = vmatprep.subr.mxu0 0.0
    %10929 = vmatpush1.msra.mxu0 %v10870
    %10930 = vmatprep.subr.mxu0 0.0
    %10931 = vmatpush1.msra.mxu0 %v10871
    %10932 = vmatprep.subr.mxu0 0.0
    %10933 = vmatpush1.msra.mxu0 %v10872
    %10934 = vmatprep.subr.mxu0 0.0
    %10935 = vmatpush1.msra.mxu0 %v10873
    %10936 = vmatprep.subr.mxu0 0.0
    %10937 = vmatpush1.msra.mxu0 %v10874
    %10938 = vmatprep.subr.mxu0 0.0
    %10939 = vmatpush1.msra.mxu0 %v10875
    %10940 = vmatprep.subr.mxu0 0.0
    %10941 = vmatpush1.msra.mxu0 %v10876
    %10942 = vmatprep.subr.mxu0 0.0
    %10943 = vmatpush1.msra.mxu0 0.0
    %10944 = vmatprep.subr.mxu0 0.0
    %10945 = vmatpush1.msra.mxu0 0.0
    %10946 = vmatprep.subr.mxu0 0.0
    %10947 = vmatpush1.msra.mxu0 0.0
    %10948 = vmatprep.subr.mxu0 0.0
    %10949 = vmatpush1.msra.mxu0 0.0
    %10950 = vmatprep.subr.mxu0 0.0
    %10951 = vmatpush1.msra.mxu0 0.0
    %10952 = vmatprep.mubr.f32.mxu0 %v10886
    %10953 = vmatmul.mubr.f32.gmra.mrb[0].mxu0 %v10846
    %v10954 = vpop.f32.mrb[0].mxu0
    %v10955 = vadd.f32 %v10882, %v10954
    %v10956 = vpop.f32.mrb[0].mxu0
    %10957 = vdwg.mxu0
    %vm10958 = vcmask 25600
    %10959 = vst.msk [vmem:[#allocation2] sm:$0x3] %vm10958, %v10955
    // Predicated region
    $region86: #{tpu_custom_call.1} parent=1 // pred_check
      _
    $region87: #{tpu_custom_call.1} parent=1 // pred_check_branch
      %10961 = sbr.rel (0) target = $region89
    $region88: #{tpu_custom_call.1} parent=1 // pred_region
      %s10963 = ssub.s32 32, 32
      %10964 = vsyncadd [#allocation3], %s10963
      %s10966 = sshll.u32 [#allocation2], 4
      %s10967 = int_to_ptr.vmem [resolvable:$true] %s10966
      %10969 = dma.vmem_to_hbm [thread:$0]  %s10967, 32, %s21, [#allocation3]
    $region89: #{tpu_custom_call.1} parent=1 // pred_fallthru
      _
    // Predicated region
    $region90: #{tpu_custom_call.1} parent=1 // pred_check
      _
    $region91: #{tpu_custom_call.1} parent=1 // pred_check_branch
      %10971 = sbr.rel (0) target = $region93
    $region92: #{tpu_custom_call.1} parent=1 // pred_region
      %10972 = dma.done [#allocation3], 32
    $region93: #{tpu_custom_call.1} parent=1 // pred_fallthru
      _
    %10973 = vsyncpa [#allocation3], 1

</llo_original>
